<compile_context>
chip_gen: v5e
topology: v5e:2x2
jax: 0.10.0
libtpu: 0.0.40
codegen_flags: <defaults>
</compile_context>

<pallas_src>
import functools
import math

import jax
import jax.numpy as jnp
from jax.experimental import pallas as pl
from jax.experimental.pallas import tpu as pltpu

NEG = -1e9                       # additive mask value (stands in for -inf masked_fill)
MM_DTYPE = jnp.bfloat16          # MXU operand dtype; accumulation stays f32
VMEM_LIMIT = 32 * 1024 * 1024    # explicit scoped-VMEM limit (>= v5e/v6e defaults)


def _round_up(x, m):
    return ((x + m - 1) // m) * m


# ----------------------------- in-kernel helpers -----------------------------

def _mm(a, b):
    """a @ b with bf16 MXU operands, f32 accumulation (bf16 weights: cast is a no-op)."""
    return jnp.dot(a.astype(MM_DTYPE), b.astype(MM_DTYPE),
                   preferred_element_type=jnp.float32)


def _layernorm(z, g, b, eps):
    mean = jnp.mean(z, axis=-1, keepdims=True)
    var = jnp.mean(jnp.square(z - mean), axis=-1, keepdims=True)
    return (z - mean) * jax.lax.rsqrt(var + eps) * g + b


def _mha(xf, wqkv, bqkv, wo, bo, nh, dk, dv, BB, S, add_mask):
    """Fused QKV proj + per-head attention + single output projection.

    xf: (BB*S, D) f32.  add_mask: (BB, S, S) additive or None.  Returns (BB*S, D) f32.
    """
    scale = 1.0 / math.sqrt(dk)
    qkv = _mm(xf, wqkv) + bqkv                      # (BB*S, nh*(2dk+dv)), lane-dense
    dq = nh * dk
    q = qkv[:, :dq].reshape(BB, S, dq)              # 128-lane aligned Q/K/V splits
    k = qkv[:, dq:2 * dq].reshape(BB, S, dq)
    v = qkv[:, 2 * dq:2 * dq + nh * dv].reshape(BB, S, nh * dv)

    # TODO(synk): at larger S switch to lax.fori_loop(..., unroll=True) over heads
    # (bounded liveness) and avoid the 16-lane sub-vreg per-head q/k/v slices.
    heads = []
    for h in range(nh):
        qh = q[..., h * dk:(h + 1) * dk].astype(MM_DTYPE)   # (BB, S, dk)
        kh = k[..., h * dk:(h + 1) * dk].astype(MM_DTYPE)
        vh = v[..., h * dv:(h + 1) * dv].astype(MM_DTYPE)
        s = jnp.einsum("bqd,bkd->bqk", qh, kh,
                       preferred_element_type=jnp.float32) * scale   # (BB,S,S) f32
        if add_mask is not None:
            s = s + add_mask
        mx = jnp.max(s, axis=-1, keepdims=True)
        p = jnp.exp(s - mx)
        p = p * pl.reciprocal(jnp.sum(p, axis=-1, keepdims=True), approx=True)
        heads.append(jnp.einsum("bqk,bkd->bqd", p.astype(MM_DTYPE), vh,
                                preferred_element_type=jnp.float32))  # (BB,S,dv)
    # all head outputs -> one lane-dense (BB*S, nh*dv) value -> single Wo matmul
    cat = jnp.concatenate(heads, axis=-1).reshape(BB * S, nh * dv)
    return _mm(cat, wo) + bo


# --------------------------- fused transformer layer -------------------------

def _layer_kernel(*refs, nh, dk, dv, act, decoder, prologue, eps):
    it = iter(refs)
    x_ref = next(it)
    if decoder:
        pos_ref = next(it)
        kadd_ref = next(it)
        wcap_ref, bcap_ref = next(it), next(it)
    elif prologue == "ln":
        lng_ref, lnb_ref = next(it), next(it)
    wqkv_ref, bqkv_ref = next(it), next(it)
    wo_ref, bo_ref = next(it), next(it)
    gm_ref, bm_ref = next(it), next(it)
    if decoder:
        g1_ref, b1_ref = next(it), next(it)
    w1_ref, c1_ref = next(it), next(it)
    w2_ref, c2_ref = next(it), next(it)
    gf_ref, bf_ref = next(it), next(it)
    o_ref = next(it)

    BB, S, D = o_ref.shape
    Hin = x_ref.shape[2]

    # ---------------- prologue (fused glue kernels) ----------------
    if decoder:
        # proj_to_caption_model(bert_out) + pos_emb(seq), fused into the layer.
        xin = x_ref[...].astype(jnp.float32).reshape(BB * S, Hin)
        pos = pos_ref[...].astype(jnp.float32).reshape(BB * S, D)
        xf = _mm(xin, wcap_ref[...]) + bcap_ref[...] + pos
    elif prologue == "ln":
        # BERT embedding LayerNorm fused into the first encoder layer.
        xf = _layernorm(x_ref[...].astype(jnp.float32).reshape(BB * S, Hin),
                        lng_ref[...], lnb_ref[...], eps)
    else:
        xf = x_ref[...].astype(jnp.float32).reshape(BB * S, Hin)

    # ---------------- masks (decoder only), built in-kernel ----------------
    if decoder:
        kadd = kadd_ref[...]                                   # (BB,1,S): 0.0 real / NEG pad
        row = jax.lax.broadcasted_iota(jnp.int32, (S, S), 0)
        col = jax.lax.broadcasted_iota(jnp.int32, (S, S), 1)
        causal = jnp.where(col > row, NEG, 0.0)                # (S,S) f32
        add_mask = causal[None, :, :] + kadd                   # (BB,S,S) causal | key-pad
        # query/row mask mq[b,s] = 1 iff token s is not pad (diagonal of key-valid).
        kvalid = jnp.where(kadd == 0.0, 1.0, 0.0)              # (BB,1,S)
        diag = jnp.where(row == col, 1.0, 0.0)                 # (S,S)
        mq = jnp.sum(diag[None, :, :] * kvalid, axis=-1, keepdims=True)   # (BB,S,1)
        mqf = mq.reshape(BB * S, 1)
    else:
        add_mask = None                                        # BERT path: attn_mask all ones

    # ---------------- MHA (internal residual + LN, as in rstnet) ----------------
    raw = _mha(xf, wqkv_ref[...], bqkv_ref[...], wo_ref[...], bo_ref[...],
               nh, dk, dv, BB, S, add_mask)
    att = _layernorm(xf + raw, gm_ref[...], bm_ref[...], eps)

    if decoder:
        # EncoderLayer: lnorm1(input + self_att) * mask_pad
        y = _layernorm(xf + att, g1_ref[...], b1_ref[...], eps) * mqf
    else:
        y = att

    # ---------------- position-wise FFN + residual + LN ----------------
    h = _mm(y, w1_ref[...]) + c1_ref[...]
    if act == "relu":
        h = jnp.maximum(h, 0.0)
    else:
        h = jax.nn.gelu(h, approximate=True)   # TODO(synk): HF BERT uses erf-GELU
    z = _mm(h, w2_ref[...]) + c2_ref[...]
    out = _layernorm(y + z, gf_ref[...], bf_ref[...], eps)
    if decoder:
        out = out * mqf                        # pwff(...) * mask_pad
    o_ref[...] = out.reshape(BB, S, D).astype(o_ref.dtype)


def _pick_batch_block(B):
    """Fold batch into the block, keeping a parallel grid axis of 2 when possible
    so both v7x TensorCores get work."""
    return B // 2 if (B >= 2 and B % 2 == 0) else 1


def transformer_layer(x, p, layer_cfg, *, pos=None, kadd=None, emb_ln=None,
                      out_dtype=jnp.float32, eps=1e-5):
    """One fused transformer layer (optionally with a fused prologue).

    x: (B, S, Hin).  decoder path iff kadd is not None:
      pos:  (B, S, D)  positional embedding to add after the fused projection
      kadd: (B, 1, S)  additive key-pad vector (0.0 real token, NEG pad)
    emb_ln: fold an input LayerNorm (BERT embedding LN) into the kernel prologue.
    """
    B, S, Hin = x.shape
    decoder = kadd is not None
    nh, dk, dv = layer_cfg["h"], layer_cfg["d_k"], layer_cfg["d_v"]
    D = p["mha"]["o"]["w"].shape[1]
    BB = _pick_batch_block(B)
    grid = B // BB

    args = [x]
    in_specs = [pl.BlockSpec((BB, S, Hin), lambda b: (b, 0, 0))]
    wlist = []
    if decoder:
        args += [pos, kadd]
        in_specs += [pl.BlockSpec((BB, S, D), lambda b: (b, 0, 0)),
                     pl.BlockSpec((BB, 1, S), lambda b: (b, 0, 0))]
        wlist += [p["proj"]["w"], p["proj"]["b"]]
    elif emb_ln is not None:
        wlist += [emb_ln["g"], emb_ln["b"]]

    mha, fp = p["mha"], p["ffn"]
    wlist += [mha["qkv"]["w"], mha["qkv"]["b"], mha["o"]["w"], mha["o"]["b"],
              mha["ln"]["g"], mha["ln"]["b"]]
    if decoder:
        wlist += [p["ln1"]["g"], p["ln1"]["b"]]
    wlist += [fp["fc1"]["w"], fp["fc1"]["b"], fp["fc2"]["w"], fp["fc2"]["b"],
              fp["ln"]["g"], fp["ln"]["b"]]
    args += wlist
    # constant-index full-block weight specs: DMAed once, reused across grid steps.
    # TODO(synk): at BERT-base scale, mark these pipeline_mode=pl.Buffered(1)
    # (double-buffering a constant block buys nothing) and raise vmem_limit_bytes.
    in_specs += [pl.BlockSpec(w.shape, lambda b: (0, 0)) for w in wlist]

    kern = functools.partial(
        _layer_kernel, nh=nh, dk=dk, dv=dv, act=layer_cfg["act"], decoder=decoder,
        prologue="proj_add" if decoder else ("ln" if emb_ln is not None else None),
        eps=eps)
    return pl.pallas_call(
        kern,
        out_shape=jax.ShapeDtypeStruct((B, S, D), out_dtype),
        grid=(grid,),
        in_specs=in_specs,
        out_specs=pl.BlockSpec((BB, S, D), lambda b: (b, 0, 0)),
        compiler_params=pltpu.CompilerParams(
            dimension_semantics=("parallel",), vmem_limit_bytes=VMEM_LIMIT),
    )(*args)


# ------------------------------ vocab projection -----------------------------

def _proj_logsoftmax_kernel(x_ref, w_ref, b_ref, o_ref):
    logits = _mm(x_ref[...], w_ref[...]) + b_ref[...]
    mx = jnp.max(logits, axis=-1, keepdims=True)
    sh = logits - mx
    lse = jnp.log(jnp.sum(jnp.exp(sh), axis=-1, keepdims=True))
    o_ref[...] = (sh - lse).astype(o_ref.dtype)


def proj_logsoftmax(x, w, b, block_rows=256):
    """log_softmax(x @ w + b, axis=-1), row-tiled (parallel grid) over N.

    TODO(synk): at BERT-scale vocab (D=768, V~30K) the (D,V) weight must also be
    tiled over V (128-lane multiples) with a two-pass / online log-sum-exp to fit
    v7x's 64 MiB VMEM; full-V blocks are fine at the toy sizes used here.
    """
    N, Dm = x.shape
    V = w.shape[1]
    # row tile: multiple of 8 sublanes, >= 2 grid steps when possible (v7x)
    bm = min(block_rows, _round_up(max(1, pl.cdiv(N, 2)), 8))
    grid = pl.cdiv(N, bm)
    Np = grid * bm
    if Np != N:
        x = jnp.pad(x, ((0, Np - N), (0, 0)))
    out = pl.pallas_call(
        _proj_logsoftmax_kernel,
        out_shape=jax.ShapeDtypeStruct((Np, V), jnp.float32),
        grid=(grid,),
        in_specs=[pl.BlockSpec((bm, Dm), lambda i: (i, 0)),
                  pl.BlockSpec((Dm, V), lambda i: (0, 0)),
                  pl.BlockSpec((1, V), lambda i: (0, 0))],
        out_specs=pl.BlockSpec((bm, V), lambda i: (i, 0)),
        compiler_params=pltpu.CompilerParams(
            dimension_semantics=("parallel",), vmem_limit_bytes=VMEM_LIMIT),
    )(x, w, b)
    return out[:N]


# ------------------------------ model glue -----------------------------------

def sinusoid_encoding_table(n_position, d_model, padding_idx=None):
    position = jnp.arange(n_position, dtype=jnp.float32)[:, None]
    dim = jnp.arange(d_model, dtype=jnp.float32)[None, :]
    angle = position / jnp.power(10000.0, 2.0 * jnp.floor(dim / 2.0) / d_model)
    even = (jnp.arange(d_model) % 2)[None, :] == 0
    table = jnp.where(even, jnp.sin(angle), jnp.cos(angle))
    if padding_idx is not None:
        table = table.at[padding_idx].set(0.0)
    return table.astype(jnp.float32)


def bert_forward(p, input_ids, token_type_ids, cfg):
    """Synthetic BERT-style encoder; the embedding LayerNorm is fused into the first
    layer kernel.  No attention mask (reference passes attention_mask = all ones)."""
    S = input_ids.shape[1]
    emb = (jnp.take(p["word_emb"], input_ids, axis=0)
           + p["pos_emb"][None, :S, :]
           + jnp.take(p["type_emb"], token_type_ids, axis=0))          # (B,S,Hb) bf16
    dh = cfg["bert_hidden"] // cfg["bert_heads"]
    layer_cfg = dict(h=cfg["bert_heads"], d_k=dh, d_v=dh, act="gelu")
    x = emb
    for li, lp in enumerate(p["layers"]):
        x = transformer_layer(x, lp, layer_cfg,
                              emb_ln=p["emb_ln"] if li == 0 else None,
                              out_dtype=jnp.bfloat16)   # inter-layer activations in bf16
    return x


def language_model_forward(params, input_ids, cfg):
    B, S = input_ids.shape
    D, V = cfg["d_model"], cfg["vocab_size"]
    pad = cfg["padding_idx"]

    not_pad = input_ids != pad
    # additive key-pad vector: 0.0 for real tokens, NEG for pad keys (lane-oriented)
    kadd = jnp.where(not_pad, 0.0, NEG).astype(jnp.float32).reshape(B, 1, S)
    # seq = arange(1, S+1) masked to 0 at padding positions -> sinusoid rows (row 0 = zeros)
    seq = jnp.where(not_pad, jnp.arange(1, S + 1, dtype=jnp.int32)[None, :], 0)
    token_type_ids = jnp.zeros_like(input_ids)

    bert_out = bert_forward(params["bert"], input_ids, token_type_ids, cfg)   # (B,S,Hb) bf16
    pos = jnp.take(params["pos_table"], seq, axis=0)                          # (B,S,D) f32

    # decoder layer kernel fuses proj_to_caption_model + positional add as its prologue
    dec_cfg = dict(h=cfg["h"], d_k=cfg["d_k"], d_v=cfg["d_v"], act="relu")
    lf = transformer_layer(bert_out, params["enc"], dec_cfg,
                           pos=pos, kadd=kadd, out_dtype=jnp.float32)

    out = proj_logsoftmax(lf.reshape(B * S, D),
                          params["proj_vocab"]["w"], params["proj_vocab"]["b"])
    return out.reshape(B, S, V), lf


# ---------------------------- parameter init ----------------------------------

def init_params(key, cfg):
    keys = iter(jax.random.split(key, 128))

    def w(shape):
        # weight matrices / embedding tables live in HBM as bf16; biases & LN stay f32.
        return (0.02 * jax.random.normal(next(keys), shape, jnp.float32)).astype(jnp.bfloat16)

    def lin(din, dout):
        return {"w": w((din, dout)), "b": jnp.zeros((1, dout), jnp.float32)}

    def ln(d):
        return {"g": jnp.ones((1, d), jnp.float32), "b": jnp.zeros((1, d), jnp.float32)}

    def mha_p(d_model, nh, dk, dv):
        # fused QKV projection: columns laid out as [Q | K | V] (128-lane aligned splits)
        return {"qkv": lin(d_model, nh * (2 * dk + dv)),
                "o": lin(nh * dv, d_model),
                "ln": ln(d_model)}

    def ffn_p(d_model, dff):
        return {"fc1": lin(d_model, dff), "fc2": lin(dff, d_model), "ln": ln(d_model)}

    Hb, D, V = cfg["bert_hidden"], cfg["d_model"], cfg["vocab_size"]
    dh = Hb // cfg["bert_heads"]
    bert_layers = [{"mha": mha_p(Hb, cfg["bert_heads"], dh, dh),
                    "ffn": ffn_p(Hb, cfg["bert_ff"])}
                   for _ in range(cfg["bert_layers"])]
    bert = {"word_emb": w((V, Hb)), "pos_emb": w((cfg["bert_max_pos"], Hb)),
            "type_emb": w((2, Hb)), "emb_ln": ln(Hb), "layers": bert_layers}

    return {
        "bert": bert,
        "pos_table": sinusoid_encoding_table(cfg["max_len"] + 1, D, cfg["padding_idx"]),
        "enc": {"proj": lin(Hb, D),              # proj_to_caption_model (fused prologue)
                "mha": mha_p(D, cfg["h"], cfg["d_k"], cfg["d_v"]),
                "ln1": ln(D),
                "ffn": ffn_p(D, cfg["d_ff"])},
        "proj_vocab": lin(D, V),
    }


# --------------------------------- main ----------------------------------------

if __name__ == "__main__":
    cfg = dict(padding_idx=0, vocab_size=256, d_model=128, d_k=16, d_v=16, h=8,
               d_ff=128, max_len=59, bert_hidden=128, bert_heads=8, bert_ff=256,
               bert_layers=1, bert_max_pos=64)

    root = jax.random.PRNGKey(0)
    pkey, ikey = jax.random.split(root)
    params = init_params(pkey, cfg)

    B, S = 4, 8
    input_ids = jax.random.randint(ikey, (B, S), 1, cfg["vocab_size"], dtype=jnp.int32)
    input_ids = input_ids.at[1, 6:].set(cfg["padding_idx"])   # pad the tail of example 1
    input_ids = input_ids.at[3, 5:].set(cfg["padding_idx"])   # pad the tail of example 3

    fwd = jax.jit(lambda ids: language_model_forward(params, ids, cfg))
    out, feat = fwd(input_ids)
    jax.block_until_ready((out, feat))

    assert out.shape == (B, S, cfg["vocab_size"])
    assert feat.shape == (B, S, cfg["d_model"])
    assert bool(jnp.all(jnp.isfinite(out))) and bool(jnp.all(jnp.isfinite(feat)))
    print("KERNEL_OK")
</pallas_src>

<mosaic_0001>
module attributes {stable_mosaic.version = 11 : i64} {
  func.func @_layer_kernel(%arg0: i32, %arg1: memref<2x8x128xbf16, #tpu.memory_space<vmem>>, %arg2: memref<1x128xf32, #tpu.memory_space<vmem>>, %arg3: memref<1x128xf32, #tpu.memory_space<vmem>>, %arg4: memref<128x384xbf16, #tpu.memory_space<vmem>>, %arg5: memref<1x384xf32, #tpu.memory_space<vmem>>, %arg6: memref<128x128xbf16, #tpu.memory_space<vmem>>, %arg7: memref<1x128xf32, #tpu.memory_space<vmem>>, %arg8: memref<1x128xf32, #tpu.memory_space<vmem>>, %arg9: memref<1x128xf32, #tpu.memory_space<vmem>>, %arg10: memref<128x256xbf16, #tpu.memory_space<vmem>>, %arg11: memref<1x256xf32, #tpu.memory_space<vmem>>, %arg12: memref<256x128xbf16, #tpu.memory_space<vmem>>, %arg13: memref<1x128xf32, #tpu.memory_space<vmem>>, %arg14: memref<1x128xf32, #tpu.memory_space<vmem>>, %arg15: memref<1x128xf32, #tpu.memory_space<vmem>>, %arg16: memref<2x8x128xbf16, #tpu.memory_space<vmem>>) attributes {dimension_semantics = [#tpu.dimension_semantics<parallel>], iteration_bounds = array<i64: 2>, scalar_prefetch = 0 : i64, scratch_operands = 0 : i64, tpu.core_type = #tpu.core_type<tc>, window_params = [{transform_indices = @transform_0, window_bounds = array<i64: 2, 8, 128>}, {pipeline_mode = #tpu.pipeline_mode<synchronous>, transform_indices = @transform_1, window_bounds = array<i64: 1, 128>}, {pipeline_mode = #tpu.pipeline_mode<synchronous>, transform_indices = @transform_2, window_bounds = array<i64: 1, 128>}, {pipeline_mode = #tpu.pipeline_mode<synchronous>, transform_indices = @transform_3, window_bounds = array<i64: 128, 384>}, {pipeline_mode = #tpu.pipeline_mode<synchronous>, transform_indices = @transform_4, window_bounds = array<i64: 1, 384>}, {pipeline_mode = #tpu.pipeline_mode<synchronous>, transform_indices = @transform_5, window_bounds = array<i64: 128, 128>}, {pipeline_mode = #tpu.pipeline_mode<synchronous>, transform_indices = @transform_6, window_bounds = array<i64: 1, 128>}, {pipeline_mode = #tpu.pipeline_mode<synchronous>, transform_indices = @transform_7, window_bounds = array<i64: 1, 128>}, {pipeline_mode = #tpu.pipeline_mode<synchronous>, transform_indices = @transform_8, window_bounds = array<i64: 1, 128>}, {pipeline_mode = #tpu.pipeline_mode<synchronous>, transform_indices = @transform_9, window_bounds = array<i64: 128, 256>}, {pipeline_mode = #tpu.pipeline_mode<synchronous>, transform_indices = @transform_10, window_bounds = array<i64: 1, 256>}, {pipeline_mode = #tpu.pipeline_mode<synchronous>, transform_indices = @transform_11, window_bounds = array<i64: 256, 128>}, {pipeline_mode = #tpu.pipeline_mode<synchronous>, transform_indices = @transform_12, window_bounds = array<i64: 1, 128>}, {pipeline_mode = #tpu.pipeline_mode<synchronous>, transform_indices = @transform_13, window_bounds = array<i64: 1, 128>}, {pipeline_mode = #tpu.pipeline_mode<synchronous>, transform_indices = @transform_14, window_bounds = array<i64: 1, 128>}, {transform_indices = @transform_15, window_bounds = array<i64: 2, 8, 128>}]} {
    %c0 = arith.constant 0 : index
    %c0_0 = arith.constant 0 : index
    %c0_1 = arith.constant 0 : index
    %0 = vector.load %arg1[%c0, %c0_0, %c0_1] : memref<2x8x128xbf16, #tpu.memory_space<vmem>>, vector<2x8x128xbf16>
    %1 = arith.extf %0 : vector<2x8x128xbf16> to vector<2x8x128xf32>
    %2 = vector.shape_cast %1 : vector<2x8x128xf32> to vector<16x128xf32>
    %c0_2 = arith.constant 0 : index
    %c0_3 = arith.constant 0 : index
    %3 = vector.load %arg2[%c0_2, %c0_3] : memref<1x128xf32, #tpu.memory_space<vmem>>, vector<1x128xf32>
    %c0_4 = arith.constant 0 : index
    %c0_5 = arith.constant 0 : index
    %4 = vector.load %arg3[%c0_4, %c0_5] : memref<1x128xf32, #tpu.memory_space<vmem>>, vector<1x128xf32>
    %cst = arith.constant dense<0.000000e+00> : vector<16xf32>
    %5 = vector.multi_reduction <add>, %2, %cst [1] : vector<16x128xf32> to vector<16xf32>
    %6 = vector.shape_cast %5 : vector<16xf32> to vector<16x1xf32>
    %cst_6 = arith.constant 1.280000e+02 : f32
    %7 = vector.broadcast %cst_6 : f32 to vector<16x1xf32>
    %8 = arith.divf %6, %7 : vector<16x1xf32>
    %9 = vector.broadcast %8 : vector<16x1xf32> to vector<16x128xf32>
    %10 = arith.subf %2, %9 : vector<16x128xf32>
    %11 = arith.mulf %10, %10 : vector<16x128xf32>
    %cst_7 = arith.constant dense<0.000000e+00> : vector<16xf32>
    %12 = vector.multi_reduction <add>, %11, %cst_7 [1] : vector<16x128xf32> to vector<16xf32>
    %13 = vector.shape_cast %12 : vector<16xf32> to vector<16x1xf32>
    %cst_8 = arith.constant 1.280000e+02 : f32
    %14 = vector.broadcast %cst_8 : f32 to vector<16x1xf32>
    %15 = arith.divf %13, %14 : vector<16x1xf32>
    %16 = vector.broadcast %8 : vector<16x1xf32> to vector<16x128xf32>
    %17 = arith.subf %2, %16 : vector<16x128xf32>
    %cst_9 = arith.constant 9.99999974E-6 : f32
    %18 = vector.broadcast %cst_9 : f32 to vector<16x1xf32>
    %19 = arith.addf %15, %18 : vector<16x1xf32>
    %20 = math.rsqrt %19 : vector<16x1xf32>
    %21 = vector.broadcast %20 : vector<16x1xf32> to vector<16x128xf32>
    %22 = arith.mulf %17, %21 : vector<16x128xf32>
    %23 = vector.broadcast %3 : vector<1x128xf32> to vector<16x128xf32>
    %24 = arith.mulf %22, %23 : vector<16x128xf32>
    %25 = vector.broadcast %4 : vector<1x128xf32> to vector<16x128xf32>
    %26 = arith.addf %24, %25 : vector<16x128xf32>
    %c0_10 = arith.constant 0 : index
    %c0_11 = arith.constant 0 : index
    %27 = vector.load %arg4[%c0_10, %c0_11] : memref<128x384xbf16, #tpu.memory_space<vmem>>, vector<128x384xbf16>
    %c0_12 = arith.constant 0 : index
    %c0_13 = arith.constant 0 : index
    %28 = vector.load %arg5[%c0_12, %c0_13] : memref<1x384xf32, #tpu.memory_space<vmem>>, vector<1x384xf32>
    %c0_14 = arith.constant 0 : index
    %c0_15 = arith.constant 0 : index
    %29 = vector.load %arg6[%c0_14, %c0_15] : memref<128x128xbf16, #tpu.memory_space<vmem>>, vector<128x128xbf16>
    %c0_16 = arith.constant 0 : index
    %c0_17 = arith.constant 0 : index
    %30 = vector.load %arg7[%c0_16, %c0_17] : memref<1x128xf32, #tpu.memory_space<vmem>>, vector<1x128xf32>
    %31 = arith.truncf %26 : vector<16x128xf32> to vector<16x128xbf16>
    %cst_18 = arith.constant dense<0.000000e+00> : vector<16x384xf32>
    %32 = tpu.matmul %31, %27, %cst_18 {dimension_numbers = #tpu.dot_dimension_numbers<[1], [0], [0], [1], [0, 0, 1, 1], [], []>} : vector<16x128xbf16>, vector<128x384xbf16>, vector<16x384xf32> -> vector<16x384xf32>
    %33 = vector.broadcast %28 : vector<1x384xf32> to vector<16x384xf32>
    %34 = arith.addf %32, %33 : vector<16x384xf32>
    %35 = vector.extract_strided_slice %34 {offsets = [0, 0], sizes = [16, 128], strides = [1, 1]} : vector<16x384xf32> to vector<16x128xf32>
    %36 = vector.shape_cast %35 : vector<16x128xf32> to vector<2x8x128xf32>
    %37 = vector.extract_strided_slice %34 {offsets = [0, 128], sizes = [16, 128], strides = [1, 1]} : vector<16x384xf32> to vector<16x128xf32>
    %38 = vector.shape_cast %37 : vector<16x128xf32> to vector<2x8x128xf32>
    %39 = vector.extract_strided_slice %34 {offsets = [0, 256], sizes = [16, 128], strides = [1, 1]} : vector<16x384xf32> to vector<16x128xf32>
    %40 = vector.shape_cast %39 : vector<16x128xf32> to vector<2x8x128xf32>
    %41 = vector.extract_strided_slice %36 {offsets = [0, 0, 0], sizes = [2, 8, 16], strides = [1, 1, 1]} : vector<2x8x128xf32> to vector<2x8x16xf32>
    %42 = arith.truncf %41 : vector<2x8x16xf32> to vector<2x8x16xbf16>
    %43 = vector.extract_strided_slice %38 {offsets = [0, 0, 0], sizes = [2, 8, 16], strides = [1, 1, 1]} : vector<2x8x128xf32> to vector<2x8x16xf32>
    %44 = arith.truncf %43 : vector<2x8x16xf32> to vector<2x8x16xbf16>
    %45 = vector.extract_strided_slice %40 {offsets = [0, 0, 0], sizes = [2, 8, 16], strides = [1, 1, 1]} : vector<2x8x128xf32> to vector<2x8x16xf32>
    %46 = arith.truncf %45 : vector<2x8x16xf32> to vector<2x8x16xbf16>
    "tpu.trace_start"() <{level = 10 : i32, message = "bqd,bkd->bqk"}> : () -> ()
    %cst_19 = arith.constant dense<0.000000e+00> : vector<2x8x8xf32>
    %47 = tpu.matmul %42, %44, %cst_19 {dimension_numbers = #tpu.dot_dimension_numbers<[2], [2], [1], [1], [0, 0, 0, 1, 1, 1], [0], [0]>} : vector<2x8x16xbf16>, vector<2x8x16xbf16>, vector<2x8x8xf32> -> vector<2x8x8xf32>
    "tpu.trace_stop"() : () -> ()
    %cst_20 = arith.constant 2.500000e-01 : f32
    %48 = vector.broadcast %cst_20 : f32 to vector<2x8x8xf32>
    %49 = arith.mulf %47, %48 : vector<2x8x8xf32>
    %cst_21 = arith.constant dense<0xFF800000> : vector<2x8xf32>
    %50 = vector.multi_reduction <maximumf>, %49, %cst_21 [2] : vector<2x8x8xf32> to vector<2x8xf32>
    %51 = vector.shape_cast %50 : vector<2x8xf32> to vector<2x8x1xf32>
    %52 = vector.broadcast %51 : vector<2x8x1xf32> to vector<2x8x8xf32>
    %53 = arith.subf %49, %52 : vector<2x8x8xf32>
    %54 = math.exp %53 : vector<2x8x8xf32>
    %cst_22 = arith.constant dense<0.000000e+00> : vector<2x8xf32>
    %55 = vector.multi_reduction <add>, %54, %cst_22 [2] : vector<2x8x8xf32> to vector<2x8xf32>
    %56 = vector.shape_cast %55 : vector<2x8xf32> to vector<2x8x1xf32>
    %57 = tpu.reciprocal %56 {approx = true} : vector<2x8x1xf32> -> vector<2x8x1xf32>
    %58 = vector.broadcast %57 : vector<2x8x1xf32> to vector<2x8x8xf32>
    %59 = arith.mulf %54, %58 : vector<2x8x8xf32>
    %60 = arith.truncf %59 : vector<2x8x8xf32> to vector<2x8x8xbf16>
    "tpu.trace_start"() <{level = 10 : i32, message = "bqk,bkd->bqd"}> : () -> ()
    %cst_23 = arith.constant dense<0.000000e+00> : vector<2x8x16xf32>
    %61 = tpu.matmul %60, %46, %cst_23 {dimension_numbers = #tpu.dot_dimension_numbers<[2], [1], [1], [2], [0, 0, 0, 1, 1, 2], [0], [0]>} : vector<2x8x8xbf16>, vector<2x8x16xbf16>, vector<2x8x16xf32> -> vector<2x8x16xf32>
    "tpu.trace_stop"() : () -> ()
    %62 = vector.extract_strided_slice %36 {offsets = [0, 0, 16], sizes = [2, 8, 16], strides = [1, 1, 1]} : vector<2x8x128xf32> to vector<2x8x16xf32>
    %63 = arith.truncf %62 : vector<2x8x16xf32> to vector<2x8x16xbf16>
    %64 = vector.extract_strided_slice %38 {offsets = [0, 0, 16], sizes = [2, 8, 16], strides = [1, 1, 1]} : vector<2x8x128xf32> to vector<2x8x16xf32>
    %65 = arith.truncf %64 : vector<2x8x16xf32> to vector<2x8x16xbf16>
    %66 = vector.extract_strided_slice %40 {offsets = [0, 0, 16], sizes = [2, 8, 16], strides = [1, 1, 1]} : vector<2x8x128xf32> to vector<2x8x16xf32>
    %67 = arith.truncf %66 : vector<2x8x16xf32> to vector<2x8x16xbf16>
    "tpu.trace_start"() <{level = 10 : i32, message = "bqd,bkd->bqk"}> : () -> ()
    %cst_24 = arith.constant dense<0.000000e+00> : vector<2x8x8xf32>
    %68 = tpu.matmul %63, %65, %cst_24 {dimension_numbers = #tpu.dot_dimension_numbers<[2], [2], [1], [1], [0, 0, 0, 1, 1, 1], [0], [0]>} : vector<2x8x16xbf16>, vector<2x8x16xbf16>, vector<2x8x8xf32> -> vector<2x8x8xf32>
    "tpu.trace_stop"() : () -> ()
    %cst_25 = arith.constant 2.500000e-01 : f32
    %69 = vector.broadcast %cst_25 : f32 to vector<2x8x8xf32>
    %70 = arith.mulf %68, %69 : vector<2x8x8xf32>
    %cst_26 = arith.constant dense<0xFF800000> : vector<2x8xf32>
    %71 = vector.multi_reduction <maximumf>, %70, %cst_26 [2] : vector<2x8x8xf32> to vector<2x8xf32>
    %72 = vector.shape_cast %71 : vector<2x8xf32> to vector<2x8x1xf32>
    %73 = vector.broadcast %72 : vector<2x8x1xf32> to vector<2x8x8xf32>
    %74 = arith.subf %70, %73 : vector<2x8x8xf32>
    %75 = math.exp %74 : vector<2x8x8xf32>
    %cst_27 = arith.constant dense<0.000000e+00> : vector<2x8xf32>
    %76 = vector.multi_reduction <add>, %75, %cst_27 [2] : vector<2x8x8xf32> to vector<2x8xf32>
    %77 = vector.shape_cast %76 : vector<2x8xf32> to vector<2x8x1xf32>
    %78 = tpu.reciprocal %77 {approx = true} : vector<2x8x1xf32> -> vector<2x8x1xf32>
    %79 = vector.broadcast %78 : vector<2x8x1xf32> to vector<2x8x8xf32>
    %80 = arith.mulf %75, %79 : vector<2x8x8xf32>
    %81 = arith.truncf %80 : vector<2x8x8xf32> to vector<2x8x8xbf16>
    "tpu.trace_start"() <{level = 10 : i32, message = "bqk,bkd->bqd"}> : () -> ()
    %cst_28 = arith.constant dense<0.000000e+00> : vector<2x8x16xf32>
    %82 = tpu.matmul %81, %67, %cst_28 {dimension_numbers = #tpu.dot_dimension_numbers<[2], [1], [1], [2], [0, 0, 0, 1, 1, 2], [0], [0]>} : vector<2x8x8xbf16>, vector<2x8x16xbf16>, vector<2x8x16xf32> -> vector<2x8x16xf32>
    "tpu.trace_stop"() : () -> ()
    %83 = vector.extract_strided_slice %36 {offsets = [0, 0, 32], sizes = [2, 8, 16], strides = [1, 1, 1]} : vector<2x8x128xf32> to vector<2x8x16xf32>
    %84 = arith.truncf %83 : vector<2x8x16xf32> to vector<2x8x16xbf16>
    %85 = vector.extract_strided_slice %38 {offsets = [0, 0, 32], sizes = [2, 8, 16], strides = [1, 1, 1]} : vector<2x8x128xf32> to vector<2x8x16xf32>
    %86 = arith.truncf %85 : vector<2x8x16xf32> to vector<2x8x16xbf16>
    %87 = vector.extract_strided_slice %40 {offsets = [0, 0, 32], sizes = [2, 8, 16], strides = [1, 1, 1]} : vector<2x8x128xf32> to vector<2x8x16xf32>
    %88 = arith.truncf %87 : vector<2x8x16xf32> to vector<2x8x16xbf16>
    "tpu.trace_start"() <{level = 10 : i32, message = "bqd,bkd->bqk"}> : () -> ()
    %cst_29 = arith.constant dense<0.000000e+00> : vector<2x8x8xf32>
    %89 = tpu.matmul %84, %86, %cst_29 {dimension_numbers = #tpu.dot_dimension_numbers<[2], [2], [1], [1], [0, 0, 0, 1, 1, 1], [0], [0]>} : vector<2x8x16xbf16>, vector<2x8x16xbf16>, vector<2x8x8xf32> -> vector<2x8x8xf32>
    "tpu.trace_stop"() : () -> ()
    %cst_30 = arith.constant 2.500000e-01 : f32
    %90 = vector.broadcast %cst_30 : f32 to vector<2x8x8xf32>
    %91 = arith.mulf %89, %90 : vector<2x8x8xf32>
    %cst_31 = arith.constant dense<0xFF800000> : vector<2x8xf32>
    %92 = vector.multi_reduction <maximumf>, %91, %cst_31 [2] : vector<2x8x8xf32> to vector<2x8xf32>
    %93 = vector.shape_cast %92 : vector<2x8xf32> to vector<2x8x1xf32>
    %94 = vector.broadcast %93 : vector<2x8x1xf32> to vector<2x8x8xf32>
    %95 = arith.subf %91, %94 : vector<2x8x8xf32>
    %96 = math.exp %95 : vector<2x8x8xf32>
    %cst_32 = arith.constant dense<0.000000e+00> : vector<2x8xf32>
    %97 = vector.multi_reduction <add>, %96, %cst_32 [2] : vector<2x8x8xf32> to vector<2x8xf32>
    %98 = vector.shape_cast %97 : vector<2x8xf32> to vector<2x8x1xf32>
    %99 = tpu.reciprocal %98 {approx = true} : vector<2x8x1xf32> -> vector<2x8x1xf32>
    %100 = vector.broadcast %99 : vector<2x8x1xf32> to vector<2x8x8xf32>
    %101 = arith.mulf %96, %100 : vector<2x8x8xf32>
    %102 = arith.truncf %101 : vector<2x8x8xf32> to vector<2x8x8xbf16>
    "tpu.trace_start"() <{level = 10 : i32, message = "bqk,bkd->bqd"}> : () -> ()
    %cst_33 = arith.constant dense<0.000000e+00> : vector<2x8x16xf32>
    %103 = tpu.matmul %102, %88, %cst_33 {dimension_numbers = #tpu.dot_dimension_numbers<[2], [1], [1], [2], [0, 0, 0, 1, 1, 2], [0], [0]>} : vector<2x8x8xbf16>, vector<2x8x16xbf16>, vector<2x8x16xf32> -> vector<2x8x16xf32>
    "tpu.trace_stop"() : () -> ()
    %104 = vector.extract_strided_slice %36 {offsets = [0, 0, 48], sizes = [2, 8, 16], strides = [1, 1, 1]} : vector<2x8x128xf32> to vector<2x8x16xf32>
    %105 = arith.truncf %104 : vector<2x8x16xf32> to vector<2x8x16xbf16>
    %106 = vector.extract_strided_slice %38 {offsets = [0, 0, 48], sizes = [2, 8, 16], strides = [1, 1, 1]} : vector<2x8x128xf32> to vector<2x8x16xf32>
    %107 = arith.truncf %106 : vector<2x8x16xf32> to vector<2x8x16xbf16>
    %108 = vector.extract_strided_slice %40 {offsets = [0, 0, 48], sizes = [2, 8, 16], strides = [1, 1, 1]} : vector<2x8x128xf32> to vector<2x8x16xf32>
    %109 = arith.truncf %108 : vector<2x8x16xf32> to vector<2x8x16xbf16>
    "tpu.trace_start"() <{level = 10 : i32, message = "bqd,bkd->bqk"}> : () -> ()
    %cst_34 = arith.constant dense<0.000000e+00> : vector<2x8x8xf32>
    %110 = tpu.matmul %105, %107, %cst_34 {dimension_numbers = #tpu.dot_dimension_numbers<[2], [2], [1], [1], [0, 0, 0, 1, 1, 1], [0], [0]>} : vector<2x8x16xbf16>, vector<2x8x16xbf16>, vector<2x8x8xf32> -> vector<2x8x8xf32>
    "tpu.trace_stop"() : () -> ()
    %cst_35 = arith.constant 2.500000e-01 : f32
    %111 = vector.broadcast %cst_35 : f32 to vector<2x8x8xf32>
    %112 = arith.mulf %110, %111 : vector<2x8x8xf32>
    %cst_36 = arith.constant dense<0xFF800000> : vector<2x8xf32>
    %113 = vector.multi_reduction <maximumf>, %112, %cst_36 [2] : vector<2x8x8xf32> to vector<2x8xf32>
    %114 = vector.shape_cast %113 : vector<2x8xf32> to vector<2x8x1xf32>
    %115 = vector.broadcast %114 : vector<2x8x1xf32> to vector<2x8x8xf32>
    %116 = arith.subf %112, %115 : vector<2x8x8xf32>
    %117 = math.exp %116 : vector<2x8x8xf32>
    %cst_37 = arith.constant dense<0.000000e+00> : vector<2x8xf32>
    %118 = vector.multi_reduction <add>, %117, %cst_37 [2] : vector<2x8x8xf32> to vector<2x8xf32>
    %119 = vector.shape_cast %118 : vector<2x8xf32> to vector<2x8x1xf32>
    %120 = tpu.reciprocal %119 {approx = true} : vector<2x8x1xf32> -> vector<2x8x1xf32>
    %121 = vector.broadcast %120 : vector<2x8x1xf32> to vector<2x8x8xf32>
    %122 = arith.mulf %117, %121 : vector<2x8x8xf32>
    %123 = arith.truncf %122 : vector<2x8x8xf32> to vector<2x8x8xbf16>
    "tpu.trace_start"() <{level = 10 : i32, message = "bqk,bkd->bqd"}> : () -> ()
    %cst_38 = arith.constant dense<0.000000e+00> : vector<2x8x16xf32>
    %124 = tpu.matmul %123, %109, %cst_38 {dimension_numbers = #tpu.dot_dimension_numbers<[2], [1], [1], [2], [0, 0, 0, 1, 1, 2], [0], [0]>} : vector<2x8x8xbf16>, vector<2x8x16xbf16>, vector<2x8x16xf32> -> vector<2x8x16xf32>
    "tpu.trace_stop"() : () -> ()
    %125 = vector.extract_strided_slice %36 {offsets = [0, 0, 64], sizes = [2, 8, 16], strides = [1, 1, 1]} : vector<2x8x128xf32> to vector<2x8x16xf32>
    %126 = arith.truncf %125 : vector<2x8x16xf32> to vector<2x8x16xbf16>
    %127 = vector.extract_strided_slice %38 {offsets = [0, 0, 64], sizes = [2, 8, 16], strides = [1, 1, 1]} : vector<2x8x128xf32> to vector<2x8x16xf32>
    %128 = arith.truncf %127 : vector<2x8x16xf32> to vector<2x8x16xbf16>
    %129 = vector.extract_strided_slice %40 {offsets = [0, 0, 64], sizes = [2, 8, 16], strides = [1, 1, 1]} : vector<2x8x128xf32> to vector<2x8x16xf32>
    %130 = arith.truncf %129 : vector<2x8x16xf32> to vector<2x8x16xbf16>
    "tpu.trace_start"() <{level = 10 : i32, message = "bqd,bkd->bqk"}> : () -> ()
    %cst_39 = arith.constant dense<0.000000e+00> : vector<2x8x8xf32>
    %131 = tpu.matmul %126, %128, %cst_39 {dimension_numbers = #tpu.dot_dimension_numbers<[2], [2], [1], [1], [0, 0, 0, 1, 1, 1], [0], [0]>} : vector<2x8x16xbf16>, vector<2x8x16xbf16>, vector<2x8x8xf32> -> vector<2x8x8xf32>
    "tpu.trace_stop"() : () -> ()
    %cst_40 = arith.constant 2.500000e-01 : f32
    %132 = vector.broadcast %cst_40 : f32 to vector<2x8x8xf32>
    %133 = arith.mulf %131, %132 : vector<2x8x8xf32>
    %cst_41 = arith.constant dense<0xFF800000> : vector<2x8xf32>
    %134 = vector.multi_reduction <maximumf>, %133, %cst_41 [2] : vector<2x8x8xf32> to vector<2x8xf32>
    %135 = vector.shape_cast %134 : vector<2x8xf32> to vector<2x8x1xf32>
    %136 = vector.broadcast %135 : vector<2x8x1xf32> to vector<2x8x8xf32>
    %137 = arith.subf %133, %136 : vector<2x8x8xf32>
    %138 = math.exp %137 : vector<2x8x8xf32>
    %cst_42 = arith.constant dense<0.000000e+00> : vector<2x8xf32>
    %139 = vector.multi_reduction <add>, %138, %cst_42 [2] : vector<2x8x8xf32> to vector<2x8xf32>
    %140 = vector.shape_cast %139 : vector<2x8xf32> to vector<2x8x1xf32>
    %141 = tpu.reciprocal %140 {approx = true} : vector<2x8x1xf32> -> vector<2x8x1xf32>
    %142 = vector.broadcast %141 : vector<2x8x1xf32> to vector<2x8x8xf32>
    %143 = arith.mulf %138, %142 : vector<2x8x8xf32>
    %144 = arith.truncf %143 : vector<2x8x8xf32> to vector<2x8x8xbf16>
    "tpu.trace_start"() <{level = 10 : i32, message = "bqk,bkd->bqd"}> : () -> ()
    %cst_43 = arith.constant dense<0.000000e+00> : vector<2x8x16xf32>
    %145 = tpu.matmul %144, %130, %cst_43 {dimension_numbers = #tpu.dot_dimension_numbers<[2], [1], [1], [2], [0, 0, 0, 1, 1, 2], [0], [0]>} : vector<2x8x8xbf16>, vector<2x8x16xbf16>, vector<2x8x16xf32> -> vector<2x8x16xf32>
    "tpu.trace_stop"() : () -> ()
    %146 = vector.extract_strided_slice %36 {offsets = [0, 0, 80], sizes = [2, 8, 16], strides = [1, 1, 1]} : vector<2x8x128xf32> to vector<2x8x16xf32>
    %147 = arith.truncf %146 : vector<2x8x16xf32> to vector<2x8x16xbf16>
    %148 = vector.extract_strided_slice %38 {offsets = [0, 0, 80], sizes = [2, 8, 16], strides = [1, 1, 1]} : vector<2x8x128xf32> to vector<2x8x16xf32>
    %149 = arith.truncf %148 : vector<2x8x16xf32> to vector<2x8x16xbf16>
    %150 = vector.extract_strided_slice %40 {offsets = [0, 0, 80], sizes = [2, 8, 16], strides = [1, 1, 1]} : vector<2x8x128xf32> to vector<2x8x16xf32>
    %151 = arith.truncf %150 : vector<2x8x16xf32> to vector<2x8x16xbf16>
    "tpu.trace_start"() <{level = 10 : i32, message = "bqd,bkd->bqk"}> : () -> ()
    %cst_44 = arith.constant dense<0.000000e+00> : vector<2x8x8xf32>
    %152 = tpu.matmul %147, %149, %cst_44 {dimension_numbers = #tpu.dot_dimension_numbers<[2], [2], [1], [1], [0, 0, 0, 1, 1, 1], [0], [0]>} : vector<2x8x16xbf16>, vector<2x8x16xbf16>, vector<2x8x8xf32> -> vector<2x8x8xf32>
    "tpu.trace_stop"() : () -> ()
    %cst_45 = arith.constant 2.500000e-01 : f32
    %153 = vector.broadcast %cst_45 : f32 to vector<2x8x8xf32>
    %154 = arith.mulf %152, %153 : vector<2x8x8xf32>
    %cst_46 = arith.constant dense<0xFF800000> : vector<2x8xf32>
    %155 = vector.multi_reduction <maximumf>, %154, %cst_46 [2] : vector<2x8x8xf32> to vector<2x8xf32>
    %156 = vector.shape_cast %155 : vector<2x8xf32> to vector<2x8x1xf32>
    %157 = vector.broadcast %156 : vector<2x8x1xf32> to vector<2x8x8xf32>
    %158 = arith.subf %154, %157 : vector<2x8x8xf32>
    %159 = math.exp %158 : vector<2x8x8xf32>
    %cst_47 = arith.constant dense<0.000000e+00> : vector<2x8xf32>
    %160 = vector.multi_reduction <add>, %159, %cst_47 [2] : vector<2x8x8xf32> to vector<2x8xf32>
    %161 = vector.shape_cast %160 : vector<2x8xf32> to vector<2x8x1xf32>
    %162 = tpu.reciprocal %161 {approx = true} : vector<2x8x1xf32> -> vector<2x8x1xf32>
    %163 = vector.broadcast %162 : vector<2x8x1xf32> to vector<2x8x8xf32>
    %164 = arith.mulf %159, %163 : vector<2x8x8xf32>
    %165 = arith.truncf %164 : vector<2x8x8xf32> to vector<2x8x8xbf16>
    "tpu.trace_start"() <{level = 10 : i32, message = "bqk,bkd->bqd"}> : () -> ()
    %cst_48 = arith.constant dense<0.000000e+00> : vector<2x8x16xf32>
    %166 = tpu.matmul %165, %151, %cst_48 {dimension_numbers = #tpu.dot_dimension_numbers<[2], [1], [1], [2], [0, 0, 0, 1, 1, 2], [0], [0]>} : vector<2x8x8xbf16>, vector<2x8x16xbf16>, vector<2x8x16xf32> -> vector<2x8x16xf32>
    "tpu.trace_stop"() : () -> ()
    %167 = vector.extract_strided_slice %36 {offsets = [0, 0, 96], sizes = [2, 8, 16], strides = [1, 1, 1]} : vector<2x8x128xf32> to vector<2x8x16xf32>
    %168 = arith.truncf %167 : vector<2x8x16xf32> to vector<2x8x16xbf16>
    %169 = vector.extract_strided_slice %38 {offsets = [0, 0, 96], sizes = [2, 8, 16], strides = [1, 1, 1]} : vector<2x8x128xf32> to vector<2x8x16xf32>
    %170 = arith.truncf %169 : vector<2x8x16xf32> to vector<2x8x16xbf16>
    %171 = vector.extract_strided_slice %40 {offsets = [0, 0, 96], sizes = [2, 8, 16], strides = [1, 1, 1]} : vector<2x8x128xf32> to vector<2x8x16xf32>
    %172 = arith.truncf %171 : vector<2x8x16xf32> to vector<2x8x16xbf16>
    "tpu.trace_start"() <{level = 10 : i32, message = "bqd,bkd->bqk"}> : () -> ()
    %cst_49 = arith.constant dense<0.000000e+00> : vector<2x8x8xf32>
    %173 = tpu.matmul %168, %170, %cst_49 {dimension_numbers = #tpu.dot_dimension_numbers<[2], [2], [1], [1], [0, 0, 0, 1, 1, 1], [0], [0]>} : vector<2x8x16xbf16>, vector<2x8x16xbf16>, vector<2x8x8xf32> -> vector<2x8x8xf32>
    "tpu.trace_stop"() : () -> ()
    %cst_50 = arith.constant 2.500000e-01 : f32
    %174 = vector.broadcast %cst_50 : f32 to vector<2x8x8xf32>
    %175 = arith.mulf %173, %174 : vector<2x8x8xf32>
    %cst_51 = arith.constant dense<0xFF800000> : vector<2x8xf32>
    %176 = vector.multi_reduction <maximumf>, %175, %cst_51 [2] : vector<2x8x8xf32> to vector<2x8xf32>
    %177 = vector.shape_cast %176 : vector<2x8xf32> to vector<2x8x1xf32>
    %178 = vector.broadcast %177 : vector<2x8x1xf32> to vector<2x8x8xf32>
    %179 = arith.subf %175, %178 : vector<2x8x8xf32>
    %180 = math.exp %179 : vector<2x8x8xf32>
    %cst_52 = arith.constant dense<0.000000e+00> : vector<2x8xf32>
    %181 = vector.multi_reduction <add>, %180, %cst_52 [2] : vector<2x8x8xf32> to vector<2x8xf32>
    %182 = vector.shape_cast %181 : vector<2x8xf32> to vector<2x8x1xf32>
    %183 = tpu.reciprocal %182 {approx = true} : vector<2x8x1xf32> -> vector<2x8x1xf32>
    %184 = vector.broadcast %183 : vector<2x8x1xf32> to vector<2x8x8xf32>
    %185 = arith.mulf %180, %184 : vector<2x8x8xf32>
    %186 = arith.truncf %185 : vector<2x8x8xf32> to vector<2x8x8xbf16>
    "tpu.trace_start"() <{level = 10 : i32, message = "bqk,bkd->bqd"}> : () -> ()
    %cst_53 = arith.constant dense<0.000000e+00> : vector<2x8x16xf32>
    %187 = tpu.matmul %186, %172, %cst_53 {dimension_numbers = #tpu.dot_dimension_numbers<[2], [1], [1], [2], [0, 0, 0, 1, 1, 2], [0], [0]>} : vector<2x8x8xbf16>, vector<2x8x16xbf16>, vector<2x8x16xf32> -> vector<2x8x16xf32>
    "tpu.trace_stop"() : () -> ()
    %188 = vector.extract_strided_slice %36 {offsets = [0, 0, 112], sizes = [2, 8, 16], strides = [1, 1, 1]} : vector<2x8x128xf32> to vector<2x8x16xf32>
    %189 = arith.truncf %188 : vector<2x8x16xf32> to vector<2x8x16xbf16>
    %190 = vector.extract_strided_slice %38 {offsets = [0, 0, 112], sizes = [2, 8, 16], strides = [1, 1, 1]} : vector<2x8x128xf32> to vector<2x8x16xf32>
    %191 = arith.truncf %190 : vector<2x8x16xf32> to vector<2x8x16xbf16>
    %192 = vector.extract_strided_slice %40 {offsets = [0, 0, 112], sizes = [2, 8, 16], strides = [1, 1, 1]} : vector<2x8x128xf32> to vector<2x8x16xf32>
    %193 = arith.truncf %192 : vector<2x8x16xf32> to vector<2x8x16xbf16>
    "tpu.trace_start"() <{level = 10 : i32, message = "bqd,bkd->bqk"}> : () -> ()
    %cst_54 = arith.constant dense<0.000000e+00> : vector<2x8x8xf32>
    %194 = tpu.matmul %189, %191, %cst_54 {dimension_numbers = #tpu.dot_dimension_numbers<[2], [2], [1], [1], [0, 0, 0, 1, 1, 1], [0], [0]>} : vector<2x8x16xbf16>, vector<2x8x16xbf16>, vector<2x8x8xf32> -> vector<2x8x8xf32>
    "tpu.trace_stop"() : () -> ()
    %cst_55 = arith.constant 2.500000e-01 : f32
    %195 = vector.broadcast %cst_55 : f32 to vector<2x8x8xf32>
    %196 = arith.mulf %194, %195 : vector<2x8x8xf32>
    %cst_56 = arith.constant dense<0xFF800000> : vector<2x8xf32>
    %197 = vector.multi_reduction <maximumf>, %196, %cst_56 [2] : vector<2x8x8xf32> to vector<2x8xf32>
    %198 = vector.shape_cast %197 : vector<2x8xf32> to vector<2x8x1xf32>
    %199 = vector.broadcast %198 : vector<2x8x1xf32> to vector<2x8x8xf32>
    %200 = arith.subf %196, %199 : vector<2x8x8xf32>
    %201 = math.exp %200 : vector<2x8x8xf32>
    %cst_57 = arith.constant dense<0.000000e+00> : vector<2x8xf32>
    %202 = vector.multi_reduction <add>, %201, %cst_57 [2] : vector<2x8x8xf32> to vector<2x8xf32>
    %203 = vector.shape_cast %202 : vector<2x8xf32> to vector<2x8x1xf32>
    %204 = tpu.reciprocal %203 {approx = true} : vector<2x8x1xf32> -> vector<2x8x1xf32>
    %205 = vector.broadcast %204 : vector<2x8x1xf32> to vector<2x8x8xf32>
    %206 = arith.mulf %201, %205 : vector<2x8x8xf32>
    %207 = arith.truncf %206 : vector<2x8x8xf32> to vector<2x8x8xbf16>
    "tpu.trace_start"() <{level = 10 : i32, message = "bqk,bkd->bqd"}> : () -> ()
    %cst_58 = arith.constant dense<0.000000e+00> : vector<2x8x16xf32>
    %208 = tpu.matmul %207, %193, %cst_58 {dimension_numbers = #tpu.dot_dimension_numbers<[2], [1], [1], [2], [0, 0, 0, 1, 1, 2], [0], [0]>} : vector<2x8x8xbf16>, vector<2x8x16xbf16>, vector<2x8x16xf32> -> vector<2x8x16xf32>
    "tpu.trace_stop"() : () -> ()
    %209 = tpu.concatenate %61, %82, %103, %124, %145, %166, %187, %208 in 2 : vector<2x8x16xf32>, vector<2x8x16xf32>, vector<2x8x16xf32>, vector<2x8x16xf32>, vector<2x8x16xf32>, vector<2x8x16xf32>, vector<2x8x16xf32>, vector<2x8x16xf32> -> vector<2x8x128xf32>
    %210 = vector.shape_cast %209 : vector<2x8x128xf32> to vector<16x128xf32>
    %211 = arith.truncf %210 : vector<16x128xf32> to vector<16x128xbf16>
    %cst_59 = arith.constant dense<0.000000e+00> : vector<16x128xf32>
    %212 = tpu.matmul %211, %29, %cst_59 {dimension_numbers = #tpu.dot_dimension_numbers<[1], [0], [0], [1], [0, 0, 1, 1], [], []>} : vector<16x128xbf16>, vector<128x128xbf16>, vector<16x128xf32> -> vector<16x128xf32>
    %213 = vector.broadcast %30 : vector<1x128xf32> to vector<16x128xf32>
    %214 = arith.addf %212, %213 : vector<16x128xf32>
    %215 = arith.addf %26, %214 : vector<16x128xf32>
    %c0_60 = arith.constant 0 : index
    %c0_61 = arith.constant 0 : index
    %216 = vector.load %arg8[%c0_60, %c0_61] : memref<1x128xf32, #tpu.memory_space<vmem>>, vector<1x128xf32>
    %c0_62 = arith.constant 0 : index
    %c0_63 = arith.constant 0 : index
    %217 = vector.load %arg9[%c0_62, %c0_63] : memref<1x128xf32, #tpu.memory_space<vmem>>, vector<1x128xf32>
    %cst_64 = arith.constant dense<0.000000e+00> : vector<16xf32>
    %218 = vector.multi_reduction <add>, %215, %cst_64 [1] : vector<16x128xf32> to vector<16xf32>
    %219 = vector.shape_cast %218 : vector<16xf32> to vector<16x1xf32>
    %cst_65 = arith.constant 1.280000e+02 : f32
    %220 = vector.broadcast %cst_65 : f32 to vector<16x1xf32>
    %221 = arith.divf %219, %220 : vector<16x1xf32>
    %222 = vector.broadcast %221 : vector<16x1xf32> to vector<16x128xf32>
    %223 = arith.subf %215, %222 : vector<16x128xf32>
    %224 = arith.mulf %223, %223 : vector<16x128xf32>
    %cst_66 = arith.constant dense<0.000000e+00> : vector<16xf32>
    %225 = vector.multi_reduction <add>, %224, %cst_66 [1] : vector<16x128xf32> to vector<16xf32>
    %226 = vector.shape_cast %225 : vector<16xf32> to vector<16x1xf32>
    %cst_67 = arith.constant 1.280000e+02 : f32
    %227 = vector.broadcast %cst_67 : f32 to vector<16x1xf32>
    %228 = arith.divf %226, %227 : vector<16x1xf32>
    %229 = vector.broadcast %221 : vector<16x1xf32> to vector<16x128xf32>
    %230 = arith.subf %215, %229 : vector<16x128xf32>
    %cst_68 = arith.constant 9.99999974E-6 : f32
    %231 = vector.broadcast %cst_68 : f32 to vector<16x1xf32>
    %232 = arith.addf %228, %231 : vector<16x1xf32>
    %233 = math.rsqrt %232 : vector<16x1xf32>
    %234 = vector.broadcast %233 : vector<16x1xf32> to vector<16x128xf32>
    %235 = arith.mulf %230, %234 : vector<16x128xf32>
    %236 = vector.broadcast %216 : vector<1x128xf32> to vector<16x128xf32>
    %237 = arith.mulf %235, %236 : vector<16x128xf32>
    %238 = vector.broadcast %217 : vector<1x128xf32> to vector<16x128xf32>
    %239 = arith.addf %237, %238 : vector<16x128xf32>
    %c0_69 = arith.constant 0 : index
    %c0_70 = arith.constant 0 : index
    %240 = vector.load %arg10[%c0_69, %c0_70] : memref<128x256xbf16, #tpu.memory_space<vmem>>, vector<128x256xbf16>
    %241 = arith.truncf %239 : vector<16x128xf32> to vector<16x128xbf16>
    %cst_71 = arith.constant dense<0.000000e+00> : vector<16x256xf32>
    %242 = tpu.matmul %241, %240, %cst_71 {dimension_numbers = #tpu.dot_dimension_numbers<[1], [0], [0], [1], [0, 0, 1, 1], [], []>} : vector<16x128xbf16>, vector<128x256xbf16>, vector<16x256xf32> -> vector<16x256xf32>
    %c0_72 = arith.constant 0 : index
    %c0_73 = arith.constant 0 : index
    %243 = vector.load %arg11[%c0_72, %c0_73] : memref<1x256xf32, #tpu.memory_space<vmem>>, vector<1x256xf32>
    %244 = vector.broadcast %243 : vector<1x256xf32> to vector<16x256xf32>
    %245 = arith.addf %242, %244 : vector<16x256xf32>
    %246 = arith.mulf %245, %245 : vector<16x256xf32>
    %247 = arith.mulf %245, %246 : vector<16x256xf32>
    %cst_74 = arith.constant 4.471500e-02 : f32
    %248 = vector.broadcast %cst_74 : f32 to vector<16x256xf32>
    %249 = arith.mulf %248, %247 : vector<16x256xf32>
    %250 = arith.addf %245, %249 : vector<16x256xf32>
    %cst_75 = arith.constant 0.797884583 : f32
    %251 = vector.broadcast %cst_75 : f32 to vector<16x256xf32>
    %252 = arith.mulf %251, %250 : vector<16x256xf32>
    %253 = math.tanh %252 : vector<16x256xf32>
    %cst_76 = arith.constant 1.000000e+00 : f32
    %254 = vector.broadcast %cst_76 : f32 to vector<16x256xf32>
    %255 = arith.addf %254, %253 : vector<16x256xf32>
    %cst_77 = arith.constant 5.000000e-01 : f32
    %256 = vector.broadcast %cst_77 : f32 to vector<16x256xf32>
    %257 = arith.mulf %256, %255 : vector<16x256xf32>
    %258 = arith.mulf %245, %257 : vector<16x256xf32>
    %c0_78 = arith.constant 0 : index
    %c0_79 = arith.constant 0 : index
    %259 = vector.load %arg12[%c0_78, %c0_79] : memref<256x128xbf16, #tpu.memory_space<vmem>>, vector<256x128xbf16>
    %260 = arith.truncf %258 : vector<16x256xf32> to vector<16x256xbf16>
    %cst_80 = arith.constant dense<0.000000e+00> : vector<16x128xf32>
    %261 = tpu.matmul %260, %259, %cst_80 {dimension_numbers = #tpu.dot_dimension_numbers<[1], [0], [0], [1], [0, 0, 1, 1], [], []>} : vector<16x256xbf16>, vector<256x128xbf16>, vector<16x128xf32> -> vector<16x128xf32>
    %c0_81 = arith.constant 0 : index
    %c0_82 = arith.constant 0 : index
    %262 = vector.load %arg13[%c0_81, %c0_82] : memref<1x128xf32, #tpu.memory_space<vmem>>, vector<1x128xf32>
    %263 = vector.broadcast %262 : vector<1x128xf32> to vector<16x128xf32>
    %264 = arith.addf %261, %263 : vector<16x128xf32>
    %265 = arith.addf %239, %264 : vector<16x128xf32>
    %c0_83 = arith.constant 0 : index
    %c0_84 = arith.constant 0 : index
    %266 = vector.load %arg14[%c0_83, %c0_84] : memref<1x128xf32, #tpu.memory_space<vmem>>, vector<1x128xf32>
    %c0_85 = arith.constant 0 : index
    %c0_86 = arith.constant 0 : index
    %267 = vector.load %arg15[%c0_85, %c0_86] : memref<1x128xf32, #tpu.memory_space<vmem>>, vector<1x128xf32>
    %cst_87 = arith.constant dense<0.000000e+00> : vector<16xf32>
    %268 = vector.multi_reduction <add>, %265, %cst_87 [1] : vector<16x128xf32> to vector<16xf32>
    %269 = vector.shape_cast %268 : vector<16xf32> to vector<16x1xf32>
    %cst_88 = arith.constant 1.280000e+02 : f32
    %270 = vector.broadcast %cst_88 : f32 to vector<16x1xf32>
    %271 = arith.divf %269, %270 : vector<16x1xf32>
    %272 = vector.broadcast %271 : vector<16x1xf32> to vector<16x128xf32>
    %273 = arith.subf %265, %272 : vector<16x128xf32>
    %274 = arith.mulf %273, %273 : vector<16x128xf32>
    %cst_89 = arith.constant dense<0.000000e+00> : vector<16xf32>
    %275 = vector.multi_reduction <add>, %274, %cst_89 [1] : vector<16x128xf32> to vector<16xf32>
    %276 = vector.shape_cast %275 : vector<16xf32> to vector<16x1xf32>
    %cst_90 = arith.constant 1.280000e+02 : f32
    %277 = vector.broadcast %cst_90 : f32 to vector<16x1xf32>
    %278 = arith.divf %276, %277 : vector<16x1xf32>
    %279 = vector.broadcast %271 : vector<16x1xf32> to vector<16x128xf32>
    %280 = arith.subf %265, %279 : vector<16x128xf32>
    %cst_91 = arith.constant 9.99999974E-6 : f32
    %281 = vector.broadcast %cst_91 : f32 to vector<16x1xf32>
    %282 = arith.addf %278, %281 : vector<16x1xf32>
    %283 = math.rsqrt %282 : vector<16x1xf32>
    %284 = vector.broadcast %283 : vector<16x1xf32> to vector<16x128xf32>
    %285 = arith.mulf %280, %284 : vector<16x128xf32>
    %286 = vector.broadcast %266 : vector<1x128xf32> to vector<16x128xf32>
    %287 = arith.mulf %285, %286 : vector<16x128xf32>
    %288 = vector.broadcast %267 : vector<1x128xf32> to vector<16x128xf32>
    %289 = arith.addf %287, %288 : vector<16x128xf32>
    %290 = vector.shape_cast %289 : vector<16x128xf32> to vector<2x8x128xf32>
    %291 = arith.truncf %290 : vector<2x8x128xf32> to vector<2x8x128xbf16>
    %c0_92 = arith.constant 0 : index
    %c0_93 = arith.constant 0 : index
    %c0_94 = arith.constant 0 : index
    %292 = vector.load %arg16[%c0_92, %c0_93, %c0_94] : memref<2x8x128xbf16, #tpu.memory_space<vmem>>, vector<2x8x128xbf16>
    tpu.vector_store %arg16[%c0_92, %c0_93, %c0_94], %291 {strides = array<i32>} : memref<2x8x128xbf16, #tpu.memory_space<vmem>>, vector<2x8x128xbf16>,
    return
  }
  func.func @transform_0(%arg0: i32) -> (i32, i32, i32) {
    %c0_i32 = arith.constant 0 : i32
    %c0_i32_0 = arith.constant 0 : i32
    %c0_i32_1 = arith.constant 0 : i32
    return %arg0, %c0_i32, %c0_i32_0 : i32, i32, i32
  }
  func.func @transform_1(%arg0: i32) -> (i32, i32) {
    %c0_i32 = arith.constant 0 : i32
    %c0_i32_0 = arith.constant 0 : i32
    %c0_i32_1 = arith.constant 0 : i32
    return %c0_i32, %c0_i32_0 : i32, i32
  }
  func.func @transform_2(%arg0: i32) -> (i32, i32) {
    %c0_i32 = arith.constant 0 : i32
    %c0_i32_0 = arith.constant 0 : i32
    %c0_i32_1 = arith.constant 0 : i32
    return %c0_i32, %c0_i32_0 : i32, i32
  }
  func.func @transform_3(%arg0: i32) -> (i32, i32) {
    %c0_i32 = arith.constant 0 : i32
    %c0_i32_0 = arith.constant 0 : i32
    %c0_i32_1 = arith.constant 0 : i32
    return %c0_i32, %c0_i32_0 : i32, i32
  }
  func.func @transform_4(%arg0: i32) -> (i32, i32) {
    %c0_i32 = arith.constant 0 : i32
    %c0_i32_0 = arith.constant 0 : i32
    %c0_i32_1 = arith.constant 0 : i32
    return %c0_i32, %c0_i32_0 : i32, i32
  }
  func.func @transform_5(%arg0: i32) -> (i32, i32) {
    %c0_i32 = arith.constant 0 : i32
    %c0_i32_0 = arith.constant 0 : i32
    %c0_i32_1 = arith.constant 0 : i32
    return %c0_i32, %c0_i32_0 : i32, i32
  }
  func.func @transform_6(%arg0: i32) -> (i32, i32) {
    %c0_i32 = arith.constant 0 : i32
    %c0_i32_0 = arith.constant 0 : i32
    %c0_i32_1 = arith.constant 0 : i32
    return %c0_i32, %c0_i32_0 : i32, i32
  }
  func.func @transform_7(%arg0: i32) -> (i32, i32) {
    %c0_i32 = arith.constant 0 : i32
    %c0_i32_0 = arith.constant 0 : i32
    %c0_i32_1 = arith.constant 0 : i32
    return %c0_i32, %c0_i32_0 : i32, i32
  }
  func.func @transform_8(%arg0: i32) -> (i32, i32) {
    %c0_i32 = arith.constant 0 : i32
    %c0_i32_0 = arith.constant 0 : i32
    %c0_i32_1 = arith.constant 0 : i32
    return %c0_i32, %c0_i32_0 : i32, i32
  }
  func.func @transform_9(%arg0: i32) -> (i32, i32) {
    %c0_i32 = arith.constant 0 : i32
    %c0_i32_0 = arith.constant 0 : i32
    %c0_i32_1 = arith.constant 0 : i32
    return %c0_i32, %c0_i32_0 : i32, i32
  }
  func.func @transform_10(%arg0: i32) -> (i32, i32) {
    %c0_i32 = arith.constant 0 : i32
    %c0_i32_0 = arith.constant 0 : i32
    %c0_i32_1 = arith.constant 0 : i32
    return %c0_i32, %c0_i32_0 : i32, i32
  }
  func.func @transform_11(%arg0: i32) -> (i32, i32) {
    %c0_i32 = arith.constant 0 : i32
    %c0_i32_0 = arith.constant 0 : i32
    %c0_i32_1 = arith.constant 0 : i32
    return %c0_i32, %c0_i32_0 : i32, i32
  }
  func.func @transform_12(%arg0: i32) -> (i32, i32) {
    %c0_i32 = arith.constant 0 : i32
    %c0_i32_0 = arith.constant 0 : i32
    %c0_i32_1 = arith.constant 0 : i32
    return %c0_i32, %c0_i32_0 : i32, i32
  }
  func.func @transform_13(%arg0: i32) -> (i32, i32) {
    %c0_i32 = arith.constant 0 : i32
    %c0_i32_0 = arith.constant 0 : i32
    %c0_i32_1 = arith.constant 0 : i32
    return %c0_i32, %c0_i32_0 : i32, i32
  }
  func.func @transform_14(%arg0: i32) -> (i32, i32) {
    %c0_i32 = arith.constant 0 : i32
    %c0_i32_0 = arith.constant 0 : i32
    %c0_i32_1 = arith.constant 0 : i32
    return %c0_i32, %c0_i32_0 : i32, i32
  }
  func.func @transform_15(%arg0: i32) -> (i32, i32, i32) {
    %c0_i32 = arith.constant 0 : i32
    %c0_i32_0 = arith.constant 0 : i32
    %c0_i32_1 = arith.constant 0 : i32
    return %arg0, %c0_i32, %c0_i32_0 : i32, i32, i32
  }
}

module attributes {stable_mosaic.version = 11 : i64} {
  func.func @_proj_logsoftmax_kernel(%arg0: i32, %arg1: memref<16x128xf32, #tpu.memory_space<vmem>>, %arg2: memref<128x256xbf16, #tpu.memory_space<vmem>>, %arg3: memref<1x256xf32, #tpu.memory_space<vmem>>, %arg4: memref<16x256xf32, #tpu.memory_space<vmem>>) attributes {dimension_semantics = [#tpu.dimension_semantics<parallel>], iteration_bounds = array<i64: 2>, scalar_prefetch = 0 : i64, scratch_operands = 0 : i64, tpu.core_type = #tpu.core_type<tc>, window_params = [{transform_indices = @transform_0, window_bounds = array<i64: 16, 128>}, {pipeline_mode = #tpu.pipeline_mode<synchronous>, transform_indices = @transform_1, window_bounds = array<i64: 128, 256>}, {pipeline_mode = #tpu.pipeline_mode<synchronous>, transform_indices = @transform_2, window_bounds = array<i64: 1, 256>}, {transform_indices = @transform_3, window_bounds = array<i64: 16, 256>}]} {
    %c0 = arith.constant 0 : index
    %c0_0 = arith.constant 0 : index
    %0 = vector.load %arg1[%c0, %c0_0] : memref<16x128xf32, #tpu.memory_space<vmem>>, vector<16x128xf32>
    %c0_1 = arith.constant 0 : index
    %c0_2 = arith.constant 0 : index
    %1 = vector.load %arg2[%c0_1, %c0_2] : memref<128x256xbf16, #tpu.memory_space<vmem>>, vector<128x256xbf16>
    %2 = arith.truncf %0 : vector<16x128xf32> to vector<16x128xbf16>
    %cst = arith.constant dense<0.000000e+00> : vector<16x256xf32>
    %3 = tpu.matmul %2, %1, %cst {dimension_numbers = #tpu.dot_dimension_numbers<[1], [0], [0], [1], [0, 0, 1, 1], [], []>} : vector<16x128xbf16>, vector<128x256xbf16>, vector<16x256xf32> -> vector<16x256xf32>
    %c0_3 = arith.constant 0 : index
    %c0_4 = arith.constant 0 : index
    %4 = vector.load %arg3[%c0_3, %c0_4] : memref<1x256xf32, #tpu.memory_space<vmem>>, vector<1x256xf32>
    %5 = vector.broadcast %4 : vector<1x256xf32> to vector<16x256xf32>
    %6 = arith.addf %3, %5 : vector<16x256xf32>
    %cst_5 = arith.constant dense<0xFF800000> : vector<16xf32>
    %7 = vector.multi_reduction <maximumf>, %6, %cst_5 [1] : vector<16x256xf32> to vector<16xf32>
    %8 = vector.shape_cast %7 : vector<16xf32> to vector<16x1xf32>
    %9 = vector.broadcast %8 : vector<16x1xf32> to vector<16x256xf32>
    %10 = arith.subf %6, %9 : vector<16x256xf32>
    %11 = math.exp %10 : vector<16x256xf32>
    %cst_6 = arith.constant dense<0.000000e+00> : vector<16xf32>
    %12 = vector.multi_reduction <add>, %11, %cst_6 [1] : vector<16x256xf32> to vector<16xf32>
    %13 = vector.shape_cast %12 : vector<16xf32> to vector<16x1xf32>
    %14 = math.log %13 : vector<16x1xf32>
    %15 = vector.broadcast %14 : vector<16x1xf32> to vector<16x256xf32>
    %16 = arith.subf %10, %15 : vector<16x256xf32>
    %c0_7 = arith.constant 0 : index
    %c0_8 = arith.constant 0 : index
    %17 = vector.load %arg4[%c0_7, %c0_8] : memref<16x256xf32, #tpu.memory_space<vmem>>, vector<16x256xf32>
    tpu.vector_store %arg4[%c0_7, %c0_8], %16 {strides = array<i32>} : memref<16x256xf32, #tpu.memory_space<vmem>>, vector<16x256xf32>,
    return
  }
  func.func @transform_0(%arg0: i32) -> (i32, i32) {
    %c0_i32 = arith.constant 0 : i32
    %c0_i32_0 = arith.constant 0 : i32
    return %arg0, %c0_i32 : i32, i32
  }
  func.func @transform_1(%arg0: i32) -> (i32, i32) {
    %c0_i32 = arith.constant 0 : i32
    %c0_i32_0 = arith.constant 0 : i32
    %c0_i32_1 = arith.constant 0 : i32
    return %c0_i32, %c0_i32_0 : i32, i32
  }
  func.func @transform_2(%arg0: i32) -> (i32, i32) {
    %c0_i32 = arith.constant 0 : i32
    %c0_i32_0 = arith.constant 0 : i32
    %c0_i32_1 = arith.constant 0 : i32
    return %c0_i32, %c0_i32_0 : i32, i32
  }
  func.func @transform_3(%arg0: i32) -> (i32, i32) {
    %c0_i32 = arith.constant 0 : i32
    %c0_i32_0 = arith.constant 0 : i32
    return %arg0, %c0_i32 : i32, i32
  }
}

module attributes {stable_mosaic.version = 11 : i64} {
  func.func @_layer_kernel(%arg0: i32, %arg1: memref<2x8x128xbf16, #tpu.memory_space<vmem>>, %arg2: memref<2x8x128xf32, #tpu.memory_space<vmem>>, %arg3: memref<2x1x8xf32, #tpu.memory_space<vmem>>, %arg4: memref<128x128xbf16, #tpu.memory_space<vmem>>, %arg5: memref<1x128xf32, #tpu.memory_space<vmem>>, %arg6: memref<128x384xbf16, #tpu.memory_space<vmem>>, %arg7: memref<1x384xf32, #tpu.memory_space<vmem>>, %arg8: memref<128x128xbf16, #tpu.memory_space<vmem>>, %arg9: memref<1x128xf32, #tpu.memory_space<vmem>>, %arg10: memref<1x128xf32, #tpu.memory_space<vmem>>, %arg11: memref<1x128xf32, #tpu.memory_space<vmem>>, %arg12: memref<1x128xf32, #tpu.memory_space<vmem>>, %arg13: memref<1x128xf32, #tpu.memory_space<vmem>>, %arg14: memref<128x128xbf16, #tpu.memory_space<vmem>>, %arg15: memref<1x128xf32, #tpu.memory_space<vmem>>, %arg16: memref<128x128xbf16, #tpu.memory_space<vmem>>, %arg17: memref<1x128xf32, #tpu.memory_space<vmem>>, %arg18: memref<1x128xf32, #tpu.memory_space<vmem>>, %arg19: memref<1x128xf32, #tpu.memory_space<vmem>>, %arg20: memref<2x8x128xf32, #tpu.memory_space<vmem>>) attributes {dimension_semantics = [#tpu.dimension_semantics<parallel>], iteration_bounds = array<i64: 2>, scalar_prefetch = 0 : i64, scratch_operands = 0 : i64, tpu.core_type = #tpu.core_type<tc>, window_params = [{transform_indices = @transform_0, window_bounds = array<i64: 2, 8, 128>}, {transform_indices = @transform_1, window_bounds = array<i64: 2, 8, 128>}, {transform_indices = @transform_2, window_bounds = array<i64: 2, 1, 8>}, {pipeline_mode = #tpu.pipeline_mode<synchronous>, transform_indices = @transform_3, window_bounds = array<i64: 128, 128>}, {pipeline_mode = #tpu.pipeline_mode<synchronous>, transform_indices = @transform_4, window_bounds = array<i64: 1, 128>}, {pipeline_mode = #tpu.pipeline_mode<synchronous>, transform_indices = @transform_5, window_bounds = array<i64: 128, 384>}, {pipeline_mode = #tpu.pipeline_mode<synchronous>, transform_indices = @transform_6, window_bounds = array<i64: 1, 384>}, {pipeline_mode = #tpu.pipeline_mode<synchronous>, transform_indices = @transform_7, window_bounds = array<i64: 128, 128>}, {pipeline_mode = #tpu.pipeline_mode<synchronous>, transform_indices = @transform_8, window_bounds = array<i64: 1, 128>}, {pipeline_mode = #tpu.pipeline_mode<synchronous>, transform_indices = @transform_9, window_bounds = array<i64: 1, 128>}, {pipeline_mode = #tpu.pipeline_mode<synchronous>, transform_indices = @transform_10, window_bounds = array<i64: 1, 128>}, {pipeline_mode = #tpu.pipeline_mode<synchronous>, transform_indices = @transform_11, window_bounds = array<i64: 1, 128>}, {pipeline_mode = #tpu.pipeline_mode<synchronous>, transform_indices = @transform_12, window_bounds = array<i64: 1, 128>}, {pipeline_mode = #tpu.pipeline_mode<synchronous>, transform_indices = @transform_13, window_bounds = array<i64: 128, 128>}, {pipeline_mode = #tpu.pipeline_mode<synchronous>, transform_indices = @transform_14, window_bounds = array<i64: 1, 128>}, {pipeline_mode = #tpu.pipeline_mode<synchronous>, transform_indices = @transform_15, window_bounds = array<i64: 128, 128>}, {pipeline_mode = #tpu.pipeline_mode<synchronous>, transform_indices = @transform_16, window_bounds = array<i64: 1, 128>}, {pipeline_mode = #tpu.pipeline_mode<synchronous>, transform_indices = @transform_17, window_bounds = array<i64: 1, 128>}, {pipeline_mode = #tpu.pipeline_mode<synchronous>, transform_indices = @transform_18, window_bounds = array<i64: 1, 128>}, {transform_indices = @transform_19, window_bounds = array<i64: 2, 8, 128>}]} {
    %c0 = arith.constant 0 : index
    %c0_0 = arith.constant 0 : index
    %c0_1 = arith.constant 0 : index
    %0 = vector.load %arg1[%c0, %c0_0, %c0_1] : memref<2x8x128xbf16, #tpu.memory_space<vmem>>, vector<2x8x128xbf16>
    %1 = arith.extf %0 : vector<2x8x128xbf16> to vector<2x8x128xf32>
    %2 = vector.shape_cast %1 : vector<2x8x128xf32> to vector<16x128xf32>
    %c0_2 = arith.constant 0 : index
    %c0_3 = arith.constant 0 : index
    %c0_4 = arith.constant 0 : index
    %3 = vector.load %arg2[%c0_2, %c0_3, %c0_4] : memref<2x8x128xf32, #tpu.memory_space<vmem>>, vector<2x8x128xf32>
    %4 = vector.shape_cast %3 : vector<2x8x128xf32> to vector<16x128xf32>
    %c0_5 = arith.constant 0 : index
    %c0_6 = arith.constant 0 : index
    %5 = vector.load %arg4[%c0_5, %c0_6] : memref<128x128xbf16, #tpu.memory_space<vmem>>, vector<128x128xbf16>
    %6 = arith.truncf %2 : vector<16x128xf32> to vector<16x128xbf16>
    %cst = arith.constant dense<0.000000e+00> : vector<16x128xf32>
    %7 = tpu.matmul %6, %5, %cst {dimension_numbers = #tpu.dot_dimension_numbers<[1], [0], [0], [1], [0, 0, 1, 1], [], []>} : vector<16x128xbf16>, vector<128x128xbf16>, vector<16x128xf32> -> vector<16x128xf32>
    %c0_7 = arith.constant 0 : index
    %c0_8 = arith.constant 0 : index
    %8 = vector.load %arg5[%c0_7, %c0_8] : memref<1x128xf32, #tpu.memory_space<vmem>>, vector<1x128xf32>
    %9 = vector.broadcast %8 : vector<1x128xf32> to vector<16x128xf32>
    %10 = arith.addf %7, %9 : vector<16x128xf32>
    %11 = arith.addf %10, %4 : vector<16x128xf32>
    %c0_9 = arith.constant 0 : index
    %c0_10 = arith.constant 0 : index
    %c0_11 = arith.constant 0 : index
    %12 = vector.load %arg3[%c0_9, %c0_10, %c0_11] : memref<2x1x8xf32, #tpu.memory_space<vmem>>, vector<2x1x8xf32>
    %13 = tpu.iota {dimensions = array<i32: 0>} : vector<8x8xi32>
    %14 = tpu.iota {dimensions = array<i32: 1>} : vector<8x8xi32>
    %15 = arith.cmpi sgt, %14, %13 : vector<8x8xi32>
    %cst_12 = arith.constant -1.000000e+09 : f32
    %cst_13 = arith.constant 0.000000e+00 : f32
    %16 = vector.broadcast %cst_12 : f32 to vector<8x8xf32>
    %17 = vector.broadcast %cst_13 : f32 to vector<8x8xf32>
    %18 = arith.select %15, %16, %17 : vector<8x8xi1>, vector<8x8xf32>
    %19 = vector.shape_cast %18 : vector<8x8xf32> to vector<1x8x8xf32>
    %20 = vector.broadcast %19 : vector<1x8x8xf32> to vector<2x8x8xf32>
    %21 = vector.broadcast %12 : vector<2x1x8xf32> to vector<2x8x8xf32>
    %22 = arith.addf %20, %21 : vector<2x8x8xf32>
    %cst_14 = arith.constant 0.000000e+00 : f32
    %23 = vector.broadcast %cst_14 : f32 to vector<2x1x8xf32>
    %24 = arith.cmpf oeq, %12, %23 : vector<2x1x8xf32>
    %cst_15 = arith.constant 1.000000e+00 : f32
    %cst_16 = arith.constant 0.000000e+00 : f32
    %25 = vector.broadcast %cst_15 : f32 to vector<2x1x8xf32>
    %26 = vector.broadcast %cst_16 : f32 to vector<2x1x8xf32>
    %27 = arith.select %24, %25, %26 : vector<2x1x8xi1>, vector<2x1x8xf32>
    %28 = arith.cmpi eq, %13, %14 : vector<8x8xi32>
    %cst_17 = arith.constant 1.000000e+00 : f32
    %cst_18 = arith.constant 0.000000e+00 : f32
    %29 = vector.broadcast %cst_17 : f32 to vector<8x8xf32>
    %30 = vector.broadcast %cst_18 : f32 to vector<8x8xf32>
    %31 = arith.select %28, %29, %30 : vector<8x8xi1>, vector<8x8xf32>
    %32 = vector.shape_cast %31 : vector<8x8xf32> to vector<1x8x8xf32>
    %33 = vector.broadcast %32 : vector<1x8x8xf32> to vector<2x8x8xf32>
    %34 = vector.broadcast %27 : vector<2x1x8xf32> to vector<2x8x8xf32>
    %35 = arith.mulf %33, %34 : vector<2x8x8xf32>
    %cst_19 = arith.constant dense<0.000000e+00> : vector<2x8xf32>
    %36 = vector.multi_reduction <add>, %35, %cst_19 [2] : vector<2x8x8xf32> to vector<2x8xf32>
    %37 = vector.shape_cast %36 : vector<2x8xf32> to vector<2x8x1xf32>
    %38 = vector.shape_cast %37 : vector<2x8x1xf32> to vector<16x1xf32>
    %c0_20 = arith.constant 0 : index
    %c0_21 = arith.constant 0 : index
    %39 = vector.load %arg6[%c0_20, %c0_21] : memref<128x384xbf16, #tpu.memory_space<vmem>>, vector<128x384xbf16>
    %c0_22 = arith.constant 0 : index
    %c0_23 = arith.constant 0 : index
    %40 = vector.load %arg7[%c0_22, %c0_23] : memref<1x384xf32, #tpu.memory_space<vmem>>, vector<1x384xf32>
    %c0_24 = arith.constant 0 : index
    %c0_25 = arith.constant 0 : index
    %41 = vector.load %arg8[%c0_24, %c0_25] : memref<128x128xbf16, #tpu.memory_space<vmem>>, vector<128x128xbf16>
    %c0_26 = arith.constant 0 : index
    %c0_27 = arith.constant 0 : index
    %42 = vector.load %arg9[%c0_26, %c0_27] : memref<1x128xf32, #tpu.memory_space<vmem>>, vector<1x128xf32>
    %43 = arith.truncf %11 : vector<16x128xf32> to vector<16x128xbf16>
    %cst_28 = arith.constant dense<0.000000e+00> : vector<16x384xf32>
    %44 = tpu.matmul %43, %39, %cst_28 {dimension_numbers = #tpu.dot_dimension_numbers<[1], [0], [0], [1], [0, 0, 1, 1], [], []>} : vector<16x128xbf16>, vector<128x384xbf16>, vector<16x384xf32> -> vector<16x384xf32>
    %45 = vector.broadcast %40 : vector<1x384xf32> to vector<16x384xf32>
    %46 = arith.addf %44, %45 : vector<16x384xf32>
    %47 = vector.extract_strided_slice %46 {offsets = [0, 0], sizes = [16, 128], strides = [1, 1]} : vector<16x384xf32> to vector<16x128xf32>
    %48 = vector.shape_cast %47 : vector<16x128xf32> to vector<2x8x128xf32>
    %49 = vector.extract_strided_slice %46 {offsets = [0, 128], sizes = [16, 128], strides = [1, 1]} : vector<16x384xf32> to vector<16x128xf32>
    %50 = vector.shape_cast %49 : vector<16x128xf32> to vector<2x8x128xf32>
    %51 = vector.extract_strided_slice %46 {offsets = [0, 256], sizes = [16, 128], strides = [1, 1]} : vector<16x384xf32> to vector<16x128xf32>
    %52 = vector.shape_cast %51 : vector<16x128xf32> to vector<2x8x128xf32>
    %53 = vector.extract_strided_slice %48 {offsets = [0, 0, 0], sizes = [2, 8, 16], strides = [1, 1, 1]} : vector<2x8x128xf32> to vector<2x8x16xf32>
    %54 = arith.truncf %53 : vector<2x8x16xf32> to vector<2x8x16xbf16>
    %55 = vector.extract_strided_slice %50 {offsets = [0, 0, 0], sizes = [2, 8, 16], strides = [1, 1, 1]} : vector<2x8x128xf32> to vector<2x8x16xf32>
    %56 = arith.truncf %55 : vector<2x8x16xf32> to vector<2x8x16xbf16>
    %57 = vector.extract_strided_slice %52 {offsets = [0, 0, 0], sizes = [2, 8, 16], strides = [1, 1, 1]} : vector<2x8x128xf32> to vector<2x8x16xf32>
    %58 = arith.truncf %57 : vector<2x8x16xf32> to vector<2x8x16xbf16>
    "tpu.trace_start"() <{level = 10 : i32, message = "bqd,bkd->bqk"}> : () -> ()
    %cst_29 = arith.constant dense<0.000000e+00> : vector<2x8x8xf32>
    %59 = tpu.matmul %54, %56, %cst_29 {dimension_numbers = #tpu.dot_dimension_numbers<[2], [2], [1], [1], [0, 0, 0, 1, 1, 1], [0], [0]>} : vector<2x8x16xbf16>, vector<2x8x16xbf16>, vector<2x8x8xf32> -> vector<2x8x8xf32>
    "tpu.trace_stop"() : () -> ()
    %cst_30 = arith.constant 2.500000e-01 : f32
    %60 = vector.broadcast %cst_30 : f32 to vector<2x8x8xf32>
    %61 = arith.mulf %59, %60 : vector<2x8x8xf32>
    %62 = arith.addf %61, %22 : vector<2x8x8xf32>
    %cst_31 = arith.constant dense<0xFF800000> : vector<2x8xf32>
    %63 = vector.multi_reduction <maximumf>, %62, %cst_31 [2] : vector<2x8x8xf32> to vector<2x8xf32>
    %64 = vector.shape_cast %63 : vector<2x8xf32> to vector<2x8x1xf32>
    %65 = vector.broadcast %64 : vector<2x8x1xf32> to vector<2x8x8xf32>
    %66 = arith.subf %62, %65 : vector<2x8x8xf32>
    %67 = math.exp %66 : vector<2x8x8xf32>
    %cst_32 = arith.constant dense<0.000000e+00> : vector<2x8xf32>
    %68 = vector.multi_reduction <add>, %67, %cst_32 [2] : vector<2x8x8xf32> to vector<2x8xf32>
    %69 = vector.shape_cast %68 : vector<2x8xf32> to vector<2x8x1xf32>
    %70 = tpu.reciprocal %69 {approx = true} : vector<2x8x1xf32> -> vector<2x8x1xf32>
    %71 = vector.broadcast %70 : vector<2x8x1xf32> to vector<2x8x8xf32>
    %72 = arith.mulf %67, %71 : vector<2x8x8xf32>
    %73 = arith.truncf %72 : vector<2x8x8xf32> to vector<2x8x8xbf16>
    "tpu.trace_start"() <{level = 10 : i32, message = "bqk,bkd->bqd"}> : () -> ()
    %cst_33 = arith.constant dense<0.000000e+00> : vector<2x8x16xf32>
    %74 = tpu.matmul %73, %58, %cst_33 {dimension_numbers = #tpu.dot_dimension_numbers<[2], [1], [1], [2], [0, 0, 0, 1, 1, 2], [0], [0]>} : vector<2x8x8xbf16>, vector<2x8x16xbf16>, vector<2x8x16xf32> -> vector<2x8x16xf32>
    "tpu.trace_stop"() : () -> ()
    %75 = vector.extract_strided_slice %48 {offsets = [0, 0, 16], sizes = [2, 8, 16], strides = [1, 1, 1]} : vector<2x8x128xf32> to vector<2x8x16xf32>
    %76 = arith.truncf %75 : vector<2x8x16xf32> to vector<2x8x16xbf16>
    %77 = vector.extract_strided_slice %50 {offsets = [0, 0, 16], sizes = [2, 8, 16], strides = [1, 1, 1]} : vector<2x8x128xf32> to vector<2x8x16xf32>
    %78 = arith.truncf %77 : vector<2x8x16xf32> to vector<2x8x16xbf16>
    %79 = vector.extract_strided_slice %52 {offsets = [0, 0, 16], sizes = [2, 8, 16], strides = [1, 1, 1]} : vector<2x8x128xf32> to vector<2x8x16xf32>
    %80 = arith.truncf %79 : vector<2x8x16xf32> to vector<2x8x16xbf16>
    "tpu.trace_start"() <{level = 10 : i32, message = "bqd,bkd->bqk"}> : () -> ()
    %cst_34 = arith.constant dense<0.000000e+00> : vector<2x8x8xf32>
    %81 = tpu.matmul %76, %78, %cst_34 {dimension_numbers = #tpu.dot_dimension_numbers<[2], [2], [1], [1], [0, 0, 0, 1, 1, 1], [0], [0]>} : vector<2x8x16xbf16>, vector<2x8x16xbf16>, vector<2x8x8xf32> -> vector<2x8x8xf32>
    "tpu.trace_stop"() : () -> ()
    %cst_35 = arith.constant 2.500000e-01 : f32
    %82 = vector.broadcast %cst_35 : f32 to vector<2x8x8xf32>
    %83 = arith.mulf %81, %82 : vector<2x8x8xf32>
    %84 = arith.addf %83, %22 : vector<2x8x8xf32>
    %cst_36 = arith.constant dense<0xFF800000> : vector<2x8xf32>
    %85 = vector.multi_reduction <maximumf>, %84, %cst_36 [2] : vector<2x8x8xf32> to vector<2x8xf32>
    %86 = vector.shape_cast %85 : vector<2x8xf32> to vector<2x8x1xf32>
    %87 = vector.broadcast %86 : vector<2x8x1xf32> to vector<2x8x8xf32>
    %88 = arith.subf %84, %87 : vector<2x8x8xf32>
    %89 = math.exp %88 : vector<2x8x8xf32>
    %cst_37 = arith.constant dense<0.000000e+00> : vector<2x8xf32>
    %90 = vector.multi_reduction <add>, %89, %cst_37 [2] : vector<2x8x8xf32> to vector<2x8xf32>
    %91 = vector.shape_cast %90 : vector<2x8xf32> to vector<2x8x1xf32>
    %92 = tpu.reciprocal %91 {approx = true} : vector<2x8x1xf32> -> vector<2x8x1xf32>
    %93 = vector.broadcast %92 : vector<2x8x1xf32> to vector<2x8x8xf32>
    %94 = arith.mulf %89, %93 : vector<2x8x8xf32>
    %95 = arith.truncf %94 : vector<2x8x8xf32> to vector<2x8x8xbf16>
    "tpu.trace_start"() <{level = 10 : i32, message = "bqk,bkd->bqd"}> : () -> ()
    %cst_38 = arith.constant dense<0.000000e+00> : vector<2x8x16xf32>
    %96 = tpu.matmul %95, %80, %cst_38 {dimension_numbers = #tpu.dot_dimension_numbers<[2], [1], [1], [2], [0, 0, 0, 1, 1, 2], [0], [0]>} : vector<2x8x8xbf16>, vector<2x8x16xbf16>, vector<2x8x16xf32> -> vector<2x8x16xf32>
    "tpu.trace_stop"() : () -> ()
    %97 = vector.extract_strided_slice %48 {offsets = [0, 0, 32], sizes = [2, 8, 16], strides = [1, 1, 1]} : vector<2x8x128xf32> to vector<2x8x16xf32>
    %98 = arith.truncf %97 : vector<2x8x16xf32> to vector<2x8x16xbf16>
    %99 = vector.extract_strided_slice %50 {offsets = [0, 0, 32], sizes = [2, 8, 16], strides = [1, 1, 1]} : vector<2x8x128xf32> to vector<2x8x16xf32>
    %100 = arith.truncf %99 : vector<2x8x16xf32> to vector<2x8x16xbf16>
    %101 = vector.extract_strided_slice %52 {offsets = [0, 0, 32], sizes = [2, 8, 16], strides = [1, 1, 1]} : vector<2x8x128xf32> to vector<2x8x16xf32>
    %102 = arith.truncf %101 : vector<2x8x16xf32> to vector<2x8x16xbf16>
    "tpu.trace_start"() <{level = 10 : i32, message = "bqd,bkd->bqk"}> : () -> ()
    %cst_39 = arith.constant dense<0.000000e+00> : vector<2x8x8xf32>
    %103 = tpu.matmul %98, %100, %cst_39 {dimension_numbers = #tpu.dot_dimension_numbers<[2], [2], [1], [1], [0, 0, 0, 1, 1, 1], [0], [0]>} : vector<2x8x16xbf16>, vector<2x8x16xbf16>, vector<2x8x8xf32> -> vector<2x8x8xf32>
    "tpu.trace_stop"() : () -> ()
    %cst_40 = arith.constant 2.500000e-01 : f32
    %104 = vector.broadcast %cst_40 : f32 to vector<2x8x8xf32>
    %105 = arith.mulf %103, %104 : vector<2x8x8xf32>
    %106 = arith.addf %105, %22 : vector<2x8x8xf32>
    %cst_41 = arith.constant dense<0xFF800000> : vector<2x8xf32>
    %107 = vector.multi_reduction <maximumf>, %106, %cst_41 [2] : vector<2x8x8xf32> to vector<2x8xf32>
    %108 = vector.shape_cast %107 : vector<2x8xf32> to vector<2x8x1xf32>
    %109 = vector.broadcast %108 : vector<2x8x1xf32> to vector<2x8x8xf32>
    %110 = arith.subf %106, %109 : vector<2x8x8xf32>
    %111 = math.exp %110 : vector<2x8x8xf32>
    %cst_42 = arith.constant dense<0.000000e+00> : vector<2x8xf32>
    %112 = vector.multi_reduction <add>, %111, %cst_42 [2] : vector<2x8x8xf32> to vector<2x8xf32>
    %113 = vector.shape_cast %112 : vector<2x8xf32> to vector<2x8x1xf32>
    %114 = tpu.reciprocal %113 {approx = true} : vector<2x8x1xf32> -> vector<2x8x1xf32>
    %115 = vector.broadcast %114 : vector<2x8x1xf32> to vector<2x8x8xf32>
    %116 = arith.mulf %111, %115 : vector<2x8x8xf32>
    %117 = arith.truncf %116 : vector<2x8x8xf32> to vector<2x8x8xbf16>
    "tpu.trace_start"() <{level = 10 : i32, message = "bqk,bkd->bqd"}> : () -> ()
    %cst_43 = arith.constant dense<0.000000e+00> : vector<2x8x16xf32>
    %118 = tpu.matmul %117, %102, %cst_43 {dimension_numbers = #tpu.dot_dimension_numbers<[2], [1], [1], [2], [0, 0, 0, 1, 1, 2], [0], [0]>} : vector<2x8x8xbf16>, vector<2x8x16xbf16>, vector<2x8x16xf32> -> vector<2x8x16xf32>
    "tpu.trace_stop"() : () -> ()
    %119 = vector.extract_strided_slice %48 {offsets = [0, 0, 48], sizes = [2, 8, 16], strides = [1, 1, 1]} : vector<2x8x128xf32> to vector<2x8x16xf32>
    %120 = arith.truncf %119 : vector<2x8x16xf32> to vector<2x8x16xbf16>
    %121 = vector.extract_strided_slice %50 {offsets = [0, 0, 48], sizes = [2, 8, 16], strides = [1, 1, 1]} : vector<2x8x128xf32> to vector<2x8x16xf32>
    %122 = arith.truncf %121 : vector<2x8x16xf32> to vector<2x8x16xbf16>
    %123 = vector.extract_strided_slice %52 {offsets = [0, 0, 48], sizes = [2, 8, 16], strides = [1, 1, 1]} : vector<2x8x128xf32> to vector<2x8x16xf32>
    %124 = arith.truncf %123 : vector<2x8x16xf32> to vector<2x8x16xbf16>
    "tpu.trace_start"() <{level = 10 : i32, message = "bqd,bkd->bqk"}> : () -> ()
    %cst_44 = arith.constant dense<0.000000e+00> : vector<2x8x8xf32>
    %125 = tpu.matmul %120, %122, %cst_44 {dimension_numbers = #tpu.dot_dimension_numbers<[2], [2], [1], [1], [0, 0, 0, 1, 1, 1], [0], [0]>} : vector<2x8x16xbf16>, vector<2x8x16xbf16>, vector<2x8x8xf32> -> vector<2x8x8xf32>
    "tpu.trace_stop"() : () -> ()
    %cst_45 = arith.constant 2.500000e-01 : f32
    %126 = vector.broadcast %cst_45 : f32 to vector<2x8x8xf32>
    %127 = arith.mulf %125, %126 : vector<2x8x8xf32>
    %128 = arith.addf %127, %22 : vector<2x8x8xf32>
    %cst_46 = arith.constant dense<0xFF800000> : vector<2x8xf32>
    %129 = vector.multi_reduction <maximumf>, %128, %cst_46 [2] : vector<2x8x8xf32> to vector<2x8xf32>
    %130 = vector.shape_cast %129 : vector<2x8xf32> to vector<2x8x1xf32>
    %131 = vector.broadcast %130 : vector<2x8x1xf32> to vector<2x8x8xf32>
    %132 = arith.subf %128, %131 : vector<2x8x8xf32>
    %133 = math.exp %132 : vector<2x8x8xf32>
    %cst_47 = arith.constant dense<0.000000e+00> : vector<2x8xf32>
    %134 = vector.multi_reduction <add>, %133, %cst_47 [2] : vector<2x8x8xf32> to vector<2x8xf32>
    %135 = vector.shape_cast %134 : vector<2x8xf32> to vector<2x8x1xf32>
    %136 = tpu.reciprocal %135 {approx = true} : vector<2x8x1xf32> -> vector<2x8x1xf32>
    %137 = vector.broadcast %136 : vector<2x8x1xf32> to vector<2x8x8xf32>
    %138 = arith.mulf %133, %137 : vector<2x8x8xf32>
    %139 = arith.truncf %138 : vector<2x8x8xf32> to vector<2x8x8xbf16>
    "tpu.trace_start"() <{level = 10 : i32, message = "bqk,bkd->bqd"}> : () -> ()
    %cst_48 = arith.constant dense<0.000000e+00> : vector<2x8x16xf32>
    %140 = tpu.matmul %139, %124, %cst_48 {dimension_numbers = #tpu.dot_dimension_numbers<[2], [1], [1], [2], [0, 0, 0, 1, 1, 2], [0], [0]>} : vector<2x8x8xbf16>, vector<2x8x16xbf16>, vector<2x8x16xf32> -> vector<2x8x16xf32>
    "tpu.trace_stop"() : () -> ()
    %141 = vector.extract_strided_slice %48 {offsets = [0, 0, 64], sizes = [2, 8, 16], strides = [1, 1, 1]} : vector<2x8x128xf32> to vector<2x8x16xf32>
    %142 = arith.truncf %141 : vector<2x8x16xf32> to vector<2x8x16xbf16>
    %143 = vector.extract_strided_slice %50 {offsets = [0, 0, 64], sizes = [2, 8, 16], strides = [1, 1, 1]} : vector<2x8x128xf32> to vector<2x8x16xf32>
    %144 = arith.truncf %143 : vector<2x8x16xf32> to vector<2x8x16xbf16>
    %145 = vector.extract_strided_slice %52 {offsets = [0, 0, 64], sizes = [2, 8, 16], strides = [1, 1, 1]} : vector<2x8x128xf32> to vector<2x8x16xf32>
    %146 = arith.truncf %145 : vector<2x8x16xf32> to vector<2x8x16xbf16>
    "tpu.trace_start"() <{level = 10 : i32, message = "bqd,bkd->bqk"}> : () -> ()
    %cst_49 = arith.constant dense<0.000000e+00> : vector<2x8x8xf32>
    %147 = tpu.matmul %142, %144, %cst_49 {dimension_numbers = #tpu.dot_dimension_numbers<[2], [2], [1], [1], [0, 0, 0, 1, 1, 1], [0], [0]>} : vector<2x8x16xbf16>, vector<2x8x16xbf16>, vector<2x8x8xf32> -> vector<2x8x8xf32>
    "tpu.trace_stop"() : () -> ()
    %cst_50 = arith.constant 2.500000e-01 : f32
    %148 = vector.broadcast %cst_50 : f32 to vector<2x8x8xf32>
    %149 = arith.mulf %147, %148 : vector<2x8x8xf32>
    %150 = arith.addf %149, %22 : vector<2x8x8xf32>
    %cst_51 = arith.constant dense<0xFF800000> : vector<2x8xf32>
    %151 = vector.multi_reduction <maximumf>, %150, %cst_51 [2] : vector<2x8x8xf32> to vector<2x8xf32>
    %152 = vector.shape_cast %151 : vector<2x8xf32> to vector<2x8x1xf32>
    %153 = vector.broadcast %152 : vector<2x8x1xf32> to vector<2x8x8xf32>
    %154 = arith.subf %150, %153 : vector<2x8x8xf32>
    %155 = math.exp %154 : vector<2x8x8xf32>
    %cst_52 = arith.constant dense<0.000000e+00> : vector<2x8xf32>
    %156 = vector.multi_reduction <add>, %155, %cst_52 [2] : vector<2x8x8xf32> to vector<2x8xf32>
    %157 = vector.shape_cast %156 : vector<2x8xf32> to vector<2x8x1xf32>
    %158 = tpu.reciprocal %157 {approx = true} : vector<2x8x1xf32> -> vector<2x8x1xf32>
    %159 = vector.broadcast %158 : vector<2x8x1xf32> to vector<2x8x8xf32>
    %160 = arith.mulf %155, %159 : vector<2x8x8xf32>
    %161 = arith.truncf %160 : vector<2x8x8xf32> to vector<2x8x8xbf16>
    "tpu.trace_start"() <{level = 10 : i32, message = "bqk,bkd->bqd"}> : () -> ()
    %cst_53 = arith.constant dense<0.000000e+00> : vector<2x8x16xf32>
    %162 = tpu.matmul %161, %146, %cst_53 {dimension_numbers = #tpu.dot_dimension_numbers<[2], [1], [1], [2], [0, 0, 0, 1, 1, 2], [0], [0]>} : vector<2x8x8xbf16>, vector<2x8x16xbf16>, vector<2x8x16xf32> -> vector<2x8x16xf32>
    "tpu.trace_stop"() : () -> ()
    %163 = vector.extract_strided_slice %48 {offsets = [0, 0, 80], sizes = [2, 8, 16], strides = [1, 1, 1]} : vector<2x8x128xf32> to vector<2x8x16xf32>
    %164 = arith.truncf %163 : vector<2x8x16xf32> to vector<2x8x16xbf16>
    %165 = vector.extract_strided_slice %50 {offsets = [0, 0, 80], sizes = [2, 8, 16], strides = [1, 1, 1]} : vector<2x8x128xf32> to vector<2x8x16xf32>
    %166 = arith.truncf %165 : vector<2x8x16xf32> to vector<2x8x16xbf16>
    %167 = vector.extract_strided_slice %52 {offsets = [0, 0, 80], sizes = [2, 8, 16], strides = [1, 1, 1]} : vector<2x8x128xf32> to vector<2x8x16xf32>
    %168 = arith.truncf %167 : vector<2x8x16xf32> to vector<2x8x16xbf16>
    "tpu.trace_start"() <{level = 10 : i32, message = "bqd,bkd->bqk"}> : () -> ()
    %cst_54 = arith.constant dense<0.000000e+00> : vector<2x8x8xf32>
    %169 = tpu.matmul %164, %166, %cst_54 {dimension_numbers = #tpu.dot_dimension_numbers<[2], [2], [1], [1], [0, 0, 0, 1, 1, 1], [0], [0]>} : vector<2x8x16xbf16>, vector<2x8x16xbf16>, vector<2x8x8xf32> -> vector<2x8x8xf32>
    "tpu.trace_stop"() : () -> ()
    %cst_55 = arith.constant 2.500000e-01 : f32
    %170 = vector.broadcast %cst_55 : f32 to vector<2x8x8xf32>
    %171 = arith.mulf %169, %170 : vector<2x8x8xf32>
    %172 = arith.addf %171, %22 : vector<2x8x8xf32>
    %cst_56 = arith.constant dense<0xFF800000> : vector<2x8xf32>
    %173 = vector.multi_reduction <maximumf>, %172, %cst_56 [2] : vector<2x8x8xf32> to vector<2x8xf32>
    %174 = vector.shape_cast %173 : vector<2x8xf32> to vector<2x8x1xf32>
    %175 = vector.broadcast %174 : vector<2x8x1xf32> to vector<2x8x8xf32>
    %176 = arith.subf %172, %175 : vector<2x8x8xf32>
    %177 = math.exp %176 : vector<2x8x8xf32>
    %cst_57 = arith.constant dense<0.000000e+00> : vector<2x8xf32>
    %178 = vector.multi_reduction <add>, %177, %cst_57 [2] : vector<2x8x8xf32> to vector<2x8xf32>
    %179 = vector.shape_cast %178 : vector<2x8xf32> to vector<2x8x1xf32>
    %180 = tpu.reciprocal %179 {approx = true} : vector<2x8x1xf32> -> vector<2x8x1xf32>
    %181 = vector.broadcast %180 : vector<2x8x1xf32> to vector<2x8x8xf32>
    %182 = arith.mulf %177, %181 : vector<2x8x8xf32>
    %183 = arith.truncf %182 : vector<2x8x8xf32> to vector<2x8x8xbf16>
    "tpu.trace_start"() <{level = 10 : i32, message = "bqk,bkd->bqd"}> : () -> ()
    %cst_58 = arith.constant dense<0.000000e+00> : vector<2x8x16xf32>
    %184 = tpu.matmul %183, %168, %cst_58 {dimension_numbers = #tpu.dot_dimension_numbers<[2], [1], [1], [2], [0, 0, 0, 1, 1, 2], [0], [0]>} : vector<2x8x8xbf16>, vector<2x8x16xbf16>, vector<2x8x16xf32> -> vector<2x8x16xf32>
    "tpu.trace_stop"() : () -> ()
    %185 = vector.extract_strided_slice %48 {offsets = [0, 0, 96], sizes = [2, 8, 16], strides = [1, 1, 1]} : vector<2x8x128xf32> to vector<2x8x16xf32>
    %186 = arith.truncf %185 : vector<2x8x16xf32> to vector<2x8x16xbf16>
    %187 = vector.extract_strided_slice %50 {offsets = [0, 0, 96], sizes = [2, 8, 16], strides = [1, 1, 1]} : vector<2x8x128xf32> to vector<2x8x16xf32>
    %188 = arith.truncf %187 : vector<2x8x16xf32> to vector<2x8x16xbf16>
    %189 = vector.extract_strided_slice %52 {offsets = [0, 0, 96], sizes = [2, 8, 16], strides = [1, 1, 1]} : vector<2x8x128xf32> to vector<2x8x16xf32>
    %190 = arith.truncf %189 : vector<2x8x16xf32> to vector<2x8x16xbf16>
    "tpu.trace_start"() <{level = 10 : i32, message = "bqd,bkd->bqk"}> : () -> ()
    %cst_59 = arith.constant dense<0.000000e+00> : vector<2x8x8xf32>
    %191 = tpu.matmul %186, %188, %cst_59 {dimension_numbers = #tpu.dot_dimension_numbers<[2], [2], [1], [1], [0, 0, 0, 1, 1, 1], [0], [0]>} : vector<2x8x16xbf16>, vector<2x8x16xbf16>, vector<2x8x8xf32> -> vector<2x8x8xf32>
    "tpu.trace_stop"() : () -> ()
    %cst_60 = arith.constant 2.500000e-01 : f32
    %192 = vector.broadcast %cst_60 : f32 to vector<2x8x8xf32>
    %193 = arith.mulf %191, %192 : vector<2x8x8xf32>
    %194 = arith.addf %193, %22 : vector<2x8x8xf32>
    %cst_61 = arith.constant dense<0xFF800000> : vector<2x8xf32>
    %195 = vector.multi_reduction <maximumf>, %194, %cst_61 [2] : vector<2x8x8xf32> to vector<2x8xf32>
    %196 = vector.shape_cast %195 : vector<2x8xf32> to vector<2x8x1xf32>
    %197 = vector.broadcast %196 : vector<2x8x1xf32> to vector<2x8x8xf32>
    %198 = arith.subf %194, %197 : vector<2x8x8xf32>
    %199 = math.exp %198 : vector<2x8x8xf32>
    %cst_62 = arith.constant dense<0.000000e+00> : vector<2x8xf32>
    %200 = vector.multi_reduction <add>, %199, %cst_62 [2] : vector<2x8x8xf32> to vector<2x8xf32>
    %201 = vector.shape_cast %200 : vector<2x8xf32> to vector<2x8x1xf32>
    %202 = tpu.reciprocal %201 {approx = true} : vector<2x8x1xf32> -> vector<2x8x1xf32>
    %203 = vector.broadcast %202 : vector<2x8x1xf32> to vector<2x8x8xf32>
    %204 = arith.mulf %199, %203 : vector<2x8x8xf32>
    %205 = arith.truncf %204 : vector<2x8x8xf32> to vector<2x8x8xbf16>
    "tpu.trace_start"() <{level = 10 : i32, message = "bqk,bkd->bqd"}> : () -> ()
    %cst_63 = arith.constant dense<0.000000e+00> : vector<2x8x16xf32>
    %206 = tpu.matmul %205, %190, %cst_63 {dimension_numbers = #tpu.dot_dimension_numbers<[2], [1], [1], [2], [0, 0, 0, 1, 1, 2], [0], [0]>} : vector<2x8x8xbf16>, vector<2x8x16xbf16>, vector<2x8x16xf32> -> vector<2x8x16xf32>
    "tpu.trace_stop"() : () -> ()
    %207 = vector.extract_strided_slice %48 {offsets = [0, 0, 112], sizes = [2, 8, 16], strides = [1, 1, 1]} : vector<2x8x128xf32> to vector<2x8x16xf32>
    %208 = arith.truncf %207 : vector<2x8x16xf32> to vector<2x8x16xbf16>
    %209 = vector.extract_strided_slice %50 {offsets = [0, 0, 112], sizes = [2, 8, 16], strides = [1, 1, 1]} : vector<2x8x128xf32> to vector<2x8x16xf32>
    %210 = arith.truncf %209 : vector<2x8x16xf32> to vector<2x8x16xbf16>
    %211 = vector.extract_strided_slice %52 {offsets = [0, 0, 112], sizes = [2, 8, 16], strides = [1, 1, 1]} : vector<2x8x128xf32> to vector<2x8x16xf32>
    %212 = arith.truncf %211 : vector<2x8x16xf32> to vector<2x8x16xbf16>
    "tpu.trace_start"() <{level = 10 : i32, message = "bqd,bkd->bqk"}> : () -> ()
    %cst_64 = arith.constant dense<0.000000e+00> : vector<2x8x8xf32>
    %213 = tpu.matmul %208, %210, %cst_64 {dimension_numbers = #tpu.dot_dimension_numbers<[2], [2], [1], [1], [0, 0, 0, 1, 1, 1], [0], [0]>} : vector<2x8x16xbf16>, vector<2x8x16xbf16>, vector<2x8x8xf32> -> vector<2x8x8xf32>
    "tpu.trace_stop"() : () -> ()
    %cst_65 = arith.constant 2.500000e-01 : f32
    %214 = vector.broadcast %cst_65 : f32 to vector<2x8x8xf32>
    %215 = arith.mulf %213, %214 : vector<2x8x8xf32>
    %216 = arith.addf %215, %22 : vector<2x8x8xf32>
    %cst_66 = arith.constant dense<0xFF800000> : vector<2x8xf32>
    %217 = vector.multi_reduction <maximumf>, %216, %cst_66 [2] : vector<2x8x8xf32> to vector<2x8xf32>
    %218 = vector.shape_cast %217 : vector<2x8xf32> to vector<2x8x1xf32>
    %219 = vector.broadcast %218 : vector<2x8x1xf32> to vector<2x8x8xf32>
    %220 = arith.subf %216, %219 : vector<2x8x8xf32>
    %221 = math.exp %220 : vector<2x8x8xf32>
    %cst_67 = arith.constant dense<0.000000e+00> : vector<2x8xf32>
    %222 = vector.multi_reduction <add>, %221, %cst_67 [2] : vector<2x8x8xf32> to vector<2x8xf32>
    %223 = vector.shape_cast %222 : vector<2x8xf32> to vector<2x8x1xf32>
    %224 = tpu.reciprocal %223 {approx = true} : vector<2x8x1xf32> -> vector<2x8x1xf32>
    %225 = vector.broadcast %224 : vector<2x8x1xf32> to vector<2x8x8xf32>
    %226 = arith.mulf %221, %225 : vector<2x8x8xf32>
    %227 = arith.truncf %226 : vector<2x8x8xf32> to vector<2x8x8xbf16>
    "tpu.trace_start"() <{level = 10 : i32, message = "bqk,bkd->bqd"}> : () -> ()
    %cst_68 = arith.constant dense<0.000000e+00> : vector<2x8x16xf32>
    %228 = tpu.matmul %227, %212, %cst_68 {dimension_numbers = #tpu.dot_dimension_numbers<[2], [1], [1], [2], [0, 0, 0, 1, 1, 2], [0], [0]>} : vector<2x8x8xbf16>, vector<2x8x16xbf16>, vector<2x8x16xf32> -> vector<2x8x16xf32>
    "tpu.trace_stop"() : () -> ()
    %229 = tpu.concatenate %74, %96, %118, %140, %162, %184, %206, %228 in 2 : vector<2x8x16xf32>, vector<2x8x16xf32>, vector<2x8x16xf32>, vector<2x8x16xf32>, vector<2x8x16xf32>, vector<2x8x16xf32>, vector<2x8x16xf32>, vector<2x8x16xf32> -> vector<2x8x128xf32>
    %230 = vector.shape_cast %229 : vector<2x8x128xf32> to vector<16x128xf32>
    %231 = arith.truncf %230 : vector<16x128xf32> to vector<16x128xbf16>
    %cst_69 = arith.constant dense<0.000000e+00> : vector<16x128xf32>
    %232 = tpu.matmul %231, %41, %cst_69 {dimension_numbers = #tpu.dot_dimension_numbers<[1], [0], [0], [1], [0, 0, 1, 1], [], []>} : vector<16x128xbf16>, vector<128x128xbf16>, vector<16x128xf32> -> vector<16x128xf32>
    %233 = vector.broadcast %42 : vector<1x128xf32> to vector<16x128xf32>
    %234 = arith.addf %232, %233 : vector<16x128xf32>
    %235 = arith.addf %11, %234 : vector<16x128xf32>
    %c0_70 = arith.constant 0 : index
    %c0_71 = arith.constant 0 : index
    %236 = vector.load %arg10[%c0_70, %c0_71] : memref<1x128xf32, #tpu.memory_space<vmem>>, vector<1x128xf32>
    %c0_72 = arith.constant 0 : index
    %c0_73 = arith.constant 0 : index
    %237 = vector.load %arg11[%c0_72, %c0_73] : memref<1x128xf32, #tpu.memory_space<vmem>>, vector<1x128xf32>
    %cst_74 = arith.constant dense<0.000000e+00> : vector<16xf32>
    %238 = vector.multi_reduction <add>, %235, %cst_74 [1] : vector<16x128xf32> to vector<16xf32>
    %239 = vector.shape_cast %238 : vector<16xf32> to vector<16x1xf32>
    %cst_75 = arith.constant 1.280000e+02 : f32
    %240 = vector.broadcast %cst_75 : f32 to vector<16x1xf32>
    %241 = arith.divf %239, %240 : vector<16x1xf32>
    %242 = vector.broadcast %241 : vector<16x1xf32> to vector<16x128xf32>
    %243 = arith.subf %235, %242 : vector<16x128xf32>
    %244 = arith.mulf %243, %243 : vector<16x128xf32>
    %cst_76 = arith.constant dense<0.000000e+00> : vector<16xf32>
    %245 = vector.multi_reduction <add>, %244, %cst_76 [1] : vector<16x128xf32> to vector<16xf32>
    %246 = vector.shape_cast %245 : vector<16xf32> to vector<16x1xf32>
    %cst_77 = arith.constant 1.280000e+02 : f32
    %247 = vector.broadcast %cst_77 : f32 to vector<16x1xf32>
    %248 = arith.divf %246, %247 : vector<16x1xf32>
    %249 = vector.broadcast %241 : vector<16x1xf32> to vector<16x128xf32>
    %250 = arith.subf %235, %249 : vector<16x128xf32>
    %cst_78 = arith.constant 9.99999974E-6 : f32
    %251 = vector.broadcast %cst_78 : f32 to vector<16x1xf32>
    %252 = arith.addf %248, %251 : vector<16x1xf32>
    %253 = math.rsqrt %252 : vector<16x1xf32>
    %254 = vector.broadcast %253 : vector<16x1xf32> to vector<16x128xf32>
    %255 = arith.mulf %250, %254 : vector<16x128xf32>
    %256 = vector.broadcast %236 : vector<1x128xf32> to vector<16x128xf32>
    %257 = arith.mulf %255, %256 : vector<16x128xf32>
    %258 = vector.broadcast %237 : vector<1x128xf32> to vector<16x128xf32>
    %259 = arith.addf %257, %258 : vector<16x128xf32>
    %260 = arith.addf %11, %259 : vector<16x128xf32>
    %c0_79 = arith.constant 0 : index
    %c0_80 = arith.constant 0 : index
    %261 = vector.load %arg12[%c0_79, %c0_80] : memref<1x128xf32, #tpu.memory_space<vmem>>, vector<1x128xf32>
    %c0_81 = arith.constant 0 : index
    %c0_82 = arith.constant 0 : index
    %262 = vector.load %arg13[%c0_81, %c0_82] : memref<1x128xf32, #tpu.memory_space<vmem>>, vector<1x128xf32>
    %cst_83 = arith.constant dense<0.000000e+00> : vector<16xf32>
    %263 = vector.multi_reduction <add>, %260, %cst_83 [1] : vector<16x128xf32> to vector<16xf32>
    %264 = vector.shape_cast %263 : vector<16xf32> to vector<16x1xf32>
    %cst_84 = arith.constant 1.280000e+02 : f32
    %265 = vector.broadcast %cst_84 : f32 to vector<16x1xf32>
    %266 = arith.divf %264, %265 : vector<16x1xf32>
    %267 = vector.broadcast %266 : vector<16x1xf32> to vector<16x128xf32>
    %268 = arith.subf %260, %267 : vector<16x128xf32>
    %269 = arith.mulf %268, %268 : vector<16x128xf32>
    %cst_85 = arith.constant dense<0.000000e+00> : vector<16xf32>
    %270 = vector.multi_reduction <add>, %269, %cst_85 [1] : vector<16x128xf32> to vector<16xf32>
    %271 = vector.shape_cast %270 : vector<16xf32> to vector<16x1xf32>
    %cst_86 = arith.constant 1.280000e+02 : f32
    %272 = vector.broadcast %cst_86 : f32 to vector<16x1xf32>
    %273 = arith.divf %271, %272 : vector<16x1xf32>
    %274 = vector.broadcast %266 : vector<16x1xf32> to vector<16x128xf32>
    %275 = arith.subf %260, %274 : vector<16x128xf32>
    %cst_87 = arith.constant 9.99999974E-6 : f32
    %276 = vector.broadcast %cst_87 : f32 to vector<16x1xf32>
    %277 = arith.addf %273, %276 : vector<16x1xf32>
    %278 = math.rsqrt %277 : vector<16x1xf32>
    %279 = vector.broadcast %278 : vector<16x1xf32> to vector<16x128xf32>
    %280 = arith.mulf %275, %279 : vector<16x128xf32>
    %281 = vector.broadcast %261 : vector<1x128xf32> to vector<16x128xf32>
    %282 = arith.mulf %280, %281 : vector<16x128xf32>
    %283 = vector.broadcast %262 : vector<1x128xf32> to vector<16x128xf32>
    %284 = arith.addf %282, %283 : vector<16x128xf32>
    %285 = vector.broadcast %38 : vector<16x1xf32> to vector<16x128xf32>
    %286 = arith.mulf %284, %285 : vector<16x128xf32>
    %c0_88 = arith.constant 0 : index
    %c0_89 = arith.constant 0 : index
    %287 = vector.load %arg14[%c0_88, %c0_89] : memref<128x128xbf16, #tpu.memory_space<vmem>>, vector<128x128xbf16>
    %288 = arith.truncf %286 : vector<16x128xf32> to vector<16x128xbf16>
    %cst_90 = arith.constant dense<0.000000e+00> : vector<16x128xf32>
    %289 = tpu.matmul %288, %287, %cst_90 {dimension_numbers = #tpu.dot_dimension_numbers<[1], [0], [0], [1], [0, 0, 1, 1], [], []>} : vector<16x128xbf16>, vector<128x128xbf16>, vector<16x128xf32> -> vector<16x128xf32>
    %c0_91 = arith.constant 0 : index
    %c0_92 = arith.constant 0 : index
    %290 = vector.load %arg15[%c0_91, %c0_92] : memref<1x128xf32, #tpu.memory_space<vmem>>, vector<1x128xf32>
    %291 = vector.broadcast %290 : vector<1x128xf32> to vector<16x128xf32>
    %292 = arith.addf %289, %291 : vector<16x128xf32>
    %cst_93 = arith.constant 0.000000e+00 : f32
    %293 = vector.broadcast %cst_93 : f32 to vector<16x128xf32>
    %294 = arith.maximumf %292, %293 : vector<16x128xf32>
    %c0_94 = arith.constant 0 : index
    %c0_95 = arith.constant 0 : index
    %295 = vector.load %arg16[%c0_94, %c0_95] : memref<128x128xbf16, #tpu.memory_space<vmem>>, vector<128x128xbf16>
    %296 = arith.truncf %294 : vector<16x128xf32> to vector<16x128xbf16>
    %cst_96 = arith.constant dense<0.000000e+00> : vector<16x128xf32>
    %297 = tpu.matmul %296, %295, %cst_96 {dimension_numbers = #tpu.dot_dimension_numbers<[1], [0], [0], [1], [0, 0, 1, 1], [], []>} : vector<16x128xbf16>, vector<128x128xbf16>, vector<16x128xf32> -> vector<16x128xf32>
    %c0_97 = arith.constant 0 : index
    %c0_98 = arith.constant 0 : index
    %298 = vector.load %arg17[%c0_97, %c0_98] : memref<1x128xf32, #tpu.memory_space<vmem>>, vector<1x128xf32>
    %299 = vector.broadcast %298 : vector<1x128xf32> to vector<16x128xf32>
    %300 = arith.addf %297, %299 : vector<16x128xf32>
    %301 = arith.addf %286, %300 : vector<16x128xf32>
    %c0_99 = arith.constant 0 : index
    %c0_100 = arith.constant 0 : index
    %302 = vector.load %arg18[%c0_99, %c0_100] : memref<1x128xf32, #tpu.memory_space<vmem>>, vector<1x128xf32>
    %c0_101 = arith.constant 0 : index
    %c0_102 = arith.constant 0 : index
    %303 = vector.load %arg19[%c0_101, %c0_102] : memref<1x128xf32, #tpu.memory_space<vmem>>, vector<1x128xf32>
    %cst_103 = arith.constant dense<0.000000e+00> : vector<16xf32>
    %304 = vector.multi_reduction <add>, %301, %cst_103 [1] : vector<16x128xf32> to vector<16xf32>
    %305 = vector.shape_cast %304 : vector<16xf32> to vector<16x1xf32>
    %cst_104 = arith.constant 1.280000e+02 : f32
    %306 = vector.broadcast %cst_104 : f32 to vector<16x1xf32>
    %307 = arith.divf %305, %306 : vector<16x1xf32>
    %308 = vector.broadcast %307 : vector<16x1xf32> to vector<16x128xf32>
    %309 = arith.subf %301, %308 : vector<16x128xf32>
    %310 = arith.mulf %309, %309 : vector<16x128xf32>
    %cst_105 = arith.constant dense<0.000000e+00> : vector<16xf32>
    %311 = vector.multi_reduction <add>, %310, %cst_105 [1] : vector<16x128xf32> to vector<16xf32>
    %312 = vector.shape_cast %311 : vector<16xf32> to vector<16x1xf32>
    %cst_106 = arith.constant 1.280000e+02 : f32
    %313 = vector.broadcast %cst_106 : f32 to vector<16x1xf32>
    %314 = arith.divf %312, %313 : vector<16x1xf32>
    %315 = vector.broadcast %307 : vector<16x1xf32> to vector<16x128xf32>
    %316 = arith.subf %301, %315 : vector<16x128xf32>
    %cst_107 = arith.constant 9.99999974E-6 : f32
    %317 = vector.broadcast %cst_107 : f32 to vector<16x1xf32>
    %318 = arith.addf %314, %317 : vector<16x1xf32>
    %319 = math.rsqrt %318 : vector<16x1xf32>
    %320 = vector.broadcast %319 : vector<16x1xf32> to vector<16x128xf32>
    %321 = arith.mulf %316, %320 : vector<16x128xf32>
    %322 = vector.broadcast %302 : vector<1x128xf32> to vector<16x128xf32>
    %323 = arith.mulf %321, %322 : vector<16x128xf32>
    %324 = vector.broadcast %303 : vector<1x128xf32> to vector<16x128xf32>
    %325 = arith.addf %323, %324 : vector<16x128xf32>
    %326 = vector.broadcast %38 : vector<16x1xf32> to vector<16x128xf32>
    %327 = arith.mulf %325, %326 : vector<16x128xf32>
    %328 = vector.shape_cast %327 : vector<16x128xf32> to vector<2x8x128xf32>
    %c0_108 = arith.constant 0 : index
    %c0_109 = arith.constant 0 : index
    %c0_110 = arith.constant 0 : index
    %329 = vector.load %arg20[%c0_108, %c0_109, %c0_110] : memref<2x8x128xf32, #tpu.memory_space<vmem>>, vector<2x8x128xf32>
    tpu.vector_store %arg20[%c0_108, %c0_109, %c0_110], %328 {strides = array<i32>} : memref<2x8x128xf32, #tpu.memory_space<vmem>>, vector<2x8x128xf32>,
    return
  }
  func.func @transform_0(%arg0: i32) -> (i32, i32, i32) {
    %c0_i32 = arith.constant 0 : i32
    %c0_i32_0 = arith.constant 0 : i32
    %c0_i32_1 = arith.constant 0 : i32
    return %arg0, %c0_i32, %c0_i32_0 : i32, i32, i32
  }
  func.func @transform_1(%arg0: i32) -> (i32, i32, i32) {
    %c0_i32 = arith.constant 0 : i32
    %c0_i32_0 = arith.constant 0 : i32
    %c0_i32_1 = arith.constant 0 : i32
    return %arg0, %c0_i32, %c0_i32_0 : i32, i32, i32
  }
  func.func @transform_2(%arg0: i32) -> (i32, i32, i32) {
    %c0_i32 = arith.constant 0 : i32
    %c0_i32_0 = arith.constant 0 : i32
    %c0_i32_1 = arith.constant 0 : i32
    return %arg0, %c0_i32, %c0_i32_0 : i32, i32, i32
  }
  func.func @transform_3(%arg0: i32) -> (i32, i32) {
    %c0_i32 = arith.constant 0 : i32
    %c0_i32_0 = arith.constant 0 : i32
    %c0_i32_1 = arith.constant 0 : i32
    return %c0_i32, %c0_i32_0 : i32, i32
  }
  func.func @transform_4(%arg0: i32) -> (i32, i32) {
    %c0_i32 = arith.constant 0 : i32
    %c0_i32_0 = arith.constant 0 : i32
    %c0_i32_1 = arith.constant 0 : i32
    return %c0_i32, %c0_i32_0 : i32, i32
  }
  func.func @transform_5(%arg0: i32) -> (i32, i32) {
    %c0_i32 = arith.constant 0 : i32
    %c0_i32_0 = arith.constant 0 : i32
    %c0_i32_1 = arith.constant 0 : i32
    return %c0_i32, %c0_i32_0 : i32, i32
  }
  func.func @transform_6(%arg0: i32) -> (i32, i32) {
    %c0_i32 = arith.constant 0 : i32
    %c0_i32_0 = arith.constant 0 : i32
    %c0_i32_1 = arith.constant 0 : i32
    return %c0_i32, %c0_i32_0 : i32, i32
  }
  func.func @transform_7(%arg0: i32) -> (i32, i32) {
    %c0_i32 = arith.constant 0 : i32
    %c0_i32_0 = arith.constant 0 : i32
    %c0_i32_1 = arith.constant 0 : i32
    return %c0_i32, %c0_i32_0 : i32, i32
  }
  func.func @transform_8(%arg0: i32) -> (i32, i32) {
    %c0_i32 = arith.constant 0 : i32
    %c0_i32_0 = arith.constant 0 : i32
    %c0_i32_1 = arith.constant 0 : i32
    return %c0_i32, %c0_i32_0 : i32, i32
  }
  func.func @transform_9(%arg0: i32) -> (i32, i32) {
    %c0_i32 = arith.constant 0 : i32
    %c0_i32_0 = arith.constant 0 : i32
    %c0_i32_1 = arith.constant 0 : i32
    return %c0_i32, %c0_i32_0 : i32, i32
  }
  func.func @transform_10(%arg0: i32) -> (i32, i32) {
    %c0_i32 = arith.constant 0 : i32
    %c0_i32_0 = arith.constant 0 : i32
    %c0_i32_1 = arith.constant 0 : i32
    return %c0_i32, %c0_i32_0 : i32, i32
  }
  func.func @transform_11(%arg0: i32) -> (i32, i32) {
    %c0_i32 = arith.constant 0 : i32
    %c0_i32_0 = arith.constant 0 : i32
    %c0_i32_1 = arith.constant 0 : i32
    return %c0_i32, %c0_i32_0 : i32, i32
  }
  func.func @transform_12(%arg0: i32) -> (i32, i32) {
    %c0_i32 = arith.constant 0 : i32
    %c0_i32_0 = arith.constant 0 : i32
    %c0_i32_1 = arith.constant 0 : i32
    return %c0_i32, %c0_i32_0 : i32, i32
  }
  func.func @transform_13(%arg0: i32) -> (i32, i32) {
    %c0_i32 = arith.constant 0 : i32
    %c0_i32_0 = arith.constant 0 : i32
    %c0_i32_1 = arith.constant 0 : i32
    return %c0_i32, %c0_i32_0 : i32, i32
  }
  func.func @transform_14(%arg0: i32) -> (i32, i32) {
    %c0_i32 = arith.constant 0 : i32
    %c0_i32_0 = arith.constant 0 : i32
    %c0_i32_1 = arith.constant 0 : i32
    return %c0_i32, %c0_i32_0 : i32, i32
  }
  func.func @transform_15(%arg0: i32) -> (i32, i32) {
    %c0_i32 = arith.constant 0 : i32
    %c0_i32_0 = arith.constant 0 : i32
    %c0_i32_1 = arith.constant 0 : i32
    return %c0_i32, %c0_i32_0 : i32, i32
  }
  func.func @transform_16(%arg0: i32) -> (i32, i32) {
    %c0_i32 = arith.constant 0 : i32
    %c0_i32_0 = arith.constant 0 : i32
    %c0_i32_1 = arith.constant 0 : i32
    return %c0_i32, %c0_i32_0 : i32, i32
  }
  func.func @transform_17(%arg0: i32) -> (i32, i32) {
    %c0_i32 = arith.constant 0 : i32
    %c0_i32_0 = arith.constant 0 : i32
    %c0_i32_1 = arith.constant 0 : i32
    return %c0_i32, %c0_i32_0 : i32, i32
  }
  func.func @transform_18(%arg0: i32) -> (i32, i32) {
    %c0_i32 = arith.constant 0 : i32
    %c0_i32_0 = arith.constant 0 : i32
    %c0_i32_1 = arith.constant 0 : i32
    return %c0_i32, %c0_i32_0 : i32, i32
  }
  func.func @transform_19(%arg0: i32) -> (i32, i32, i32) {
    %c0_i32 = arith.constant 0 : i32
    %c0_i32_0 = arith.constant 0 : i32
    %c0_i32_1 = arith.constant 0 : i32
    return %arg0, %c0_i32, %c0_i32_0 : i32, i32, i32
  }
}

</mosaic_0001>

<llo_original>
// kernel: _lambda_.5
$region0: #{_lambda_.5}
  #allocation0 [shape = 'u32[]', space=smem, size = 0x4, offset = 0x4, fixed_abs, tag = 'smem constant byte address 0x4 - core index']
  #allocation1 [shape = 'u32[72,128]{1,0:T(1,128)}', space=vmem, size = 0x9000, scoped, tag = 'internal scratch']
  %s0 = inlined_call_operand.vmem [shape: f32[32,128], index: 0, kind: input, shape index: {}]
  %s1 = inlined_call_operand.vmem [shape: bf16[128,256], index: 1, kind: input, shape index: {}]
  %s2 = inlined_call_operand.vmem [shape: f32[1,256], index: 2, kind: input, shape index: {}]
  %s3 = inlined_call_operand.hbm [shape: f32[32,256], index: 3, kind: output, shape index: {}]
  %s4 = sld [smem:[#allocation0]]
  $region45: #{_lambda_.5} parent=0
    _
  %s6 = ssub.s32 1, %s4
  %s7 = scalar_select 0, %s6, %s4
  $region1: #{_lambda_.5} parent=0
    #allocation2 [shape = 'u8[32768]{0}', space=vmem, size = 0x8000, scoped, tag = 'output window, operand 0']
    #allocation3 [shape = 's32[2]{0}', space=sflag, size = 0x8, scoped, tag = 'scoped memory for _lambda_.5']
    %8 = vsyncpa [#allocation3], 0
    %s9 = scalar_lea.sflag [#allocation3], 1
    %10 = vsyncpa %s9, 0
    loop: start=0, step=1, limit=4
    $region2: #{_lambda_.5} parent=1 // loop_pre_header
      _
    $region3: #{_lambda_.5} parent=1 // loop_header
      %s12 = sphi 0, %s16
      %p13 = scmp.ge.s32.totalorder %s12, 4
      %s22 = sphi 0, %s24
      %s25 = sphi 0, %s22
      %s26 = sphi 0, %s25
      %s42 = sphi 0, %s26
      %s46 = sphi 0, %s46
      %s48 = sphi 0, %s46
      %s49 = sphi 0, %s48
      %s63 = sphi 0, %s49
      %s67 = sphi 0, %s67
      %s69 = sphi 0, %s67
      %s70 = sphi 0, %s69
      %s84 = sphi 0, %s70
      %s90 = sphi 0, %s92
      %s93 = sphi 0, %s90
      %s94 = sphi 0, %s93
      %s110 = sphi 0, %s94
    $region4: #{_lambda_.5} parent=1 // loop_header_branch
      %15 = sbr.rel (%p13) target = $region8
    $region5: #{_lambda_.5} parent=1 // loop_body
      %s17 = ssub.s32 %s12, 1
      %s18 = ssub.s32 %s12, 2
      %s19 = sadd.s32 %s12, 1
      %s20 = ssub.s32 %s12, %s19
      %p21 = scmp.eq.s32.totalorder %s20, 0
      %s23 = sadd.s32 %s22, 1
      %s24 = scalar_select %p21, %s22, %s23
      %p27 = pneg %p21
      %p28 = scmp.eq.s32.totalorder %s12, 1
      %p29 = por %p27, %p28
      %p30 = scmp.ne.s32.totalorder %s22, %s25
      %p31 = scmp.eq.s32.totalorder %s12, 0
      %p32 = por %p30, %p31
      %p33 = scmp.ne.s32.totalorder %s22, %s25
      %p34 = scmp.eq.s32.totalorder %s17, 1
      %p35 = por %p33, %p34
      %p36 = scmp.ne.s32.totalorder %s25, %s26
      %p37 = scmp.eq.s32.totalorder %s17, 0
      %p38 = por %p36, %p37
      %p39 = scmp.ne.s32.totalorder %s25, %s26
      %p40 = scmp.eq.s32.totalorder %s18, 1
      %p41 = por %p39, %p40
      %p43 = scmp.ne.s32.totalorder %s26, %s42
      %p44 = scmp.eq.s32.totalorder %s18, 0
      %p45 = por %p43, %p44
      %s47 = sadd.s32 %s46, 1
      %p50 = scmp.eq.s32.totalorder %s12, 1
      %p51 = scmp.ne.s32.totalorder %s46, %s48
      %p52 = scmp.eq.s32.totalorder %s12, 0
      %p53 = por %p51, %p52
      %p54 = scmp.ne.s32.totalorder %s46, %s48
      %p55 = scmp.eq.s32.totalorder %s17, 1
      %p56 = por %p54, %p55
      %p57 = scmp.ne.s32.totalorder %s48, %s49
      %p58 = scmp.eq.s32.totalorder %s17, 0
      %p59 = por %p57, %p58
      %p60 = scmp.ne.s32.totalorder %s48, %s49
      %p61 = scmp.eq.s32.totalorder %s18, 1
      %p62 = por %p60, %p61
      %p64 = scmp.ne.s32.totalorder %s49, %s63
      %p65 = scmp.eq.s32.totalorder %s18, 0
      %p66 = por %p64, %p65
      %s68 = sadd.s32 %s67, 1
      %p71 = scmp.eq.s32.totalorder %s12, 1
      %p72 = scmp.ne.s32.totalorder %s67, %s69
      %p73 = scmp.eq.s32.totalorder %s12, 0
      %p74 = por %p72, %p73
      %p75 = scmp.ne.s32.totalorder %s67, %s69
      %p76 = scmp.eq.s32.totalorder %s17, 1
      %p77 = por %p75, %p76
      %p78 = scmp.ne.s32.totalorder %s69, %s70
      %p79 = scmp.eq.s32.totalorder %s17, 0
      %p80 = por %p78, %p79
      %p81 = scmp.ne.s32.totalorder %s69, %s70
      %p82 = scmp.eq.s32.totalorder %s18, 1
      %p83 = por %p81, %p82
      %p85 = scmp.ne.s32.totalorder %s70, %s84
      %p86 = scmp.eq.s32.totalorder %s18, 0
      %p87 = por %p85, %p86
      %s88 = ssub.s32 %s12, %s19
      %p89 = scmp.eq.s32.totalorder %s88, 0
      %s91 = sadd.s32 %s90, 1
      %s92 = scalar_select %p89, %s90, %s91
      %p95 = pneg %p89
      %p96 = scmp.eq.s32.totalorder %s12, 1
      %p97 = por %p95, %p96
      %p98 = scmp.ne.s32.totalorder %s90, %s93
      %p99 = scmp.eq.s32.totalorder %s12, 0
      %p100 = por %p98, %p99
      %p101 = scmp.ne.s32.totalorder %s90, %s93
      %p102 = scmp.eq.s32.totalorder %s17, 1
      %p103 = por %p101, %p102
      %p104 = scmp.ne.s32.totalorder %s93, %s94
      %p105 = scmp.eq.s32.totalorder %s17, 0
      %p106 = por %p104, %p105
      %p107 = scmp.ne.s32.totalorder %s93, %s94
      %p108 = scmp.eq.s32.totalorder %s18, 1
      %p109 = por %p107, %p108
      %p111 = scmp.ne.s32.totalorder %s94, %s110
      %p112 = scmp.eq.s32.totalorder %s18, 0
      %p113 = por %p111, %p112
      %p114 = scmp.le.s32.totalorder 1, %s12
      %p115 = scmp.lt.s32.totalorder %s12, 3
      %p116 = pnand %p114, %p115
      %p117 = pneg %p116
      // Predicated region
      $region9: #{_lambda_.5} parent=5 // pred_check
        _
      $region10: #{_lambda_.5} parent=5 // pred_check_branch
        %119 = sbr.rel (%p116) target = $region12
      $region11: #{_lambda_.5} parent=5 // pred_region
        %s120 = ssub.s32 %s12, 1
        // Predicated region
        $region13: #{_lambda_.5} parent=11 // pred_check
          %p121 = pneg %p59
        $region14: #{_lambda_.5} parent=11 // pred_check_branch
          %123 = sbr.rel (%p121) target = $region16
        $region15: #{_lambda_.5} parent=11 // pred_region
          _
        $region16: #{_lambda_.5} parent=11 // pred_fallthru
          _
        // Predicated region
        $region17: #{_lambda_.5} parent=11 // pred_check
          %p124 = pneg %p80
        $region18: #{_lambda_.5} parent=11 // pred_check_branch
          %126 = sbr.rel (%p124) target = $region20
        $region19: #{_lambda_.5} parent=11 // pred_region
          _
        $region20: #{_lambda_.5} parent=11 // pred_fallthru
          _
      $region12: #{_lambda_.5} parent=5 // pred_fallthru
        _
      %p127 = scmp.lt.s32.totalorder %s12, 2
      // Predicated region
      $region21: #{_lambda_.5} parent=5 // pred_check
        %p128 = pneg %p127
      $region22: #{_lambda_.5} parent=5 // pred_check_branch
        %130 = sbr.rel (%p128) target = $region24
      $region23: #{_lambda_.5} parent=5 // pred_region
        // Predicated region
        $region25: #{_lambda_.5} parent=23 // pred_check
          %p131 = pneg %p32
        $region26: #{_lambda_.5} parent=23 // pred_check_branch
          %133 = sbr.rel (%p131) target = $region28
        $region27: #{_lambda_.5} parent=23 // pred_region
          %s134 = smul.u32 2, %s12
          %p135 = scmp.lt.s32.totalorder %s134, 3
          %s136 = scalar_select %p135, %s134, 3
          %s137 = smul.addr %s136, 8
          %s138 = scalar_lea.vmem %s0, %s137
          %s139 = smul.u32 2, %s12
        $region28: #{_lambda_.5} parent=23 // pred_fallthru
          _
      $region24: #{_lambda_.5} parent=5 // pred_fallthru
        _
      %p140 = scmp.le.s32.totalorder 1, %s12
      %p141 = scmp.lt.s32.totalorder %s12, 3
      %p142 = pnand %p140, %p141
      %p143 = pneg %p142
      // Predicated region
      $region29: #{_lambda_.5} parent=5 // pred_check
        _
      $region30: #{_lambda_.5} parent=5 // pred_check_branch
        %145 = sbr.rel (%p142) target = $region32
      $region31: #{_lambda_.5} parent=5 // pred_region
        %s146 = ssub.s32 %s12, 1
        %s147 = smul.u32 2, %s17
        %p148 = scmp.lt.s32.totalorder %s147, 3
        %s149 = scalar_select %p148, %s147, 3
        %s150 = smul.addr %s149, 8
        %s151 = scalar_lea.vmem %s0, %s150
        %p152 = pneg %p38
        %p153 = pneg %p35
        %p154 = pneg %p59
        %p155 = pneg %p56
        %p156 = pneg %p80
        %p157 = pneg %p77
        %p158 = pneg %p106
        %p159 = pneg %p103
        %s160 = sand.u32 %s93, 1
        %s161 = scalar_lea.sflag [#allocation3], %s160
        %s162 = sand.u32 %s93, 1
        %s163 = smul.addr %s162, 32
        %s164 = scalar_lea.vmem [#allocation2], %s163
        %s165 = smul.u32 2, %s17
        %p166 = scmp.lt.s32.totalorder %s165, 3
        %s167 = scalar_select %p166, %s165, 3
        %s168 = smul.addr %s167, 8
        %s169 = scalar_lea.vmem %s0, %s168
        %s170 = smul.u32 2, %s17
        %s171 = smul.u32 2, %s17
        %v172 = vld [vmem:[%s169] sm:$0xff]
        %v173 = vld [vmem:[%s169 + $0x8] sm:$0xff]
        %v174 = vld [vmem:[%s1] sm:$0xff]
        %v175 = vld [vmem:[%s1 + $0x8] sm:$0xff]
        %v176 = vld [vmem:[%s1 + $0x10] sm:$0xff]
        %v177 = vld [vmem:[%s1 + $0x18] sm:$0xff]
        %v178 = vld [vmem:[%s1 + $0x20] sm:$0xff]
        %v179 = vld [vmem:[%s1 + $0x28] sm:$0xff]
        %v180 = vld [vmem:[%s1 + $0x30] sm:$0xff]
        %v181 = vld [vmem:[%s1 + $0x38] sm:$0xff]
        %v182 = vld [vmem:[%s1 + $0x40] sm:$0xff]
        %v183 = vld [vmem:[%s1 + $0x48] sm:$0xff]
        %v184 = vld [vmem:[%s1 + $0x50] sm:$0xff]
        %v185 = vld [vmem:[%s1 + $0x58] sm:$0xff]
        %v186 = vld [vmem:[%s1 + $0x60] sm:$0xff]
        %v187 = vld [vmem:[%s1 + $0x68] sm:$0xff]
        %v188 = vld [vmem:[%s1 + $0x70] sm:$0xff]
        %v189 = vld [vmem:[%s1 + $0x78] sm:$0xff]
        %v190 = vpack.c.bf16 %v173, %v172
        %v191 = vld [vmem:[%s2] sm:$0x3]
        %v193 = vperm.slane %v191, 0
        %v194 = vperm.slane %v191, 1
        %v213 = vunpack.c.l.b16 %v174
        %v214 = vunpack.c.h.b16 %v174
        %v215 = vunpack.c.l.b16 %v175
        %v216 = vunpack.c.h.b16 %v175
        %v217 = vunpack.c.l.b16 %v176
        %v218 = vunpack.c.h.b16 %v176
        %v219 = vunpack.c.l.b16 %v177
        %v220 = vunpack.c.h.b16 %v177
        %v221 = vunpack.c.l.b16 %v178
        %v222 = vunpack.c.h.b16 %v178
        %v223 = vunpack.c.l.b16 %v179
        %v224 = vunpack.c.h.b16 %v179
        %v225 = vunpack.c.l.b16 %v180
        %v226 = vunpack.c.h.b16 %v180
        %v227 = vunpack.c.l.b16 %v181
        %v228 = vunpack.c.h.b16 %v181
        %v229 = vunpack.c.l.b16 %v182
        %v230 = vunpack.c.h.b16 %v182
        %v231 = vunpack.c.l.b16 %v183
        %v232 = vunpack.c.h.b16 %v183
        %v233 = vunpack.c.l.b16 %v184
        %v234 = vunpack.c.h.b16 %v184
        %v235 = vunpack.c.l.b16 %v185
        %v236 = vunpack.c.h.b16 %v185
        %v237 = vunpack.c.l.b16 %v186
        %v238 = vunpack.c.h.b16 %v186
        %v239 = vunpack.c.l.b16 %v187
        %v240 = vunpack.c.h.b16 %v187
        %v241 = vunpack.c.l.b16 %v188
        %v242 = vunpack.c.h.b16 %v188
        %v243 = vunpack.c.l.b16 %v189
        %v244 = vunpack.c.h.b16 %v189
        %v245 = vpack.c.b16 %v215, %v213
        %v246 = vpack.c.b16 %v216, %v214
        %v247 = vpack.c.b16 %v219, %v217
        %v248 = vpack.c.b16 %v220, %v218
        %v249 = vpack.c.b16 %v223, %v221
        %v250 = vpack.c.b16 %v224, %v222
        %v251 = vpack.c.b16 %v227, %v225
        %v252 = vpack.c.b16 %v228, %v226
        %v253 = vpack.c.b16 %v231, %v229
        %v254 = vpack.c.b16 %v232, %v230
        %v255 = vpack.c.b16 %v235, %v233
        %v256 = vpack.c.b16 %v236, %v234
        %v257 = vpack.c.b16 %v239, %v237
        %v258 = vpack.c.b16 %v240, %v238
        %v259 = vpack.c.b16 %v243, %v241
        %v260 = vpack.c.b16 %v244, %v242
        %277 = vmatpush.bf16.msra.mxu0 %v259
        %278 = vmatpush.bf16.msra.mxu0 %v257
        %279 = vmatpush.bf16.msra.mxu0 %v255
        %280 = vmatpush.bf16.msra.mxu0 %v253
        %281 = vmatpush.bf16.msra.mxu0 %v251
        %282 = vmatpush.bf16.msra.mxu0 %v249
        %283 = vmatpush.bf16.msra.mxu0 %v247
        %284 = vmatpush.bf16.msra.mxu0 %v245
        %285 = vmatmul.bf16.gmra.mxu0 %v190
        %v286 = vpop.f32.mrf.mxu0
        %v287 = vadd.f32 %v193, %v286
        %v288 = vpop.f32.mrf.mxu0
        %v289 = vadd.f32 %v193, %v288
        %290 = vdwg.mxu0
        %291 = vmatpush.bf16.msra.mxu0 %v260
        %292 = vmatpush.bf16.msra.mxu0 %v258
        %293 = vmatpush.bf16.msra.mxu0 %v256
        %294 = vmatpush.bf16.msra.mxu0 %v254
        %295 = vmatpush.bf16.msra.mxu0 %v252
        %296 = vmatpush.bf16.msra.mxu0 %v250
        %297 = vmatpush.bf16.msra.mxu0 %v248
        %298 = vmatpush.bf16.msra.mxu0 %v246
        %299 = vmatmul.bf16.gmra.mxu0 %v190
        %v300 = vpop.f32.mrf.mxu0
        %v301 = vadd.f32 %v194, %v300
        %v302 = vpop.f32.mrf.mxu0
        %v303 = vadd.f32 %v194, %v302
        %304 = vdwg.mxu0
        %v305 = vmax.f32 %v287, %v301
        %306 = vmax.xlane.f32.xlu0 %v305
        %v307 = vpop.xlane.xlu0 %306
        %v308 = vmax.f32 %v289, %v303
        %309 = vmax.xlane.f32.xlu0 %v308
        %v310 = vpop.xlane.xlu0 %309
        %v311 = vsub.f32 %v287, %v307
        %v312 = vsub.f32 %v301, %v307
        %v313 = vsub.f32 %v289, %v310
        %v314 = vsub.f32 %v303, %v310
        %v315 = vmul.f32 %v311, 1.442695
        %v316 = vpow.pop %v315
        %v317 = vmul.f32 %v312, 1.442695
        %v318 = vpow.pop %v317
        %v319 = vmul.f32 %v313, 1.442695
        %v320 = vpow.pop %v319
        %v321 = vmul.f32 %v314, 1.442695
        %v322 = vpow.pop %v321
        %v323 = vadd.f32 %v316, %v318
        %324 = vadd.xlane.f32.xlu0 %v323
        %v325 = vpop.xlane.xlu0 %324
        %v326 = vadd.f32 %v320, %v322
        %327 = vadd.xlane.f32.xlu0 %v326
        %v328 = vpop.xlane.xlu0 %327
        %v329 = vlog2.pop %v325
        %v330 = vmul.f32 %v329, 0.6931472
        %v331 = vlog2.pop %v328
        %v332 = vmul.f32 %v331, 0.6931472
        %v333 = vsub.f32 %v311, %v330
        %v334 = vsub.f32 %v312, %v330
        %v335 = vsub.f32 %v313, %v332
        %v336 = vsub.f32 %v314, %v332
        %337 = vst [vmem:[%s164] sm:$0xff] %v333
        %338 = vst [vmem:[%s164 + $0x8] sm:$0xff] %v334
        %339 = vst [vmem:[%s164 + $0x10] sm:$0xff] %v335
        %340 = vst [vmem:[%s164 + $0x18] sm:$0xff] %v336
        %s341 = sand.u32 %s93, 1
        %s342 = scalar_lea.sflag [#allocation3], %s341
        %s343 = sand.u32 %s93, 1
        %s344 = smul.addr %s343, 32
        %s345 = scalar_lea.vmem [#allocation2], %s344
        // Predicated region
        $region33: #{_lambda_.5} parent=31 // pred_check
          %p346 = pneg %p103
        $region34: #{_lambda_.5} parent=31 // pred_check_branch
          %348 = sbr.rel (%p346) target = $region36
        $region35: #{_lambda_.5} parent=31 // pred_region
          %s349 = smul.u32 2, %s17
          %351 = vsyncadd %s342, 0
          %s352 = smul.addr %s349, 2
          %s353 = smul.addr %s352, 8
          %s354 = scalar_lea.hbm %s3, %s353
          %s355 = sshll.u32 %s345, 4
          %s356 = int_to_ptr.vmem [resolvable:$true] %s355
          %s357 = sshll.u32 %s354, 4
          %s358 = int_to_ptr.hbm [resolvable:$true] %s357
          %363 = dma.vmem_to_hbm [thread:$0]  %s356, 512, %s358, %s342, 256, 256, 16
        $region36: #{_lambda_.5} parent=31 // pred_fallthru
          _
      $region32: #{_lambda_.5} parent=5 // pred_fallthru
        _
      %p364 = scmp.le.s32.totalorder 2, %s12
      // Predicated region
      $region37: #{_lambda_.5} parent=5 // pred_check
        %p365 = pneg %p364
      $region38: #{_lambda_.5} parent=5 // pred_check_branch
        %367 = sbr.rel (%p365) target = $region40
      $region39: #{_lambda_.5} parent=5 // pred_region
        %s368 = ssub.s32 %s12, 2
        // Predicated region
        $region41: #{_lambda_.5} parent=39 // pred_check
          %p369 = pneg %p109
        $region42: #{_lambda_.5} parent=39 // pred_check_branch
          %371 = sbr.rel (%p369) target = $region44
        $region43: #{_lambda_.5} parent=39 // pred_region
          %s372 = sand.u32 %s94, 1
          %s373 = scalar_lea.sflag [#allocation3], %s372
          %s374 = sand.u32 %s94, 1
          %s375 = smul.addr %s374, 32
          %s376 = scalar_lea.vmem [#allocation2], %s375
          %378 = dma.done %s373, 512
        $region44: #{_lambda_.5} parent=39 // pred_fallthru
          _
      $region40: #{_lambda_.5} parent=5 // pred_fallthru
        _
    $region6: #{_lambda_.5} parent=1 // loop_footer
      %s16 = sadd.s32 1, %s12
    $region7: #{_lambda_.5} parent=1 // loop_footer_branch
      %11 = sbr.rel target = $region3
    $region8: #{_lambda_.5} parent=1 // loop_exit
      _
    %379 = vsyncpa [#allocation3], 1
    %s380 = scalar_lea.sflag [#allocation3], 1
    %381 = vsyncpa %s380, 1

// kernel: _lambda_.3
$region0: #{_lambda_.3}
  #allocation0 [shape = 'u32[]', space=smem, size = 0x4, offset = 0x4, fixed_abs, tag = 'smem constant byte address 0x4 - core index']
  #allocation1 [shape = 'u32[72,128]{1,0:T(1,128)}', space=vmem, size = 0x9000, scoped, tag = 'internal scratch']
  %s0 = inlined_call_operand.vmem [shape: bf16[4,8,128], index: 0, kind: input, shape index: {}]
  %s1 = inlined_call_operand.vmem [shape: f32[1,128], index: 1, kind: input, shape index: {}, may-alias: {1,7,13}]
  %s2 = inlined_call_operand.vmem [shape: f32[1,128], index: 2, kind: input, shape index: {}, may-alias: {2,6,8,12,14}]
  %s3 = inlined_call_operand.hbm [shape: bf16[128,384], index: 3, kind: input, shape index: {}]
  %s4 = inlined_call_operand.vmem [shape: f32[1,384], index: 4, kind: input, shape index: {}]
  %s5 = inlined_call_operand.hbm [shape: bf16[128,128], index: 5, kind: input, shape index: {}]
  %s6 = inlined_call_operand.vmem [shape: f32[1,128], index: 6, kind: input, shape index: {}, may-alias: {2,6,8,12,14}]
  %s7 = inlined_call_operand.vmem [shape: f32[1,128], index: 7, kind: input, shape index: {}, may-alias: {1,7,13}]
  %s8 = inlined_call_operand.vmem [shape: f32[1,128], index: 8, kind: input, shape index: {}, may-alias: {2,6,8,12,14}]
  %s9 = inlined_call_operand.hbm [shape: bf16[128,256], index: 9, kind: input, shape index: {}]
  %s10 = inlined_call_operand.vmem [shape: f32[1,256], index: 10, kind: input, shape index: {}]
  %s11 = inlined_call_operand.vmem [shape: bf16[256,128], index: 11, kind: input, shape index: {}]
  %s12 = inlined_call_operand.vmem [shape: f32[1,128], index: 12, kind: input, shape index: {}, may-alias: {2,6,8,12,14}]
  %s13 = inlined_call_operand.vmem [shape: f32[1,128], index: 13, kind: input, shape index: {}, may-alias: {1,7,13}]
  %s14 = inlined_call_operand.vmem [shape: f32[1,128], index: 14, kind: input, shape index: {}, may-alias: {2,6,8,12,14}]
  %s15 = inlined_call_operand.vmem [shape: bf16[4,8,128], index: 15, kind: output, shape index: {}]
  %s16 = sld [smem:[#allocation0]]
  $region105: #{_lambda_.3} parent=0
    _
  %s18 = ssub.s32 1, %s16
  %s19 = scalar_select 0, %s18, %s16
  $region1: #{_lambda_.3} parent=0
    #allocation2 [shape = 'u8[98304]{0}', space=vmem, size = 0x18000, scoped, tag = 'input window, operand 3, single buffered']
    #allocation3 [shape = 's32[2]{0}', space=sflag, size = 0x8, scoped, tag = 'scoped memory for _lambda_.3']
    #allocation4 [shape = 'u8[32768]{0}', space=vmem, size = 0x8000, scoped, tag = 'input window, operand 5, single buffered']
    #allocation5 [shape = 's32[1]{0}', space=sflag, size = 0x4, scoped, tag = 'scoped memory for _lambda_.3']
    #allocation6 [shape = 'u8[65536]{0}', space=vmem, size = 0x10000, scoped, tag = 'input window, operand 9, single buffered']
    %20 = vsyncpa [#allocation3], 0
    %21 = vsyncpa [#allocation5], 0
    loop: start=0, step=1, limit=4
    $region2: #{_lambda_.3} parent=1 // loop_pre_header
      _
    $region3: #{_lambda_.3} parent=1 // loop_header
      %s23 = sphi 0, %s27
      %p24 = scmp.ge.s32.totalorder %s23, 4
      %s33 = sphi 0, %s35
      %s36 = sphi 0, %s33
      %s37 = sphi 0, %s36
      %s53 = sphi 0, %s37
      %s57 = sphi 0, %s57
      %s59 = sphi 0, %s57
      %s60 = sphi 0, %s59
      %s74 = sphi 0, %s60
      %s78 = sphi 0, %s78
      %s80 = sphi 0, %s78
      %s81 = sphi 0, %s80
      %s95 = sphi 0, %s81
      %s99 = sphi 0, %s99
      %s101 = sphi 0, %s99
      %s102 = sphi 0, %s101
      %s116 = sphi 0, %s102
      %s120 = sphi 0, %s120
      %s122 = sphi 0, %s120
      %s123 = sphi 0, %s122
      %s137 = sphi 0, %s123
      %s141 = sphi 0, %s141
      %s143 = sphi 0, %s141
      %s144 = sphi 0, %s143
      %s158 = sphi 0, %s144
      %s162 = sphi 0, %s162
      %s164 = sphi 0, %s162
      %s165 = sphi 0, %s164
      %s179 = sphi 0, %s165
      %s183 = sphi 0, %s183
      %s185 = sphi 0, %s183
      %s186 = sphi 0, %s185
      %s200 = sphi 0, %s186
      %s204 = sphi 0, %s204
      %s206 = sphi 0, %s204
      %s207 = sphi 0, %s206
      %s221 = sphi 0, %s207
      %s225 = sphi 0, %s225
      %s227 = sphi 0, %s225
      %s228 = sphi 0, %s227
      %s242 = sphi 0, %s228
      %s246 = sphi 0, %s246
      %s248 = sphi 0, %s246
      %s249 = sphi 0, %s248
      %s263 = sphi 0, %s249
      %s267 = sphi 0, %s267
      %s269 = sphi 0, %s267
      %s270 = sphi 0, %s269
      %s284 = sphi 0, %s270
      %s288 = sphi 0, %s288
      %s290 = sphi 0, %s288
      %s291 = sphi 0, %s290
      %s305 = sphi 0, %s291
      %s309 = sphi 0, %s309
      %s311 = sphi 0, %s309
      %s312 = sphi 0, %s311
      %s326 = sphi 0, %s312
      %s330 = sphi 0, %s330
      %s332 = sphi 0, %s330
      %s333 = sphi 0, %s332
      %s347 = sphi 0, %s333
      %s353 = sphi 0, %s355
      %s356 = sphi 0, %s353
      %s357 = sphi 0, %s356
      %s373 = sphi 0, %s357
    $region4: #{_lambda_.3} parent=1 // loop_header_branch
      %26 = sbr.rel (%p24) target = $region8
    $region5: #{_lambda_.3} parent=1 // loop_body
      %s28 = ssub.s32 %s23, 1
      %s29 = ssub.s32 %s23, 2
      %s30 = sadd.s32 %s23, 1
      %s31 = ssub.s32 %s23, %s30
      %p32 = scmp.eq.s32.totalorder %s31, 0
      %s34 = sadd.s32 %s33, 1
      %s35 = scalar_select %p32, %s33, %s34
      %p38 = pneg %p32
      %p39 = scmp.eq.s32.totalorder %s23, 1
      %p40 = por %p38, %p39
      %p41 = scmp.ne.s32.totalorder %s33, %s36
      %p42 = scmp.eq.s32.totalorder %s23, 0
      %p43 = por %p41, %p42
      %p44 = scmp.ne.s32.totalorder %s33, %s36
      %p45 = scmp.eq.s32.totalorder %s28, 1
      %p46 = por %p44, %p45
      %p47 = scmp.ne.s32.totalorder %s36, %s37
      %p48 = scmp.eq.s32.totalorder %s28, 0
      %p49 = por %p47, %p48
      %p50 = scmp.ne.s32.totalorder %s36, %s37
      %p51 = scmp.eq.s32.totalorder %s29, 1
      %p52 = por %p50, %p51
      %p54 = scmp.ne.s32.totalorder %s37, %s53
      %p55 = scmp.eq.s32.totalorder %s29, 0
      %p56 = por %p54, %p55
      %s58 = sadd.s32 %s57, 1
      %p61 = scmp.eq.s32.totalorder %s23, 1
      %p62 = scmp.ne.s32.totalorder %s57, %s59
      %p63 = scmp.eq.s32.totalorder %s23, 0
      %p64 = por %p62, %p63
      %p65 = scmp.ne.s32.totalorder %s57, %s59
      %p66 = scmp.eq.s32.totalorder %s28, 1
      %p67 = por %p65, %p66
      %p68 = scmp.ne.s32.totalorder %s59, %s60
      %p69 = scmp.eq.s32.totalorder %s28, 0
      %p70 = por %p68, %p69
      %p71 = scmp.ne.s32.totalorder %s59, %s60
      %p72 = scmp.eq.s32.totalorder %s29, 1
      %p73 = por %p71, %p72
      %p75 = scmp.ne.s32.totalorder %s60, %s74
      %p76 = scmp.eq.s32.totalorder %s29, 0
      %p77 = por %p75, %p76
      %s79 = sadd.s32 %s78, 1
      %p82 = scmp.eq.s32.totalorder %s23, 1
      %p83 = scmp.ne.s32.totalorder %s78, %s80
      %p84 = scmp.eq.s32.totalorder %s23, 0
      %p85 = por %p83, %p84
      %p86 = scmp.ne.s32.totalorder %s78, %s80
      %p87 = scmp.eq.s32.totalorder %s28, 1
      %p88 = por %p86, %p87
      %p89 = scmp.ne.s32.totalorder %s80, %s81
      %p90 = scmp.eq.s32.totalorder %s28, 0
      %p91 = por %p89, %p90
      %p92 = scmp.ne.s32.totalorder %s80, %s81
      %p93 = scmp.eq.s32.totalorder %s29, 1
      %p94 = por %p92, %p93
      %p96 = scmp.ne.s32.totalorder %s81, %s95
      %p97 = scmp.eq.s32.totalorder %s29, 0
      %p98 = por %p96, %p97
      %s100 = sadd.s32 %s99, 1
      %p103 = scmp.eq.s32.totalorder %s23, 1
      %p104 = scmp.ne.s32.totalorder %s99, %s101
      %p105 = scmp.eq.s32.totalorder %s23, 0
      %p106 = por %p104, %p105
      %p107 = scmp.ne.s32.totalorder %s99, %s101
      %p108 = scmp.eq.s32.totalorder %s28, 1
      %p109 = por %p107, %p108
      %p110 = scmp.ne.s32.totalorder %s101, %s102
      %p111 = scmp.eq.s32.totalorder %s28, 0
      %p112 = por %p110, %p111
      %p113 = scmp.ne.s32.totalorder %s101, %s102
      %p114 = scmp.eq.s32.totalorder %s29, 1
      %p115 = por %p113, %p114
      %p117 = scmp.ne.s32.totalorder %s102, %s116
      %p118 = scmp.eq.s32.totalorder %s29, 0
      %p119 = por %p117, %p118
      %s121 = sadd.s32 %s120, 1
      %p124 = scmp.eq.s32.totalorder %s23, 1
      %p125 = scmp.ne.s32.totalorder %s120, %s122
      %p126 = scmp.eq.s32.totalorder %s23, 0
      %p127 = por %p125, %p126
      %p128 = scmp.ne.s32.totalorder %s120, %s122
      %p129 = scmp.eq.s32.totalorder %s28, 1
      %p130 = por %p128, %p129
      %p131 = scmp.ne.s32.totalorder %s122, %s123
      %p132 = scmp.eq.s32.totalorder %s28, 0
      %p133 = por %p131, %p132
      %p134 = scmp.ne.s32.totalorder %s122, %s123
      %p135 = scmp.eq.s32.totalorder %s29, 1
      %p136 = por %p134, %p135
      %p138 = scmp.ne.s32.totalorder %s123, %s137
      %p139 = scmp.eq.s32.totalorder %s29, 0
      %p140 = por %p138, %p139
      %s142 = sadd.s32 %s141, 1
      %p145 = scmp.eq.s32.totalorder %s23, 1
      %p146 = scmp.ne.s32.totalorder %s141, %s143
      %p147 = scmp.eq.s32.totalorder %s23, 0
      %p148 = por %p146, %p147
      %p149 = scmp.ne.s32.totalorder %s141, %s143
      %p150 = scmp.eq.s32.totalorder %s28, 1
      %p151 = por %p149, %p150
      %p152 = scmp.ne.s32.totalorder %s143, %s144
      %p153 = scmp.eq.s32.totalorder %s28, 0
      %p154 = por %p152, %p153
      %p155 = scmp.ne.s32.totalorder %s143, %s144
      %p156 = scmp.eq.s32.totalorder %s29, 1
      %p157 = por %p155, %p156
      %p159 = scmp.ne.s32.totalorder %s144, %s158
      %p160 = scmp.eq.s32.totalorder %s29, 0
      %p161 = por %p159, %p160
      %s163 = sadd.s32 %s162, 1
      %p166 = scmp.eq.s32.totalorder %s23, 1
      %p167 = scmp.ne.s32.totalorder %s162, %s164
      %p168 = scmp.eq.s32.totalorder %s23, 0
      %p169 = por %p167, %p168
      %p170 = scmp.ne.s32.totalorder %s162, %s164
      %p171 = scmp.eq.s32.totalorder %s28, 1
      %p172 = por %p170, %p171
      %p173 = scmp.ne.s32.totalorder %s164, %s165
      %p174 = scmp.eq.s32.totalorder %s28, 0
      %p175 = por %p173, %p174
      %p176 = scmp.ne.s32.totalorder %s164, %s165
      %p177 = scmp.eq.s32.totalorder %s29, 1
      %p178 = por %p176, %p177
      %p180 = scmp.ne.s32.totalorder %s165, %s179
      %p181 = scmp.eq.s32.totalorder %s29, 0
      %p182 = por %p180, %p181
      %s184 = sadd.s32 %s183, 1
      %p187 = scmp.eq.s32.totalorder %s23, 1
      %p188 = scmp.ne.s32.totalorder %s183, %s185
      %p189 = scmp.eq.s32.totalorder %s23, 0
      %p190 = por %p188, %p189
      %p191 = scmp.ne.s32.totalorder %s183, %s185
      %p192 = scmp.eq.s32.totalorder %s28, 1
      %p193 = por %p191, %p192
      %p194 = scmp.ne.s32.totalorder %s185, %s186
      %p195 = scmp.eq.s32.totalorder %s28, 0
      %p196 = por %p194, %p195
      %p197 = scmp.ne.s32.totalorder %s185, %s186
      %p198 = scmp.eq.s32.totalorder %s29, 1
      %p199 = por %p197, %p198
      %p201 = scmp.ne.s32.totalorder %s186, %s200
      %p202 = scmp.eq.s32.totalorder %s29, 0
      %p203 = por %p201, %p202
      %s205 = sadd.s32 %s204, 1
      %p208 = scmp.eq.s32.totalorder %s23, 1
      %p209 = scmp.ne.s32.totalorder %s204, %s206
      %p210 = scmp.eq.s32.totalorder %s23, 0
      %p211 = por %p209, %p210
      %p212 = scmp.ne.s32.totalorder %s204, %s206
      %p213 = scmp.eq.s32.totalorder %s28, 1
      %p214 = por %p212, %p213
      %p215 = scmp.ne.s32.totalorder %s206, %s207
      %p216 = scmp.eq.s32.totalorder %s28, 0
      %p217 = por %p215, %p216
      %p218 = scmp.ne.s32.totalorder %s206, %s207
      %p219 = scmp.eq.s32.totalorder %s29, 1
      %p220 = por %p218, %p219
      %p222 = scmp.ne.s32.totalorder %s207, %s221
      %p223 = scmp.eq.s32.totalorder %s29, 0
      %p224 = por %p222, %p223
      %s226 = sadd.s32 %s225, 1
      %p229 = scmp.eq.s32.totalorder %s23, 1
      %p230 = scmp.ne.s32.totalorder %s225, %s227
      %p231 = scmp.eq.s32.totalorder %s23, 0
      %p232 = por %p230, %p231
      %p233 = scmp.ne.s32.totalorder %s225, %s227
      %p234 = scmp.eq.s32.totalorder %s28, 1
      %p235 = por %p233, %p234
      %p236 = scmp.ne.s32.totalorder %s227, %s228
      %p237 = scmp.eq.s32.totalorder %s28, 0
      %p238 = por %p236, %p237
      %p239 = scmp.ne.s32.totalorder %s227, %s228
      %p240 = scmp.eq.s32.totalorder %s29, 1
      %p241 = por %p239, %p240
      %p243 = scmp.ne.s32.totalorder %s228, %s242
      %p244 = scmp.eq.s32.totalorder %s29, 0
      %p245 = por %p243, %p244
      %s247 = sadd.s32 %s246, 1
      %p250 = scmp.eq.s32.totalorder %s23, 1
      %p251 = scmp.ne.s32.totalorder %s246, %s248
      %p252 = scmp.eq.s32.totalorder %s23, 0
      %p253 = por %p251, %p252
      %p254 = scmp.ne.s32.totalorder %s246, %s248
      %p255 = scmp.eq.s32.totalorder %s28, 1
      %p256 = por %p254, %p255
      %p257 = scmp.ne.s32.totalorder %s248, %s249
      %p258 = scmp.eq.s32.totalorder %s28, 0
      %p259 = por %p257, %p258
      %p260 = scmp.ne.s32.totalorder %s248, %s249
      %p261 = scmp.eq.s32.totalorder %s29, 1
      %p262 = por %p260, %p261
      %p264 = scmp.ne.s32.totalorder %s249, %s263
      %p265 = scmp.eq.s32.totalorder %s29, 0
      %p266 = por %p264, %p265
      %s268 = sadd.s32 %s267, 1
      %p271 = scmp.eq.s32.totalorder %s23, 1
      %p272 = scmp.ne.s32.totalorder %s267, %s269
      %p273 = scmp.eq.s32.totalorder %s23, 0
      %p274 = por %p272, %p273
      %p275 = scmp.ne.s32.totalorder %s267, %s269
      %p276 = scmp.eq.s32.totalorder %s28, 1
      %p277 = por %p275, %p276
      %p278 = scmp.ne.s32.totalorder %s269, %s270
      %p279 = scmp.eq.s32.totalorder %s28, 0
      %p280 = por %p278, %p279
      %p281 = scmp.ne.s32.totalorder %s269, %s270
      %p282 = scmp.eq.s32.totalorder %s29, 1
      %p283 = por %p281, %p282
      %p285 = scmp.ne.s32.totalorder %s270, %s284
      %p286 = scmp.eq.s32.totalorder %s29, 0
      %p287 = por %p285, %p286
      %s289 = sadd.s32 %s288, 1
      %p292 = scmp.eq.s32.totalorder %s23, 1
      %p293 = scmp.ne.s32.totalorder %s288, %s290
      %p294 = scmp.eq.s32.totalorder %s23, 0
      %p295 = por %p293, %p294
      %p296 = scmp.ne.s32.totalorder %s288, %s290
      %p297 = scmp.eq.s32.totalorder %s28, 1
      %p298 = por %p296, %p297
      %p299 = scmp.ne.s32.totalorder %s290, %s291
      %p300 = scmp.eq.s32.totalorder %s28, 0
      %p301 = por %p299, %p300
      %p302 = scmp.ne.s32.totalorder %s290, %s291
      %p303 = scmp.eq.s32.totalorder %s29, 1
      %p304 = por %p302, %p303
      %p306 = scmp.ne.s32.totalorder %s291, %s305
      %p307 = scmp.eq.s32.totalorder %s29, 0
      %p308 = por %p306, %p307
      %s310 = sadd.s32 %s309, 1
      %p313 = scmp.eq.s32.totalorder %s23, 1
      %p314 = scmp.ne.s32.totalorder %s309, %s311
      %p315 = scmp.eq.s32.totalorder %s23, 0
      %p316 = por %p314, %p315
      %p317 = scmp.ne.s32.totalorder %s309, %s311
      %p318 = scmp.eq.s32.totalorder %s28, 1
      %p319 = por %p317, %p318
      %p320 = scmp.ne.s32.totalorder %s311, %s312
      %p321 = scmp.eq.s32.totalorder %s28, 0
      %p322 = por %p320, %p321
      %p323 = scmp.ne.s32.totalorder %s311, %s312
      %p324 = scmp.eq.s32.totalorder %s29, 1
      %p325 = por %p323, %p324
      %p327 = scmp.ne.s32.totalorder %s312, %s326
      %p328 = scmp.eq.s32.totalorder %s29, 0
      %p329 = por %p327, %p328
      %s331 = sadd.s32 %s330, 1
      %p334 = scmp.eq.s32.totalorder %s23, 1
      %p335 = scmp.ne.s32.totalorder %s330, %s332
      %p336 = scmp.eq.s32.totalorder %s23, 0
      %p337 = por %p335, %p336
      %p338 = scmp.ne.s32.totalorder %s330, %s332
      %p339 = scmp.eq.s32.totalorder %s28, 1
      %p340 = por %p338, %p339
      %p341 = scmp.ne.s32.totalorder %s332, %s333
      %p342 = scmp.eq.s32.totalorder %s28, 0
      %p343 = por %p341, %p342
      %p344 = scmp.ne.s32.totalorder %s332, %s333
      %p345 = scmp.eq.s32.totalorder %s29, 1
      %p346 = por %p344, %p345
      %p348 = scmp.ne.s32.totalorder %s333, %s347
      %p349 = scmp.eq.s32.totalorder %s29, 0
      %p350 = por %p348, %p349
      %s351 = ssub.s32 %s23, %s30
      %p352 = scmp.eq.s32.totalorder %s351, 0
      %s354 = sadd.s32 %s353, 1
      %s355 = scalar_select %p352, %s353, %s354
      %p358 = pneg %p352
      %p359 = scmp.eq.s32.totalorder %s23, 1
      %p360 = por %p358, %p359
      %p361 = scmp.ne.s32.totalorder %s353, %s356
      %p362 = scmp.eq.s32.totalorder %s23, 0
      %p363 = por %p361, %p362
      %p364 = scmp.ne.s32.totalorder %s353, %s356
      %p365 = scmp.eq.s32.totalorder %s28, 1
      %p366 = por %p364, %p365
      %p367 = scmp.ne.s32.totalorder %s356, %s357
      %p368 = scmp.eq.s32.totalorder %s28, 0
      %p369 = por %p367, %p368
      %p370 = scmp.ne.s32.totalorder %s356, %s357
      %p371 = scmp.eq.s32.totalorder %s29, 1
      %p372 = por %p370, %p371
      %p374 = scmp.ne.s32.totalorder %s357, %s373
      %p375 = scmp.eq.s32.totalorder %s29, 0
      %p376 = por %p374, %p375
      %p377 = scmp.le.s32.totalorder 1, %s23
      %p378 = scmp.lt.s32.totalorder %s23, 3
      %p379 = pnand %p377, %p378
      %p380 = pneg %p379
      // Predicated region
      $region9: #{_lambda_.3} parent=5 // pred_check
        _
      $region10: #{_lambda_.3} parent=5 // pred_check_branch
        %382 = sbr.rel (%p379) target = $region12
      $region11: #{_lambda_.3} parent=5 // pred_region
        %s383 = ssub.s32 %s23, 1
        // Predicated region
        $region13: #{_lambda_.3} parent=11 // pred_check
          %p384 = pneg %p70
        $region14: #{_lambda_.3} parent=11 // pred_check_branch
          %386 = sbr.rel (%p384) target = $region16
        $region15: #{_lambda_.3} parent=11 // pred_region
          _
        $region16: #{_lambda_.3} parent=11 // pred_fallthru
          _
        // Predicated region
        $region17: #{_lambda_.3} parent=11 // pred_check
          %p387 = pneg %p91
        $region18: #{_lambda_.3} parent=11 // pred_check_branch
          %389 = sbr.rel (%p387) target = $region20
        $region19: #{_lambda_.3} parent=11 // pred_region
          _
        $region20: #{_lambda_.3} parent=11 // pred_fallthru
          _
        // Predicated region
        $region21: #{_lambda_.3} parent=11 // pred_check
          %p390 = pneg %p112
        $region22: #{_lambda_.3} parent=11 // pred_check_branch
          %392 = sbr.rel (%p390) target = $region24
        $region23: #{_lambda_.3} parent=11 // pred_region
          %394 = vsyncadd [#allocation3], 0
          %s395 = sshll.u32 %s3, 4
          %s396 = int_to_ptr.hbm [resolvable:$true] %s395
          %s397 = sshll.u32 [#allocation2], 4
          %s398 = int_to_ptr.vmem [resolvable:$true] %s397
          %403 = dma.hbm_to_vmem [thread:$0]  %s396, 3072, %s398, [#allocation3], 192, 192, 12
        $region24: #{_lambda_.3} parent=11 // pred_fallthru
          _
        // Predicated region
        $region25: #{_lambda_.3} parent=11 // pred_check
          %p404 = pneg %p133
        $region26: #{_lambda_.3} parent=11 // pred_check_branch
          %406 = sbr.rel (%p404) target = $region28
        $region27: #{_lambda_.3} parent=11 // pred_region
          _
        $region28: #{_lambda_.3} parent=11 // pred_fallthru
          _
        // Predicated region
        $region29: #{_lambda_.3} parent=11 // pred_check
          %p407 = pneg %p154
        $region30: #{_lambda_.3} parent=11 // pred_check_branch
          %409 = sbr.rel (%p407) target = $region32
        $region31: #{_lambda_.3} parent=11 // pred_region
          %411 = vsyncadd [#allocation5], 0
          %s412 = sshll.u32 %s5, 4
          %s413 = int_to_ptr.hbm [resolvable:$true] %s412
          %s414 = sshll.u32 [#allocation4], 4
          %s415 = int_to_ptr.vmem [resolvable:$true] %s414
          %420 = dma.hbm_to_vmem [thread:$0]  %s413, 1024, %s415, [#allocation5], 64, 64, 4
        $region32: #{_lambda_.3} parent=11 // pred_fallthru
          _
        // Predicated region
        $region33: #{_lambda_.3} parent=11 // pred_check
          %p421 = pneg %p175
        $region34: #{_lambda_.3} parent=11 // pred_check_branch
          %423 = sbr.rel (%p421) target = $region36
        $region35: #{_lambda_.3} parent=11 // pred_region
          _
        $region36: #{_lambda_.3} parent=11 // pred_fallthru
          _
        // Predicated region
        $region37: #{_lambda_.3} parent=11 // pred_check
          %p424 = pneg %p196
        $region38: #{_lambda_.3} parent=11 // pred_check_branch
          %426 = sbr.rel (%p424) target = $region40
        $region39: #{_lambda_.3} parent=11 // pred_region
          _
        $region40: #{_lambda_.3} parent=11 // pred_fallthru
          _
        // Predicated region
        $region41: #{_lambda_.3} parent=11 // pred_check
          %p427 = pneg %p217
        $region42: #{_lambda_.3} parent=11 // pred_check_branch
          %429 = sbr.rel (%p427) target = $region44
        $region43: #{_lambda_.3} parent=11 // pred_region
          _
        $region44: #{_lambda_.3} parent=11 // pred_fallthru
          _
        // Predicated region
        $region45: #{_lambda_.3} parent=11 // pred_check
          %p430 = pneg %p238
        $region46: #{_lambda_.3} parent=11 // pred_check_branch
          %432 = sbr.rel (%p430) target = $region48
        $region47: #{_lambda_.3} parent=11 // pred_region
          %434 = vsyncadd [#allocation5], 0
          %s435 = sshll.u32 %s9, 4
          %s436 = int_to_ptr.hbm [resolvable:$true] %s435
          %s437 = sshll.u32 [#allocation6], 4
          %s438 = int_to_ptr.vmem [resolvable:$true] %s437
          %443 = dma.hbm_to_vmem [thread:$0]  %s436, 2048, %s438, [#allocation5], 128, 128, 8
        $region48: #{_lambda_.3} parent=11 // pred_fallthru
          _
        // Predicated region
        $region49: #{_lambda_.3} parent=11 // pred_check
          %p444 = pneg %p259
        $region50: #{_lambda_.3} parent=11 // pred_check_branch
          %446 = sbr.rel (%p444) target = $region52
        $region51: #{_lambda_.3} parent=11 // pred_region
          _
        $region52: #{_lambda_.3} parent=11 // pred_fallthru
          _
        // Predicated region
        $region53: #{_lambda_.3} parent=11 // pred_check
          %p447 = pneg %p280
        $region54: #{_lambda_.3} parent=11 // pred_check_branch
          %449 = sbr.rel (%p447) target = $region56
        $region55: #{_lambda_.3} parent=11 // pred_region
          _
        $region56: #{_lambda_.3} parent=11 // pred_fallthru
          _
        // Predicated region
        $region57: #{_lambda_.3} parent=11 // pred_check
          %p450 = pneg %p301
        $region58: #{_lambda_.3} parent=11 // pred_check_branch
          %452 = sbr.rel (%p450) target = $region60
        $region59: #{_lambda_.3} parent=11 // pred_region
          _
        $region60: #{_lambda_.3} parent=11 // pred_fallthru
          _
        // Predicated region
        $region61: #{_lambda_.3} parent=11 // pred_check
          %p453 = pneg %p322
        $region62: #{_lambda_.3} parent=11 // pred_check_branch
          %455 = sbr.rel (%p453) target = $region64
        $region63: #{_lambda_.3} parent=11 // pred_region
          _
        $region64: #{_lambda_.3} parent=11 // pred_fallthru
          _
        // Predicated region
        $region65: #{_lambda_.3} parent=11 // pred_check
          %p456 = pneg %p343
        $region66: #{_lambda_.3} parent=11 // pred_check_branch
          %458 = sbr.rel (%p456) target = $region68
        $region67: #{_lambda_.3} parent=11 // pred_region
          _
        $region68: #{_lambda_.3} parent=11 // pred_fallthru
          _
      $region12: #{_lambda_.3} parent=5 // pred_fallthru
        _
      %p459 = scmp.lt.s32.totalorder %s23, 2
      // Predicated region
      $region69: #{_lambda_.3} parent=5 // pred_check
        %p460 = pneg %p459
      $region70: #{_lambda_.3} parent=5 // pred_check_branch
        %462 = sbr.rel (%p460) target = $region72
      $region71: #{_lambda_.3} parent=5 // pred_region
        // Predicated region
        $region73: #{_lambda_.3} parent=71 // pred_check
          %p463 = pneg %p43
        $region74: #{_lambda_.3} parent=71 // pred_check_branch
          %465 = sbr.rel (%p463) target = $region76
        $region75: #{_lambda_.3} parent=71 // pred_region
          %s466 = smul.u32 2, %s23
          %p467 = scmp.lt.s32.totalorder %s466, 3
          %s468 = scalar_select %p467, %s466, 3
          %s469 = smul.addr %s468, 4
          %s470 = scalar_lea.vmem %s0, %s469
          %s471 = smul.u32 2, %s23
        $region76: #{_lambda_.3} parent=71 // pred_fallthru
          _
      $region72: #{_lambda_.3} parent=5 // pred_fallthru
        _
      %p472 = scmp.le.s32.totalorder 1, %s23
      %p473 = scmp.lt.s32.totalorder %s23, 3
      %p474 = pnand %p472, %p473
      %p475 = pneg %p474
      // Predicated region
      $region77: #{_lambda_.3} parent=5 // pred_check
        _
      $region78: #{_lambda_.3} parent=5 // pred_check_branch
        %477 = sbr.rel (%p474) target = $region80
      $region79: #{_lambda_.3} parent=5 // pred_region
        %s478 = ssub.s32 %s23, 1
        // Predicated region
        $region81: #{_lambda_.3} parent=79 // pred_check
          %p479 = pneg %p112
        $region82: #{_lambda_.3} parent=79 // pred_check_branch
          %481 = sbr.rel (%p479) target = $region84
        $region83: #{_lambda_.3} parent=79 // pred_region
          %483 = dma.done [#allocation3], 3072
        $region84: #{_lambda_.3} parent=79 // pred_fallthru
          _
        // Predicated region
        $region85: #{_lambda_.3} parent=79 // pred_check
          %p484 = pneg %p154
        $region86: #{_lambda_.3} parent=79 // pred_check_branch
          %486 = sbr.rel (%p484) target = $region88
        $region87: #{_lambda_.3} parent=79 // pred_region
          %488 = dma.done [#allocation5], 1024
        $region88: #{_lambda_.3} parent=79 // pred_fallthru
          _
        // Predicated region
        $region89: #{_lambda_.3} parent=79 // pred_check
          %p489 = pneg %p238
        $region90: #{_lambda_.3} parent=79 // pred_check_branch
          %491 = sbr.rel (%p489) target = $region92
        $region91: #{_lambda_.3} parent=79 // pred_region
          %493 = dma.done [#allocation5], 2048
        $region92: #{_lambda_.3} parent=79 // pred_fallthru
          _
        %s494 = smul.u32 2, %s28
        %p495 = scmp.lt.s32.totalorder %s494, 3
        %s496 = scalar_select %p495, %s494, 3
        %s497 = smul.addr %s496, 4
        %s498 = scalar_lea.vmem %s0, %s497
        %p499 = pneg %p49
        %p500 = pneg %p46
        %p501 = pneg %p70
        %p502 = pneg %p67
        %p503 = pneg %p91
        %p504 = pneg %p88
        %p505 = pneg %p112
        %p506 = pneg %p109
        %p507 = pneg %p133
        %p508 = pneg %p130
        %p509 = pneg %p154
        %p510 = pneg %p151
        %p511 = pneg %p175
        %p512 = pneg %p172
        %p513 = pneg %p196
        %p514 = pneg %p193
        %p515 = pneg %p217
        %p516 = pneg %p214
        %p517 = pneg %p238
        %p518 = pneg %p235
        %p519 = pneg %p259
        %p520 = pneg %p256
        %p521 = pneg %p280
        %p522 = pneg %p277
        %p523 = pneg %p301
        %p524 = pneg %p298
        %p525 = pneg %p322
        %p526 = pneg %p319
        %p527 = pneg %p343
        %p528 = pneg %p340
        %p529 = pneg %p369
        %p530 = pneg %p366
        %s531 = smul.u32 2, %s28
        %p532 = scmp.lt.s32.totalorder %s531, 3
        %s533 = scalar_select %p532, %s531, 3
        %s534 = smul.addr %s533, 4
        %s535 = scalar_lea.vmem %s15, %s534
        %s536 = smul.u32 2, %s28
        %p537 = scmp.lt.s32.totalorder %s536, 3
        %s538 = scalar_select %p537, %s536, 3
        %s539 = smul.addr %s538, 4
        %s540 = scalar_lea.vmem %s0, %s539
        %s541 = smul.u32 2, %s28
        %s542 = smul.u32 2, %s28
        %p543 = scmp.lt.s32.totalorder %s542, 3
        %s544 = scalar_select %p543, %s542, 3
        %s545 = smul.addr %s544, 4
        %s546 = scalar_lea.vmem %s15, %s545
        %s547 = smul.u32 2, %s28
        %v549 = vld [vmem:[%s540] sm:$0xf]
        %v550 = vld [vmem:[%s540 + $0x4] sm:$0xf]
        %v551 = vunpack.c.l.bf16 %v549
        %v552 = vunpack.c.l.bf16 %v550
        %v553 = vld [vmem:[%s1] sm:$0x1]
        %v554 = vld [vmem:[%s2] sm:$0x1]
        %555 = vadd.xlane.f32.xlu0 %v551
        %v556 = vpop.xlane.xlu0 %555
        %557 = vadd.xlane.f32.xlu0 %v552
        %v558 = vpop.xlane.xlu0 %557
        %v559 = vrcp.pop 128.0
        %v560 = vmul.f32 128.0, %v559
        %v561 = vsub.f32 1.0, %v560
        %v562 = vmul.f32 %v559, %v561
        %v563 = vadd.f32 %v559, %v562
        %vm564 = vweird.f32 %v559
        %v565 = vsel %vm564, %v559, %v563
        %v566 = vmul.f32 %v556, %v565
        %v567 = vmul.f32 %v558, %v565
        %v568 = vsub.f32 %v551, %v566
        %v569 = vsub.f32 %v552, %v567
        %v570 = vmul.f32 %v568, %v568
        %v571 = vmul.f32 %v569, %v569
        %572 = vadd.xlane.f32.xlu0 %v570
        %v573 = vpop.xlane.xlu0 %572
        %574 = vadd.xlane.f32.xlu0 %v571
        %v575 = vpop.xlane.xlu0 %574
        %v576 = vmul.f32 %v573, %v565
        %v577 = vmul.f32 %v575, %v565
        %v578 = vadd.f32 %v576, 1e-05
        %v579 = vadd.f32 %v577, 1e-05
        %v580 = vrsqrt.pop %v578
        %v581 = vmul.f32 %v580, %v578
        %v582 = vmul.f32 %v581, %v580
        %v583 = vmul.f32 0.5, %v582
        %v584 = vsub.f32 1.5, %v583
        %v585 = vmul.f32 %v580, %v584
        %vm586 = vweird.f32 %v578
        %vm587 = vweird.f32 %v580
        %vm588 = vmor %vm586, %vm587
        %v589 = vsel %vm588, %v580, %v585
        %v590 = vrsqrt.pop %v579
        %v591 = vmul.f32 %v590, %v579
        %v592 = vmul.f32 %v591, %v590
        %v593 = vmul.f32 0.5, %v592
        %v594 = vsub.f32 1.5, %v593
        %v595 = vmul.f32 %v590, %v594
        %vm596 = vweird.f32 %v579
        %vm597 = vweird.f32 %v590
        %vm598 = vmor %vm596, %vm597
        %v599 = vsel %vm598, %v590, %v595
        %v600 = vmul.f32 %v568, %v589
        %v601 = vmul.f32 %v569, %v599
        %v603 = vperm.slane %v553, 0
        %v605 = vmul.f32 %v600, %v603
        %v606 = vmul.f32 %v601, %v603
        %v608 = vperm.slane %v554, 0
        %v610 = vadd.f32 %v605, %v608
        %v611 = vadd.f32 %v606, %v608
        %v612 = vld [vmem:[#allocation2] sm:$0xff]
        %v613 = vld [vmem:[#allocation2 + $0x8] sm:$0xf]
        %v614 = vld [vmem:[#allocation2 + $0xc] sm:$0xff]
        %v615 = vld [vmem:[#allocation2 + $0x14] sm:$0xf]
        %v616 = vld [vmem:[#allocation2 + $0x18] sm:$0xff]
        %v617 = vld [vmem:[#allocation2 + $0x20] sm:$0xf]
        %v618 = vld [vmem:[#allocation2 + $0x24] sm:$0xff]
        %v619 = vld [vmem:[#allocation2 + $0x2c] sm:$0xf]
        %v620 = vld [vmem:[#allocation2 + $0x30] sm:$0xff]
        %v621 = vld [vmem:[#allocation2 + $0x38] sm:$0xf]
        %v622 = vld [vmem:[#allocation2 + $0x3c] sm:$0xff]
        %v623 = vld [vmem:[#allocation2 + $0x44] sm:$0xf]
        %v624 = vld [vmem:[#allocation2 + $0x48] sm:$0xff]
        %v625 = vld [vmem:[#allocation2 + $0x50] sm:$0xf]
        %v626 = vld [vmem:[#allocation2 + $0x54] sm:$0xff]
        %v627 = vld [vmem:[#allocation2 + $0x5c] sm:$0xf]
        %v628 = vld [vmem:[#allocation2 + $0x60] sm:$0xff]
        %v629 = vld [vmem:[#allocation2 + $0x68] sm:$0xf]
        %v630 = vld [vmem:[#allocation2 + $0x6c] sm:$0xff]
        %v631 = vld [vmem:[#allocation2 + $0x74] sm:$0xf]
        %v632 = vld [vmem:[#allocation2 + $0x78] sm:$0xff]
        %v633 = vld [vmem:[#allocation2 + $0x80] sm:$0xf]
        %v634 = vld [vmem:[#allocation2 + $0x84] sm:$0xff]
        %v635 = vld [vmem:[#allocation2 + $0x8c] sm:$0xf]
        %v636 = vld [vmem:[#allocation2 + $0x90] sm:$0xff]
        %v637 = vld [vmem:[#allocation2 + $0x98] sm:$0xf]
        %v638 = vld [vmem:[#allocation2 + $0x9c] sm:$0xff]
        %v639 = vld [vmem:[#allocation2 + $0xa4] sm:$0xf]
        %v640 = vld [vmem:[#allocation2 + $0xa8] sm:$0xff]
        %v641 = vld [vmem:[#allocation2 + $0xb0] sm:$0xf]
        %v642 = vld [vmem:[#allocation2 + $0xb4] sm:$0xff]
        %v643 = vld [vmem:[#allocation2 + $0xbc] sm:$0xf]
        %v644 = vld [vmem:[%s4] sm:$0x7]
        %v645 = vld [vmem:[#allocation4] sm:$0xf]
        %v646 = vld [vmem:[#allocation4 + $0x4] sm:$0xf]
        %v647 = vld [vmem:[#allocation4 + $0x8] sm:$0xf]
        %v648 = vld [vmem:[#allocation4 + $0xc] sm:$0xf]
        %v649 = vld [vmem:[#allocation4 + $0x10] sm:$0xf]
        %v650 = vld [vmem:[#allocation4 + $0x14] sm:$0xf]
        %v651 = vld [vmem:[#allocation4 + $0x18] sm:$0xf]
        %v652 = vld [vmem:[#allocation4 + $0x1c] sm:$0xf]
        %v653 = vld [vmem:[#allocation4 + $0x20] sm:$0xf]
        %v654 = vld [vmem:[#allocation4 + $0x24] sm:$0xf]
        %v655 = vld [vmem:[#allocation4 + $0x28] sm:$0xf]
        %v656 = vld [vmem:[#allocation4 + $0x2c] sm:$0xf]
        %v657 = vld [vmem:[#allocation4 + $0x30] sm:$0xf]
        %v658 = vld [vmem:[#allocation4 + $0x34] sm:$0xf]
        %v659 = vld [vmem:[#allocation4 + $0x38] sm:$0xf]
        %v660 = vld [vmem:[#allocation4 + $0x3c] sm:$0xf]
        %v661 = vld [vmem:[%s6] sm:$0x1]
        %v662 = vpack.c.bf16 %v611, %v610
        %v664 = vperm.slane %v644, 0
        %v665 = vperm.slane %v644, 1
        %v666 = vperm.slane %v644, 2
        %v702 = vunpack.c.l.b16 %v612
        %v703 = vunpack.c.h.b16 %v612
        %v704 = vunpack.c.l.b16 %v613
        %v705 = vunpack.c.l.b16 %v614
        %v706 = vunpack.c.h.b16 %v614
        %v707 = vunpack.c.l.b16 %v615
        %v708 = vunpack.c.l.b16 %v616
        %v709 = vunpack.c.h.b16 %v616
        %v710 = vunpack.c.l.b16 %v617
        %v711 = vunpack.c.l.b16 %v618
        %v712 = vunpack.c.h.b16 %v618
        %v713 = vunpack.c.l.b16 %v619
        %v714 = vunpack.c.l.b16 %v620
        %v715 = vunpack.c.h.b16 %v620
        %v716 = vunpack.c.l.b16 %v621
        %v717 = vunpack.c.l.b16 %v622
        %v718 = vunpack.c.h.b16 %v622
        %v719 = vunpack.c.l.b16 %v623
        %v720 = vunpack.c.l.b16 %v624
        %v721 = vunpack.c.h.b16 %v624
        %v722 = vunpack.c.l.b16 %v625
        %v723 = vunpack.c.l.b16 %v626
        %v724 = vunpack.c.h.b16 %v626
        %v725 = vunpack.c.l.b16 %v627
        %v726 = vunpack.c.l.b16 %v628
        %v727 = vunpack.c.h.b16 %v628
        %v728 = vunpack.c.l.b16 %v629
        %v729 = vunpack.c.l.b16 %v630
        %v730 = vunpack.c.h.b16 %v630
        %v731 = vunpack.c.l.b16 %v631
        %v732 = vunpack.c.l.b16 %v632
        %v733 = vunpack.c.h.b16 %v632
        %v734 = vunpack.c.l.b16 %v633
        %v735 = vunpack.c.l.b16 %v634
        %v736 = vunpack.c.h.b16 %v634
        %v737 = vunpack.c.l.b16 %v635
        %v738 = vunpack.c.l.b16 %v636
        %v739 = vunpack.c.h.b16 %v636
        %v740 = vunpack.c.l.b16 %v637
        %v741 = vunpack.c.l.b16 %v638
        %v742 = vunpack.c.h.b16 %v638
        %v743 = vunpack.c.l.b16 %v639
        %v744 = vunpack.c.l.b16 %v640
        %v745 = vunpack.c.h.b16 %v640
        %v746 = vunpack.c.l.b16 %v641
        %v747 = vunpack.c.l.b16 %v642
        %v748 = vunpack.c.h.b16 %v642
        %v749 = vunpack.c.l.b16 %v643
        %v750 = vpack.c.b16 %v705, %v702
        %v751 = vpack.c.b16 %v706, %v703
        %v752 = vpack.c.b16 %v707, %v704
        %v753 = vpack.c.b16 %v711, %v708
        %v754 = vpack.c.b16 %v712, %v709
        %v755 = vpack.c.b16 %v713, %v710
        %v756 = vpack.c.b16 %v717, %v714
        %v757 = vpack.c.b16 %v718, %v715
        %v758 = vpack.c.b16 %v719, %v716
        %v759 = vpack.c.b16 %v723, %v720
        %v760 = vpack.c.b16 %v724, %v721
        %v761 = vpack.c.b16 %v725, %v722
        %v762 = vpack.c.b16 %v729, %v726
        %v763 = vpack.c.b16 %v730, %v727
        %v764 = vpack.c.b16 %v731, %v728
        %v765 = vpack.c.b16 %v735, %v732
        %v766 = vpack.c.b16 %v736, %v733
        %v767 = vpack.c.b16 %v737, %v734
        %v768 = vpack.c.b16 %v741, %v738
        %v769 = vpack.c.b16 %v742, %v739
        %v770 = vpack.c.b16 %v743, %v740
        %v771 = vpack.c.b16 %v747, %v744
        %v772 = vpack.c.b16 %v748, %v745
        %v773 = vpack.c.b16 %v749, %v746
        %798 = vmatpush.bf16.msra.mxu0 %v771
        %799 = vmatpush.bf16.msra.mxu0 %v768
        %800 = vmatpush.bf16.msra.mxu0 %v765
        %801 = vmatpush.bf16.msra.mxu0 %v762
        %802 = vmatpush.bf16.msra.mxu0 %v759
        %803 = vmatpush.bf16.msra.mxu0 %v756
        %804 = vmatpush.bf16.msra.mxu0 %v753
        %805 = vmatpush.bf16.msra.mxu0 %v750
        %806 = vmatmul.bf16.gmra.mxu0 %v662
        %v807 = vpop.f32.mrf.mxu0
        %v808 = vadd.f32 %v664, %v807
        %v809 = vpop.f32.mrf.mxu0
        %v810 = vadd.f32 %v664, %v809
        %811 = vdwg.mxu0
        %812 = vmatpush.bf16.msra.mxu0 %v772
        %813 = vmatpush.bf16.msra.mxu0 %v769
        %814 = vmatpush.bf16.msra.mxu0 %v766
        %815 = vmatpush.bf16.msra.mxu0 %v763
        %816 = vmatpush.bf16.msra.mxu0 %v760
        %817 = vmatpush.bf16.msra.mxu0 %v757
        %818 = vmatpush.bf16.msra.mxu0 %v754
        %819 = vmatpush.bf16.msra.mxu0 %v751
        %820 = vmatmul.bf16.gmra.mxu0 %v662
        %v821 = vpop.f32.mrf.mxu0
        %v822 = vadd.f32 %v665, %v821
        %v823 = vpop.f32.mrf.mxu0
        %v824 = vadd.f32 %v665, %v823
        %825 = vdwg.mxu0
        %826 = vmatpush.bf16.msra.mxu0 %v773
        %827 = vmatpush.bf16.msra.mxu0 %v770
        %828 = vmatpush.bf16.msra.mxu0 %v767
        %829 = vmatpush.bf16.msra.mxu0 %v764
        %830 = vmatpush.bf16.msra.mxu0 %v761
        %831 = vmatpush.bf16.msra.mxu0 %v758
        %832 = vmatpush.bf16.msra.mxu0 %v755
        %833 = vmatpush.bf16.msra.mxu0 %v752
        %834 = vmatmul.bf16.gmra.mxu0 %v662
        %v835 = vpop.f32.mrf.mxu0
        %v836 = vadd.f32 %v666, %v835
        %v837 = vpop.f32.mrf.mxu0
        %v838 = vadd.f32 %v666, %v837
        %839 = vdwg.mxu0
        %v840 = vpack.c.bf16 %v808, %v808
        %v841 = vpack.c.bf16 %v810, %v810
        %v842 = vpack.c.bf16 %v822, %v822
        %v843 = vpack.c.bf16 %v824, %v824
        %v844 = vpack.c.bf16 %v836, %v836
        %v845 = vpack.c.bf16 %v838, %v838
        %vm846 = vcmask 130048
        %v848 = vsel %vm846, %v840, 0
        %v851 = vsel %vm846, %v842, 0
        %853 = vmatpush.bf16.xpose.msra.mxu0 0
        %854 = vmatpush.bf16.xpose.msra.mxu0 0
        %855 = vmatpush.bf16.xpose.msra.mxu0 0
        %856 = vmatpush.bf16.xpose.msra.mxu0 0
        %857 = vmatpush.bf16.xpose.msra.mxu0 0
        %858 = vmatpush.bf16.xpose.msra.mxu0 0
        %859 = vmatpush.bf16.xpose.msra.mxu0 0
        %860 = vmatpush.bf16.xpose.msra.mxu0 %v851
        %861 = vmatmul.bf16.gmra.mxu0 %v848
        %v862 = vpop.f32.mrf.mxu0
        %v863 = vadd.f32 0.0, %v862
        %v864 = vpop.f32.mrf.mxu0
        %865 = vdwg.mxu0
        %v867 = vsel %vm846, %v841, 0
        %v870 = vsel %vm846, %v843, 0
        %872 = vmatpush.bf16.xpose.msra.mxu0 0
        %873 = vmatpush.bf16.xpose.msra.mxu0 0
        %874 = vmatpush.bf16.xpose.msra.mxu0 0
        %875 = vmatpush.bf16.xpose.msra.mxu0 0
        %876 = vmatpush.bf16.xpose.msra.mxu0 0
        %877 = vmatpush.bf16.xpose.msra.mxu0 0
        %878 = vmatpush.bf16.xpose.msra.mxu0 0
        %879 = vmatpush.bf16.xpose.msra.mxu0 %v870
        %880 = vmatmul.bf16.gmra.mxu0 %v867
        %v881 = vpop.f32.mrf.mxu0
        %v882 = vadd.f32 0.0, %v881
        %v883 = vpop.f32.mrf.mxu0
        %884 = vdwg.mxu0
        %v885 = vmul.f32 %v863, 0.25
        %v886 = vmul.f32 %v882, 0.25
        %vm887 = vcmask 64512
        %v888 = vsel %vm887, %v885, -inf
        %889 = vmax.xlane.f32.xlu0 %v888
        %v890 = vpop.xlane.xlu0 %889
        %v891 = vsel %vm887, %v886, -inf
        %892 = vmax.xlane.f32.xlu0 %v891
        %v893 = vpop.xlane.xlu0 %892
        %v894 = vsub.f32 %v885, %v890
        %v895 = vsub.f32 %v886, %v893
        %v896 = vmul.f32 %v894, 1.442695
        %v897 = vpow.pop %v896
        %v898 = vmul.f32 %v895, 1.442695
        %v899 = vpow.pop %v898
        %v900 = vsel %vm887, %v897, 0.0
        %901 = vadd.xlane.f32.xlu0 %v900
        %v902 = vpop.xlane.xlu0 %901
        %v903 = vsel %vm887, %v899, 0.0
        %904 = vadd.xlane.f32.xlu0 %v903
        %v905 = vpop.xlane.xlu0 %904
        %v906 = vrcp.pop %v902
        %v907 = vrcp.pop %v905
        %v908 = vmul.f32 %v897, %v906
        %v909 = vmul.f32 %v899, %v907
        %v910 = vpack.c.bf16 %v908, %v908
        %v911 = vpack.c.bf16 %v909, %v909
        %v913 = vsel %vm887, %v910, 0
        %vm915 = vcmask 1043456
        %v917 = vsel %vm915, %v844, 0
        %919 = vmatpush.bf16.msra.mxu0 0
        %920 = vmatpush.bf16.msra.mxu0 0
        %921 = vmatpush.bf16.msra.mxu0 0
        %922 = vmatpush.bf16.msra.mxu0 0
        %923 = vmatpush.bf16.msra.mxu0 0
        %924 = vmatpush.bf16.msra.mxu0 0
        %925 = vmatpush.bf16.msra.mxu0 0
        %926 = vmatpush.bf16.msra.mxu0 %v917
        %927 = vmatmul.bf16.gmra.mxu0 %v913
        %v928 = vpop.f32.mrf.mxu0
        %v929 = vadd.f32 0.0, %v928
        %v930 = vpop.f32.mrf.mxu0
        %931 = vdwg.mxu0
        %v933 = vsel %vm887, %v911, 0
        %v936 = vsel %vm915, %v845, 0
        %938 = vmatpush.bf16.msra.mxu0 0
        %939 = vmatpush.bf16.msra.mxu0 0
        %940 = vmatpush.bf16.msra.mxu0 0
        %941 = vmatpush.bf16.msra.mxu0 0
        %942 = vmatpush.bf16.msra.mxu0 0
        %943 = vmatpush.bf16.msra.mxu0 0
        %944 = vmatpush.bf16.msra.mxu0 0
        %945 = vmatpush.bf16.msra.mxu0 %v936
        %946 = vmatmul.bf16.gmra.mxu0 %v933
        %v947 = vpop.f32.mrf.mxu0
        %v948 = vadd.f32 0.0, %v947
        %v949 = vpop.f32.mrf.mxu0
        %950 = vdwg.mxu0
        %v952 = vunpack.c.l.b16 %v840
        %v953 = vpack.c.b16 %v952, %v952
        %954 = vrot.lane.b32.xlu0 %v953, 112
        %v955 = vpop.permute.xlu0 %954
        %v957 = vunpack.c.l.b16 %v842
        %v958 = vpack.c.b16 %v957, %v957
        %959 = vrot.lane.b32.xlu0 %v958, 112
        %v960 = vpop.permute.xlu0 %959
        %v962 = vsel %vm846, %v955, 0
        %v965 = vsel %vm846, %v960, 0
        %967 = vmatpush.bf16.xpose.msra.mxu0 0
        %968 = vmatpush.bf16.xpose.msra.mxu0 0
        %969 = vmatpush.bf16.xpose.msra.mxu0 0
        %970 = vmatpush.bf16.xpose.msra.mxu0 0
        %971 = vmatpush.bf16.xpose.msra.mxu0 0
        %972 = vmatpush.bf16.xpose.msra.mxu0 0
        %973 = vmatpush.bf16.xpose.msra.mxu0 0
        %974 = vmatpush.bf16.xpose.msra.mxu0 %v965
        %975 = vmatmul.bf16.gmra.mxu0 %v962
        %v976 = vpop.f32.mrf.mxu0
        %v977 = vadd.f32 0.0, %v976
        %v978 = vpop.f32.mrf.mxu0
        %979 = vdwg.mxu0
        %v981 = vunpack.c.l.b16 %v841
        %v982 = vpack.c.b16 %v981, %v981
        %983 = vrot.lane.b32.xlu0 %v982, 112
        %v984 = vpop.permute.xlu0 %983
        %v986 = vunpack.c.l.b16 %v843
        %v987 = vpack.c.b16 %v986, %v986
        %988 = vrot.lane.b32.xlu0 %v987, 112
        %v989 = vpop.permute.xlu0 %988
        %v991 = vsel %vm846, %v984, 0
        %v994 = vsel %vm846, %v989, 0
        %996 = vmatpush.bf16.xpose.msra.mxu0 0
        %997 = vmatpush.bf16.xpose.msra.mxu0 0
        %998 = vmatpush.bf16.xpose.msra.mxu0 0
        %999 = vmatpush.bf16.xpose.msra.mxu0 0
        %1000 = vmatpush.bf16.xpose.msra.mxu0 0
        %1001 = vmatpush.bf16.xpose.msra.mxu0 0
        %1002 = vmatpush.bf16.xpose.msra.mxu0 0
        %1003 = vmatpush.bf16.xpose.msra.mxu0 %v994
        %1004 = vmatmul.bf16.gmra.mxu0 %v991
        %v1005 = vpop.f32.mrf.mxu0
        %v1006 = vadd.f32 0.0, %v1005
        %v1007 = vpop.f32.mrf.mxu0
        %1008 = vdwg.mxu0
        %v1009 = vmul.f32 %v977, 0.25
        %v1010 = vmul.f32 %v1006, 0.25
        %v1011 = vsel %vm887, %v1009, -inf
        %1012 = vmax.xlane.f32.xlu0 %v1011
        %v1013 = vpop.xlane.xlu0 %1012
        %v1014 = vsel %vm887, %v1010, -inf
        %1015 = vmax.xlane.f32.xlu0 %v1014
        %v1016 = vpop.xlane.xlu0 %1015
        %v1017 = vsub.f32 %v1009, %v1013
        %v1018 = vsub.f32 %v1010, %v1016
        %v1019 = vmul.f32 %v1017, 1.442695
        %v1020 = vpow.pop %v1019
        %v1021 = vmul.f32 %v1018, 1.442695
        %v1022 = vpow.pop %v1021
        %v1023 = vsel %vm887, %v1020, 0.0
        %1024 = vadd.xlane.f32.xlu0 %v1023
        %v1025 = vpop.xlane.xlu0 %1024
        %v1026 = vsel %vm887, %v1022, 0.0
        %1027 = vadd.xlane.f32.xlu0 %v1026
        %v1028 = vpop.xlane.xlu0 %1027
        %v1029 = vrcp.pop %v1025
        %v1030 = vrcp.pop %v1028
        %v1031 = vmul.f32 %v1020, %v1029
        %v1032 = vmul.f32 %v1022, %v1030
        %v1033 = vpack.c.bf16 %v1031, %v1031
        %v1034 = vpack.c.bf16 %v1032, %v1032
        %v1036 = vunpack.c.l.b16 %v844
        %v1037 = vpack.c.b16 %v1036, %v1036
        %1038 = vrot.lane.b32.xlu0 %v1037, 112
        %v1039 = vpop.permute.xlu0 %1038
        %v1041 = vsel %vm887, %v1033, 0
        %v1044 = vsel %vm915, %v1039, 0
        %1046 = vmatpush.bf16.msra.mxu0 0
        %1047 = vmatpush.bf16.msra.mxu0 0
        %1048 = vmatpush.bf16.msra.mxu0 0
        %1049 = vmatpush.bf16.msra.mxu0 0
        %1050 = vmatpush.bf16.msra.mxu0 0
        %1051 = vmatpush.bf16.msra.mxu0 0
        %1052 = vmatpush.bf16.msra.mxu0 0
        %1053 = vmatpush.bf16.msra.mxu0 %v1044
        %1054 = vmatmul.bf16.gmra.mxu0 %v1041
        %v1055 = vpop.f32.mrf.mxu0
        %v1056 = vadd.f32 0.0, %v1055
        %v1057 = vpop.f32.mrf.mxu0
        %1058 = vdwg.mxu0
        %v1060 = vunpack.c.l.b16 %v845
        %v1061 = vpack.c.b16 %v1060, %v1060
        %1062 = vrot.lane.b32.xlu0 %v1061, 112
        %v1063 = vpop.permute.xlu0 %1062
        %v1065 = vsel %vm887, %v1034, 0
        %v1068 = vsel %vm915, %v1063, 0
        %1070 = vmatpush.bf16.msra.mxu0 0
        %1071 = vmatpush.bf16.msra.mxu0 0
        %1072 = vmatpush.bf16.msra.mxu0 0
        %1073 = vmatpush.bf16.msra.mxu0 0
        %1074 = vmatpush.bf16.msra.mxu0 0
        %1075 = vmatpush.bf16.msra.mxu0 0
        %1076 = vmatpush.bf16.msra.mxu0 0
        %1077 = vmatpush.bf16.msra.mxu0 %v1068
        %1078 = vmatmul.bf16.gmra.mxu0 %v1065
        %v1079 = vpop.f32.mrf.mxu0
        %v1080 = vadd.f32 0.0, %v1079
        %v1081 = vpop.f32.mrf.mxu0
        %1082 = vdwg.mxu0
        %1083 = vrot.lane.b32.xlu0 %v953, 96
        %v1084 = vpop.permute.xlu0 %1083
        %1085 = vrot.lane.b32.xlu0 %v958, 96
        %v1086 = vpop.permute.xlu0 %1085
        %v1088 = vsel %vm846, %v1084, 0
        %v1091 = vsel %vm846, %v1086, 0
        %1093 = vmatpush.bf16.xpose.msra.mxu0 0
        %1094 = vmatpush.bf16.xpose.msra.mxu0 0
        %1095 = vmatpush.bf16.xpose.msra.mxu0 0
        %1096 = vmatpush.bf16.xpose.msra.mxu0 0
        %1097 = vmatpush.bf16.xpose.msra.mxu0 0
        %1098 = vmatpush.bf16.xpose.msra.mxu0 0
        %1099 = vmatpush.bf16.xpose.msra.mxu0 0
        %1100 = vmatpush.bf16.xpose.msra.mxu0 %v1091
        %1101 = vmatmul.bf16.gmra.mxu0 %v1088
        %v1102 = vpop.f32.mrf.mxu0
        %v1103 = vadd.f32 0.0, %v1102
        %v1104 = vpop.f32.mrf.mxu0
        %1105 = vdwg.mxu0
        %1106 = vrot.lane.b32.xlu0 %v982, 96
        %v1107 = vpop.permute.xlu0 %1106
        %1108 = vrot.lane.b32.xlu0 %v987, 96
        %v1109 = vpop.permute.xlu0 %1108
        %v1111 = vsel %vm846, %v1107, 0
        %v1114 = vsel %vm846, %v1109, 0
        %1116 = vmatpush.bf16.xpose.msra.mxu0 0
        %1117 = vmatpush.bf16.xpose.msra.mxu0 0
        %1118 = vmatpush.bf16.xpose.msra.mxu0 0
        %1119 = vmatpush.bf16.xpose.msra.mxu0 0
        %1120 = vmatpush.bf16.xpose.msra.mxu0 0
        %1121 = vmatpush.bf16.xpose.msra.mxu0 0
        %1122 = vmatpush.bf16.xpose.msra.mxu0 0
        %1123 = vmatpush.bf16.xpose.msra.mxu0 %v1114
        %1124 = vmatmul.bf16.gmra.mxu0 %v1111
        %v1125 = vpop.f32.mrf.mxu0
        %v1126 = vadd.f32 0.0, %v1125
        %v1127 = vpop.f32.mrf.mxu0
        %1128 = vdwg.mxu0
        %v1129 = vmul.f32 %v1103, 0.25
        %v1130 = vmul.f32 %v1126, 0.25
        %v1131 = vsel %vm887, %v1129, -inf
        %1132 = vmax.xlane.f32.xlu0 %v1131
        %v1133 = vpop.xlane.xlu0 %1132
        %v1134 = vsel %vm887, %v1130, -inf
        %1135 = vmax.xlane.f32.xlu0 %v1134
        %v1136 = vpop.xlane.xlu0 %1135
        %v1137 = vsub.f32 %v1129, %v1133
        %v1138 = vsub.f32 %v1130, %v1136
        %v1139 = vmul.f32 %v1137, 1.442695
        %v1140 = vpow.pop %v1139
        %v1141 = vmul.f32 %v1138, 1.442695
        %v1142 = vpow.pop %v1141
        %v1143 = vsel %vm887, %v1140, 0.0
        %1144 = vadd.xlane.f32.xlu0 %v1143
        %v1145 = vpop.xlane.xlu0 %1144
        %v1146 = vsel %vm887, %v1142, 0.0
        %1147 = vadd.xlane.f32.xlu0 %v1146
        %v1148 = vpop.xlane.xlu0 %1147
        %v1149 = vrcp.pop %v1145
        %v1150 = vrcp.pop %v1148
        %v1151 = vmul.f32 %v1140, %v1149
        %v1152 = vmul.f32 %v1142, %v1150
        %v1153 = vpack.c.bf16 %v1151, %v1151
        %v1154 = vpack.c.bf16 %v1152, %v1152
        %1155 = vrot.lane.b32.xlu0 %v1037, 96
        %v1156 = vpop.permute.xlu0 %1155
        %v1158 = vsel %vm887, %v1153, 0
        %v1161 = vsel %vm915, %v1156, 0
        %1163 = vmatpush.bf16.msra.mxu0 0
        %1164 = vmatpush.bf16.msra.mxu0 0
        %1165 = vmatpush.bf16.msra.mxu0 0
        %1166 = vmatpush.bf16.msra.mxu0 0
        %1167 = vmatpush.bf16.msra.mxu0 0
        %1168 = vmatpush.bf16.msra.mxu0 0
        %1169 = vmatpush.bf16.msra.mxu0 0
        %1170 = vmatpush.bf16.msra.mxu0 %v1161
        %1171 = vmatmul.bf16.gmra.mxu0 %v1158
        %v1172 = vpop.f32.mrf.mxu0
        %v1173 = vadd.f32 0.0, %v1172
        %v1174 = vpop.f32.mrf.mxu0
        %1175 = vdwg.mxu0
        %1176 = vrot.lane.b32.xlu0 %v1061, 96
        %v1177 = vpop.permute.xlu0 %1176
        %v1179 = vsel %vm887, %v1154, 0
        %v1182 = vsel %vm915, %v1177, 0
        %1184 = vmatpush.bf16.msra.mxu0 0
        %1185 = vmatpush.bf16.msra.mxu0 0
        %1186 = vmatpush.bf16.msra.mxu0 0
        %1187 = vmatpush.bf16.msra.mxu0 0
        %1188 = vmatpush.bf16.msra.mxu0 0
        %1189 = vmatpush.bf16.msra.mxu0 0
        %1190 = vmatpush.bf16.msra.mxu0 0
        %1191 = vmatpush.bf16.msra.mxu0 %v1182
        %1192 = vmatmul.bf16.gmra.mxu0 %v1179
        %v1193 = vpop.f32.mrf.mxu0
        %v1194 = vadd.f32 0.0, %v1193
        %v1195 = vpop.f32.mrf.mxu0
        %1196 = vdwg.mxu0
        %1197 = vrot.lane.b32.xlu0 %v953, 80
        %v1198 = vpop.permute.xlu0 %1197
        %1199 = vrot.lane.b32.xlu0 %v958, 80
        %v1200 = vpop.permute.xlu0 %1199
        %v1202 = vsel %vm846, %v1198, 0
        %v1205 = vsel %vm846, %v1200, 0
        %1207 = vmatpush.bf16.xpose.msra.mxu0 0
        %1208 = vmatpush.bf16.xpose.msra.mxu0 0
        %1209 = vmatpush.bf16.xpose.msra.mxu0 0
        %1210 = vmatpush.bf16.xpose.msra.mxu0 0
        %1211 = vmatpush.bf16.xpose.msra.mxu0 0
        %1212 = vmatpush.bf16.xpose.msra.mxu0 0
        %1213 = vmatpush.bf16.xpose.msra.mxu0 0
        %1214 = vmatpush.bf16.xpose.msra.mxu0 %v1205
        %1215 = vmatmul.bf16.gmra.mxu0 %v1202
        %v1216 = vpop.f32.mrf.mxu0
        %v1217 = vadd.f32 0.0, %v1216
        %v1218 = vpop.f32.mrf.mxu0
        %1219 = vdwg.mxu0
        %1220 = vrot.lane.b32.xlu0 %v982, 80
        %v1221 = vpop.permute.xlu0 %1220
        %1222 = vrot.lane.b32.xlu0 %v987, 80
        %v1223 = vpop.permute.xlu0 %1222
        %v1225 = vsel %vm846, %v1221, 0
        %v1228 = vsel %vm846, %v1223, 0
        %1230 = vmatpush.bf16.xpose.msra.mxu0 0
        %1231 = vmatpush.bf16.xpose.msra.mxu0 0
        %1232 = vmatpush.bf16.xpose.msra.mxu0 0
        %1233 = vmatpush.bf16.xpose.msra.mxu0 0
        %1234 = vmatpush.bf16.xpose.msra.mxu0 0
        %1235 = vmatpush.bf16.xpose.msra.mxu0 0
        %1236 = vmatpush.bf16.xpose.msra.mxu0 0
        %1237 = vmatpush.bf16.xpose.msra.mxu0 %v1228
        %1238 = vmatmul.bf16.gmra.mxu0 %v1225
        %v1239 = vpop.f32.mrf.mxu0
        %v1240 = vadd.f32 0.0, %v1239
        %v1241 = vpop.f32.mrf.mxu0
        %1242 = vdwg.mxu0
        %v1243 = vmul.f32 %v1217, 0.25
        %v1244 = vmul.f32 %v1240, 0.25
        %v1245 = vsel %vm887, %v1243, -inf
        %1246 = vmax.xlane.f32.xlu0 %v1245
        %v1247 = vpop.xlane.xlu0 %1246
        %v1248 = vsel %vm887, %v1244, -inf
        %1249 = vmax.xlane.f32.xlu0 %v1248
        %v1250 = vpop.xlane.xlu0 %1249
        %v1251 = vsub.f32 %v1243, %v1247
        %v1252 = vsub.f32 %v1244, %v1250
        %v1253 = vmul.f32 %v1251, 1.442695
        %v1254 = vpow.pop %v1253
        %v1255 = vmul.f32 %v1252, 1.442695
        %v1256 = vpow.pop %v1255
        %v1257 = vsel %vm887, %v1254, 0.0
        %1258 = vadd.xlane.f32.xlu0 %v1257
        %v1259 = vpop.xlane.xlu0 %1258
        %v1260 = vsel %vm887, %v1256, 0.0
        %1261 = vadd.xlane.f32.xlu0 %v1260
        %v1262 = vpop.xlane.xlu0 %1261
        %v1263 = vrcp.pop %v1259
        %v1264 = vrcp.pop %v1262
        %v1265 = vmul.f32 %v1254, %v1263
        %v1266 = vmul.f32 %v1256, %v1264
        %v1267 = vpack.c.bf16 %v1265, %v1265
        %v1268 = vpack.c.bf16 %v1266, %v1266
        %1269 = vrot.lane.b32.xlu0 %v1037, 80
        %v1270 = vpop.permute.xlu0 %1269
        %v1272 = vsel %vm887, %v1267, 0
        %v1275 = vsel %vm915, %v1270, 0
        %1277 = vmatpush.bf16.msra.mxu0 0
        %1278 = vmatpush.bf16.msra.mxu0 0
        %1279 = vmatpush.bf16.msra.mxu0 0
        %1280 = vmatpush.bf16.msra.mxu0 0
        %1281 = vmatpush.bf16.msra.mxu0 0
        %1282 = vmatpush.bf16.msra.mxu0 0
        %1283 = vmatpush.bf16.msra.mxu0 0
        %1284 = vmatpush.bf16.msra.mxu0 %v1275
        %1285 = vmatmul.bf16.gmra.mxu0 %v1272
        %v1286 = vpop.f32.mrf.mxu0
        %v1287 = vadd.f32 0.0, %v1286
        %v1288 = vpop.f32.mrf.mxu0
        %1289 = vdwg.mxu0
        %1290 = vrot.lane.b32.xlu0 %v1061, 80
        %v1291 = vpop.permute.xlu0 %1290
        %v1293 = vsel %vm887, %v1268, 0
        %v1296 = vsel %vm915, %v1291, 0
        %1298 = vmatpush.bf16.msra.mxu0 0
        %1299 = vmatpush.bf16.msra.mxu0 0
        %1300 = vmatpush.bf16.msra.mxu0 0
        %1301 = vmatpush.bf16.msra.mxu0 0
        %1302 = vmatpush.bf16.msra.mxu0 0
        %1303 = vmatpush.bf16.msra.mxu0 0
        %1304 = vmatpush.bf16.msra.mxu0 0
        %1305 = vmatpush.bf16.msra.mxu0 %v1296
        %1306 = vmatmul.bf16.gmra.mxu0 %v1293
        %v1307 = vpop.f32.mrf.mxu0
        %v1308 = vadd.f32 0.0, %v1307
        %v1309 = vpop.f32.mrf.mxu0
        %1310 = vdwg.mxu0
        %1311 = vrot.lane.b32.xlu0 %v953, 64
        %v1312 = vpop.permute.xlu0 %1311
        %1313 = vrot.lane.b32.xlu0 %v958, 64
        %v1314 = vpop.permute.xlu0 %1313
        %v1316 = vsel %vm846, %v1312, 0
        %v1319 = vsel %vm846, %v1314, 0
        %1321 = vmatpush.bf16.xpose.msra.mxu0 0
        %1322 = vmatpush.bf16.xpose.msra.mxu0 0
        %1323 = vmatpush.bf16.xpose.msra.mxu0 0
        %1324 = vmatpush.bf16.xpose.msra.mxu0 0
        %1325 = vmatpush.bf16.xpose.msra.mxu0 0
        %1326 = vmatpush.bf16.xpose.msra.mxu0 0
        %1327 = vmatpush.bf16.xpose.msra.mxu0 0
        %1328 = vmatpush.bf16.xpose.msra.mxu0 %v1319
        %1329 = vmatmul.bf16.gmra.mxu0 %v1316
        %v1330 = vpop.f32.mrf.mxu0
        %v1331 = vadd.f32 0.0, %v1330
        %v1332 = vpop.f32.mrf.mxu0
        %1333 = vdwg.mxu0
        %1334 = vrot.lane.b32.xlu0 %v982, 64
        %v1335 = vpop.permute.xlu0 %1334
        %1336 = vrot.lane.b32.xlu0 %v987, 64
        %v1337 = vpop.permute.xlu0 %1336
        %v1339 = vsel %vm846, %v1335, 0
        %v1342 = vsel %vm846, %v1337, 0
        %1344 = vmatpush.bf16.xpose.msra.mxu0 0
        %1345 = vmatpush.bf16.xpose.msra.mxu0 0
        %1346 = vmatpush.bf16.xpose.msra.mxu0 0
        %1347 = vmatpush.bf16.xpose.msra.mxu0 0
        %1348 = vmatpush.bf16.xpose.msra.mxu0 0
        %1349 = vmatpush.bf16.xpose.msra.mxu0 0
        %1350 = vmatpush.bf16.xpose.msra.mxu0 0
        %1351 = vmatpush.bf16.xpose.msra.mxu0 %v1342
        %1352 = vmatmul.bf16.gmra.mxu0 %v1339
        %v1353 = vpop.f32.mrf.mxu0
        %v1354 = vadd.f32 0.0, %v1353
        %v1355 = vpop.f32.mrf.mxu0
        %1356 = vdwg.mxu0
        %v1357 = vmul.f32 %v1331, 0.25
        %v1358 = vmul.f32 %v1354, 0.25
        %v1359 = vsel %vm887, %v1357, -inf
        %1360 = vmax.xlane.f32.xlu0 %v1359
        %v1361 = vpop.xlane.xlu0 %1360
        %v1362 = vsel %vm887, %v1358, -inf
        %1363 = vmax.xlane.f32.xlu0 %v1362
        %v1364 = vpop.xlane.xlu0 %1363
        %v1365 = vsub.f32 %v1357, %v1361
        %v1366 = vsub.f32 %v1358, %v1364
        %v1367 = vmul.f32 %v1365, 1.442695
        %v1368 = vpow.pop %v1367
        %v1369 = vmul.f32 %v1366, 1.442695
        %v1370 = vpow.pop %v1369
        %v1371 = vsel %vm887, %v1368, 0.0
        %1372 = vadd.xlane.f32.xlu0 %v1371
        %v1373 = vpop.xlane.xlu0 %1372
        %v1374 = vsel %vm887, %v1370, 0.0
        %1375 = vadd.xlane.f32.xlu0 %v1374
        %v1376 = vpop.xlane.xlu0 %1375
        %v1377 = vrcp.pop %v1373
        %v1378 = vrcp.pop %v1376
        %v1379 = vmul.f32 %v1368, %v1377
        %v1380 = vmul.f32 %v1370, %v1378
        %v1381 = vpack.c.bf16 %v1379, %v1379
        %v1382 = vpack.c.bf16 %v1380, %v1380
        %1383 = vrot.lane.b32.xlu0 %v1037, 64
        %v1384 = vpop.permute.xlu0 %1383
        %v1386 = vsel %vm887, %v1381, 0
        %v1389 = vsel %vm915, %v1384, 0
        %1391 = vmatpush.bf16.msra.mxu0 0
        %1392 = vmatpush.bf16.msra.mxu0 0
        %1393 = vmatpush.bf16.msra.mxu0 0
        %1394 = vmatpush.bf16.msra.mxu0 0
        %1395 = vmatpush.bf16.msra.mxu0 0
        %1396 = vmatpush.bf16.msra.mxu0 0
        %1397 = vmatpush.bf16.msra.mxu0 0
        %1398 = vmatpush.bf16.msra.mxu0 %v1389
        %1399 = vmatmul.bf16.gmra.mxu0 %v1386
        %v1400 = vpop.f32.mrf.mxu0
        %v1401 = vadd.f32 0.0, %v1400
        %v1402 = vpop.f32.mrf.mxu0
        %1403 = vdwg.mxu0
        %1404 = vrot.lane.b32.xlu0 %v1061, 64
        %v1405 = vpop.permute.xlu0 %1404
        %v1407 = vsel %vm887, %v1382, 0
        %v1410 = vsel %vm915, %v1405, 0
        %1412 = vmatpush.bf16.msra.mxu0 0
        %1413 = vmatpush.bf16.msra.mxu0 0
        %1414 = vmatpush.bf16.msra.mxu0 0
        %1415 = vmatpush.bf16.msra.mxu0 0
        %1416 = vmatpush.bf16.msra.mxu0 0
        %1417 = vmatpush.bf16.msra.mxu0 0
        %1418 = vmatpush.bf16.msra.mxu0 0
        %1419 = vmatpush.bf16.msra.mxu0 %v1410
        %1420 = vmatmul.bf16.gmra.mxu0 %v1407
        %v1421 = vpop.f32.mrf.mxu0
        %v1422 = vadd.f32 0.0, %v1421
        %v1423 = vpop.f32.mrf.mxu0
        %1424 = vdwg.mxu0
        %1425 = vrot.lane.b32.xlu0 %v953, 48
        %v1426 = vpop.permute.xlu0 %1425
        %1427 = vrot.lane.b32.xlu0 %v958, 48
        %v1428 = vpop.permute.xlu0 %1427
        %v1430 = vsel %vm846, %v1426, 0
        %v1433 = vsel %vm846, %v1428, 0
        %1435 = vmatpush.bf16.xpose.msra.mxu0 0
        %1436 = vmatpush.bf16.xpose.msra.mxu0 0
        %1437 = vmatpush.bf16.xpose.msra.mxu0 0
        %1438 = vmatpush.bf16.xpose.msra.mxu0 0
        %1439 = vmatpush.bf16.xpose.msra.mxu0 0
        %1440 = vmatpush.bf16.xpose.msra.mxu0 0
        %1441 = vmatpush.bf16.xpose.msra.mxu0 0
        %1442 = vmatpush.bf16.xpose.msra.mxu0 %v1433
        %1443 = vmatmul.bf16.gmra.mxu0 %v1430
        %v1444 = vpop.f32.mrf.mxu0
        %v1445 = vadd.f32 0.0, %v1444
        %v1446 = vpop.f32.mrf.mxu0
        %1447 = vdwg.mxu0
        %1448 = vrot.lane.b32.xlu0 %v982, 48
        %v1449 = vpop.permute.xlu0 %1448
        %1450 = vrot.lane.b32.xlu0 %v987, 48
        %v1451 = vpop.permute.xlu0 %1450
        %v1453 = vsel %vm846, %v1449, 0
        %v1456 = vsel %vm846, %v1451, 0
        %1458 = vmatpush.bf16.xpose.msra.mxu0 0
        %1459 = vmatpush.bf16.xpose.msra.mxu0 0
        %1460 = vmatpush.bf16.xpose.msra.mxu0 0
        %1461 = vmatpush.bf16.xpose.msra.mxu0 0
        %1462 = vmatpush.bf16.xpose.msra.mxu0 0
        %1463 = vmatpush.bf16.xpose.msra.mxu0 0
        %1464 = vmatpush.bf16.xpose.msra.mxu0 0
        %1465 = vmatpush.bf16.xpose.msra.mxu0 %v1456
        %1466 = vmatmul.bf16.gmra.mxu0 %v1453
        %v1467 = vpop.f32.mrf.mxu0
        %v1468 = vadd.f32 0.0, %v1467
        %v1469 = vpop.f32.mrf.mxu0
        %1470 = vdwg.mxu0
        %v1471 = vmul.f32 %v1445, 0.25
        %v1472 = vmul.f32 %v1468, 0.25
        %v1473 = vsel %vm887, %v1471, -inf
        %1474 = vmax.xlane.f32.xlu0 %v1473
        %v1475 = vpop.xlane.xlu0 %1474
        %v1476 = vsel %vm887, %v1472, -inf
        %1477 = vmax.xlane.f32.xlu0 %v1476
        %v1478 = vpop.xlane.xlu0 %1477
        %v1479 = vsub.f32 %v1471, %v1475
        %v1480 = vsub.f32 %v1472, %v1478
        %v1481 = vmul.f32 %v1479, 1.442695
        %v1482 = vpow.pop %v1481
        %v1483 = vmul.f32 %v1480, 1.442695
        %v1484 = vpow.pop %v1483
        %v1485 = vsel %vm887, %v1482, 0.0
        %1486 = vadd.xlane.f32.xlu0 %v1485
        %v1487 = vpop.xlane.xlu0 %1486
        %v1488 = vsel %vm887, %v1484, 0.0
        %1489 = vadd.xlane.f32.xlu0 %v1488
        %v1490 = vpop.xlane.xlu0 %1489
        %v1491 = vrcp.pop %v1487
        %v1492 = vrcp.pop %v1490
        %v1493 = vmul.f32 %v1482, %v1491
        %v1494 = vmul.f32 %v1484, %v1492
        %v1495 = vpack.c.bf16 %v1493, %v1493
        %v1496 = vpack.c.bf16 %v1494, %v1494
        %1497 = vrot.lane.b32.xlu0 %v1037, 48
        %v1498 = vpop.permute.xlu0 %1497
        %v1500 = vsel %vm887, %v1495, 0
        %v1503 = vsel %vm915, %v1498, 0
        %1505 = vmatpush.bf16.msra.mxu0 0
        %1506 = vmatpush.bf16.msra.mxu0 0
        %1507 = vmatpush.bf16.msra.mxu0 0
        %1508 = vmatpush.bf16.msra.mxu0 0
        %1509 = vmatpush.bf16.msra.mxu0 0
        %1510 = vmatpush.bf16.msra.mxu0 0
        %1511 = vmatpush.bf16.msra.mxu0 0
        %1512 = vmatpush.bf16.msra.mxu0 %v1503
        %1513 = vmatmul.bf16.gmra.mxu0 %v1500
        %v1514 = vpop.f32.mrf.mxu0
        %v1515 = vadd.f32 0.0, %v1514
        %v1516 = vpop.f32.mrf.mxu0
        %1517 = vdwg.mxu0
        %1518 = vrot.lane.b32.xlu0 %v1061, 48
        %v1519 = vpop.permute.xlu0 %1518
        %v1521 = vsel %vm887, %v1496, 0
        %v1524 = vsel %vm915, %v1519, 0
        %1526 = vmatpush.bf16.msra.mxu0 0
        %1527 = vmatpush.bf16.msra.mxu0 0
        %1528 = vmatpush.bf16.msra.mxu0 0
        %1529 = vmatpush.bf16.msra.mxu0 0
        %1530 = vmatpush.bf16.msra.mxu0 0
        %1531 = vmatpush.bf16.msra.mxu0 0
        %1532 = vmatpush.bf16.msra.mxu0 0
        %1533 = vmatpush.bf16.msra.mxu0 %v1524
        %1534 = vmatmul.bf16.gmra.mxu0 %v1521
        %v1535 = vpop.f32.mrf.mxu0
        %v1536 = vadd.f32 0.0, %v1535
        %v1537 = vpop.f32.mrf.mxu0
        %1538 = vdwg.mxu0
        %1539 = vrot.lane.b32.xlu0 %v953, 32
        %v1540 = vpop.permute.xlu0 %1539
        %1541 = vrot.lane.b32.xlu0 %v958, 32
        %v1542 = vpop.permute.xlu0 %1541
        %v1544 = vsel %vm846, %v1540, 0
        %v1547 = vsel %vm846, %v1542, 0
        %1549 = vmatpush.bf16.xpose.msra.mxu0 0
        %1550 = vmatpush.bf16.xpose.msra.mxu0 0
        %1551 = vmatpush.bf16.xpose.msra.mxu0 0
        %1552 = vmatpush.bf16.xpose.msra.mxu0 0
        %1553 = vmatpush.bf16.xpose.msra.mxu0 0
        %1554 = vmatpush.bf16.xpose.msra.mxu0 0
        %1555 = vmatpush.bf16.xpose.msra.mxu0 0
        %1556 = vmatpush.bf16.xpose.msra.mxu0 %v1547
        %1557 = vmatmul.bf16.gmra.mxu0 %v1544
        %v1558 = vpop.f32.mrf.mxu0
        %v1559 = vadd.f32 0.0, %v1558
        %v1560 = vpop.f32.mrf.mxu0
        %1561 = vdwg.mxu0
        %1562 = vrot.lane.b32.xlu0 %v982, 32
        %v1563 = vpop.permute.xlu0 %1562
        %1564 = vrot.lane.b32.xlu0 %v987, 32
        %v1565 = vpop.permute.xlu0 %1564
        %v1567 = vsel %vm846, %v1563, 0
        %v1570 = vsel %vm846, %v1565, 0
        %1572 = vmatpush.bf16.xpose.msra.mxu0 0
        %1573 = vmatpush.bf16.xpose.msra.mxu0 0
        %1574 = vmatpush.bf16.xpose.msra.mxu0 0
        %1575 = vmatpush.bf16.xpose.msra.mxu0 0
        %1576 = vmatpush.bf16.xpose.msra.mxu0 0
        %1577 = vmatpush.bf16.xpose.msra.mxu0 0
        %1578 = vmatpush.bf16.xpose.msra.mxu0 0
        %1579 = vmatpush.bf16.xpose.msra.mxu0 %v1570
        %1580 = vmatmul.bf16.gmra.mxu0 %v1567
        %v1581 = vpop.f32.mrf.mxu0
        %v1582 = vadd.f32 0.0, %v1581
        %v1583 = vpop.f32.mrf.mxu0
        %1584 = vdwg.mxu0
        %v1585 = vmul.f32 %v1559, 0.25
        %v1586 = vmul.f32 %v1582, 0.25
        %v1587 = vsel %vm887, %v1585, -inf
        %1588 = vmax.xlane.f32.xlu0 %v1587
        %v1589 = vpop.xlane.xlu0 %1588
        %v1590 = vsel %vm887, %v1586, -inf
        %1591 = vmax.xlane.f32.xlu0 %v1590
        %v1592 = vpop.xlane.xlu0 %1591
        %v1593 = vsub.f32 %v1585, %v1589
        %v1594 = vsub.f32 %v1586, %v1592
        %v1595 = vmul.f32 %v1593, 1.442695
        %v1596 = vpow.pop %v1595
        %v1597 = vmul.f32 %v1594, 1.442695
        %v1598 = vpow.pop %v1597
        %v1599 = vsel %vm887, %v1596, 0.0
        %1600 = vadd.xlane.f32.xlu0 %v1599
        %v1601 = vpop.xlane.xlu0 %1600
        %v1602 = vsel %vm887, %v1598, 0.0
        %1603 = vadd.xlane.f32.xlu0 %v1602
        %v1604 = vpop.xlane.xlu0 %1603
        %v1605 = vrcp.pop %v1601
        %v1606 = vrcp.pop %v1604
        %v1607 = vmul.f32 %v1596, %v1605
        %v1608 = vmul.f32 %v1598, %v1606
        %v1609 = vpack.c.bf16 %v1607, %v1607
        %v1610 = vpack.c.bf16 %v1608, %v1608
        %1611 = vrot.lane.b32.xlu0 %v1037, 32
        %v1612 = vpop.permute.xlu0 %1611
        %v1614 = vsel %vm887, %v1609, 0
        %v1617 = vsel %vm915, %v1612, 0
        %1619 = vmatpush.bf16.msra.mxu0 0
        %1620 = vmatpush.bf16.msra.mxu0 0
        %1621 = vmatpush.bf16.msra.mxu0 0
        %1622 = vmatpush.bf16.msra.mxu0 0
        %1623 = vmatpush.bf16.msra.mxu0 0
        %1624 = vmatpush.bf16.msra.mxu0 0
        %1625 = vmatpush.bf16.msra.mxu0 0
        %1626 = vmatpush.bf16.msra.mxu0 %v1617
        %1627 = vmatmul.bf16.gmra.mxu0 %v1614
        %v1628 = vpop.f32.mrf.mxu0
        %v1629 = vadd.f32 0.0, %v1628
        %v1630 = vpop.f32.mrf.mxu0
        %1631 = vdwg.mxu0
        %1632 = vrot.lane.b32.xlu0 %v1061, 32
        %v1633 = vpop.permute.xlu0 %1632
        %v1635 = vsel %vm887, %v1610, 0
        %v1638 = vsel %vm915, %v1633, 0
        %1640 = vmatpush.bf16.msra.mxu0 0
        %1641 = vmatpush.bf16.msra.mxu0 0
        %1642 = vmatpush.bf16.msra.mxu0 0
        %1643 = vmatpush.bf16.msra.mxu0 0
        %1644 = vmatpush.bf16.msra.mxu0 0
        %1645 = vmatpush.bf16.msra.mxu0 0
        %1646 = vmatpush.bf16.msra.mxu0 0
        %1647 = vmatpush.bf16.msra.mxu0 %v1638
        %1648 = vmatmul.bf16.gmra.mxu0 %v1635
        %v1649 = vpop.f32.mrf.mxu0
        %v1650 = vadd.f32 0.0, %v1649
        %v1651 = vpop.f32.mrf.mxu0
        %1652 = vdwg.mxu0
        %1653 = vrot.lane.b32.xlu0 %v953, 16
        %v1654 = vpop.permute.xlu0 %1653
        %1655 = vrot.lane.b32.xlu0 %v958, 16
        %v1656 = vpop.permute.xlu0 %1655
        %v1658 = vsel %vm846, %v1654, 0
        %v1661 = vsel %vm846, %v1656, 0
        %1663 = vmatpush.bf16.xpose.msra.mxu0 0
        %1664 = vmatpush.bf16.xpose.msra.mxu0 0
        %1665 = vmatpush.bf16.xpose.msra.mxu0 0
        %1666 = vmatpush.bf16.xpose.msra.mxu0 0
        %1667 = vmatpush.bf16.xpose.msra.mxu0 0
        %1668 = vmatpush.bf16.xpose.msra.mxu0 0
        %1669 = vmatpush.bf16.xpose.msra.mxu0 0
        %1670 = vmatpush.bf16.xpose.msra.mxu0 %v1661
        %1671 = vmatmul.bf16.gmra.mxu0 %v1658
        %v1672 = vpop.f32.mrf.mxu0
        %v1673 = vadd.f32 0.0, %v1672
        %v1674 = vpop.f32.mrf.mxu0
        %1675 = vdwg.mxu0
        %1676 = vrot.lane.b32.xlu0 %v982, 16
        %v1677 = vpop.permute.xlu0 %1676
        %1678 = vrot.lane.b32.xlu0 %v987, 16
        %v1679 = vpop.permute.xlu0 %1678
        %v1681 = vsel %vm846, %v1677, 0
        %v1684 = vsel %vm846, %v1679, 0
        %1686 = vmatpush.bf16.xpose.msra.mxu0 0
        %1687 = vmatpush.bf16.xpose.msra.mxu0 0
        %1688 = vmatpush.bf16.xpose.msra.mxu0 0
        %1689 = vmatpush.bf16.xpose.msra.mxu0 0
        %1690 = vmatpush.bf16.xpose.msra.mxu0 0
        %1691 = vmatpush.bf16.xpose.msra.mxu0 0
        %1692 = vmatpush.bf16.xpose.msra.mxu0 0
        %1693 = vmatpush.bf16.xpose.msra.mxu0 %v1684
        %1694 = vmatmul.bf16.gmra.mxu0 %v1681
        %v1695 = vpop.f32.mrf.mxu0
        %v1696 = vadd.f32 0.0, %v1695
        %v1697 = vpop.f32.mrf.mxu0
        %1698 = vdwg.mxu0
        %v1699 = vmul.f32 %v1673, 0.25
        %v1700 = vmul.f32 %v1696, 0.25
        %v1701 = vsel %vm887, %v1699, -inf
        %1702 = vmax.xlane.f32.xlu0 %v1701
        %v1703 = vpop.xlane.xlu0 %1702
        %v1704 = vsel %vm887, %v1700, -inf
        %1705 = vmax.xlane.f32.xlu0 %v1704
        %v1706 = vpop.xlane.xlu0 %1705
        %v1707 = vsub.f32 %v1699, %v1703
        %v1708 = vsub.f32 %v1700, %v1706
        %v1709 = vmul.f32 %v1707, 1.442695
        %v1710 = vpow.pop %v1709
        %v1711 = vmul.f32 %v1708, 1.442695
        %v1712 = vpow.pop %v1711
        %v1713 = vsel %vm887, %v1710, 0.0
        %1714 = vadd.xlane.f32.xlu0 %v1713
        %v1715 = vpop.xlane.xlu0 %1714
        %v1716 = vsel %vm887, %v1712, 0.0
        %1717 = vadd.xlane.f32.xlu0 %v1716
        %v1718 = vpop.xlane.xlu0 %1717
        %v1719 = vrcp.pop %v1715
        %v1720 = vrcp.pop %v1718
        %v1721 = vmul.f32 %v1710, %v1719
        %v1722 = vmul.f32 %v1712, %v1720
        %v1723 = vpack.c.bf16 %v1721, %v1721
        %v1724 = vpack.c.bf16 %v1722, %v1722
        %1725 = vrot.lane.b32.xlu0 %v1037, 16
        %v1726 = vpop.permute.xlu0 %1725
        %v1728 = vsel %vm887, %v1723, 0
        %v1731 = vsel %vm915, %v1726, 0
        %1733 = vmatpush.bf16.msra.mxu0 0
        %1734 = vmatpush.bf16.msra.mxu0 0
        %1735 = vmatpush.bf16.msra.mxu0 0
        %1736 = vmatpush.bf16.msra.mxu0 0
        %1737 = vmatpush.bf16.msra.mxu0 0
        %1738 = vmatpush.bf16.msra.mxu0 0
        %1739 = vmatpush.bf16.msra.mxu0 0
        %1740 = vmatpush.bf16.msra.mxu0 %v1731
        %1741 = vmatmul.bf16.gmra.mxu0 %v1728
        %v1742 = vpop.f32.mrf.mxu0
        %v1743 = vadd.f32 0.0, %v1742
        %v1744 = vpop.f32.mrf.mxu0
        %1745 = vdwg.mxu0
        %1746 = vrot.lane.b32.xlu0 %v1061, 16
        %v1747 = vpop.permute.xlu0 %1746
        %v1749 = vsel %vm887, %v1724, 0
        %v1752 = vsel %vm915, %v1747, 0
        %1754 = vmatpush.bf16.msra.mxu0 0
        %1755 = vmatpush.bf16.msra.mxu0 0
        %1756 = vmatpush.bf16.msra.mxu0 0
        %1757 = vmatpush.bf16.msra.mxu0 0
        %1758 = vmatpush.bf16.msra.mxu0 0
        %1759 = vmatpush.bf16.msra.mxu0 0
        %1760 = vmatpush.bf16.msra.mxu0 0
        %1761 = vmatpush.bf16.msra.mxu0 %v1752
        %1762 = vmatmul.bf16.gmra.mxu0 %v1749
        %v1763 = vpop.f32.mrf.mxu0
        %v1764 = vadd.f32 0.0, %v1763
        %v1765 = vpop.f32.mrf.mxu0
        %1766 = vdwg.mxu0
        %1769 = vrot.lane.b32.xlu0 %v1056, 16
        %v1770 = vpop.permute.xlu0 %1769
        %1771 = vrot.lane.b32.xlu0 %v1080, 16
        %v1772 = vpop.permute.xlu0 %1771
        %1777 = vrot.lane.b32.xlu0 %v1173, 32
        %v1778 = vpop.permute.xlu0 %1777
        %1779 = vrot.lane.b32.xlu0 %v1194, 32
        %v1780 = vpop.permute.xlu0 %1779
        %1785 = vrot.lane.b32.xlu0 %v1287, 48
        %v1786 = vpop.permute.xlu0 %1785
        %1787 = vrot.lane.b32.xlu0 %v1308, 48
        %v1788 = vpop.permute.xlu0 %1787
        %1793 = vrot.lane.b32.xlu0 %v1401, 64
        %v1794 = vpop.permute.xlu0 %1793
        %1795 = vrot.lane.b32.xlu0 %v1422, 64
        %v1796 = vpop.permute.xlu0 %1795
        %1801 = vrot.lane.b32.xlu0 %v1515, 80
        %v1802 = vpop.permute.xlu0 %1801
        %1803 = vrot.lane.b32.xlu0 %v1536, 80
        %v1804 = vpop.permute.xlu0 %1803
        %1809 = vrot.lane.b32.xlu0 %v1629, 96
        %v1810 = vpop.permute.xlu0 %1809
        %1811 = vrot.lane.b32.xlu0 %v1650, 96
        %v1812 = vpop.permute.xlu0 %1811
        %1817 = vrot.lane.b32.xlu0 %v1743, 112
        %v1818 = vpop.permute.xlu0 %1817
        %1819 = vrot.lane.b32.xlu0 %v1764, 112
        %v1820 = vpop.permute.xlu0 %1819
        %v1823 = vsel %vm846, %v929, %v1770
        %v1824 = vsel %vm846, %v948, %v1772
        %vm1825 = vcmask 261120
        %v1826 = vsel %vm1825, %v1823, %v1778
        %v1827 = vsel %vm1825, %v1824, %v1780
        %vm1828 = vcmask 392192
        %v1829 = vsel %vm1828, %v1826, %v1786
        %v1830 = vsel %vm1828, %v1827, %v1788
        %vm1831 = vcmask 523264
        %v1832 = vsel %vm1831, %v1829, %v1794
        %v1833 = vsel %vm1831, %v1830, %v1796
        %vm1834 = vcmask 654336
        %v1835 = vsel %vm1834, %v1832, %v1802
        %v1836 = vsel %vm1834, %v1833, %v1804
        %vm1837 = vcmask 785408
        %v1838 = vsel %vm1837, %v1835, %v1810
        %v1839 = vsel %vm1837, %v1836, %v1812
        %vm1840 = vcmask 916480
        %v1841 = vsel %vm1840, %v1838, %v1818
        %v1842 = vsel %vm1840, %v1839, %v1820
        %v1843 = vpack.c.bf16 %v1842, %v1841
        %v1845 = vperm.slane %v661, 0
        %v1863 = vunpack.c.l.b16 %v645
        %v1864 = vunpack.c.l.b16 %v646
        %v1865 = vunpack.c.l.b16 %v647
        %v1866 = vunpack.c.l.b16 %v648
        %v1867 = vunpack.c.l.b16 %v649
        %v1868 = vunpack.c.l.b16 %v650
        %v1869 = vunpack.c.l.b16 %v651
        %v1870 = vunpack.c.l.b16 %v652
        %v1871 = vunpack.c.l.b16 %v653
        %v1872 = vunpack.c.l.b16 %v654
        %v1873 = vunpack.c.l.b16 %v655
        %v1874 = vunpack.c.l.b16 %v656
        %v1875 = vunpack.c.l.b16 %v657
        %v1876 = vunpack.c.l.b16 %v658
        %v1877 = vunpack.c.l.b16 %v659
        %v1878 = vunpack.c.l.b16 %v660
        %v1879 = vpack.c.b16 %v1864, %v1863
        %v1880 = vpack.c.b16 %v1866, %v1865
        %v1881 = vpack.c.b16 %v1868, %v1867
        %v1882 = vpack.c.b16 %v1870, %v1869
        %v1883 = vpack.c.b16 %v1872, %v1871
        %v1884 = vpack.c.b16 %v1874, %v1873
        %v1885 = vpack.c.b16 %v1876, %v1875
        %v1886 = vpack.c.b16 %v1878, %v1877
        %1895 = vmatpush.bf16.msra.mxu0 %v1886
        %1896 = vmatpush.bf16.msra.mxu0 %v1885
        %1897 = vmatpush.bf16.msra.mxu0 %v1884
        %1898 = vmatpush.bf16.msra.mxu0 %v1883
        %1899 = vmatpush.bf16.msra.mxu0 %v1882
        %1900 = vmatpush.bf16.msra.mxu0 %v1881
        %1901 = vmatpush.bf16.msra.mxu0 %v1880
        %1902 = vmatpush.bf16.msra.mxu0 %v1879
        %1903 = vmatmul.bf16.gmra.mxu0 %v1843
        %v1904 = vpop.f32.mrf.mxu0
        %v1905 = vadd.f32 %v1845, %v1904
        %v1906 = vpop.f32.mrf.mxu0
        %v1907 = vadd.f32 %v1845, %v1906
        %1908 = vdwg.mxu0
        %v1909 = vadd.f32 %v610, %v1905
        %v1910 = vadd.f32 %v611, %v1907
        %v1911 = vld [vmem:[%s7] sm:$0x1]
        %v1912 = vld [vmem:[%s8] sm:$0x1]
        %1913 = vadd.xlane.f32.xlu0 %v1909
        %v1914 = vpop.xlane.xlu0 %1913
        %1915 = vadd.xlane.f32.xlu0 %v1910
        %v1916 = vpop.xlane.xlu0 %1915
        %v1917 = vmul.f32 %v1914, %v565
        %v1918 = vmul.f32 %v1916, %v565
        %v1919 = vsub.f32 %v1909, %v1917
        %v1920 = vsub.f32 %v1910, %v1918
        %v1921 = vmul.f32 %v1919, %v1919
        %v1922 = vmul.f32 %v1920, %v1920
        %1923 = vadd.xlane.f32.xlu0 %v1921
        %v1924 = vpop.xlane.xlu0 %1923
        %1925 = vadd.xlane.f32.xlu0 %v1922
        %v1926 = vpop.xlane.xlu0 %1925
        %v1927 = vmul.f32 %v1924, %v565
        %v1928 = vmul.f32 %v1926, %v565
        %v1929 = vadd.f32 %v1927, 1e-05
        %v1930 = vadd.f32 %v1928, 1e-05
        %v1931 = vrsqrt.pop %v1929
        %v1932 = vmul.f32 %v1931, %v1929
        %v1933 = vmul.f32 %v1932, %v1931
        %v1934 = vmul.f32 0.5, %v1933
        %v1935 = vsub.f32 1.5, %v1934
        %v1936 = vmul.f32 %v1931, %v1935
        %vm1937 = vweird.f32 %v1929
        %vm1938 = vweird.f32 %v1931
        %vm1939 = vmor %vm1937, %vm1938
        %v1940 = vsel %vm1939, %v1931, %v1936
        %v1941 = vrsqrt.pop %v1930
        %v1942 = vmul.f32 %v1941, %v1930
        %v1943 = vmul.f32 %v1942, %v1941
        %v1944 = vmul.f32 0.5, %v1943
        %v1945 = vsub.f32 1.5, %v1944
        %v1946 = vmul.f32 %v1941, %v1945
        %vm1947 = vweird.f32 %v1930
        %vm1948 = vweird.f32 %v1941
        %vm1949 = vmor %vm1947, %vm1948
        %v1950 = vsel %vm1949, %v1941, %v1946
        %v1951 = vmul.f32 %v1919, %v1940
        %v1952 = vmul.f32 %v1920, %v1950
        %v1954 = vperm.slane %v1911, 0
        %v1956 = vmul.f32 %v1951, %v1954
        %v1957 = vmul.f32 %v1952, %v1954
        %v1959 = vperm.slane %v1912, 0
        %v1961 = vadd.f32 %v1956, %v1959
        %v1962 = vadd.f32 %v1957, %v1959
        %v1963 = vld [vmem:[#allocation6] sm:$0xff]
        %v1964 = vld [vmem:[#allocation6 + $0x8] sm:$0xff]
        %v1965 = vld [vmem:[#allocation6 + $0x10] sm:$0xff]
        %v1966 = vld [vmem:[#allocation6 + $0x18] sm:$0xff]
        %v1967 = vld [vmem:[#allocation6 + $0x20] sm:$0xff]
        %v1968 = vld [vmem:[#allocation6 + $0x28] sm:$0xff]
        %v1969 = vld [vmem:[#allocation6 + $0x30] sm:$0xff]
        %v1970 = vld [vmem:[#allocation6 + $0x38] sm:$0xff]
        %v1971 = vld [vmem:[#allocation6 + $0x40] sm:$0xff]
        %v1972 = vld [vmem:[#allocation6 + $0x48] sm:$0xff]
        %v1973 = vld [vmem:[#allocation6 + $0x50] sm:$0xff]
        %v1974 = vld [vmem:[#allocation6 + $0x58] sm:$0xff]
        %v1975 = vld [vmem:[#allocation6 + $0x60] sm:$0xff]
        %v1976 = vld [vmem:[#allocation6 + $0x68] sm:$0xff]
        %v1977 = vld [vmem:[#allocation6 + $0x70] sm:$0xff]
        %v1978 = vld [vmem:[#allocation6 + $0x78] sm:$0xff]
        %v1979 = vpack.c.bf16 %v1962, %v1961
        %v1980 = vld [vmem:[%s10] sm:$0x3]
        %v1982 = vperm.slane %v1980, 0
        %v1983 = vperm.slane %v1980, 1
        %v2002 = vunpack.c.l.b16 %v1963
        %v2003 = vunpack.c.h.b16 %v1963
        %v2004 = vunpack.c.l.b16 %v1964
        %v2005 = vunpack.c.h.b16 %v1964
        %v2006 = vunpack.c.l.b16 %v1965
        %v2007 = vunpack.c.h.b16 %v1965
        %v2008 = vunpack.c.l.b16 %v1966
        %v2009 = vunpack.c.h.b16 %v1966
        %v2010 = vunpack.c.l.b16 %v1967
        %v2011 = vunpack.c.h.b16 %v1967
        %v2012 = vunpack.c.l.b16 %v1968
        %v2013 = vunpack.c.h.b16 %v1968
        %v2014 = vunpack.c.l.b16 %v1969
        %v2015 = vunpack.c.h.b16 %v1969
        %v2016 = vunpack.c.l.b16 %v1970
        %v2017 = vunpack.c.h.b16 %v1970
        %v2018 = vunpack.c.l.b16 %v1971
        %v2019 = vunpack.c.h.b16 %v1971
        %v2020 = vunpack.c.l.b16 %v1972
        %v2021 = vunpack.c.h.b16 %v1972
        %v2022 = vunpack.c.l.b16 %v1973
        %v2023 = vunpack.c.h.b16 %v1973
        %v2024 = vunpack.c.l.b16 %v1974
        %v2025 = vunpack.c.h.b16 %v1974
        %v2026 = vunpack.c.l.b16 %v1975
        %v2027 = vunpack.c.h.b16 %v1975
        %v2028 = vunpack.c.l.b16 %v1976
        %v2029 = vunpack.c.h.b16 %v1976
        %v2030 = vunpack.c.l.b16 %v1977
        %v2031 = vunpack.c.h.b16 %v1977
        %v2032 = vunpack.c.l.b16 %v1978
        %v2033 = vunpack.c.h.b16 %v1978
        %v2034 = vpack.c.b16 %v2004, %v2002
        %v2035 = vpack.c.b16 %v2005, %v2003
        %v2036 = vpack.c.b16 %v2008, %v2006
        %v2037 = vpack.c.b16 %v2009, %v2007
        %v2038 = vpack.c.b16 %v2012, %v2010
        %v2039 = vpack.c.b16 %v2013, %v2011
        %v2040 = vpack.c.b16 %v2016, %v2014
        %v2041 = vpack.c.b16 %v2017, %v2015
        %v2042 = vpack.c.b16 %v2020, %v2018
        %v2043 = vpack.c.b16 %v2021, %v2019
        %v2044 = vpack.c.b16 %v2024, %v2022
        %v2045 = vpack.c.b16 %v2025, %v2023
        %v2046 = vpack.c.b16 %v2028, %v2026
        %v2047 = vpack.c.b16 %v2029, %v2027
        %v2048 = vpack.c.b16 %v2032, %v2030
        %v2049 = vpack.c.b16 %v2033, %v2031
        %2066 = vmatpush.bf16.msra.mxu0 %v2048
        %2067 = vmatpush.bf16.msra.mxu0 %v2046
        %2068 = vmatpush.bf16.msra.mxu0 %v2044
        %2069 = vmatpush.bf16.msra.mxu0 %v2042
        %2070 = vmatpush.bf16.msra.mxu0 %v2040
        %2071 = vmatpush.bf16.msra.mxu0 %v2038
        %2072 = vmatpush.bf16.msra.mxu0 %v2036
        %2073 = vmatpush.bf16.msra.mxu0 %v2034
        %2074 = vmatmul.bf16.gmra.mxu0 %v1979
        %v2075 = vpop.f32.mrf.mxu0
        %v2076 = vadd.f32 %v1982, %v2075
        %v2077 = vpop.f32.mrf.mxu0
        %v2078 = vadd.f32 %v1982, %v2077
        %2079 = vdwg.mxu0
        %2080 = vmatpush.bf16.msra.mxu0 %v2049
        %2081 = vmatpush.bf16.msra.mxu0 %v2047
        %2082 = vmatpush.bf16.msra.mxu0 %v2045
        %2083 = vmatpush.bf16.msra.mxu0 %v2043
        %2084 = vmatpush.bf16.msra.mxu0 %v2041
        %2085 = vmatpush.bf16.msra.mxu0 %v2039
        %2086 = vmatpush.bf16.msra.mxu0 %v2037
        %2087 = vmatpush.bf16.msra.mxu0 %v2035
        %2088 = vmatmul.bf16.gmra.mxu0 %v1979
        %v2089 = vpop.f32.mrf.mxu0
        %v2090 = vadd.f32 %v1983, %v2089
        %v2091 = vpop.f32.mrf.mxu0
        %v2092 = vadd.f32 %v1983, %v2091
        %2093 = vdwg.mxu0
        %v2094 = vmul.f32 %v2076, %v2076
        %v2095 = vmul.f32 %v2090, %v2090
        %v2096 = vmul.f32 %v2078, %v2078
        %v2097 = vmul.f32 %v2092, %v2092
        %v2098 = vmul.f32 %v2076, %v2094
        %v2099 = vmul.f32 %v2090, %v2095
        %v2100 = vmul.f32 %v2078, %v2096
        %v2101 = vmul.f32 %v2092, %v2097
        %v2102 = vmul.f32 %v2098, 0.044715
        %v2103 = vmul.f32 %v2099, 0.044715
        %v2104 = vmul.f32 %v2100, 0.044715
        %v2105 = vmul.f32 %v2101, 0.044715
        %v2106 = vadd.f32 %v2076, %v2102
        %v2107 = vadd.f32 %v2090, %v2103
        %v2108 = vadd.f32 %v2078, %v2104
        %v2109 = vadd.f32 %v2092, %v2105
        %v2110 = vmul.f32 %v2106, 0.7978846
        %v2111 = vmul.f32 %v2107, 0.7978846
        %v2112 = vmul.f32 %v2108, 0.7978846
        %v2113 = vmul.f32 %v2109, 0.7978846
        %v2114 = vtanh.pop %v2110
        %v2115 = vtanh.pop %v2111
        %v2116 = vtanh.pop %v2112
        %v2117 = vtanh.pop %v2113
        %v2118 = vadd.f32 %v2114, 1.0
        %v2119 = vadd.f32 %v2115, 1.0
        %v2120 = vadd.f32 %v2116, 1.0
        %v2121 = vadd.f32 %v2117, 1.0
        %v2122 = vmul.f32 %v2118, 0.5
        %v2123 = vmul.f32 %v2119, 0.5
        %v2124 = vmul.f32 %v2120, 0.5
        %v2125 = vmul.f32 %v2121, 0.5
        %v2126 = vmul.f32 %v2076, %v2122
        %v2127 = vmul.f32 %v2090, %v2123
        %v2128 = vmul.f32 %v2078, %v2124
        %v2129 = vmul.f32 %v2092, %v2125
        %v2130 = vld [vmem:[%s11] sm:$0xf]
        %v2131 = vld [vmem:[%s11 + $0x4] sm:$0xf]
        %v2132 = vld [vmem:[%s11 + $0x8] sm:$0xf]
        %v2133 = vld [vmem:[%s11 + $0xc] sm:$0xf]
        %v2134 = vld [vmem:[%s11 + $0x10] sm:$0xf]
        %v2135 = vld [vmem:[%s11 + $0x14] sm:$0xf]
        %v2136 = vld [vmem:[%s11 + $0x18] sm:$0xf]
        %v2137 = vld [vmem:[%s11 + $0x1c] sm:$0xf]
        %v2138 = vld [vmem:[%s11 + $0x20] sm:$0xf]
        %v2139 = vld [vmem:[%s11 + $0x24] sm:$0xf]
        %v2140 = vld [vmem:[%s11 + $0x28] sm:$0xf]
        %v2141 = vld [vmem:[%s11 + $0x2c] sm:$0xf]
        %v2142 = vld [vmem:[%s11 + $0x30] sm:$0xf]
        %v2143 = vld [vmem:[%s11 + $0x34] sm:$0xf]
        %v2144 = vld [vmem:[%s11 + $0x38] sm:$0xf]
        %v2145 = vld [vmem:[%s11 + $0x3c] sm:$0xf]
        %v2146 = vld [vmem:[%s11 + $0x40] sm:$0xf]
        %v2147 = vld [vmem:[%s11 + $0x44] sm:$0xf]
        %v2148 = vld [vmem:[%s11 + $0x48] sm:$0xf]
        %v2149 = vld [vmem:[%s11 + $0x4c] sm:$0xf]
        %v2150 = vld [vmem:[%s11 + $0x50] sm:$0xf]
        %v2151 = vld [vmem:[%s11 + $0x54] sm:$0xf]
        %v2152 = vld [vmem:[%s11 + $0x58] sm:$0xf]
        %v2153 = vld [vmem:[%s11 + $0x5c] sm:$0xf]
        %v2154 = vld [vmem:[%s11 + $0x60] sm:$0xf]
        %v2155 = vld [vmem:[%s11 + $0x64] sm:$0xf]
        %v2156 = vld [vmem:[%s11 + $0x68] sm:$0xf]
        %v2157 = vld [vmem:[%s11 + $0x6c] sm:$0xf]
        %v2158 = vld [vmem:[%s11 + $0x70] sm:$0xf]
        %v2159 = vld [vmem:[%s11 + $0x74] sm:$0xf]
        %v2160 = vld [vmem:[%s11 + $0x78] sm:$0xf]
        %v2161 = vld [vmem:[%s11 + $0x7c] sm:$0xf]
        %v2162 = vpack.c.bf16 %v2128, %v2126
        %v2163 = vpack.c.bf16 %v2129, %v2127
        %v2164 = vld [vmem:[%s12] sm:$0x1]
        %v2166 = vperm.slane %v2164, 0
        %v2200 = vunpack.c.l.b16 %v2130
        %v2201 = vunpack.c.l.b16 %v2131
        %v2202 = vunpack.c.l.b16 %v2132
        %v2203 = vunpack.c.l.b16 %v2133
        %v2204 = vunpack.c.l.b16 %v2134
        %v2205 = vunpack.c.l.b16 %v2135
        %v2206 = vunpack.c.l.b16 %v2136
        %v2207 = vunpack.c.l.b16 %v2137
        %v2208 = vunpack.c.l.b16 %v2138
        %v2209 = vunpack.c.l.b16 %v2139
        %v2210 = vunpack.c.l.b16 %v2140
        %v2211 = vunpack.c.l.b16 %v2141
        %v2212 = vunpack.c.l.b16 %v2142
        %v2213 = vunpack.c.l.b16 %v2143
        %v2214 = vunpack.c.l.b16 %v2144
        %v2215 = vunpack.c.l.b16 %v2145
        %v2216 = vunpack.c.l.b16 %v2146
        %v2217 = vunpack.c.l.b16 %v2147
        %v2218 = vunpack.c.l.b16 %v2148
        %v2219 = vunpack.c.l.b16 %v2149
        %v2220 = vunpack.c.l.b16 %v2150
        %v2221 = vunpack.c.l.b16 %v2151
        %v2222 = vunpack.c.l.b16 %v2152
        %v2223 = vunpack.c.l.b16 %v2153
        %v2224 = vunpack.c.l.b16 %v2154
        %v2225 = vunpack.c.l.b16 %v2155
        %v2226 = vunpack.c.l.b16 %v2156
        %v2227 = vunpack.c.l.b16 %v2157
        %v2228 = vunpack.c.l.b16 %v2158
        %v2229 = vunpack.c.l.b16 %v2159
        %v2230 = vunpack.c.l.b16 %v2160
        %v2231 = vunpack.c.l.b16 %v2161
        %v2232 = vpack.c.b16 %v2201, %v2200
        %v2233 = vpack.c.b16 %v2203, %v2202
        %v2234 = vpack.c.b16 %v2205, %v2204
        %v2235 = vpack.c.b16 %v2207, %v2206
        %v2236 = vpack.c.b16 %v2209, %v2208
        %v2237 = vpack.c.b16 %v2211, %v2210
        %v2238 = vpack.c.b16 %v2213, %v2212
        %v2239 = vpack.c.b16 %v2215, %v2214
        %v2240 = vpack.c.b16 %v2217, %v2216
        %v2241 = vpack.c.b16 %v2219, %v2218
        %v2242 = vpack.c.b16 %v2221, %v2220
        %v2243 = vpack.c.b16 %v2223, %v2222
        %v2244 = vpack.c.b16 %v2225, %v2224
        %v2245 = vpack.c.b16 %v2227, %v2226
        %v2246 = vpack.c.b16 %v2229, %v2228
        %v2247 = vpack.c.b16 %v2231, %v2230
        %2264 = vmatpush.bf16.msra.mxu0 %v2239
        %2265 = vmatpush.bf16.msra.mxu0 %v2238
        %2266 = vmatpush.bf16.msra.mxu0 %v2237
        %2267 = vmatpush.bf16.msra.mxu0 %v2236
        %2268 = vmatpush.bf16.msra.mxu0 %v2235
        %2269 = vmatpush.bf16.msra.mxu0 %v2234
        %2270 = vmatpush.bf16.msra.mxu0 %v2233
        %2271 = vmatpush.bf16.msra.mxu0 %v2232
        %2272 = vmatmul.bf16.gmra.mxu0 %v2162
        %v2273 = vpop.f32.mrf.mxu0
        %v2274 = vadd.f32 %v2166, %v2273
        %v2275 = vpop.f32.mrf.mxu0
        %v2276 = vadd.f32 %v2166, %v2275
        %2277 = vdwg.mxu0
        %2278 = vmatpush.bf16.msra.mxu0 %v2247
        %2279 = vmatpush.bf16.msra.mxu0 %v2246
        %2280 = vmatpush.bf16.msra.mxu0 %v2245
        %2281 = vmatpush.bf16.msra.mxu0 %v2244
        %2282 = vmatpush.bf16.msra.mxu0 %v2243
        %2283 = vmatpush.bf16.msra.mxu0 %v2242
        %2284 = vmatpush.bf16.msra.mxu0 %v2241
        %2285 = vmatpush.bf16.msra.mxu0 %v2240
        %2286 = vmatmul.bf16.gmra.mxu0 %v2163
        %v2287 = vpop.f32.mrf.mxu0
        %v2288 = vadd.f32 %v2274, %v2287
        %v2289 = vpop.f32.mrf.mxu0
        %v2290 = vadd.f32 %v2276, %v2289
        %2291 = vdwg.mxu0
        %v2292 = vadd.f32 %v1961, %v2288
        %v2293 = vadd.f32 %v1962, %v2290
        %v2294 = vld [vmem:[%s13] sm:$0x1]
        %v2295 = vld [vmem:[%s14] sm:$0x1]
        %2296 = vadd.xlane.f32.xlu0 %v2292
        %v2297 = vpop.xlane.xlu0 %2296
        %2298 = vadd.xlane.f32.xlu0 %v2293
        %v2299 = vpop.xlane.xlu0 %2298
        %v2300 = vmul.f32 %v2297, %v565
        %v2301 = vmul.f32 %v2299, %v565
        %v2302 = vsub.f32 %v2292, %v2300
        %v2303 = vsub.f32 %v2293, %v2301
        %v2304 = vmul.f32 %v2302, %v2302
        %v2305 = vmul.f32 %v2303, %v2303
        %2306 = vadd.xlane.f32.xlu0 %v2304
        %v2307 = vpop.xlane.xlu0 %2306
        %2308 = vadd.xlane.f32.xlu0 %v2305
        %v2309 = vpop.xlane.xlu0 %2308
        %v2310 = vmul.f32 %v2307, %v565
        %v2311 = vmul.f32 %v2309, %v565
        %v2312 = vadd.f32 %v2310, 1e-05
        %v2313 = vadd.f32 %v2311, 1e-05
        %v2314 = vrsqrt.pop %v2312
        %v2315 = vmul.f32 %v2314, %v2312
        %v2316 = vmul.f32 %v2315, %v2314
        %v2317 = vmul.f32 0.5, %v2316
        %v2318 = vsub.f32 1.5, %v2317
        %v2319 = vmul.f32 %v2314, %v2318
        %vm2320 = vweird.f32 %v2312
        %vm2321 = vweird.f32 %v2314
        %vm2322 = vmor %vm2320, %vm2321
        %v2323 = vsel %vm2322, %v2314, %v2319
        %v2324 = vrsqrt.pop %v2313
        %v2325 = vmul.f32 %v2324, %v2313
        %v2326 = vmul.f32 %v2325, %v2324
        %v2327 = vmul.f32 0.5, %v2326
        %v2328 = vsub.f32 1.5, %v2327
        %v2329 = vmul.f32 %v2324, %v2328
        %vm2330 = vweird.f32 %v2313
        %vm2331 = vweird.f32 %v2324
        %vm2332 = vmor %vm2330, %vm2331
        %v2333 = vsel %vm2332, %v2324, %v2329
        %v2334 = vmul.f32 %v2302, %v2323
        %v2335 = vmul.f32 %v2303, %v2333
        %v2337 = vperm.slane %v2294, 0
        %v2339 = vmul.f32 %v2334, %v2337
        %v2340 = vmul.f32 %v2335, %v2337
        %v2342 = vperm.slane %v2295, 0
        %v2344 = vadd.f32 %v2339, %v2342
        %v2345 = vadd.f32 %v2340, %v2342
        %v2346 = vpack.c.bf16 %v2344, %v2344
        %v2347 = vpack.c.bf16 %v2345, %v2345
        %2348 = vst [vmem:[%s546] sm:$0xf] %v2346
        %2349 = vst [vmem:[%s546 + $0x4] sm:$0xf] %v2347
        %s2350 = smul.u32 2, %s28
        %p2351 = scmp.lt.s32.totalorder %s2350, 3
        %s2352 = scalar_select %p2351, %s2350, 3
        %s2353 = smul.addr %s2352, 4
        %s2354 = scalar_lea.vmem %s15, %s2353
        // Predicated region
        $region93: #{_lambda_.3} parent=79 // pred_check
          %p2355 = pneg %p366
        $region94: #{_lambda_.3} parent=79 // pred_check_branch
          %2357 = sbr.rel (%p2355) target = $region96
        $region95: #{_lambda_.3} parent=79 // pred_region
          %s2358 = smul.u32 2, %s28
        $region96: #{_lambda_.3} parent=79 // pred_fallthru
          _
      $region80: #{_lambda_.3} parent=5 // pred_fallthru
        _
      %p2359 = scmp.le.s32.totalorder 2, %s23
      // Predicated region
      $region97: #{_lambda_.3} parent=5 // pred_check
        %p2360 = pneg %p2359
      $region98: #{_lambda_.3} parent=5 // pred_check_branch
        %2362 = sbr.rel (%p2360) target = $region100
      $region99: #{_lambda_.3} parent=5 // pred_region
        %s2363 = ssub.s32 %s23, 2
        // Predicated region
        $region101: #{_lambda_.3} parent=99 // pred_check
          %p2364 = pneg %p372
        $region102: #{_lambda_.3} parent=99 // pred_check_branch
          %2366 = sbr.rel (%p2364) target = $region104
        $region103: #{_lambda_.3} parent=99 // pred_region
          %s2367 = smul.u32 2, %s29
          %p2368 = scmp.lt.s32.totalorder %s2367, 3
          %s2369 = scalar_select %p2368, %s2367, 3
          %s2370 = smul.addr %s2369, 4
          %s2371 = scalar_lea.vmem %s15, %s2370
        $region104: #{_lambda_.3} parent=99 // pred_fallthru
          _
      $region100: #{_lambda_.3} parent=5 // pred_fallthru
        _
    $region6: #{_lambda_.3} parent=1 // loop_footer
      %s27 = sadd.s32 1, %s23
    $region7: #{_lambda_.3} parent=1 // loop_footer_branch
      %22 = sbr.rel target = $region3
    $region8: #{_lambda_.3} parent=1 // loop_exit
      _
    %2372 = vsyncpa [#allocation3], 1
    %s2373 = scalar_lea.sflag [#allocation3], 1
    %2374 = vsyncpa %s2373, 1
    %2375 = vsyncpa [#allocation5], 1

// kernel: _lambda_.4
$region0: #{_lambda_.4}
  #allocation0 [shape = 'u32[]', space=smem, size = 0x4, offset = 0x4, fixed_abs, tag = 'smem constant byte address 0x4 - core index']
  #allocation1 [shape = 'u32[72,128]{1,0:T(1,128)}', space=vmem, size = 0x9000, scoped, tag = 'internal scratch']
  %s0 = inlined_call_operand.vmem [shape: bf16[4,8,128], index: 0, kind: input, shape index: {}]
  %s1 = inlined_call_operand.vmem [shape: f32[4,8,128], index: 1, kind: input, shape index: {}]
  %s2 = inlined_call_operand.vmem [shape: f32[4,1,8], index: 2, kind: input, shape index: {}]
  %s3 = inlined_call_operand.hbm [shape: bf16[128,128], index: 3, kind: input, shape index: {}]
  %s4 = inlined_call_operand.vmem [shape: f32[1,128], index: 4, kind: input, shape index: {}, may-alias: {4,8,10,12,14,16,18}]
  %s5 = inlined_call_operand.vmem [shape: bf16[128,384], index: 5, kind: input, shape index: {}]
  %s6 = inlined_call_operand.vmem [shape: f32[1,384], index: 6, kind: input, shape index: {}]
  %s7 = inlined_call_operand.hbm [shape: bf16[128,128], index: 7, kind: input, shape index: {}]
  %s8 = inlined_call_operand.vmem [shape: f32[1,128], index: 8, kind: input, shape index: {}, may-alias: {4,8,10,12,14,16,18}]
  %s9 = inlined_call_operand.vmem [shape: f32[1,128], index: 9, kind: input, shape index: {}, may-alias: {9,11,17}]
  %s10 = inlined_call_operand.vmem [shape: f32[1,128], index: 10, kind: input, shape index: {}, may-alias: {4,8,10,12,14,16,18}]
  %s11 = inlined_call_operand.vmem [shape: f32[1,128], index: 11, kind: input, shape index: {}, may-alias: {9,11,17}]
  %s12 = inlined_call_operand.vmem [shape: f32[1,128], index: 12, kind: input, shape index: {}, may-alias: {4,8,10,12,14,16,18}]
  %s13 = inlined_call_operand.hbm [shape: bf16[128,128], index: 13, kind: input, shape index: {}]
  %s14 = inlined_call_operand.vmem [shape: f32[1,128], index: 14, kind: input, shape index: {}, may-alias: {4,8,10,12,14,16,18}]
  %s15 = inlined_call_operand.hbm [shape: bf16[128,128], index: 15, kind: input, shape index: {}]
  %s16 = inlined_call_operand.vmem [shape: f32[1,128], index: 16, kind: input, shape index: {}, may-alias: {4,8,10,12,14,16,18}]
  %s17 = inlined_call_operand.vmem [shape: f32[1,128], index: 17, kind: input, shape index: {}, may-alias: {9,11,17}]
  %s18 = inlined_call_operand.vmem [shape: f32[1,128], index: 18, kind: input, shape index: {}, may-alias: {4,8,10,12,14,16,18}]
  %s19 = inlined_call_operand.vmem [shape: f32[4,8,128], index: 19, kind: output, shape index: {}]
  %s20 = sld [smem:[#allocation0]]
  $region125: #{_lambda_.4} parent=0
    _
  %s22 = ssub.s32 1, %s20
  %s23 = scalar_select 0, %s22, %s20
  $region1: #{_lambda_.4} parent=0
    #allocation2 [shape = 'u8[32768]{0}', space=vmem, size = 0x8000, scoped, tag = 'input window, operand 3, single buffered']
    #allocation3 [shape = 's32[2]{0}', space=sflag, size = 0x8, scoped, tag = 'scoped memory for _lambda_.4']
    #allocation4 [shape = 'u8[32768]{0}', space=vmem, size = 0x8000, scoped, tag = 'input window, operand 7, single buffered']
    #allocation5 [shape = 's32[1]{0}', space=sflag, size = 0x4, scoped, tag = 'scoped memory for _lambda_.4']
    #allocation6 [shape = 'u8[32768]{0}', space=vmem, size = 0x8000, scoped, tag = 'input window, operand 13, single buffered']
    #allocation7 [shape = 'u8[32768]{0}', space=vmem, size = 0x8000, scoped, tag = 'input window, operand 15, single buffered']
    #allocation8 [shape = 's32[1]{0}', space=sflag, size = 0x4, scoped, tag = 'scoped memory for _lambda_.4']
    %24 = vsyncpa [#allocation3], 0
    %25 = vsyncpa [#allocation5], 0
    %26 = vsyncpa [#allocation8], 0
    loop: start=0, step=1, limit=4
    $region2: #{_lambda_.4} parent=1 // loop_pre_header
      _
    $region3: #{_lambda_.4} parent=1 // loop_header
      %s28 = sphi 0, %s32
      %p29 = scmp.ge.s32.totalorder %s28, 4
      %s38 = sphi 0, %s40
      %s41 = sphi 0, %s38
      %s42 = sphi 0, %s41
      %s58 = sphi 0, %s42
      %s64 = sphi 0, %s66
      %s67 = sphi 0, %s64
      %s68 = sphi 0, %s67
      %s84 = sphi 0, %s68
      %s90 = sphi 0, %s92
      %s93 = sphi 0, %s90
      %s94 = sphi 0, %s93
      %s110 = sphi 0, %s94
      %s114 = sphi 0, %s114
      %s116 = sphi 0, %s114
      %s117 = sphi 0, %s116
      %s131 = sphi 0, %s117
      %s135 = sphi 0, %s135
      %s137 = sphi 0, %s135
      %s138 = sphi 0, %s137
      %s152 = sphi 0, %s138
      %s156 = sphi 0, %s156
      %s158 = sphi 0, %s156
      %s159 = sphi 0, %s158
      %s173 = sphi 0, %s159
      %s177 = sphi 0, %s177
      %s179 = sphi 0, %s177
      %s180 = sphi 0, %s179
      %s194 = sphi 0, %s180
      %s198 = sphi 0, %s198
      %s200 = sphi 0, %s198
      %s201 = sphi 0, %s200
      %s215 = sphi 0, %s201
      %s219 = sphi 0, %s219
      %s221 = sphi 0, %s219
      %s222 = sphi 0, %s221
      %s236 = sphi 0, %s222
      %s240 = sphi 0, %s240
      %s242 = sphi 0, %s240
      %s243 = sphi 0, %s242
      %s257 = sphi 0, %s243
      %s261 = sphi 0, %s261
      %s263 = sphi 0, %s261
      %s264 = sphi 0, %s263
      %s278 = sphi 0, %s264
      %s282 = sphi 0, %s282
      %s284 = sphi 0, %s282
      %s285 = sphi 0, %s284
      %s299 = sphi 0, %s285
      %s303 = sphi 0, %s303
      %s305 = sphi 0, %s303
      %s306 = sphi 0, %s305
      %s320 = sphi 0, %s306
      %s324 = sphi 0, %s324
      %s326 = sphi 0, %s324
      %s327 = sphi 0, %s326
      %s341 = sphi 0, %s327
      %s345 = sphi 0, %s345
      %s347 = sphi 0, %s345
      %s348 = sphi 0, %s347
      %s362 = sphi 0, %s348
      %s366 = sphi 0, %s366
      %s368 = sphi 0, %s366
      %s369 = sphi 0, %s368
      %s383 = sphi 0, %s369
      %s387 = sphi 0, %s387
      %s389 = sphi 0, %s387
      %s390 = sphi 0, %s389
      %s404 = sphi 0, %s390
      %s408 = sphi 0, %s408
      %s410 = sphi 0, %s408
      %s411 = sphi 0, %s410
      %s425 = sphi 0, %s411
      %s429 = sphi 0, %s429
      %s431 = sphi 0, %s429
      %s432 = sphi 0, %s431
      %s446 = sphi 0, %s432
      %s452 = sphi 0, %s454
      %s455 = sphi 0, %s452
      %s456 = sphi 0, %s455
      %s472 = sphi 0, %s456
    $region4: #{_lambda_.4} parent=1 // loop_header_branch
      %31 = sbr.rel (%p29) target = $region8
    $region5: #{_lambda_.4} parent=1 // loop_body
      %s33 = ssub.s32 %s28, 1
      %s34 = ssub.s32 %s28, 2
      %s35 = sadd.s32 %s28, 1
      %s36 = ssub.s32 %s28, %s35
      %p37 = scmp.eq.s32.totalorder %s36, 0
      %s39 = sadd.s32 %s38, 1
      %s40 = scalar_select %p37, %s38, %s39
      %p43 = pneg %p37
      %p44 = scmp.eq.s32.totalorder %s28, 1
      %p45 = por %p43, %p44
      %p46 = scmp.ne.s32.totalorder %s38, %s41
      %p47 = scmp.eq.s32.totalorder %s28, 0
      %p48 = por %p46, %p47
      %p49 = scmp.ne.s32.totalorder %s38, %s41
      %p50 = scmp.eq.s32.totalorder %s33, 1
      %p51 = por %p49, %p50
      %p52 = scmp.ne.s32.totalorder %s41, %s42
      %p53 = scmp.eq.s32.totalorder %s33, 0
      %p54 = por %p52, %p53
      %p55 = scmp.ne.s32.totalorder %s41, %s42
      %p56 = scmp.eq.s32.totalorder %s34, 1
      %p57 = por %p55, %p56
      %p59 = scmp.ne.s32.totalorder %s42, %s58
      %p60 = scmp.eq.s32.totalorder %s34, 0
      %p61 = por %p59, %p60
      %s62 = ssub.s32 %s28, %s35
      %p63 = scmp.eq.s32.totalorder %s62, 0
      %s65 = sadd.s32 %s64, 1
      %s66 = scalar_select %p63, %s64, %s65
      %p69 = pneg %p63
      %p70 = scmp.eq.s32.totalorder %s28, 1
      %p71 = por %p69, %p70
      %p72 = scmp.ne.s32.totalorder %s64, %s67
      %p73 = scmp.eq.s32.totalorder %s28, 0
      %p74 = por %p72, %p73
      %p75 = scmp.ne.s32.totalorder %s64, %s67
      %p76 = scmp.eq.s32.totalorder %s33, 1
      %p77 = por %p75, %p76
      %p78 = scmp.ne.s32.totalorder %s67, %s68
      %p79 = scmp.eq.s32.totalorder %s33, 0
      %p80 = por %p78, %p79
      %p81 = scmp.ne.s32.totalorder %s67, %s68
      %p82 = scmp.eq.s32.totalorder %s34, 1
      %p83 = por %p81, %p82
      %p85 = scmp.ne.s32.totalorder %s68, %s84
      %p86 = scmp.eq.s32.totalorder %s34, 0
      %p87 = por %p85, %p86
      %s88 = ssub.s32 %s28, %s35
      %p89 = scmp.eq.s32.totalorder %s88, 0
      %s91 = sadd.s32 %s90, 1
      %s92 = scalar_select %p89, %s90, %s91
      %p95 = pneg %p89
      %p96 = scmp.eq.s32.totalorder %s28, 1
      %p97 = por %p95, %p96
      %p98 = scmp.ne.s32.totalorder %s90, %s93
      %p99 = scmp.eq.s32.totalorder %s28, 0
      %p100 = por %p98, %p99
      %p101 = scmp.ne.s32.totalorder %s90, %s93
      %p102 = scmp.eq.s32.totalorder %s33, 1
      %p103 = por %p101, %p102
      %p104 = scmp.ne.s32.totalorder %s93, %s94
      %p105 = scmp.eq.s32.totalorder %s33, 0
      %p106 = por %p104, %p105
      %p107 = scmp.ne.s32.totalorder %s93, %s94
      %p108 = scmp.eq.s32.totalorder %s34, 1
      %p109 = por %p107, %p108
      %p111 = scmp.ne.s32.totalorder %s94, %s110
      %p112 = scmp.eq.s32.totalorder %s34, 0
      %p113 = por %p111, %p112
      %s115 = sadd.s32 %s114, 1
      %p118 = scmp.eq.s32.totalorder %s28, 1
      %p119 = scmp.ne.s32.totalorder %s114, %s116
      %p120 = scmp.eq.s32.totalorder %s28, 0
      %p121 = por %p119, %p120
      %p122 = scmp.ne.s32.totalorder %s114, %s116
      %p123 = scmp.eq.s32.totalorder %s33, 1
      %p124 = por %p122, %p123
      %p125 = scmp.ne.s32.totalorder %s116, %s117
      %p126 = scmp.eq.s32.totalorder %s33, 0
      %p127 = por %p125, %p126
      %p128 = scmp.ne.s32.totalorder %s116, %s117
      %p129 = scmp.eq.s32.totalorder %s34, 1
      %p130 = por %p128, %p129
      %p132 = scmp.ne.s32.totalorder %s117, %s131
      %p133 = scmp.eq.s32.totalorder %s34, 0
      %p134 = por %p132, %p133
      %s136 = sadd.s32 %s135, 1
      %p139 = scmp.eq.s32.totalorder %s28, 1
      %p140 = scmp.ne.s32.totalorder %s135, %s137
      %p141 = scmp.eq.s32.totalorder %s28, 0
      %p142 = por %p140, %p141
      %p143 = scmp.ne.s32.totalorder %s135, %s137
      %p144 = scmp.eq.s32.totalorder %s33, 1
      %p145 = por %p143, %p144
      %p146 = scmp.ne.s32.totalorder %s137, %s138
      %p147 = scmp.eq.s32.totalorder %s33, 0
      %p148 = por %p146, %p147
      %p149 = scmp.ne.s32.totalorder %s137, %s138
      %p150 = scmp.eq.s32.totalorder %s34, 1
      %p151 = por %p149, %p150
      %p153 = scmp.ne.s32.totalorder %s138, %s152
      %p154 = scmp.eq.s32.totalorder %s34, 0
      %p155 = por %p153, %p154
      %s157 = sadd.s32 %s156, 1
      %p160 = scmp.eq.s32.totalorder %s28, 1
      %p161 = scmp.ne.s32.totalorder %s156, %s158
      %p162 = scmp.eq.s32.totalorder %s28, 0
      %p163 = por %p161, %p162
      %p164 = scmp.ne.s32.totalorder %s156, %s158
      %p165 = scmp.eq.s32.totalorder %s33, 1
      %p166 = por %p164, %p165
      %p167 = scmp.ne.s32.totalorder %s158, %s159
      %p168 = scmp.eq.s32.totalorder %s33, 0
      %p169 = por %p167, %p168
      %p170 = scmp.ne.s32.totalorder %s158, %s159
      %p171 = scmp.eq.s32.totalorder %s34, 1
      %p172 = por %p170, %p171
      %p174 = scmp.ne.s32.totalorder %s159, %s173
      %p175 = scmp.eq.s32.totalorder %s34, 0
      %p176 = por %p174, %p175
      %s178 = sadd.s32 %s177, 1
      %p181 = scmp.eq.s32.totalorder %s28, 1
      %p182 = scmp.ne.s32.totalorder %s177, %s179
      %p183 = scmp.eq.s32.totalorder %s28, 0
      %p184 = por %p182, %p183
      %p185 = scmp.ne.s32.totalorder %s177, %s179
      %p186 = scmp.eq.s32.totalorder %s33, 1
      %p187 = por %p185, %p186
      %p188 = scmp.ne.s32.totalorder %s179, %s180
      %p189 = scmp.eq.s32.totalorder %s33, 0
      %p190 = por %p188, %p189
      %p191 = scmp.ne.s32.totalorder %s179, %s180
      %p192 = scmp.eq.s32.totalorder %s34, 1
      %p193 = por %p191, %p192
      %p195 = scmp.ne.s32.totalorder %s180, %s194
      %p196 = scmp.eq.s32.totalorder %s34, 0
      %p197 = por %p195, %p196
      %s199 = sadd.s32 %s198, 1
      %p202 = scmp.eq.s32.totalorder %s28, 1
      %p203 = scmp.ne.s32.totalorder %s198, %s200
      %p204 = scmp.eq.s32.totalorder %s28, 0
      %p205 = por %p203, %p204
      %p206 = scmp.ne.s32.totalorder %s198, %s200
      %p207 = scmp.eq.s32.totalorder %s33, 1
      %p208 = por %p206, %p207
      %p209 = scmp.ne.s32.totalorder %s200, %s201
      %p210 = scmp.eq.s32.totalorder %s33, 0
      %p211 = por %p209, %p210
      %p212 = scmp.ne.s32.totalorder %s200, %s201
      %p213 = scmp.eq.s32.totalorder %s34, 1
      %p214 = por %p212, %p213
      %p216 = scmp.ne.s32.totalorder %s201, %s215
      %p217 = scmp.eq.s32.totalorder %s34, 0
      %p218 = por %p216, %p217
      %s220 = sadd.s32 %s219, 1
      %p223 = scmp.eq.s32.totalorder %s28, 1
      %p224 = scmp.ne.s32.totalorder %s219, %s221
      %p225 = scmp.eq.s32.totalorder %s28, 0
      %p226 = por %p224, %p225
      %p227 = scmp.ne.s32.totalorder %s219, %s221
      %p228 = scmp.eq.s32.totalorder %s33, 1
      %p229 = por %p227, %p228
      %p230 = scmp.ne.s32.totalorder %s221, %s222
      %p231 = scmp.eq.s32.totalorder %s33, 0
      %p232 = por %p230, %p231
      %p233 = scmp.ne.s32.totalorder %s221, %s222
      %p234 = scmp.eq.s32.totalorder %s34, 1
      %p235 = por %p233, %p234
      %p237 = scmp.ne.s32.totalorder %s222, %s236
      %p238 = scmp.eq.s32.totalorder %s34, 0
      %p239 = por %p237, %p238
      %s241 = sadd.s32 %s240, 1
      %p244 = scmp.eq.s32.totalorder %s28, 1
      %p245 = scmp.ne.s32.totalorder %s240, %s242
      %p246 = scmp.eq.s32.totalorder %s28, 0
      %p247 = por %p245, %p246
      %p248 = scmp.ne.s32.totalorder %s240, %s242
      %p249 = scmp.eq.s32.totalorder %s33, 1
      %p250 = por %p248, %p249
      %p251 = scmp.ne.s32.totalorder %s242, %s243
      %p252 = scmp.eq.s32.totalorder %s33, 0
      %p253 = por %p251, %p252
      %p254 = scmp.ne.s32.totalorder %s242, %s243
      %p255 = scmp.eq.s32.totalorder %s34, 1
      %p256 = por %p254, %p255
      %p258 = scmp.ne.s32.totalorder %s243, %s257
      %p259 = scmp.eq.s32.totalorder %s34, 0
      %p260 = por %p258, %p259
      %s262 = sadd.s32 %s261, 1
      %p265 = scmp.eq.s32.totalorder %s28, 1
      %p266 = scmp.ne.s32.totalorder %s261, %s263
      %p267 = scmp.eq.s32.totalorder %s28, 0
      %p268 = por %p266, %p267
      %p269 = scmp.ne.s32.totalorder %s261, %s263
      %p270 = scmp.eq.s32.totalorder %s33, 1
      %p271 = por %p269, %p270
      %p272 = scmp.ne.s32.totalorder %s263, %s264
      %p273 = scmp.eq.s32.totalorder %s33, 0
      %p274 = por %p272, %p273
      %p275 = scmp.ne.s32.totalorder %s263, %s264
      %p276 = scmp.eq.s32.totalorder %s34, 1
      %p277 = por %p275, %p276
      %p279 = scmp.ne.s32.totalorder %s264, %s278
      %p280 = scmp.eq.s32.totalorder %s34, 0
      %p281 = por %p279, %p280
      %s283 = sadd.s32 %s282, 1
      %p286 = scmp.eq.s32.totalorder %s28, 1
      %p287 = scmp.ne.s32.totalorder %s282, %s284
      %p288 = scmp.eq.s32.totalorder %s28, 0
      %p289 = por %p287, %p288
      %p290 = scmp.ne.s32.totalorder %s282, %s284
      %p291 = scmp.eq.s32.totalorder %s33, 1
      %p292 = por %p290, %p291
      %p293 = scmp.ne.s32.totalorder %s284, %s285
      %p294 = scmp.eq.s32.totalorder %s33, 0
      %p295 = por %p293, %p294
      %p296 = scmp.ne.s32.totalorder %s284, %s285
      %p297 = scmp.eq.s32.totalorder %s34, 1
      %p298 = por %p296, %p297
      %p300 = scmp.ne.s32.totalorder %s285, %s299
      %p301 = scmp.eq.s32.totalorder %s34, 0
      %p302 = por %p300, %p301
      %s304 = sadd.s32 %s303, 1
      %p307 = scmp.eq.s32.totalorder %s28, 1
      %p308 = scmp.ne.s32.totalorder %s303, %s305
      %p309 = scmp.eq.s32.totalorder %s28, 0
      %p310 = por %p308, %p309
      %p311 = scmp.ne.s32.totalorder %s303, %s305
      %p312 = scmp.eq.s32.totalorder %s33, 1
      %p313 = por %p311, %p312
      %p314 = scmp.ne.s32.totalorder %s305, %s306
      %p315 = scmp.eq.s32.totalorder %s33, 0
      %p316 = por %p314, %p315
      %p317 = scmp.ne.s32.totalorder %s305, %s306
      %p318 = scmp.eq.s32.totalorder %s34, 1
      %p319 = por %p317, %p318
      %p321 = scmp.ne.s32.totalorder %s306, %s320
      %p322 = scmp.eq.s32.totalorder %s34, 0
      %p323 = por %p321, %p322
      %s325 = sadd.s32 %s324, 1
      %p328 = scmp.eq.s32.totalorder %s28, 1
      %p329 = scmp.ne.s32.totalorder %s324, %s326
      %p330 = scmp.eq.s32.totalorder %s28, 0
      %p331 = por %p329, %p330
      %p332 = scmp.ne.s32.totalorder %s324, %s326
      %p333 = scmp.eq.s32.totalorder %s33, 1
      %p334 = por %p332, %p333
      %p335 = scmp.ne.s32.totalorder %s326, %s327
      %p336 = scmp.eq.s32.totalorder %s33, 0
      %p337 = por %p335, %p336
      %p338 = scmp.ne.s32.totalorder %s326, %s327
      %p339 = scmp.eq.s32.totalorder %s34, 1
      %p340 = por %p338, %p339
      %p342 = scmp.ne.s32.totalorder %s327, %s341
      %p343 = scmp.eq.s32.totalorder %s34, 0
      %p344 = por %p342, %p343
      %s346 = sadd.s32 %s345, 1
      %p349 = scmp.eq.s32.totalorder %s28, 1
      %p350 = scmp.ne.s32.totalorder %s345, %s347
      %p351 = scmp.eq.s32.totalorder %s28, 0
      %p352 = por %p350, %p351
      %p353 = scmp.ne.s32.totalorder %s345, %s347
      %p354 = scmp.eq.s32.totalorder %s33, 1
      %p355 = por %p353, %p354
      %p356 = scmp.ne.s32.totalorder %s347, %s348
      %p357 = scmp.eq.s32.totalorder %s33, 0
      %p358 = por %p356, %p357
      %p359 = scmp.ne.s32.totalorder %s347, %s348
      %p360 = scmp.eq.s32.totalorder %s34, 1
      %p361 = por %p359, %p360
      %p363 = scmp.ne.s32.totalorder %s348, %s362
      %p364 = scmp.eq.s32.totalorder %s34, 0
      %p365 = por %p363, %p364
      %s367 = sadd.s32 %s366, 1
      %p370 = scmp.eq.s32.totalorder %s28, 1
      %p371 = scmp.ne.s32.totalorder %s366, %s368
      %p372 = scmp.eq.s32.totalorder %s28, 0
      %p373 = por %p371, %p372
      %p374 = scmp.ne.s32.totalorder %s366, %s368
      %p375 = scmp.eq.s32.totalorder %s33, 1
      %p376 = por %p374, %p375
      %p377 = scmp.ne.s32.totalorder %s368, %s369
      %p378 = scmp.eq.s32.totalorder %s33, 0
      %p379 = por %p377, %p378
      %p380 = scmp.ne.s32.totalorder %s368, %s369
      %p381 = scmp.eq.s32.totalorder %s34, 1
      %p382 = por %p380, %p381
      %p384 = scmp.ne.s32.totalorder %s369, %s383
      %p385 = scmp.eq.s32.totalorder %s34, 0
      %p386 = por %p384, %p385
      %s388 = sadd.s32 %s387, 1
      %p391 = scmp.eq.s32.totalorder %s28, 1
      %p392 = scmp.ne.s32.totalorder %s387, %s389
      %p393 = scmp.eq.s32.totalorder %s28, 0
      %p394 = por %p392, %p393
      %p395 = scmp.ne.s32.totalorder %s387, %s389
      %p396 = scmp.eq.s32.totalorder %s33, 1
      %p397 = por %p395, %p396
      %p398 = scmp.ne.s32.totalorder %s389, %s390
      %p399 = scmp.eq.s32.totalorder %s33, 0
      %p400 = por %p398, %p399
      %p401 = scmp.ne.s32.totalorder %s389, %s390
      %p402 = scmp.eq.s32.totalorder %s34, 1
      %p403 = por %p401, %p402
      %p405 = scmp.ne.s32.totalorder %s390, %s404
      %p406 = scmp.eq.s32.totalorder %s34, 0
      %p407 = por %p405, %p406
      %s409 = sadd.s32 %s408, 1
      %p412 = scmp.eq.s32.totalorder %s28, 1
      %p413 = scmp.ne.s32.totalorder %s408, %s410
      %p414 = scmp.eq.s32.totalorder %s28, 0
      %p415 = por %p413, %p414
      %p416 = scmp.ne.s32.totalorder %s408, %s410
      %p417 = scmp.eq.s32.totalorder %s33, 1
      %p418 = por %p416, %p417
      %p419 = scmp.ne.s32.totalorder %s410, %s411
      %p420 = scmp.eq.s32.totalorder %s33, 0
      %p421 = por %p419, %p420
      %p422 = scmp.ne.s32.totalorder %s410, %s411
      %p423 = scmp.eq.s32.totalorder %s34, 1
      %p424 = por %p422, %p423
      %p426 = scmp.ne.s32.totalorder %s411, %s425
      %p427 = scmp.eq.s32.totalorder %s34, 0
      %p428 = por %p426, %p427
      %s430 = sadd.s32 %s429, 1
      %p433 = scmp.eq.s32.totalorder %s28, 1
      %p434 = scmp.ne.s32.totalorder %s429, %s431
      %p435 = scmp.eq.s32.totalorder %s28, 0
      %p436 = por %p434, %p435
      %p437 = scmp.ne.s32.totalorder %s429, %s431
      %p438 = scmp.eq.s32.totalorder %s33, 1
      %p439 = por %p437, %p438
      %p440 = scmp.ne.s32.totalorder %s431, %s432
      %p441 = scmp.eq.s32.totalorder %s33, 0
      %p442 = por %p440, %p441
      %p443 = scmp.ne.s32.totalorder %s431, %s432
      %p444 = scmp.eq.s32.totalorder %s34, 1
      %p445 = por %p443, %p444
      %p447 = scmp.ne.s32.totalorder %s432, %s446
      %p448 = scmp.eq.s32.totalorder %s34, 0
      %p449 = por %p447, %p448
      %s450 = ssub.s32 %s28, %s35
      %p451 = scmp.eq.s32.totalorder %s450, 0
      %s453 = sadd.s32 %s452, 1
      %s454 = scalar_select %p451, %s452, %s453
      %p457 = pneg %p451
      %p458 = scmp.eq.s32.totalorder %s28, 1
      %p459 = por %p457, %p458
      %p460 = scmp.ne.s32.totalorder %s452, %s455
      %p461 = scmp.eq.s32.totalorder %s28, 0
      %p462 = por %p460, %p461
      %p463 = scmp.ne.s32.totalorder %s452, %s455
      %p464 = scmp.eq.s32.totalorder %s33, 1
      %p465 = por %p463, %p464
      %p466 = scmp.ne.s32.totalorder %s455, %s456
      %p467 = scmp.eq.s32.totalorder %s33, 0
      %p468 = por %p466, %p467
      %p469 = scmp.ne.s32.totalorder %s455, %s456
      %p470 = scmp.eq.s32.totalorder %s34, 1
      %p471 = por %p469, %p470
      %p473 = scmp.ne.s32.totalorder %s456, %s472
      %p474 = scmp.eq.s32.totalorder %s34, 0
      %p475 = por %p473, %p474
      %p476 = scmp.le.s32.totalorder 1, %s28
      %p477 = scmp.lt.s32.totalorder %s28, 3
      %p478 = pnand %p476, %p477
      %p479 = pneg %p478
      // Predicated region
      $region9: #{_lambda_.4} parent=5 // pred_check
        _
      $region10: #{_lambda_.4} parent=5 // pred_check_branch
        %481 = sbr.rel (%p478) target = $region12
      $region11: #{_lambda_.4} parent=5 // pred_region
        %s482 = ssub.s32 %s28, 1
        // Predicated region
        $region13: #{_lambda_.4} parent=11 // pred_check
          %p483 = pneg %p127
        $region14: #{_lambda_.4} parent=11 // pred_check_branch
          %485 = sbr.rel (%p483) target = $region16
        $region15: #{_lambda_.4} parent=11 // pred_region
          %487 = vsyncadd [#allocation3], 0
          %s488 = sshll.u32 %s3, 4
          %s489 = int_to_ptr.hbm [resolvable:$true] %s488
          %s490 = sshll.u32 [#allocation2], 4
          %s491 = int_to_ptr.vmem [resolvable:$true] %s490
          %496 = dma.hbm_to_vmem [thread:$0]  %s489, 1024, %s491, [#allocation3], 64, 64, 4
        $region16: #{_lambda_.4} parent=11 // pred_fallthru
          _
        // Predicated region
        $region17: #{_lambda_.4} parent=11 // pred_check
          %p497 = pneg %p148
        $region18: #{_lambda_.4} parent=11 // pred_check_branch
          %499 = sbr.rel (%p497) target = $region20
        $region19: #{_lambda_.4} parent=11 // pred_region
          _
        $region20: #{_lambda_.4} parent=11 // pred_fallthru
          _
        // Predicated region
        $region21: #{_lambda_.4} parent=11 // pred_check
          %p500 = pneg %p169
        $region22: #{_lambda_.4} parent=11 // pred_check_branch
          %502 = sbr.rel (%p500) target = $region24
        $region23: #{_lambda_.4} parent=11 // pred_region
          _
        $region24: #{_lambda_.4} parent=11 // pred_fallthru
          _
        // Predicated region
        $region25: #{_lambda_.4} parent=11 // pred_check
          %p503 = pneg %p190
        $region26: #{_lambda_.4} parent=11 // pred_check_branch
          %505 = sbr.rel (%p503) target = $region28
        $region27: #{_lambda_.4} parent=11 // pred_region
          _
        $region28: #{_lambda_.4} parent=11 // pred_fallthru
          _
        // Predicated region
        $region29: #{_lambda_.4} parent=11 // pred_check
          %p506 = pneg %p211
        $region30: #{_lambda_.4} parent=11 // pred_check_branch
          %508 = sbr.rel (%p506) target = $region32
        $region31: #{_lambda_.4} parent=11 // pred_region
          %510 = vsyncadd [#allocation5], 0
          %s511 = sshll.u32 %s7, 4
          %s512 = int_to_ptr.hbm [resolvable:$true] %s511
          %s513 = sshll.u32 [#allocation4], 4
          %s514 = int_to_ptr.vmem [resolvable:$true] %s513
          %519 = dma.hbm_to_vmem [thread:$0]  %s512, 1024, %s514, [#allocation5], 64, 64, 4
        $region32: #{_lambda_.4} parent=11 // pred_fallthru
          _
        // Predicated region
        $region33: #{_lambda_.4} parent=11 // pred_check
          %p520 = pneg %p232
        $region34: #{_lambda_.4} parent=11 // pred_check_branch
          %522 = sbr.rel (%p520) target = $region36
        $region35: #{_lambda_.4} parent=11 // pred_region
          _
        $region36: #{_lambda_.4} parent=11 // pred_fallthru
          _
        // Predicated region
        $region37: #{_lambda_.4} parent=11 // pred_check
          %p523 = pneg %p253
        $region38: #{_lambda_.4} parent=11 // pred_check_branch
          %525 = sbr.rel (%p523) target = $region40
        $region39: #{_lambda_.4} parent=11 // pred_region
          _
        $region40: #{_lambda_.4} parent=11 // pred_fallthru
          _
        // Predicated region
        $region41: #{_lambda_.4} parent=11 // pred_check
          %p526 = pneg %p274
        $region42: #{_lambda_.4} parent=11 // pred_check_branch
          %528 = sbr.rel (%p526) target = $region44
        $region43: #{_lambda_.4} parent=11 // pred_region
          _
        $region44: #{_lambda_.4} parent=11 // pred_fallthru
          _
        // Predicated region
        $region45: #{_lambda_.4} parent=11 // pred_check
          %p529 = pneg %p295
        $region46: #{_lambda_.4} parent=11 // pred_check_branch
          %531 = sbr.rel (%p529) target = $region48
        $region47: #{_lambda_.4} parent=11 // pred_region
          _
        $region48: #{_lambda_.4} parent=11 // pred_fallthru
          _
        // Predicated region
        $region49: #{_lambda_.4} parent=11 // pred_check
          %p532 = pneg %p316
        $region50: #{_lambda_.4} parent=11 // pred_check_branch
          %534 = sbr.rel (%p532) target = $region52
        $region51: #{_lambda_.4} parent=11 // pred_region
          _
        $region52: #{_lambda_.4} parent=11 // pred_fallthru
          _
        // Predicated region
        $region53: #{_lambda_.4} parent=11 // pred_check
          %p535 = pneg %p337
        $region54: #{_lambda_.4} parent=11 // pred_check_branch
          %537 = sbr.rel (%p535) target = $region56
        $region55: #{_lambda_.4} parent=11 // pred_region
          %539 = vsyncadd [#allocation5], 0
          %s540 = sshll.u32 %s13, 4
          %s541 = int_to_ptr.hbm [resolvable:$true] %s540
          %s542 = sshll.u32 [#allocation6], 4
          %s543 = int_to_ptr.vmem [resolvable:$true] %s542
          %548 = dma.hbm_to_vmem [thread:$0]  %s541, 1024, %s543, [#allocation5], 64, 64, 4
        $region56: #{_lambda_.4} parent=11 // pred_fallthru
          _
        // Predicated region
        $region57: #{_lambda_.4} parent=11 // pred_check
          %p549 = pneg %p358
        $region58: #{_lambda_.4} parent=11 // pred_check_branch
          %551 = sbr.rel (%p549) target = $region60
        $region59: #{_lambda_.4} parent=11 // pred_region
          _
        $region60: #{_lambda_.4} parent=11 // pred_fallthru
          _
        // Predicated region
        $region61: #{_lambda_.4} parent=11 // pred_check
          %p552 = pneg %p379
        $region62: #{_lambda_.4} parent=11 // pred_check_branch
          %554 = sbr.rel (%p552) target = $region64
        $region63: #{_lambda_.4} parent=11 // pred_region
          %556 = vsyncadd [#allocation8], 0
          %s557 = sshll.u32 %s15, 4
          %s558 = int_to_ptr.hbm [resolvable:$true] %s557
          %s559 = sshll.u32 [#allocation7], 4
          %s560 = int_to_ptr.vmem [resolvable:$true] %s559
          %565 = dma.hbm_to_vmem [thread:$0]  %s558, 1024, %s560, [#allocation8], 64, 64, 4
        $region64: #{_lambda_.4} parent=11 // pred_fallthru
          _
        // Predicated region
        $region65: #{_lambda_.4} parent=11 // pred_check
          %p566 = pneg %p400
        $region66: #{_lambda_.4} parent=11 // pred_check_branch
          %568 = sbr.rel (%p566) target = $region68
        $region67: #{_lambda_.4} parent=11 // pred_region
          _
        $region68: #{_lambda_.4} parent=11 // pred_fallthru
          _
        // Predicated region
        $region69: #{_lambda_.4} parent=11 // pred_check
          %p569 = pneg %p421
        $region70: #{_lambda_.4} parent=11 // pred_check_branch
          %571 = sbr.rel (%p569) target = $region72
        $region71: #{_lambda_.4} parent=11 // pred_region
          _
        $region72: #{_lambda_.4} parent=11 // pred_fallthru
          _
        // Predicated region
        $region73: #{_lambda_.4} parent=11 // pred_check
          %p572 = pneg %p442
        $region74: #{_lambda_.4} parent=11 // pred_check_branch
          %574 = sbr.rel (%p572) target = $region76
        $region75: #{_lambda_.4} parent=11 // pred_region
          _
        $region76: #{_lambda_.4} parent=11 // pred_fallthru
          _
      $region12: #{_lambda_.4} parent=5 // pred_fallthru
        _
      %p575 = scmp.lt.s32.totalorder %s28, 2
      // Predicated region
      $region77: #{_lambda_.4} parent=5 // pred_check
        %p576 = pneg %p575
      $region78: #{_lambda_.4} parent=5 // pred_check_branch
        %578 = sbr.rel (%p576) target = $region80
      $region79: #{_lambda_.4} parent=5 // pred_region
        // Predicated region
        $region81: #{_lambda_.4} parent=79 // pred_check
          %p579 = pneg %p48
        $region82: #{_lambda_.4} parent=79 // pred_check_branch
          %581 = sbr.rel (%p579) target = $region84
        $region83: #{_lambda_.4} parent=79 // pred_region
          %s582 = smul.u32 2, %s28
          %p583 = scmp.lt.s32.totalorder %s582, 3
          %s584 = scalar_select %p583, %s582, 3
          %s585 = smul.addr %s584, 4
          %s586 = scalar_lea.vmem %s0, %s585
          %s587 = smul.u32 2, %s28
        $region84: #{_lambda_.4} parent=79 // pred_fallthru
          _
        // Predicated region
        $region85: #{_lambda_.4} parent=79 // pred_check
          %p588 = pneg %p74
        $region86: #{_lambda_.4} parent=79 // pred_check_branch
          %590 = sbr.rel (%p588) target = $region88
        $region87: #{_lambda_.4} parent=79 // pred_region
          %s591 = smul.u32 2, %s28
          %p592 = scmp.lt.s32.totalorder %s591, 3
          %s593 = scalar_select %p592, %s591, 3
          %s594 = smul.addr %s593, 8
          %s595 = scalar_lea.vmem %s1, %s594
          %s596 = smul.u32 2, %s28
        $region88: #{_lambda_.4} parent=79 // pred_fallthru
          _
        // Predicated region
        $region89: #{_lambda_.4} parent=79 // pred_check
          %p597 = pneg %p100
        $region90: #{_lambda_.4} parent=79 // pred_check_branch
          %599 = sbr.rel (%p597) target = $region92
        $region91: #{_lambda_.4} parent=79 // pred_region
          %s600 = smul.u32 2, %s28
          %p601 = scmp.lt.s32.totalorder %s600, 3
          %s602 = scalar_select %p601, %s600, 3
          %s603 = scalar_lea.vmem %s2, %s602
          %s604 = smul.u32 2, %s28
        $region92: #{_lambda_.4} parent=79 // pred_fallthru
          _
      $region80: #{_lambda_.4} parent=5 // pred_fallthru
        _
      %p605 = scmp.le.s32.totalorder 1, %s28
      %p606 = scmp.lt.s32.totalorder %s28, 3
      %p607 = pnand %p605, %p606
      %p608 = pneg %p607
      // Predicated region
      $region93: #{_lambda_.4} parent=5 // pred_check
        _
      $region94: #{_lambda_.4} parent=5 // pred_check_branch
        %610 = sbr.rel (%p607) target = $region96
      $region95: #{_lambda_.4} parent=5 // pred_region
        %s611 = ssub.s32 %s28, 1
        // Predicated region
        $region97: #{_lambda_.4} parent=95 // pred_check
          %p612 = pneg %p127
        $region98: #{_lambda_.4} parent=95 // pred_check_branch
          %614 = sbr.rel (%p612) target = $region100
        $region99: #{_lambda_.4} parent=95 // pred_region
          %616 = dma.done [#allocation3], 1024
        $region100: #{_lambda_.4} parent=95 // pred_fallthru
          _
        // Predicated region
        $region101: #{_lambda_.4} parent=95 // pred_check
          %p617 = pneg %p211
        $region102: #{_lambda_.4} parent=95 // pred_check_branch
          %619 = sbr.rel (%p617) target = $region104
        $region103: #{_lambda_.4} parent=95 // pred_region
          %621 = dma.done [#allocation5], 1024
        $region104: #{_lambda_.4} parent=95 // pred_fallthru
          _
        // Predicated region
        $region105: #{_lambda_.4} parent=95 // pred_check
          %p622 = pneg %p337
        $region106: #{_lambda_.4} parent=95 // pred_check_branch
          %624 = sbr.rel (%p622) target = $region108
        $region107: #{_lambda_.4} parent=95 // pred_region
          %626 = dma.done [#allocation5], 1024
        $region108: #{_lambda_.4} parent=95 // pred_fallthru
          _
        // Predicated region
        $region109: #{_lambda_.4} parent=95 // pred_check
          %p627 = pneg %p379
        $region110: #{_lambda_.4} parent=95 // pred_check_branch
          %629 = sbr.rel (%p627) target = $region112
        $region111: #{_lambda_.4} parent=95 // pred_region
          %631 = dma.done [#allocation8], 1024
        $region112: #{_lambda_.4} parent=95 // pred_fallthru
          _
        %s632 = smul.u32 2, %s33
        %p633 = scmp.lt.s32.totalorder %s632, 3
        %s634 = scalar_select %p633, %s632, 3
        %s635 = smul.addr %s634, 4
        %s636 = scalar_lea.vmem %s0, %s635
        %p637 = pneg %p54
        %p638 = pneg %p51
        %s639 = smul.u32 2, %s33
        %p640 = scmp.lt.s32.totalorder %s639, 3
        %s641 = scalar_select %p640, %s639, 3
        %s642 = smul.addr %s641, 8
        %s643 = scalar_lea.vmem %s1, %s642
        %p644 = pneg %p80
        %p645 = pneg %p77
        %s646 = smul.u32 2, %s33
        %p647 = scmp.lt.s32.totalorder %s646, 3
        %s648 = scalar_select %p647, %s646, 3
        %s649 = scalar_lea.vmem %s2, %s648
        %p650 = pneg %p106
        %p651 = pneg %p103
        %p652 = pneg %p127
        %p653 = pneg %p124
        %p654 = pneg %p148
        %p655 = pneg %p145
        %p656 = pneg %p169
        %p657 = pneg %p166
        %p658 = pneg %p190
        %p659 = pneg %p187
        %p660 = pneg %p211
        %p661 = pneg %p208
        %p662 = pneg %p232
        %p663 = pneg %p229
        %p664 = pneg %p253
        %p665 = pneg %p250
        %p666 = pneg %p274
        %p667 = pneg %p271
        %p668 = pneg %p295
        %p669 = pneg %p292
        %p670 = pneg %p316
        %p671 = pneg %p313
        %p672 = pneg %p337
        %p673 = pneg %p334
        %p674 = pneg %p358
        %p675 = pneg %p355
        %p676 = pneg %p379
        %p677 = pneg %p376
        %p678 = pneg %p400
        %p679 = pneg %p397
        %p680 = pneg %p421
        %p681 = pneg %p418
        %p682 = pneg %p442
        %p683 = pneg %p439
        %p684 = pneg %p468
        %p685 = pneg %p465
        %s686 = smul.u32 2, %s33
        %p687 = scmp.lt.s32.totalorder %s686, 3
        %s688 = scalar_select %p687, %s686, 3
        %s689 = smul.addr %s688, 8
        %s690 = scalar_lea.vmem %s19, %s689
        %s691 = smul.u32 2, %s33
        %p692 = scmp.lt.s32.totalorder %s691, 3
        %s693 = scalar_select %p692, %s691, 3
        %s694 = smul.addr %s693, 4
        %s695 = scalar_lea.vmem %s0, %s694
        %s696 = smul.u32 2, %s33
        %s697 = smul.u32 2, %s33
        %p698 = scmp.lt.s32.totalorder %s697, 3
        %s699 = scalar_select %p698, %s697, 3
        %s700 = smul.addr %s699, 8
        %s701 = scalar_lea.vmem %s1, %s700
        %s702 = smul.u32 2, %s33
        %s703 = smul.u32 2, %s33
        %p704 = scmp.lt.s32.totalorder %s703, 3
        %s705 = scalar_select %p704, %s703, 3
        %s706 = scalar_lea.vmem %s2, %s705
        %s707 = smul.u32 2, %s33
        %s708 = smul.u32 2, %s33
        %p709 = scmp.lt.s32.totalorder %s708, 3
        %s710 = scalar_select %p709, %s708, 3
        %s711 = smul.addr %s710, 8
        %s712 = scalar_lea.vmem %s19, %s711
        %s713 = smul.u32 2, %s33
        %v715 = vld [vmem:[%s695] sm:$0xf]
        %v716 = vld [vmem:[%s695 + $0x4] sm:$0xf]
        %v717 = vunpack.c.l.bf16 %v715
        %v718 = vunpack.c.l.bf16 %v716
        %v719 = vld [vmem:[%s701] sm:$0xff]
        %v720 = vld [vmem:[%s701 + $0x8] sm:$0xff]
        %v721 = vld [vmem:[#allocation2] sm:$0xf]
        %v722 = vld [vmem:[#allocation2 + $0x4] sm:$0xf]
        %v723 = vld [vmem:[#allocation2 + $0x8] sm:$0xf]
        %v724 = vld [vmem:[#allocation2 + $0xc] sm:$0xf]
        %v725 = vld [vmem:[#allocation2 + $0x10] sm:$0xf]
        %v726 = vld [vmem:[#allocation2 + $0x14] sm:$0xf]
        %v727 = vld [vmem:[#allocation2 + $0x18] sm:$0xf]
        %v728 = vld [vmem:[#allocation2 + $0x1c] sm:$0xf]
        %v729 = vld [vmem:[#allocation2 + $0x20] sm:$0xf]
        %v730 = vld [vmem:[#allocation2 + $0x24] sm:$0xf]
        %v731 = vld [vmem:[#allocation2 + $0x28] sm:$0xf]
        %v732 = vld [vmem:[#allocation2 + $0x2c] sm:$0xf]
        %v733 = vld [vmem:[#allocation2 + $0x30] sm:$0xf]
        %v734 = vld [vmem:[#allocation2 + $0x34] sm:$0xf]
        %v735 = vld [vmem:[#allocation2 + $0x38] sm:$0xf]
        %v736 = vld [vmem:[#allocation2 + $0x3c] sm:$0xf]
        %v737 = vpack.c.bf16 %v718, %v717
        %v738 = vld [vmem:[%s4] sm:$0x1]
        %v740 = vperm.slane %v738, 0
        %v758 = vunpack.c.l.b16 %v721
        %v759 = vunpack.c.l.b16 %v722
        %v760 = vunpack.c.l.b16 %v723
        %v761 = vunpack.c.l.b16 %v724
        %v762 = vunpack.c.l.b16 %v725
        %v763 = vunpack.c.l.b16 %v726
        %v764 = vunpack.c.l.b16 %v727
        %v765 = vunpack.c.l.b16 %v728
        %v766 = vunpack.c.l.b16 %v729
        %v767 = vunpack.c.l.b16 %v730
        %v768 = vunpack.c.l.b16 %v731
        %v769 = vunpack.c.l.b16 %v732
        %v770 = vunpack.c.l.b16 %v733
        %v771 = vunpack.c.l.b16 %v734
        %v772 = vunpack.c.l.b16 %v735
        %v773 = vunpack.c.l.b16 %v736
        %v774 = vpack.c.b16 %v759, %v758
        %v775 = vpack.c.b16 %v761, %v760
        %v776 = vpack.c.b16 %v763, %v762
        %v777 = vpack.c.b16 %v765, %v764
        %v778 = vpack.c.b16 %v767, %v766
        %v779 = vpack.c.b16 %v769, %v768
        %v780 = vpack.c.b16 %v771, %v770
        %v781 = vpack.c.b16 %v773, %v772
        %790 = vmatpush.bf16.msra.mxu0 %v781
        %791 = vmatpush.bf16.msra.mxu0 %v780
        %792 = vmatpush.bf16.msra.mxu0 %v779
        %793 = vmatpush.bf16.msra.mxu0 %v778
        %794 = vmatpush.bf16.msra.mxu0 %v777
        %795 = vmatpush.bf16.msra.mxu0 %v776
        %796 = vmatpush.bf16.msra.mxu0 %v775
        %797 = vmatpush.bf16.msra.mxu0 %v774
        %798 = vmatmul.bf16.gmra.mxu0 %v737
        %v799 = vpop.f32.mrf.mxu0
        %v800 = vadd.f32 %v740, %v799
        %v801 = vpop.f32.mrf.mxu0
        %v802 = vadd.f32 %v740, %v801
        %803 = vdwg.mxu0
        %v804 = vadd.f32 %v800, %v719
        %v805 = vadd.f32 %v802, %v720
        %v806 = vld [vmem:[%s706] sm:$0x1]
        %v807 = vld [vmem:[%s706 + $0x1] sm:$0x1]
        %v808 = vlaneseq
        %v809 = vshrl.u32 %v808, 7
        %v810 = vlaneseq
        %v811 = vand.u32 %v810, 127
        %vm812 = vcmp.gt.s32.totalorder %v811, %v809
        %v813 = vsel %vm812, -1e+09, 0.0
        %v816 = vperm.slane %v806, 0
        %v817 = vperm.slane %v807, 0
        %v820 = vadd.f32 %v813, %v816
        %v821 = vadd.f32 %v813, %v817
        %vm822 = vcmp.eq.f32.partialorder %v806, 0.0
        %vm823 = vcmp.eq.f32.partialorder %v807, 0.0
        %v824 = vsel %vm822, 1.0, 0.0
        %v825 = vsel %vm823, 1.0, 0.0
        %vm826 = vcmp.eq.s32.totalorder %v809, %v811
        %v827 = vsel %vm826, 1.0, 0.0
        %v830 = vperm.slane %v824, 0
        %v831 = vperm.slane %v825, 0
        %v834 = vmul.f32 %v827, %v830
        %v835 = vmul.f32 %v827, %v831
        %vm836 = vcmask 64512
        %v837 = vsel %vm836, %v834, 0.0
        %838 = vadd.xlane.f32.xlu0 %v837
        %v839 = vpop.xlane.xlu0 %838
        %v840 = vsel %vm836, %v835, 0.0
        %841 = vadd.xlane.f32.xlu0 %v840
        %v842 = vpop.xlane.xlu0 %841
        %v843 = vld [vmem:[%s5] sm:$0xff]
        %v844 = vld [vmem:[%s5 + $0x8] sm:$0xf]
        %v845 = vld [vmem:[%s5 + $0xc] sm:$0xff]
        %v846 = vld [vmem:[%s5 + $0x14] sm:$0xf]
        %v847 = vld [vmem:[%s5 + $0x18] sm:$0xff]
        %v848 = vld [vmem:[%s5 + $0x20] sm:$0xf]
        %v849 = vld [vmem:[%s5 + $0x24] sm:$0xff]
        %v850 = vld [vmem:[%s5 + $0x2c] sm:$0xf]
        %v851 = vld [vmem:[%s5 + $0x30] sm:$0xff]
        %v852 = vld [vmem:[%s5 + $0x38] sm:$0xf]
        %v853 = vld [vmem:[%s5 + $0x3c] sm:$0xff]
        %v854 = vld [vmem:[%s5 + $0x44] sm:$0xf]
        %v855 = vld [vmem:[%s5 + $0x48] sm:$0xff]
        %v856 = vld [vmem:[%s5 + $0x50] sm:$0xf]
        %v857 = vld [vmem:[%s5 + $0x54] sm:$0xff]
        %v858 = vld [vmem:[%s5 + $0x5c] sm:$0xf]
        %v859 = vld [vmem:[%s5 + $0x60] sm:$0xff]
        %v860 = vld [vmem:[%s5 + $0x68] sm:$0xf]
        %v861 = vld [vmem:[%s5 + $0x6c] sm:$0xff]
        %v862 = vld [vmem:[%s5 + $0x74] sm:$0xf]
        %v863 = vld [vmem:[%s5 + $0x78] sm:$0xff]
        %v864 = vld [vmem:[%s5 + $0x80] sm:$0xf]
        %v865 = vld [vmem:[%s5 + $0x84] sm:$0xff]
        %v866 = vld [vmem:[%s5 + $0x8c] sm:$0xf]
        %v867 = vld [vmem:[%s5 + $0x90] sm:$0xff]
        %v868 = vld [vmem:[%s5 + $0x98] sm:$0xf]
        %v869 = vld [vmem:[%s5 + $0x9c] sm:$0xff]
        %v870 = vld [vmem:[%s5 + $0xa4] sm:$0xf]
        %v871 = vld [vmem:[%s5 + $0xa8] sm:$0xff]
        %v872 = vld [vmem:[%s5 + $0xb0] sm:$0xf]
        %v873 = vld [vmem:[%s5 + $0xb4] sm:$0xff]
        %v874 = vld [vmem:[%s5 + $0xbc] sm:$0xf]
        %v875 = vld [vmem:[%s6] sm:$0x7]
        %v876 = vld [vmem:[#allocation4] sm:$0xf]
        %v877 = vld [vmem:[#allocation4 + $0x4] sm:$0xf]
        %v878 = vld [vmem:[#allocation4 + $0x8] sm:$0xf]
        %v879 = vld [vmem:[#allocation4 + $0xc] sm:$0xf]
        %v880 = vld [vmem:[#allocation4 + $0x10] sm:$0xf]
        %v881 = vld [vmem:[#allocation4 + $0x14] sm:$0xf]
        %v882 = vld [vmem:[#allocation4 + $0x18] sm:$0xf]
        %v883 = vld [vmem:[#allocation4 + $0x1c] sm:$0xf]
        %v884 = vld [vmem:[#allocation4 + $0x20] sm:$0xf]
        %v885 = vld [vmem:[#allocation4 + $0x24] sm:$0xf]
        %v886 = vld [vmem:[#allocation4 + $0x28] sm:$0xf]
        %v887 = vld [vmem:[#allocation4 + $0x2c] sm:$0xf]
        %v888 = vld [vmem:[#allocation4 + $0x30] sm:$0xf]
        %v889 = vld [vmem:[#allocation4 + $0x34] sm:$0xf]
        %v890 = vld [vmem:[#allocation4 + $0x38] sm:$0xf]
        %v891 = vld [vmem:[#allocation4 + $0x3c] sm:$0xf]
        %v892 = vld [vmem:[%s8] sm:$0x1]
        %v893 = vpack.c.bf16 %v805, %v804
        %v895 = vperm.slane %v875, 0
        %v896 = vperm.slane %v875, 1
        %v897 = vperm.slane %v875, 2
        %v933 = vunpack.c.l.b16 %v843
        %v934 = vunpack.c.h.b16 %v843
        %v935 = vunpack.c.l.b16 %v844
        %v936 = vunpack.c.l.b16 %v845
        %v937 = vunpack.c.h.b16 %v845
        %v938 = vunpack.c.l.b16 %v846
        %v939 = vunpack.c.l.b16 %v847
        %v940 = vunpack.c.h.b16 %v847
        %v941 = vunpack.c.l.b16 %v848
        %v942 = vunpack.c.l.b16 %v849
        %v943 = vunpack.c.h.b16 %v849
        %v944 = vunpack.c.l.b16 %v850
        %v945 = vunpack.c.l.b16 %v851
        %v946 = vunpack.c.h.b16 %v851
        %v947 = vunpack.c.l.b16 %v852
        %v948 = vunpack.c.l.b16 %v853
        %v949 = vunpack.c.h.b16 %v853
        %v950 = vunpack.c.l.b16 %v854
        %v951 = vunpack.c.l.b16 %v855
        %v952 = vunpack.c.h.b16 %v855
        %v953 = vunpack.c.l.b16 %v856
        %v954 = vunpack.c.l.b16 %v857
        %v955 = vunpack.c.h.b16 %v857
        %v956 = vunpack.c.l.b16 %v858
        %v957 = vunpack.c.l.b16 %v859
        %v958 = vunpack.c.h.b16 %v859
        %v959 = vunpack.c.l.b16 %v860
        %v960 = vunpack.c.l.b16 %v861
        %v961 = vunpack.c.h.b16 %v861
        %v962 = vunpack.c.l.b16 %v862
        %v963 = vunpack.c.l.b16 %v863
        %v964 = vunpack.c.h.b16 %v863
        %v965 = vunpack.c.l.b16 %v864
        %v966 = vunpack.c.l.b16 %v865
        %v967 = vunpack.c.h.b16 %v865
        %v968 = vunpack.c.l.b16 %v866
        %v969 = vunpack.c.l.b16 %v867
        %v970 = vunpack.c.h.b16 %v867
        %v971 = vunpack.c.l.b16 %v868
        %v972 = vunpack.c.l.b16 %v869
        %v973 = vunpack.c.h.b16 %v869
        %v974 = vunpack.c.l.b16 %v870
        %v975 = vunpack.c.l.b16 %v871
        %v976 = vunpack.c.h.b16 %v871
        %v977 = vunpack.c.l.b16 %v872
        %v978 = vunpack.c.l.b16 %v873
        %v979 = vunpack.c.h.b16 %v873
        %v980 = vunpack.c.l.b16 %v874
        %v981 = vpack.c.b16 %v936, %v933
        %v982 = vpack.c.b16 %v937, %v934
        %v983 = vpack.c.b16 %v938, %v935
        %v984 = vpack.c.b16 %v942, %v939
        %v985 = vpack.c.b16 %v943, %v940
        %v986 = vpack.c.b16 %v944, %v941
        %v987 = vpack.c.b16 %v948, %v945
        %v988 = vpack.c.b16 %v949, %v946
        %v989 = vpack.c.b16 %v950, %v947
        %v990 = vpack.c.b16 %v954, %v951
        %v991 = vpack.c.b16 %v955, %v952
        %v992 = vpack.c.b16 %v956, %v953
        %v993 = vpack.c.b16 %v960, %v957
        %v994 = vpack.c.b16 %v961, %v958
        %v995 = vpack.c.b16 %v962, %v959
        %v996 = vpack.c.b16 %v966, %v963
        %v997 = vpack.c.b16 %v967, %v964
        %v998 = vpack.c.b16 %v968, %v965
        %v999 = vpack.c.b16 %v972, %v969
        %v1000 = vpack.c.b16 %v973, %v970
        %v1001 = vpack.c.b16 %v974, %v971
        %v1002 = vpack.c.b16 %v978, %v975
        %v1003 = vpack.c.b16 %v979, %v976
        %v1004 = vpack.c.b16 %v980, %v977
        %1029 = vmatpush.bf16.msra.mxu0 %v1002
        %1030 = vmatpush.bf16.msra.mxu0 %v999
        %1031 = vmatpush.bf16.msra.mxu0 %v996
        %1032 = vmatpush.bf16.msra.mxu0 %v993
        %1033 = vmatpush.bf16.msra.mxu0 %v990
        %1034 = vmatpush.bf16.msra.mxu0 %v987
        %1035 = vmatpush.bf16.msra.mxu0 %v984
        %1036 = vmatpush.bf16.msra.mxu0 %v981
        %1037 = vmatmul.bf16.gmra.mxu0 %v893
        %v1038 = vpop.f32.mrf.mxu0
        %v1039 = vadd.f32 %v895, %v1038
        %v1040 = vpop.f32.mrf.mxu0
        %v1041 = vadd.f32 %v895, %v1040
        %1042 = vdwg.mxu0
        %1043 = vmatpush.bf16.msra.mxu0 %v1003
        %1044 = vmatpush.bf16.msra.mxu0 %v1000
        %1045 = vmatpush.bf16.msra.mxu0 %v997
        %1046 = vmatpush.bf16.msra.mxu0 %v994
        %1047 = vmatpush.bf16.msra.mxu0 %v991
        %1048 = vmatpush.bf16.msra.mxu0 %v988
        %1049 = vmatpush.bf16.msra.mxu0 %v985
        %1050 = vmatpush.bf16.msra.mxu0 %v982
        %1051 = vmatmul.bf16.gmra.mxu0 %v893
        %v1052 = vpop.f32.mrf.mxu0
        %v1053 = vadd.f32 %v896, %v1052
        %v1054 = vpop.f32.mrf.mxu0
        %v1055 = vadd.f32 %v896, %v1054
        %1056 = vdwg.mxu0
        %1057 = vmatpush.bf16.msra.mxu0 %v1004
        %1058 = vmatpush.bf16.msra.mxu0 %v1001
        %1059 = vmatpush.bf16.msra.mxu0 %v998
        %1060 = vmatpush.bf16.msra.mxu0 %v995
        %1061 = vmatpush.bf16.msra.mxu0 %v992
        %1062 = vmatpush.bf16.msra.mxu0 %v989
        %1063 = vmatpush.bf16.msra.mxu0 %v986
        %1064 = vmatpush.bf16.msra.mxu0 %v983
        %1065 = vmatmul.bf16.gmra.mxu0 %v893
        %v1066 = vpop.f32.mrf.mxu0
        %v1067 = vadd.f32 %v897, %v1066
        %v1068 = vpop.f32.mrf.mxu0
        %v1069 = vadd.f32 %v897, %v1068
        %1070 = vdwg.mxu0
        %v1071 = vpack.c.bf16 %v1039, %v1039
        %v1072 = vpack.c.bf16 %v1041, %v1041
        %v1073 = vpack.c.bf16 %v1053, %v1053
        %v1074 = vpack.c.bf16 %v1055, %v1055
        %v1075 = vpack.c.bf16 %v1067, %v1067
        %v1076 = vpack.c.bf16 %v1069, %v1069
        %vm1077 = vcmask 130048
        %v1079 = vsel %vm1077, %v1071, 0
        %v1082 = vsel %vm1077, %v1073, 0
        %1084 = vmatpush.bf16.xpose.msra.mxu0 0
        %1085 = vmatpush.bf16.xpose.msra.mxu0 0
        %1086 = vmatpush.bf16.xpose.msra.mxu0 0
        %1087 = vmatpush.bf16.xpose.msra.mxu0 0
        %1088 = vmatpush.bf16.xpose.msra.mxu0 0
        %1089 = vmatpush.bf16.xpose.msra.mxu0 0
        %1090 = vmatpush.bf16.xpose.msra.mxu0 0
        %1091 = vmatpush.bf16.xpose.msra.mxu0 %v1082
        %1092 = vmatmul.bf16.gmra.mxu0 %v1079
        %v1093 = vpop.f32.mrf.mxu0
        %v1094 = vadd.f32 0.0, %v1093
        %v1095 = vpop.f32.mrf.mxu0
        %1096 = vdwg.mxu0
        %v1098 = vsel %vm1077, %v1072, 0
        %v1101 = vsel %vm1077, %v1074, 0
        %1103 = vmatpush.bf16.xpose.msra.mxu0 0
        %1104 = vmatpush.bf16.xpose.msra.mxu0 0
        %1105 = vmatpush.bf16.xpose.msra.mxu0 0
        %1106 = vmatpush.bf16.xpose.msra.mxu0 0
        %1107 = vmatpush.bf16.xpose.msra.mxu0 0
        %1108 = vmatpush.bf16.xpose.msra.mxu0 0
        %1109 = vmatpush.bf16.xpose.msra.mxu0 0
        %1110 = vmatpush.bf16.xpose.msra.mxu0 %v1101
        %1111 = vmatmul.bf16.gmra.mxu0 %v1098
        %v1112 = vpop.f32.mrf.mxu0
        %v1113 = vadd.f32 0.0, %v1112
        %v1114 = vpop.f32.mrf.mxu0
        %1115 = vdwg.mxu0
        %v1116 = vmul.f32 %v1094, 0.25
        %v1117 = vmul.f32 %v1113, 0.25
        %v1118 = vadd.f32 %v1116, %v820
        %v1119 = vadd.f32 %v1117, %v821
        %v1120 = vsel %vm836, %v1118, -inf
        %1121 = vmax.xlane.f32.xlu0 %v1120
        %v1122 = vpop.xlane.xlu0 %1121
        %v1123 = vsel %vm836, %v1119, -inf
        %1124 = vmax.xlane.f32.xlu0 %v1123
        %v1125 = vpop.xlane.xlu0 %1124
        %v1126 = vsub.f32 %v1118, %v1122
        %v1127 = vsub.f32 %v1119, %v1125
        %v1128 = vmul.f32 %v1126, 1.442695
        %v1129 = vpow.pop %v1128
        %v1130 = vmul.f32 %v1127, 1.442695
        %v1131 = vpow.pop %v1130
        %v1132 = vsel %vm836, %v1129, 0.0
        %1133 = vadd.xlane.f32.xlu0 %v1132
        %v1134 = vpop.xlane.xlu0 %1133
        %v1135 = vsel %vm836, %v1131, 0.0
        %1136 = vadd.xlane.f32.xlu0 %v1135
        %v1137 = vpop.xlane.xlu0 %1136
        %v1138 = vrcp.pop %v1134
        %v1139 = vrcp.pop %v1137
        %v1140 = vmul.f32 %v1129, %v1138
        %v1141 = vmul.f32 %v1131, %v1139
        %v1142 = vpack.c.bf16 %v1140, %v1140
        %v1143 = vpack.c.bf16 %v1141, %v1141
        %v1145 = vsel %vm836, %v1142, 0
        %vm1147 = vcmask 1043456
        %v1149 = vsel %vm1147, %v1075, 0
        %1151 = vmatpush.bf16.msra.mxu0 0
        %1152 = vmatpush.bf16.msra.mxu0 0
        %1153 = vmatpush.bf16.msra.mxu0 0
        %1154 = vmatpush.bf16.msra.mxu0 0
        %1155 = vmatpush.bf16.msra.mxu0 0
        %1156 = vmatpush.bf16.msra.mxu0 0
        %1157 = vmatpush.bf16.msra.mxu0 0
        %1158 = vmatpush.bf16.msra.mxu0 %v1149
        %1159 = vmatmul.bf16.gmra.mxu0 %v1145
        %v1160 = vpop.f32.mrf.mxu0
        %v1161 = vadd.f32 0.0, %v1160
        %v1162 = vpop.f32.mrf.mxu0
        %1163 = vdwg.mxu0
        %v1165 = vsel %vm836, %v1143, 0
        %v1168 = vsel %vm1147, %v1076, 0
        %1170 = vmatpush.bf16.msra.mxu0 0
        %1171 = vmatpush.bf16.msra.mxu0 0
        %1172 = vmatpush.bf16.msra.mxu0 0
        %1173 = vmatpush.bf16.msra.mxu0 0
        %1174 = vmatpush.bf16.msra.mxu0 0
        %1175 = vmatpush.bf16.msra.mxu0 0
        %1176 = vmatpush.bf16.msra.mxu0 0
        %1177 = vmatpush.bf16.msra.mxu0 %v1168
        %1178 = vmatmul.bf16.gmra.mxu0 %v1165
        %v1179 = vpop.f32.mrf.mxu0
        %v1180 = vadd.f32 0.0, %v1179
        %v1181 = vpop.f32.mrf.mxu0
        %1182 = vdwg.mxu0
        %v1184 = vunpack.c.l.b16 %v1071
        %v1185 = vpack.c.b16 %v1184, %v1184
        %1186 = vrot.lane.b32.xlu0 %v1185, 112
        %v1187 = vpop.permute.xlu0 %1186
        %v1189 = vunpack.c.l.b16 %v1073
        %v1190 = vpack.c.b16 %v1189, %v1189
        %1191 = vrot.lane.b32.xlu0 %v1190, 112
        %v1192 = vpop.permute.xlu0 %1191
        %v1194 = vsel %vm1077, %v1187, 0
        %v1197 = vsel %vm1077, %v1192, 0
        %1199 = vmatpush.bf16.xpose.msra.mxu0 0
        %1200 = vmatpush.bf16.xpose.msra.mxu0 0
        %1201 = vmatpush.bf16.xpose.msra.mxu0 0
        %1202 = vmatpush.bf16.xpose.msra.mxu0 0
        %1203 = vmatpush.bf16.xpose.msra.mxu0 0
        %1204 = vmatpush.bf16.xpose.msra.mxu0 0
        %1205 = vmatpush.bf16.xpose.msra.mxu0 0
        %1206 = vmatpush.bf16.xpose.msra.mxu0 %v1197
        %1207 = vmatmul.bf16.gmra.mxu0 %v1194
        %v1208 = vpop.f32.mrf.mxu0
        %v1209 = vadd.f32 0.0, %v1208
        %v1210 = vpop.f32.mrf.mxu0
        %1211 = vdwg.mxu0
        %v1213 = vunpack.c.l.b16 %v1072
        %v1214 = vpack.c.b16 %v1213, %v1213
        %1215 = vrot.lane.b32.xlu0 %v1214, 112
        %v1216 = vpop.permute.xlu0 %1215
        %v1218 = vunpack.c.l.b16 %v1074
        %v1219 = vpack.c.b16 %v1218, %v1218
        %1220 = vrot.lane.b32.xlu0 %v1219, 112
        %v1221 = vpop.permute.xlu0 %1220
        %v1223 = vsel %vm1077, %v1216, 0
        %v1226 = vsel %vm1077, %v1221, 0
        %1228 = vmatpush.bf16.xpose.msra.mxu0 0
        %1229 = vmatpush.bf16.xpose.msra.mxu0 0
        %1230 = vmatpush.bf16.xpose.msra.mxu0 0
        %1231 = vmatpush.bf16.xpose.msra.mxu0 0
        %1232 = vmatpush.bf16.xpose.msra.mxu0 0
        %1233 = vmatpush.bf16.xpose.msra.mxu0 0
        %1234 = vmatpush.bf16.xpose.msra.mxu0 0
        %1235 = vmatpush.bf16.xpose.msra.mxu0 %v1226
        %1236 = vmatmul.bf16.gmra.mxu0 %v1223
        %v1237 = vpop.f32.mrf.mxu0
        %v1238 = vadd.f32 0.0, %v1237
        %v1239 = vpop.f32.mrf.mxu0
        %1240 = vdwg.mxu0
        %v1241 = vmul.f32 %v1209, 0.25
        %v1242 = vmul.f32 %v1238, 0.25
        %v1243 = vadd.f32 %v1241, %v820
        %v1244 = vadd.f32 %v1242, %v821
        %v1245 = vsel %vm836, %v1243, -inf
        %1246 = vmax.xlane.f32.xlu0 %v1245
        %v1247 = vpop.xlane.xlu0 %1246
        %v1248 = vsel %vm836, %v1244, -inf
        %1249 = vmax.xlane.f32.xlu0 %v1248
        %v1250 = vpop.xlane.xlu0 %1249
        %v1251 = vsub.f32 %v1243, %v1247
        %v1252 = vsub.f32 %v1244, %v1250
        %v1253 = vmul.f32 %v1251, 1.442695
        %v1254 = vpow.pop %v1253
        %v1255 = vmul.f32 %v1252, 1.442695
        %v1256 = vpow.pop %v1255
        %v1257 = vsel %vm836, %v1254, 0.0
        %1258 = vadd.xlane.f32.xlu0 %v1257
        %v1259 = vpop.xlane.xlu0 %1258
        %v1260 = vsel %vm836, %v1256, 0.0
        %1261 = vadd.xlane.f32.xlu0 %v1260
        %v1262 = vpop.xlane.xlu0 %1261
        %v1263 = vrcp.pop %v1259
        %v1264 = vrcp.pop %v1262
        %v1265 = vmul.f32 %v1254, %v1263
        %v1266 = vmul.f32 %v1256, %v1264
        %v1267 = vpack.c.bf16 %v1265, %v1265
        %v1268 = vpack.c.bf16 %v1266, %v1266
        %v1270 = vunpack.c.l.b16 %v1075
        %v1271 = vpack.c.b16 %v1270, %v1270
        %1272 = vrot.lane.b32.xlu0 %v1271, 112
        %v1273 = vpop.permute.xlu0 %1272
        %v1275 = vsel %vm836, %v1267, 0
        %v1278 = vsel %vm1147, %v1273, 0
        %1280 = vmatpush.bf16.msra.mxu0 0
        %1281 = vmatpush.bf16.msra.mxu0 0
        %1282 = vmatpush.bf16.msra.mxu0 0
        %1283 = vmatpush.bf16.msra.mxu0 0
        %1284 = vmatpush.bf16.msra.mxu0 0
        %1285 = vmatpush.bf16.msra.mxu0 0
        %1286 = vmatpush.bf16.msra.mxu0 0
        %1287 = vmatpush.bf16.msra.mxu0 %v1278
        %1288 = vmatmul.bf16.gmra.mxu0 %v1275
        %v1289 = vpop.f32.mrf.mxu0
        %v1290 = vadd.f32 0.0, %v1289
        %v1291 = vpop.f32.mrf.mxu0
        %1292 = vdwg.mxu0
        %v1294 = vunpack.c.l.b16 %v1076
        %v1295 = vpack.c.b16 %v1294, %v1294
        %1296 = vrot.lane.b32.xlu0 %v1295, 112
        %v1297 = vpop.permute.xlu0 %1296
        %v1299 = vsel %vm836, %v1268, 0
        %v1302 = vsel %vm1147, %v1297, 0
        %1304 = vmatpush.bf16.msra.mxu0 0
        %1305 = vmatpush.bf16.msra.mxu0 0
        %1306 = vmatpush.bf16.msra.mxu0 0
        %1307 = vmatpush.bf16.msra.mxu0 0
        %1308 = vmatpush.bf16.msra.mxu0 0
        %1309 = vmatpush.bf16.msra.mxu0 0
        %1310 = vmatpush.bf16.msra.mxu0 0
        %1311 = vmatpush.bf16.msra.mxu0 %v1302
        %1312 = vmatmul.bf16.gmra.mxu0 %v1299
        %v1313 = vpop.f32.mrf.mxu0
        %v1314 = vadd.f32 0.0, %v1313
        %v1315 = vpop.f32.mrf.mxu0
        %1316 = vdwg.mxu0
        %1317 = vrot.lane.b32.xlu0 %v1185, 96
        %v1318 = vpop.permute.xlu0 %1317
        %1319 = vrot.lane.b32.xlu0 %v1190, 96
        %v1320 = vpop.permute.xlu0 %1319
        %v1322 = vsel %vm1077, %v1318, 0
        %v1325 = vsel %vm1077, %v1320, 0
        %1327 = vmatpush.bf16.xpose.msra.mxu0 0
        %1328 = vmatpush.bf16.xpose.msra.mxu0 0
        %1329 = vmatpush.bf16.xpose.msra.mxu0 0
        %1330 = vmatpush.bf16.xpose.msra.mxu0 0
        %1331 = vmatpush.bf16.xpose.msra.mxu0 0
        %1332 = vmatpush.bf16.xpose.msra.mxu0 0
        %1333 = vmatpush.bf16.xpose.msra.mxu0 0
        %1334 = vmatpush.bf16.xpose.msra.mxu0 %v1325
        %1335 = vmatmul.bf16.gmra.mxu0 %v1322
        %v1336 = vpop.f32.mrf.mxu0
        %v1337 = vadd.f32 0.0, %v1336
        %v1338 = vpop.f32.mrf.mxu0
        %1339 = vdwg.mxu0
        %1340 = vrot.lane.b32.xlu0 %v1214, 96
        %v1341 = vpop.permute.xlu0 %1340
        %1342 = vrot.lane.b32.xlu0 %v1219, 96
        %v1343 = vpop.permute.xlu0 %1342
        %v1345 = vsel %vm1077, %v1341, 0
        %v1348 = vsel %vm1077, %v1343, 0
        %1350 = vmatpush.bf16.xpose.msra.mxu0 0
        %1351 = vmatpush.bf16.xpose.msra.mxu0 0
        %1352 = vmatpush.bf16.xpose.msra.mxu0 0
        %1353 = vmatpush.bf16.xpose.msra.mxu0 0
        %1354 = vmatpush.bf16.xpose.msra.mxu0 0
        %1355 = vmatpush.bf16.xpose.msra.mxu0 0
        %1356 = vmatpush.bf16.xpose.msra.mxu0 0
        %1357 = vmatpush.bf16.xpose.msra.mxu0 %v1348
        %1358 = vmatmul.bf16.gmra.mxu0 %v1345
        %v1359 = vpop.f32.mrf.mxu0
        %v1360 = vadd.f32 0.0, %v1359
        %v1361 = vpop.f32.mrf.mxu0
        %1362 = vdwg.mxu0
        %v1363 = vmul.f32 %v1337, 0.25
        %v1364 = vmul.f32 %v1360, 0.25
        %v1365 = vadd.f32 %v1363, %v820
        %v1366 = vadd.f32 %v1364, %v821
        %v1367 = vsel %vm836, %v1365, -inf
        %1368 = vmax.xlane.f32.xlu0 %v1367
        %v1369 = vpop.xlane.xlu0 %1368
        %v1370 = vsel %vm836, %v1366, -inf
        %1371 = vmax.xlane.f32.xlu0 %v1370
        %v1372 = vpop.xlane.xlu0 %1371
        %v1373 = vsub.f32 %v1365, %v1369
        %v1374 = vsub.f32 %v1366, %v1372
        %v1375 = vmul.f32 %v1373, 1.442695
        %v1376 = vpow.pop %v1375
        %v1377 = vmul.f32 %v1374, 1.442695
        %v1378 = vpow.pop %v1377
        %v1379 = vsel %vm836, %v1376, 0.0
        %1380 = vadd.xlane.f32.xlu0 %v1379
        %v1381 = vpop.xlane.xlu0 %1380
        %v1382 = vsel %vm836, %v1378, 0.0
        %1383 = vadd.xlane.f32.xlu0 %v1382
        %v1384 = vpop.xlane.xlu0 %1383
        %v1385 = vrcp.pop %v1381
        %v1386 = vrcp.pop %v1384
        %v1387 = vmul.f32 %v1376, %v1385
        %v1388 = vmul.f32 %v1378, %v1386
        %v1389 = vpack.c.bf16 %v1387, %v1387
        %v1390 = vpack.c.bf16 %v1388, %v1388
        %1391 = vrot.lane.b32.xlu0 %v1271, 96
        %v1392 = vpop.permute.xlu0 %1391
        %v1394 = vsel %vm836, %v1389, 0
        %v1397 = vsel %vm1147, %v1392, 0
        %1399 = vmatpush.bf16.msra.mxu0 0
        %1400 = vmatpush.bf16.msra.mxu0 0
        %1401 = vmatpush.bf16.msra.mxu0 0
        %1402 = vmatpush.bf16.msra.mxu0 0
        %1403 = vmatpush.bf16.msra.mxu0 0
        %1404 = vmatpush.bf16.msra.mxu0 0
        %1405 = vmatpush.bf16.msra.mxu0 0
        %1406 = vmatpush.bf16.msra.mxu0 %v1397
        %1407 = vmatmul.bf16.gmra.mxu0 %v1394
        %v1408 = vpop.f32.mrf.mxu0
        %v1409 = vadd.f32 0.0, %v1408
        %v1410 = vpop.f32.mrf.mxu0
        %1411 = vdwg.mxu0
        %1412 = vrot.lane.b32.xlu0 %v1295, 96
        %v1413 = vpop.permute.xlu0 %1412
        %v1415 = vsel %vm836, %v1390, 0
        %v1418 = vsel %vm1147, %v1413, 0
        %1420 = vmatpush.bf16.msra.mxu0 0
        %1421 = vmatpush.bf16.msra.mxu0 0
        %1422 = vmatpush.bf16.msra.mxu0 0
        %1423 = vmatpush.bf16.msra.mxu0 0
        %1424 = vmatpush.bf16.msra.mxu0 0
        %1425 = vmatpush.bf16.msra.mxu0 0
        %1426 = vmatpush.bf16.msra.mxu0 0
        %1427 = vmatpush.bf16.msra.mxu0 %v1418
        %1428 = vmatmul.bf16.gmra.mxu0 %v1415
        %v1429 = vpop.f32.mrf.mxu0
        %v1430 = vadd.f32 0.0, %v1429
        %v1431 = vpop.f32.mrf.mxu0
        %1432 = vdwg.mxu0
        %1433 = vrot.lane.b32.xlu0 %v1185, 80
        %v1434 = vpop.permute.xlu0 %1433
        %1435 = vrot.lane.b32.xlu0 %v1190, 80
        %v1436 = vpop.permute.xlu0 %1435
        %v1438 = vsel %vm1077, %v1434, 0
        %v1441 = vsel %vm1077, %v1436, 0
        %1443 = vmatpush.bf16.xpose.msra.mxu0 0
        %1444 = vmatpush.bf16.xpose.msra.mxu0 0
        %1445 = vmatpush.bf16.xpose.msra.mxu0 0
        %1446 = vmatpush.bf16.xpose.msra.mxu0 0
        %1447 = vmatpush.bf16.xpose.msra.mxu0 0
        %1448 = vmatpush.bf16.xpose.msra.mxu0 0
        %1449 = vmatpush.bf16.xpose.msra.mxu0 0
        %1450 = vmatpush.bf16.xpose.msra.mxu0 %v1441
        %1451 = vmatmul.bf16.gmra.mxu0 %v1438
        %v1452 = vpop.f32.mrf.mxu0
        %v1453 = vadd.f32 0.0, %v1452
        %v1454 = vpop.f32.mrf.mxu0
        %1455 = vdwg.mxu0
        %1456 = vrot.lane.b32.xlu0 %v1214, 80
        %v1457 = vpop.permute.xlu0 %1456
        %1458 = vrot.lane.b32.xlu0 %v1219, 80
        %v1459 = vpop.permute.xlu0 %1458
        %v1461 = vsel %vm1077, %v1457, 0
        %v1464 = vsel %vm1077, %v1459, 0
        %1466 = vmatpush.bf16.xpose.msra.mxu0 0
        %1467 = vmatpush.bf16.xpose.msra.mxu0 0
        %1468 = vmatpush.bf16.xpose.msra.mxu0 0
        %1469 = vmatpush.bf16.xpose.msra.mxu0 0
        %1470 = vmatpush.bf16.xpose.msra.mxu0 0
        %1471 = vmatpush.bf16.xpose.msra.mxu0 0
        %1472 = vmatpush.bf16.xpose.msra.mxu0 0
        %1473 = vmatpush.bf16.xpose.msra.mxu0 %v1464
        %1474 = vmatmul.bf16.gmra.mxu0 %v1461
        %v1475 = vpop.f32.mrf.mxu0
        %v1476 = vadd.f32 0.0, %v1475
        %v1477 = vpop.f32.mrf.mxu0
        %1478 = vdwg.mxu0
        %v1479 = vmul.f32 %v1453, 0.25
        %v1480 = vmul.f32 %v1476, 0.25
        %v1481 = vadd.f32 %v1479, %v820
        %v1482 = vadd.f32 %v1480, %v821
        %v1483 = vsel %vm836, %v1481, -inf
        %1484 = vmax.xlane.f32.xlu0 %v1483
        %v1485 = vpop.xlane.xlu0 %1484
        %v1486 = vsel %vm836, %v1482, -inf
        %1487 = vmax.xlane.f32.xlu0 %v1486
        %v1488 = vpop.xlane.xlu0 %1487
        %v1489 = vsub.f32 %v1481, %v1485
        %v1490 = vsub.f32 %v1482, %v1488
        %v1491 = vmul.f32 %v1489, 1.442695
        %v1492 = vpow.pop %v1491
        %v1493 = vmul.f32 %v1490, 1.442695
        %v1494 = vpow.pop %v1493
        %v1495 = vsel %vm836, %v1492, 0.0
        %1496 = vadd.xlane.f32.xlu0 %v1495
        %v1497 = vpop.xlane.xlu0 %1496
        %v1498 = vsel %vm836, %v1494, 0.0
        %1499 = vadd.xlane.f32.xlu0 %v1498
        %v1500 = vpop.xlane.xlu0 %1499
        %v1501 = vrcp.pop %v1497
        %v1502 = vrcp.pop %v1500
        %v1503 = vmul.f32 %v1492, %v1501
        %v1504 = vmul.f32 %v1494, %v1502
        %v1505 = vpack.c.bf16 %v1503, %v1503
        %v1506 = vpack.c.bf16 %v1504, %v1504
        %1507 = vrot.lane.b32.xlu0 %v1271, 80
        %v1508 = vpop.permute.xlu0 %1507
        %v1510 = vsel %vm836, %v1505, 0
        %v1513 = vsel %vm1147, %v1508, 0
        %1515 = vmatpush.bf16.msra.mxu0 0
        %1516 = vmatpush.bf16.msra.mxu0 0
        %1517 = vmatpush.bf16.msra.mxu0 0
        %1518 = vmatpush.bf16.msra.mxu0 0
        %1519 = vmatpush.bf16.msra.mxu0 0
        %1520 = vmatpush.bf16.msra.mxu0 0
        %1521 = vmatpush.bf16.msra.mxu0 0
        %1522 = vmatpush.bf16.msra.mxu0 %v1513
        %1523 = vmatmul.bf16.gmra.mxu0 %v1510
        %v1524 = vpop.f32.mrf.mxu0
        %v1525 = vadd.f32 0.0, %v1524
        %v1526 = vpop.f32.mrf.mxu0
        %1527 = vdwg.mxu0
        %1528 = vrot.lane.b32.xlu0 %v1295, 80
        %v1529 = vpop.permute.xlu0 %1528
        %v1531 = vsel %vm836, %v1506, 0
        %v1534 = vsel %vm1147, %v1529, 0
        %1536 = vmatpush.bf16.msra.mxu0 0
        %1537 = vmatpush.bf16.msra.mxu0 0
        %1538 = vmatpush.bf16.msra.mxu0 0
        %1539 = vmatpush.bf16.msra.mxu0 0
        %1540 = vmatpush.bf16.msra.mxu0 0
        %1541 = vmatpush.bf16.msra.mxu0 0
        %1542 = vmatpush.bf16.msra.mxu0 0
        %1543 = vmatpush.bf16.msra.mxu0 %v1534
        %1544 = vmatmul.bf16.gmra.mxu0 %v1531
        %v1545 = vpop.f32.mrf.mxu0
        %v1546 = vadd.f32 0.0, %v1545
        %v1547 = vpop.f32.mrf.mxu0
        %1548 = vdwg.mxu0
        %1549 = vrot.lane.b32.xlu0 %v1185, 64
        %v1550 = vpop.permute.xlu0 %1549
        %1551 = vrot.lane.b32.xlu0 %v1190, 64
        %v1552 = vpop.permute.xlu0 %1551
        %v1554 = vsel %vm1077, %v1550, 0
        %v1557 = vsel %vm1077, %v1552, 0
        %1559 = vmatpush.bf16.xpose.msra.mxu0 0
        %1560 = vmatpush.bf16.xpose.msra.mxu0 0
        %1561 = vmatpush.bf16.xpose.msra.mxu0 0
        %1562 = vmatpush.bf16.xpose.msra.mxu0 0
        %1563 = vmatpush.bf16.xpose.msra.mxu0 0
        %1564 = vmatpush.bf16.xpose.msra.mxu0 0
        %1565 = vmatpush.bf16.xpose.msra.mxu0 0
        %1566 = vmatpush.bf16.xpose.msra.mxu0 %v1557
        %1567 = vmatmul.bf16.gmra.mxu0 %v1554
        %v1568 = vpop.f32.mrf.mxu0
        %v1569 = vadd.f32 0.0, %v1568
        %v1570 = vpop.f32.mrf.mxu0
        %1571 = vdwg.mxu0
        %1572 = vrot.lane.b32.xlu0 %v1214, 64
        %v1573 = vpop.permute.xlu0 %1572
        %1574 = vrot.lane.b32.xlu0 %v1219, 64
        %v1575 = vpop.permute.xlu0 %1574
        %v1577 = vsel %vm1077, %v1573, 0
        %v1580 = vsel %vm1077, %v1575, 0
        %1582 = vmatpush.bf16.xpose.msra.mxu0 0
        %1583 = vmatpush.bf16.xpose.msra.mxu0 0
        %1584 = vmatpush.bf16.xpose.msra.mxu0 0
        %1585 = vmatpush.bf16.xpose.msra.mxu0 0
        %1586 = vmatpush.bf16.xpose.msra.mxu0 0
        %1587 = vmatpush.bf16.xpose.msra.mxu0 0
        %1588 = vmatpush.bf16.xpose.msra.mxu0 0
        %1589 = vmatpush.bf16.xpose.msra.mxu0 %v1580
        %1590 = vmatmul.bf16.gmra.mxu0 %v1577
        %v1591 = vpop.f32.mrf.mxu0
        %v1592 = vadd.f32 0.0, %v1591
        %v1593 = vpop.f32.mrf.mxu0
        %1594 = vdwg.mxu0
        %v1595 = vmul.f32 %v1569, 0.25
        %v1596 = vmul.f32 %v1592, 0.25
        %v1597 = vadd.f32 %v1595, %v820
        %v1598 = vadd.f32 %v1596, %v821
        %v1599 = vsel %vm836, %v1597, -inf
        %1600 = vmax.xlane.f32.xlu0 %v1599
        %v1601 = vpop.xlane.xlu0 %1600
        %v1602 = vsel %vm836, %v1598, -inf
        %1603 = vmax.xlane.f32.xlu0 %v1602
        %v1604 = vpop.xlane.xlu0 %1603
        %v1605 = vsub.f32 %v1597, %v1601
        %v1606 = vsub.f32 %v1598, %v1604
        %v1607 = vmul.f32 %v1605, 1.442695
        %v1608 = vpow.pop %v1607
        %v1609 = vmul.f32 %v1606, 1.442695
        %v1610 = vpow.pop %v1609
        %v1611 = vsel %vm836, %v1608, 0.0
        %1612 = vadd.xlane.f32.xlu0 %v1611
        %v1613 = vpop.xlane.xlu0 %1612
        %v1614 = vsel %vm836, %v1610, 0.0
        %1615 = vadd.xlane.f32.xlu0 %v1614
        %v1616 = vpop.xlane.xlu0 %1615
        %v1617 = vrcp.pop %v1613
        %v1618 = vrcp.pop %v1616
        %v1619 = vmul.f32 %v1608, %v1617
        %v1620 = vmul.f32 %v1610, %v1618
        %v1621 = vpack.c.bf16 %v1619, %v1619
        %v1622 = vpack.c.bf16 %v1620, %v1620
        %1623 = vrot.lane.b32.xlu0 %v1271, 64
        %v1624 = vpop.permute.xlu0 %1623
        %v1626 = vsel %vm836, %v1621, 0
        %v1629 = vsel %vm1147, %v1624, 0
        %1631 = vmatpush.bf16.msra.mxu0 0
        %1632 = vmatpush.bf16.msra.mxu0 0
        %1633 = vmatpush.bf16.msra.mxu0 0
        %1634 = vmatpush.bf16.msra.mxu0 0
        %1635 = vmatpush.bf16.msra.mxu0 0
        %1636 = vmatpush.bf16.msra.mxu0 0
        %1637 = vmatpush.bf16.msra.mxu0 0
        %1638 = vmatpush.bf16.msra.mxu0 %v1629
        %1639 = vmatmul.bf16.gmra.mxu0 %v1626
        %v1640 = vpop.f32.mrf.mxu0
        %v1641 = vadd.f32 0.0, %v1640
        %v1642 = vpop.f32.mrf.mxu0
        %1643 = vdwg.mxu0
        %1644 = vrot.lane.b32.xlu0 %v1295, 64
        %v1645 = vpop.permute.xlu0 %1644
        %v1647 = vsel %vm836, %v1622, 0
        %v1650 = vsel %vm1147, %v1645, 0
        %1652 = vmatpush.bf16.msra.mxu0 0
        %1653 = vmatpush.bf16.msra.mxu0 0
        %1654 = vmatpush.bf16.msra.mxu0 0
        %1655 = vmatpush.bf16.msra.mxu0 0
        %1656 = vmatpush.bf16.msra.mxu0 0
        %1657 = vmatpush.bf16.msra.mxu0 0
        %1658 = vmatpush.bf16.msra.mxu0 0
        %1659 = vmatpush.bf16.msra.mxu0 %v1650
        %1660 = vmatmul.bf16.gmra.mxu0 %v1647
        %v1661 = vpop.f32.mrf.mxu0
        %v1662 = vadd.f32 0.0, %v1661
        %v1663 = vpop.f32.mrf.mxu0
        %1664 = vdwg.mxu0
        %1665 = vrot.lane.b32.xlu0 %v1185, 48
        %v1666 = vpop.permute.xlu0 %1665
        %1667 = vrot.lane.b32.xlu0 %v1190, 48
        %v1668 = vpop.permute.xlu0 %1667
        %v1670 = vsel %vm1077, %v1666, 0
        %v1673 = vsel %vm1077, %v1668, 0
        %1675 = vmatpush.bf16.xpose.msra.mxu0 0
        %1676 = vmatpush.bf16.xpose.msra.mxu0 0
        %1677 = vmatpush.bf16.xpose.msra.mxu0 0
        %1678 = vmatpush.bf16.xpose.msra.mxu0 0
        %1679 = vmatpush.bf16.xpose.msra.mxu0 0
        %1680 = vmatpush.bf16.xpose.msra.mxu0 0
        %1681 = vmatpush.bf16.xpose.msra.mxu0 0
        %1682 = vmatpush.bf16.xpose.msra.mxu0 %v1673
        %1683 = vmatmul.bf16.gmra.mxu0 %v1670
        %v1684 = vpop.f32.mrf.mxu0
        %v1685 = vadd.f32 0.0, %v1684
        %v1686 = vpop.f32.mrf.mxu0
        %1687 = vdwg.mxu0
        %1688 = vrot.lane.b32.xlu0 %v1214, 48
        %v1689 = vpop.permute.xlu0 %1688
        %1690 = vrot.lane.b32.xlu0 %v1219, 48
        %v1691 = vpop.permute.xlu0 %1690
        %v1693 = vsel %vm1077, %v1689, 0
        %v1696 = vsel %vm1077, %v1691, 0
        %1698 = vmatpush.bf16.xpose.msra.mxu0 0
        %1699 = vmatpush.bf16.xpose.msra.mxu0 0
        %1700 = vmatpush.bf16.xpose.msra.mxu0 0
        %1701 = vmatpush.bf16.xpose.msra.mxu0 0
        %1702 = vmatpush.bf16.xpose.msra.mxu0 0
        %1703 = vmatpush.bf16.xpose.msra.mxu0 0
        %1704 = vmatpush.bf16.xpose.msra.mxu0 0
        %1705 = vmatpush.bf16.xpose.msra.mxu0 %v1696
        %1706 = vmatmul.bf16.gmra.mxu0 %v1693
        %v1707 = vpop.f32.mrf.mxu0
        %v1708 = vadd.f32 0.0, %v1707
        %v1709 = vpop.f32.mrf.mxu0
        %1710 = vdwg.mxu0
        %v1711 = vmul.f32 %v1685, 0.25
        %v1712 = vmul.f32 %v1708, 0.25
        %v1713 = vadd.f32 %v1711, %v820
        %v1714 = vadd.f32 %v1712, %v821
        %v1715 = vsel %vm836, %v1713, -inf
        %1716 = vmax.xlane.f32.xlu0 %v1715
        %v1717 = vpop.xlane.xlu0 %1716
        %v1718 = vsel %vm836, %v1714, -inf
        %1719 = vmax.xlane.f32.xlu0 %v1718
        %v1720 = vpop.xlane.xlu0 %1719
        %v1721 = vsub.f32 %v1713, %v1717
        %v1722 = vsub.f32 %v1714, %v1720
        %v1723 = vmul.f32 %v1721, 1.442695
        %v1724 = vpow.pop %v1723
        %v1725 = vmul.f32 %v1722, 1.442695
        %v1726 = vpow.pop %v1725
        %v1727 = vsel %vm836, %v1724, 0.0
        %1728 = vadd.xlane.f32.xlu0 %v1727
        %v1729 = vpop.xlane.xlu0 %1728
        %v1730 = vsel %vm836, %v1726, 0.0
        %1731 = vadd.xlane.f32.xlu0 %v1730
        %v1732 = vpop.xlane.xlu0 %1731
        %v1733 = vrcp.pop %v1729
        %v1734 = vrcp.pop %v1732
        %v1735 = vmul.f32 %v1724, %v1733
        %v1736 = vmul.f32 %v1726, %v1734
        %v1737 = vpack.c.bf16 %v1735, %v1735
        %v1738 = vpack.c.bf16 %v1736, %v1736
        %1739 = vrot.lane.b32.xlu0 %v1271, 48
        %v1740 = vpop.permute.xlu0 %1739
        %v1742 = vsel %vm836, %v1737, 0
        %v1745 = vsel %vm1147, %v1740, 0
        %1747 = vmatpush.bf16.msra.mxu0 0
        %1748 = vmatpush.bf16.msra.mxu0 0
        %1749 = vmatpush.bf16.msra.mxu0 0
        %1750 = vmatpush.bf16.msra.mxu0 0
        %1751 = vmatpush.bf16.msra.mxu0 0
        %1752 = vmatpush.bf16.msra.mxu0 0
        %1753 = vmatpush.bf16.msra.mxu0 0
        %1754 = vmatpush.bf16.msra.mxu0 %v1745
        %1755 = vmatmul.bf16.gmra.mxu0 %v1742
        %v1756 = vpop.f32.mrf.mxu0
        %v1757 = vadd.f32 0.0, %v1756
        %v1758 = vpop.f32.mrf.mxu0
        %1759 = vdwg.mxu0
        %1760 = vrot.lane.b32.xlu0 %v1295, 48
        %v1761 = vpop.permute.xlu0 %1760
        %v1763 = vsel %vm836, %v1738, 0
        %v1766 = vsel %vm1147, %v1761, 0
        %1768 = vmatpush.bf16.msra.mxu0 0
        %1769 = vmatpush.bf16.msra.mxu0 0
        %1770 = vmatpush.bf16.msra.mxu0 0
        %1771 = vmatpush.bf16.msra.mxu0 0
        %1772 = vmatpush.bf16.msra.mxu0 0
        %1773 = vmatpush.bf16.msra.mxu0 0
        %1774 = vmatpush.bf16.msra.mxu0 0
        %1775 = vmatpush.bf16.msra.mxu0 %v1766
        %1776 = vmatmul.bf16.gmra.mxu0 %v1763
        %v1777 = vpop.f32.mrf.mxu0
        %v1778 = vadd.f32 0.0, %v1777
        %v1779 = vpop.f32.mrf.mxu0
        %1780 = vdwg.mxu0
        %1781 = vrot.lane.b32.xlu0 %v1185, 32
        %v1782 = vpop.permute.xlu0 %1781
        %1783 = vrot.lane.b32.xlu0 %v1190, 32
        %v1784 = vpop.permute.xlu0 %1783
        %v1786 = vsel %vm1077, %v1782, 0
        %v1789 = vsel %vm1077, %v1784, 0
        %1791 = vmatpush.bf16.xpose.msra.mxu0 0
        %1792 = vmatpush.bf16.xpose.msra.mxu0 0
        %1793 = vmatpush.bf16.xpose.msra.mxu0 0
        %1794 = vmatpush.bf16.xpose.msra.mxu0 0
        %1795 = vmatpush.bf16.xpose.msra.mxu0 0
        %1796 = vmatpush.bf16.xpose.msra.mxu0 0
        %1797 = vmatpush.bf16.xpose.msra.mxu0 0
        %1798 = vmatpush.bf16.xpose.msra.mxu0 %v1789
        %1799 = vmatmul.bf16.gmra.mxu0 %v1786
        %v1800 = vpop.f32.mrf.mxu0
        %v1801 = vadd.f32 0.0, %v1800
        %v1802 = vpop.f32.mrf.mxu0
        %1803 = vdwg.mxu0
        %1804 = vrot.lane.b32.xlu0 %v1214, 32
        %v1805 = vpop.permute.xlu0 %1804
        %1806 = vrot.lane.b32.xlu0 %v1219, 32
        %v1807 = vpop.permute.xlu0 %1806
        %v1809 = vsel %vm1077, %v1805, 0
        %v1812 = vsel %vm1077, %v1807, 0
        %1814 = vmatpush.bf16.xpose.msra.mxu0 0
        %1815 = vmatpush.bf16.xpose.msra.mxu0 0
        %1816 = vmatpush.bf16.xpose.msra.mxu0 0
        %1817 = vmatpush.bf16.xpose.msra.mxu0 0
        %1818 = vmatpush.bf16.xpose.msra.mxu0 0
        %1819 = vmatpush.bf16.xpose.msra.mxu0 0
        %1820 = vmatpush.bf16.xpose.msra.mxu0 0
        %1821 = vmatpush.bf16.xpose.msra.mxu0 %v1812
        %1822 = vmatmul.bf16.gmra.mxu0 %v1809
        %v1823 = vpop.f32.mrf.mxu0
        %v1824 = vadd.f32 0.0, %v1823
        %v1825 = vpop.f32.mrf.mxu0
        %1826 = vdwg.mxu0
        %v1827 = vmul.f32 %v1801, 0.25
        %v1828 = vmul.f32 %v1824, 0.25
        %v1829 = vadd.f32 %v1827, %v820
        %v1830 = vadd.f32 %v1828, %v821
        %v1831 = vsel %vm836, %v1829, -inf
        %1832 = vmax.xlane.f32.xlu0 %v1831
        %v1833 = vpop.xlane.xlu0 %1832
        %v1834 = vsel %vm836, %v1830, -inf
        %1835 = vmax.xlane.f32.xlu0 %v1834
        %v1836 = vpop.xlane.xlu0 %1835
        %v1837 = vsub.f32 %v1829, %v1833
        %v1838 = vsub.f32 %v1830, %v1836
        %v1839 = vmul.f32 %v1837, 1.442695
        %v1840 = vpow.pop %v1839
        %v1841 = vmul.f32 %v1838, 1.442695
        %v1842 = vpow.pop %v1841
        %v1843 = vsel %vm836, %v1840, 0.0
        %1844 = vadd.xlane.f32.xlu0 %v1843
        %v1845 = vpop.xlane.xlu0 %1844
        %v1846 = vsel %vm836, %v1842, 0.0
        %1847 = vadd.xlane.f32.xlu0 %v1846
        %v1848 = vpop.xlane.xlu0 %1847
        %v1849 = vrcp.pop %v1845
        %v1850 = vrcp.pop %v1848
        %v1851 = vmul.f32 %v1840, %v1849
        %v1852 = vmul.f32 %v1842, %v1850
        %v1853 = vpack.c.bf16 %v1851, %v1851
        %v1854 = vpack.c.bf16 %v1852, %v1852
        %1855 = vrot.lane.b32.xlu0 %v1271, 32
        %v1856 = vpop.permute.xlu0 %1855
        %v1858 = vsel %vm836, %v1853, 0
        %v1861 = vsel %vm1147, %v1856, 0
        %1863 = vmatpush.bf16.msra.mxu0 0
        %1864 = vmatpush.bf16.msra.mxu0 0
        %1865 = vmatpush.bf16.msra.mxu0 0
        %1866 = vmatpush.bf16.msra.mxu0 0
        %1867 = vmatpush.bf16.msra.mxu0 0
        %1868 = vmatpush.bf16.msra.mxu0 0
        %1869 = vmatpush.bf16.msra.mxu0 0
        %1870 = vmatpush.bf16.msra.mxu0 %v1861
        %1871 = vmatmul.bf16.gmra.mxu0 %v1858
        %v1872 = vpop.f32.mrf.mxu0
        %v1873 = vadd.f32 0.0, %v1872
        %v1874 = vpop.f32.mrf.mxu0
        %1875 = vdwg.mxu0
        %1876 = vrot.lane.b32.xlu0 %v1295, 32
        %v1877 = vpop.permute.xlu0 %1876
        %v1879 = vsel %vm836, %v1854, 0
        %v1882 = vsel %vm1147, %v1877, 0
        %1884 = vmatpush.bf16.msra.mxu0 0
        %1885 = vmatpush.bf16.msra.mxu0 0
        %1886 = vmatpush.bf16.msra.mxu0 0
        %1887 = vmatpush.bf16.msra.mxu0 0
        %1888 = vmatpush.bf16.msra.mxu0 0
        %1889 = vmatpush.bf16.msra.mxu0 0
        %1890 = vmatpush.bf16.msra.mxu0 0
        %1891 = vmatpush.bf16.msra.mxu0 %v1882
        %1892 = vmatmul.bf16.gmra.mxu0 %v1879
        %v1893 = vpop.f32.mrf.mxu0
        %v1894 = vadd.f32 0.0, %v1893
        %v1895 = vpop.f32.mrf.mxu0
        %1896 = vdwg.mxu0
        %1897 = vrot.lane.b32.xlu0 %v1185, 16
        %v1898 = vpop.permute.xlu0 %1897
        %1899 = vrot.lane.b32.xlu0 %v1190, 16
        %v1900 = vpop.permute.xlu0 %1899
        %v1902 = vsel %vm1077, %v1898, 0
        %v1905 = vsel %vm1077, %v1900, 0
        %1907 = vmatpush.bf16.xpose.msra.mxu0 0
        %1908 = vmatpush.bf16.xpose.msra.mxu0 0
        %1909 = vmatpush.bf16.xpose.msra.mxu0 0
        %1910 = vmatpush.bf16.xpose.msra.mxu0 0
        %1911 = vmatpush.bf16.xpose.msra.mxu0 0
        %1912 = vmatpush.bf16.xpose.msra.mxu0 0
        %1913 = vmatpush.bf16.xpose.msra.mxu0 0
        %1914 = vmatpush.bf16.xpose.msra.mxu0 %v1905
        %1915 = vmatmul.bf16.gmra.mxu0 %v1902
        %v1916 = vpop.f32.mrf.mxu0
        %v1917 = vadd.f32 0.0, %v1916
        %v1918 = vpop.f32.mrf.mxu0
        %1919 = vdwg.mxu0
        %1920 = vrot.lane.b32.xlu0 %v1214, 16
        %v1921 = vpop.permute.xlu0 %1920
        %1922 = vrot.lane.b32.xlu0 %v1219, 16
        %v1923 = vpop.permute.xlu0 %1922
        %v1925 = vsel %vm1077, %v1921, 0
        %v1928 = vsel %vm1077, %v1923, 0
        %1930 = vmatpush.bf16.xpose.msra.mxu0 0
        %1931 = vmatpush.bf16.xpose.msra.mxu0 0
        %1932 = vmatpush.bf16.xpose.msra.mxu0 0
        %1933 = vmatpush.bf16.xpose.msra.mxu0 0
        %1934 = vmatpush.bf16.xpose.msra.mxu0 0
        %1935 = vmatpush.bf16.xpose.msra.mxu0 0
        %1936 = vmatpush.bf16.xpose.msra.mxu0 0
        %1937 = vmatpush.bf16.xpose.msra.mxu0 %v1928
        %1938 = vmatmul.bf16.gmra.mxu0 %v1925
        %v1939 = vpop.f32.mrf.mxu0
        %v1940 = vadd.f32 0.0, %v1939
        %v1941 = vpop.f32.mrf.mxu0
        %1942 = vdwg.mxu0
        %v1943 = vmul.f32 %v1917, 0.25
        %v1944 = vmul.f32 %v1940, 0.25
        %v1945 = vadd.f32 %v1943, %v820
        %v1946 = vadd.f32 %v1944, %v821
        %v1947 = vsel %vm836, %v1945, -inf
        %1948 = vmax.xlane.f32.xlu0 %v1947
        %v1949 = vpop.xlane.xlu0 %1948
        %v1950 = vsel %vm836, %v1946, -inf
        %1951 = vmax.xlane.f32.xlu0 %v1950
        %v1952 = vpop.xlane.xlu0 %1951
        %v1953 = vsub.f32 %v1945, %v1949
        %v1954 = vsub.f32 %v1946, %v1952
        %v1955 = vmul.f32 %v1953, 1.442695
        %v1956 = vpow.pop %v1955
        %v1957 = vmul.f32 %v1954, 1.442695
        %v1958 = vpow.pop %v1957
        %v1959 = vsel %vm836, %v1956, 0.0
        %1960 = vadd.xlane.f32.xlu0 %v1959
        %v1961 = vpop.xlane.xlu0 %1960
        %v1962 = vsel %vm836, %v1958, 0.0
        %1963 = vadd.xlane.f32.xlu0 %v1962
        %v1964 = vpop.xlane.xlu0 %1963
        %v1965 = vrcp.pop %v1961
        %v1966 = vrcp.pop %v1964
        %v1967 = vmul.f32 %v1956, %v1965
        %v1968 = vmul.f32 %v1958, %v1966
        %v1969 = vpack.c.bf16 %v1967, %v1967
        %v1970 = vpack.c.bf16 %v1968, %v1968
        %1971 = vrot.lane.b32.xlu0 %v1271, 16
        %v1972 = vpop.permute.xlu0 %1971
        %v1974 = vsel %vm836, %v1969, 0
        %v1977 = vsel %vm1147, %v1972, 0
        %1979 = vmatpush.bf16.msra.mxu0 0
        %1980 = vmatpush.bf16.msra.mxu0 0
        %1981 = vmatpush.bf16.msra.mxu0 0
        %1982 = vmatpush.bf16.msra.mxu0 0
        %1983 = vmatpush.bf16.msra.mxu0 0
        %1984 = vmatpush.bf16.msra.mxu0 0
        %1985 = vmatpush.bf16.msra.mxu0 0
        %1986 = vmatpush.bf16.msra.mxu0 %v1977
        %1987 = vmatmul.bf16.gmra.mxu0 %v1974
        %v1988 = vpop.f32.mrf.mxu0
        %v1989 = vadd.f32 0.0, %v1988
        %v1990 = vpop.f32.mrf.mxu0
        %1991 = vdwg.mxu0
        %1992 = vrot.lane.b32.xlu0 %v1295, 16
        %v1993 = vpop.permute.xlu0 %1992
        %v1995 = vsel %vm836, %v1970, 0
        %v1998 = vsel %vm1147, %v1993, 0
        %2000 = vmatpush.bf16.msra.mxu0 0
        %2001 = vmatpush.bf16.msra.mxu0 0
        %2002 = vmatpush.bf16.msra.mxu0 0
        %2003 = vmatpush.bf16.msra.mxu0 0
        %2004 = vmatpush.bf16.msra.mxu0 0
        %2005 = vmatpush.bf16.msra.mxu0 0
        %2006 = vmatpush.bf16.msra.mxu0 0
        %2007 = vmatpush.bf16.msra.mxu0 %v1998
        %2008 = vmatmul.bf16.gmra.mxu0 %v1995
        %v2009 = vpop.f32.mrf.mxu0
        %v2010 = vadd.f32 0.0, %v2009
        %v2011 = vpop.f32.mrf.mxu0
        %2012 = vdwg.mxu0
        %2015 = vrot.lane.b32.xlu0 %v1290, 16
        %v2016 = vpop.permute.xlu0 %2015
        %2017 = vrot.lane.b32.xlu0 %v1314, 16
        %v2018 = vpop.permute.xlu0 %2017
        %2023 = vrot.lane.b32.xlu0 %v1409, 32
        %v2024 = vpop.permute.xlu0 %2023
        %2025 = vrot.lane.b32.xlu0 %v1430, 32
        %v2026 = vpop.permute.xlu0 %2025
        %2031 = vrot.lane.b32.xlu0 %v1525, 48
        %v2032 = vpop.permute.xlu0 %2031
        %2033 = vrot.lane.b32.xlu0 %v1546, 48
        %v2034 = vpop.permute.xlu0 %2033
        %2039 = vrot.lane.b32.xlu0 %v1641, 64
        %v2040 = vpop.permute.xlu0 %2039
        %2041 = vrot.lane.b32.xlu0 %v1662, 64
        %v2042 = vpop.permute.xlu0 %2041
        %2047 = vrot.lane.b32.xlu0 %v1757, 80
        %v2048 = vpop.permute.xlu0 %2047
        %2049 = vrot.lane.b32.xlu0 %v1778, 80
        %v2050 = vpop.permute.xlu0 %2049
        %2055 = vrot.lane.b32.xlu0 %v1873, 96
        %v2056 = vpop.permute.xlu0 %2055
        %2057 = vrot.lane.b32.xlu0 %v1894, 96
        %v2058 = vpop.permute.xlu0 %2057
        %2063 = vrot.lane.b32.xlu0 %v1989, 112
        %v2064 = vpop.permute.xlu0 %2063
        %2065 = vrot.lane.b32.xlu0 %v2010, 112
        %v2066 = vpop.permute.xlu0 %2065
        %v2069 = vsel %vm1077, %v1161, %v2016
        %v2070 = vsel %vm1077, %v1180, %v2018
        %vm2071 = vcmask 261120
        %v2072 = vsel %vm2071, %v2069, %v2024
        %v2073 = vsel %vm2071, %v2070, %v2026
        %vm2074 = vcmask 392192
        %v2075 = vsel %vm2074, %v2072, %v2032
        %v2076 = vsel %vm2074, %v2073, %v2034
        %vm2077 = vcmask 523264
        %v2078 = vsel %vm2077, %v2075, %v2040
        %v2079 = vsel %vm2077, %v2076, %v2042
        %vm2080 = vcmask 654336
        %v2081 = vsel %vm2080, %v2078, %v2048
        %v2082 = vsel %vm2080, %v2079, %v2050
        %vm2083 = vcmask 785408
        %v2084 = vsel %vm2083, %v2081, %v2056
        %v2085 = vsel %vm2083, %v2082, %v2058
        %vm2086 = vcmask 916480
        %v2087 = vsel %vm2086, %v2084, %v2064
        %v2088 = vsel %vm2086, %v2085, %v2066
        %v2089 = vpack.c.bf16 %v2088, %v2087
        %v2091 = vperm.slane %v892, 0
        %v2109 = vunpack.c.l.b16 %v876
        %v2110 = vunpack.c.l.b16 %v877
        %v2111 = vunpack.c.l.b16 %v878
        %v2112 = vunpack.c.l.b16 %v879
        %v2113 = vunpack.c.l.b16 %v880
        %v2114 = vunpack.c.l.b16 %v881
        %v2115 = vunpack.c.l.b16 %v882
        %v2116 = vunpack.c.l.b16 %v883
        %v2117 = vunpack.c.l.b16 %v884
        %v2118 = vunpack.c.l.b16 %v885
        %v2119 = vunpack.c.l.b16 %v886
        %v2120 = vunpack.c.l.b16 %v887
        %v2121 = vunpack.c.l.b16 %v888
        %v2122 = vunpack.c.l.b16 %v889
        %v2123 = vunpack.c.l.b16 %v890
        %v2124 = vunpack.c.l.b16 %v891
        %v2125 = vpack.c.b16 %v2110, %v2109
        %v2126 = vpack.c.b16 %v2112, %v2111
        %v2127 = vpack.c.b16 %v2114, %v2113
        %v2128 = vpack.c.b16 %v2116, %v2115
        %v2129 = vpack.c.b16 %v2118, %v2117
        %v2130 = vpack.c.b16 %v2120, %v2119
        %v2131 = vpack.c.b16 %v2122, %v2121
        %v2132 = vpack.c.b16 %v2124, %v2123
        %2141 = vmatpush.bf16.msra.mxu0 %v2132
        %2142 = vmatpush.bf16.msra.mxu0 %v2131
        %2143 = vmatpush.bf16.msra.mxu0 %v2130
        %2144 = vmatpush.bf16.msra.mxu0 %v2129
        %2145 = vmatpush.bf16.msra.mxu0 %v2128
        %2146 = vmatpush.bf16.msra.mxu0 %v2127
        %2147 = vmatpush.bf16.msra.mxu0 %v2126
        %2148 = vmatpush.bf16.msra.mxu0 %v2125
        %2149 = vmatmul.bf16.gmra.mxu0 %v2089
        %v2150 = vpop.f32.mrf.mxu0
        %v2151 = vadd.f32 %v2091, %v2150
        %v2152 = vpop.f32.mrf.mxu0
        %v2153 = vadd.f32 %v2091, %v2152
        %2154 = vdwg.mxu0
        %v2155 = vadd.f32 %v804, %v2151
        %v2156 = vadd.f32 %v805, %v2153
        %v2157 = vld [vmem:[%s9] sm:$0x1]
        %v2158 = vld [vmem:[%s10] sm:$0x1]
        %2159 = vadd.xlane.f32.xlu0 %v2155
        %v2160 = vpop.xlane.xlu0 %2159
        %2161 = vadd.xlane.f32.xlu0 %v2156
        %v2162 = vpop.xlane.xlu0 %2161
        %v2163 = vrcp.pop 128.0
        %v2164 = vmul.f32 128.0, %v2163
        %v2165 = vsub.f32 1.0, %v2164
        %v2166 = vmul.f32 %v2163, %v2165
        %v2167 = vadd.f32 %v2163, %v2166
        %vm2168 = vweird.f32 %v2163
        %v2169 = vsel %vm2168, %v2163, %v2167
        %v2170 = vmul.f32 %v2160, %v2169
        %v2171 = vmul.f32 %v2162, %v2169
        %v2172 = vsub.f32 %v2155, %v2170
        %v2173 = vsub.f32 %v2156, %v2171
        %v2174 = vmul.f32 %v2172, %v2172
        %v2175 = vmul.f32 %v2173, %v2173
        %2176 = vadd.xlane.f32.xlu0 %v2174
        %v2177 = vpop.xlane.xlu0 %2176
        %2178 = vadd.xlane.f32.xlu0 %v2175
        %v2179 = vpop.xlane.xlu0 %2178
        %v2180 = vmul.f32 %v2177, %v2169
        %v2181 = vmul.f32 %v2179, %v2169
        %v2182 = vadd.f32 %v2180, 1e-05
        %v2183 = vadd.f32 %v2181, 1e-05
        %v2184 = vrsqrt.pop %v2182
        %v2185 = vmul.f32 %v2184, %v2182
        %v2186 = vmul.f32 %v2185, %v2184
        %v2187 = vmul.f32 0.5, %v2186
        %v2188 = vsub.f32 1.5, %v2187
        %v2189 = vmul.f32 %v2184, %v2188
        %vm2190 = vweird.f32 %v2182
        %vm2191 = vweird.f32 %v2184
        %vm2192 = vmor %vm2190, %vm2191
        %v2193 = vsel %vm2192, %v2184, %v2189
        %v2194 = vrsqrt.pop %v2183
        %v2195 = vmul.f32 %v2194, %v2183
        %v2196 = vmul.f32 %v2195, %v2194
        %v2197 = vmul.f32 0.5, %v2196
        %v2198 = vsub.f32 1.5, %v2197
        %v2199 = vmul.f32 %v2194, %v2198
        %vm2200 = vweird.f32 %v2183
        %vm2201 = vweird.f32 %v2194
        %vm2202 = vmor %vm2200, %vm2201
        %v2203 = vsel %vm2202, %v2194, %v2199
        %v2204 = vmul.f32 %v2172, %v2193
        %v2205 = vmul.f32 %v2173, %v2203
        %v2207 = vperm.slane %v2157, 0
        %v2209 = vmul.f32 %v2204, %v2207
        %v2210 = vmul.f32 %v2205, %v2207
        %v2212 = vperm.slane %v2158, 0
        %v2214 = vadd.f32 %v2209, %v2212
        %v2215 = vadd.f32 %v2210, %v2212
        %v2216 = vadd.f32 %v804, %v2214
        %v2217 = vadd.f32 %v805, %v2215
        %v2218 = vld [vmem:[%s11] sm:$0x1]
        %v2219 = vld [vmem:[%s12] sm:$0x1]
        %2220 = vadd.xlane.f32.xlu0 %v2216
        %v2221 = vpop.xlane.xlu0 %2220
        %2222 = vadd.xlane.f32.xlu0 %v2217
        %v2223 = vpop.xlane.xlu0 %2222
        %v2224 = vmul.f32 %v2221, %v2169
        %v2225 = vmul.f32 %v2223, %v2169
        %v2226 = vsub.f32 %v2216, %v2224
        %v2227 = vsub.f32 %v2217, %v2225
        %v2228 = vmul.f32 %v2226, %v2226
        %v2229 = vmul.f32 %v2227, %v2227
        %2230 = vadd.xlane.f32.xlu0 %v2228
        %v2231 = vpop.xlane.xlu0 %2230
        %2232 = vadd.xlane.f32.xlu0 %v2229
        %v2233 = vpop.xlane.xlu0 %2232
        %v2234 = vmul.f32 %v2231, %v2169
        %v2235 = vmul.f32 %v2233, %v2169
        %v2236 = vadd.f32 %v2234, 1e-05
        %v2237 = vadd.f32 %v2235, 1e-05
        %v2238 = vrsqrt.pop %v2236
        %v2239 = vmul.f32 %v2238, %v2236
        %v2240 = vmul.f32 %v2239, %v2238
        %v2241 = vmul.f32 0.5, %v2240
        %v2242 = vsub.f32 1.5, %v2241
        %v2243 = vmul.f32 %v2238, %v2242
        %vm2244 = vweird.f32 %v2236
        %vm2245 = vweird.f32 %v2238
        %vm2246 = vmor %vm2244, %vm2245
        %v2247 = vsel %vm2246, %v2238, %v2243
        %v2248 = vrsqrt.pop %v2237
        %v2249 = vmul.f32 %v2248, %v2237
        %v2250 = vmul.f32 %v2249, %v2248
        %v2251 = vmul.f32 0.5, %v2250
        %v2252 = vsub.f32 1.5, %v2251
        %v2253 = vmul.f32 %v2248, %v2252
        %vm2254 = vweird.f32 %v2237
        %vm2255 = vweird.f32 %v2248
        %vm2256 = vmor %vm2254, %vm2255
        %v2257 = vsel %vm2256, %v2248, %v2253
        %v2258 = vmul.f32 %v2226, %v2247
        %v2259 = vmul.f32 %v2227, %v2257
        %v2261 = vperm.slane %v2218, 0
        %v2263 = vmul.f32 %v2258, %v2261
        %v2264 = vmul.f32 %v2259, %v2261
        %v2266 = vperm.slane %v2219, 0
        %v2268 = vadd.f32 %v2263, %v2266
        %v2269 = vadd.f32 %v2264, %v2266
        %v2270 = vmul.f32 %v2268, %v839
        %v2271 = vmul.f32 %v2269, %v842
        %v2272 = vld [vmem:[#allocation6] sm:$0xf]
        %v2273 = vld [vmem:[#allocation6 + $0x4] sm:$0xf]
        %v2274 = vld [vmem:[#allocation6 + $0x8] sm:$0xf]
        %v2275 = vld [vmem:[#allocation6 + $0xc] sm:$0xf]
        %v2276 = vld [vmem:[#allocation6 + $0x10] sm:$0xf]
        %v2277 = vld [vmem:[#allocation6 + $0x14] sm:$0xf]
        %v2278 = vld [vmem:[#allocation6 + $0x18] sm:$0xf]
        %v2279 = vld [vmem:[#allocation6 + $0x1c] sm:$0xf]
        %v2280 = vld [vmem:[#allocation6 + $0x20] sm:$0xf]
        %v2281 = vld [vmem:[#allocation6 + $0x24] sm:$0xf]
        %v2282 = vld [vmem:[#allocation6 + $0x28] sm:$0xf]
        %v2283 = vld [vmem:[#allocation6 + $0x2c] sm:$0xf]
        %v2284 = vld [vmem:[#allocation6 + $0x30] sm:$0xf]
        %v2285 = vld [vmem:[#allocation6 + $0x34] sm:$0xf]
        %v2286 = vld [vmem:[#allocation6 + $0x38] sm:$0xf]
        %v2287 = vld [vmem:[#allocation6 + $0x3c] sm:$0xf]
        %v2288 = vpack.c.bf16 %v2271, %v2270
        %v2289 = vld [vmem:[%s14] sm:$0x1]
        %v2291 = vperm.slane %v2289, 0
        %v2309 = vunpack.c.l.b16 %v2272
        %v2310 = vunpack.c.l.b16 %v2273
        %v2311 = vunpack.c.l.b16 %v2274
        %v2312 = vunpack.c.l.b16 %v2275
        %v2313 = vunpack.c.l.b16 %v2276
        %v2314 = vunpack.c.l.b16 %v2277
        %v2315 = vunpack.c.l.b16 %v2278
        %v2316 = vunpack.c.l.b16 %v2279
        %v2317 = vunpack.c.l.b16 %v2280
        %v2318 = vunpack.c.l.b16 %v2281
        %v2319 = vunpack.c.l.b16 %v2282
        %v2320 = vunpack.c.l.b16 %v2283
        %v2321 = vunpack.c.l.b16 %v2284
        %v2322 = vunpack.c.l.b16 %v2285
        %v2323 = vunpack.c.l.b16 %v2286
        %v2324 = vunpack.c.l.b16 %v2287
        %v2325 = vpack.c.b16 %v2310, %v2309
        %v2326 = vpack.c.b16 %v2312, %v2311
        %v2327 = vpack.c.b16 %v2314, %v2313
        %v2328 = vpack.c.b16 %v2316, %v2315
        %v2329 = vpack.c.b16 %v2318, %v2317
        %v2330 = vpack.c.b16 %v2320, %v2319
        %v2331 = vpack.c.b16 %v2322, %v2321
        %v2332 = vpack.c.b16 %v2324, %v2323
        %2341 = vmatpush.bf16.msra.mxu0 %v2332
        %2342 = vmatpush.bf16.msra.mxu0 %v2331
        %2343 = vmatpush.bf16.msra.mxu0 %v2330
        %2344 = vmatpush.bf16.msra.mxu0 %v2329
        %2345 = vmatpush.bf16.msra.mxu0 %v2328
        %2346 = vmatpush.bf16.msra.mxu0 %v2327
        %2347 = vmatpush.bf16.msra.mxu0 %v2326
        %2348 = vmatpush.bf16.msra.mxu0 %v2325
        %2349 = vmatmul.bf16.gmra.mxu0 %v2288
        %v2350 = vpop.f32.mrf.mxu0
        %v2351 = vadd.f32 %v2291, %v2350
        %v2352 = vpop.f32.mrf.mxu0
        %v2353 = vadd.f32 %v2291, %v2352
        %2354 = vdwg.mxu0
        %v2355 = vmax.f32 %v2351, 0.0
        %v2356 = vmax.f32 %v2353, 0.0
        %v2357 = vld [vmem:[#allocation7] sm:$0xf]
        %v2358 = vld [vmem:[#allocation7 + $0x4] sm:$0xf]
        %v2359 = vld [vmem:[#allocation7 + $0x8] sm:$0xf]
        %v2360 = vld [vmem:[#allocation7 + $0xc] sm:$0xf]
        %v2361 = vld [vmem:[#allocation7 + $0x10] sm:$0xf]
        %v2362 = vld [vmem:[#allocation7 + $0x14] sm:$0xf]
        %v2363 = vld [vmem:[#allocation7 + $0x18] sm:$0xf]
        %v2364 = vld [vmem:[#allocation7 + $0x1c] sm:$0xf]
        %v2365 = vld [vmem:[#allocation7 + $0x20] sm:$0xf]
        %v2366 = vld [vmem:[#allocation7 + $0x24] sm:$0xf]
        %v2367 = vld [vmem:[#allocation7 + $0x28] sm:$0xf]
        %v2368 = vld [vmem:[#allocation7 + $0x2c] sm:$0xf]
        %v2369 = vld [vmem:[#allocation7 + $0x30] sm:$0xf]
        %v2370 = vld [vmem:[#allocation7 + $0x34] sm:$0xf]
        %v2371 = vld [vmem:[#allocation7 + $0x38] sm:$0xf]
        %v2372 = vld [vmem:[#allocation7 + $0x3c] sm:$0xf]
        %v2373 = vpack.c.bf16 %v2356, %v2355
        %v2374 = vld [vmem:[%s16] sm:$0x1]
        %v2376 = vperm.slane %v2374, 0
        %v2394 = vunpack.c.l.b16 %v2357
        %v2395 = vunpack.c.l.b16 %v2358
        %v2396 = vunpack.c.l.b16 %v2359
        %v2397 = vunpack.c.l.b16 %v2360
        %v2398 = vunpack.c.l.b16 %v2361
        %v2399 = vunpack.c.l.b16 %v2362
        %v2400 = vunpack.c.l.b16 %v2363
        %v2401 = vunpack.c.l.b16 %v2364
        %v2402 = vunpack.c.l.b16 %v2365
        %v2403 = vunpack.c.l.b16 %v2366
        %v2404 = vunpack.c.l.b16 %v2367
        %v2405 = vunpack.c.l.b16 %v2368
        %v2406 = vunpack.c.l.b16 %v2369
        %v2407 = vunpack.c.l.b16 %v2370
        %v2408 = vunpack.c.l.b16 %v2371
        %v2409 = vunpack.c.l.b16 %v2372
        %v2410 = vpack.c.b16 %v2395, %v2394
        %v2411 = vpack.c.b16 %v2397, %v2396
        %v2412 = vpack.c.b16 %v2399, %v2398
        %v2413 = vpack.c.b16 %v2401, %v2400
        %v2414 = vpack.c.b16 %v2403, %v2402
        %v2415 = vpack.c.b16 %v2405, %v2404
        %v2416 = vpack.c.b16 %v2407, %v2406
        %v2417 = vpack.c.b16 %v2409, %v2408
        %2426 = vmatpush.bf16.msra.mxu0 %v2417
        %2427 = vmatpush.bf16.msra.mxu0 %v2416
        %2428 = vmatpush.bf16.msra.mxu0 %v2415
        %2429 = vmatpush.bf16.msra.mxu0 %v2414
        %2430 = vmatpush.bf16.msra.mxu0 %v2413
        %2431 = vmatpush.bf16.msra.mxu0 %v2412
        %2432 = vmatpush.bf16.msra.mxu0 %v2411
        %2433 = vmatpush.bf16.msra.mxu0 %v2410
        %2434 = vmatmul.bf16.gmra.mxu0 %v2373
        %v2435 = vpop.f32.mrf.mxu0
        %v2436 = vadd.f32 %v2376, %v2435
        %v2437 = vpop.f32.mrf.mxu0
        %v2438 = vadd.f32 %v2376, %v2437
        %2439 = vdwg.mxu0
        %v2440 = vadd.f32 %v2270, %v2436
        %v2441 = vadd.f32 %v2271, %v2438
        %v2442 = vld [vmem:[%s17] sm:$0x1]
        %v2443 = vld [vmem:[%s18] sm:$0x1]
        %2444 = vadd.xlane.f32.xlu0 %v2440
        %v2445 = vpop.xlane.xlu0 %2444
        %2446 = vadd.xlane.f32.xlu0 %v2441
        %v2447 = vpop.xlane.xlu0 %2446
        %v2448 = vmul.f32 %v2445, %v2169
        %v2449 = vmul.f32 %v2447, %v2169
        %v2450 = vsub.f32 %v2440, %v2448
        %v2451 = vsub.f32 %v2441, %v2449
        %v2452 = vmul.f32 %v2450, %v2450
        %v2453 = vmul.f32 %v2451, %v2451
        %2454 = vadd.xlane.f32.xlu0 %v2452
        %v2455 = vpop.xlane.xlu0 %2454
        %2456 = vadd.xlane.f32.xlu0 %v2453
        %v2457 = vpop.xlane.xlu0 %2456
        %v2458 = vmul.f32 %v2455, %v2169
        %v2459 = vmul.f32 %v2457, %v2169
        %v2460 = vadd.f32 %v2458, 1e-05
        %v2461 = vadd.f32 %v2459, 1e-05
        %v2462 = vrsqrt.pop %v2460
        %v2463 = vmul.f32 %v2462, %v2460
        %v2464 = vmul.f32 %v2463, %v2462
        %v2465 = vmul.f32 0.5, %v2464
        %v2466 = vsub.f32 1.5, %v2465
        %v2467 = vmul.f32 %v2462, %v2466
        %vm2468 = vweird.f32 %v2460
        %vm2469 = vweird.f32 %v2462
        %vm2470 = vmor %vm2468, %vm2469
        %v2471 = vsel %vm2470, %v2462, %v2467
        %v2472 = vrsqrt.pop %v2461
        %v2473 = vmul.f32 %v2472, %v2461
        %v2474 = vmul.f32 %v2473, %v2472
        %v2475 = vmul.f32 0.5, %v2474
        %v2476 = vsub.f32 1.5, %v2475
        %v2477 = vmul.f32 %v2472, %v2476
        %vm2478 = vweird.f32 %v2461
        %vm2479 = vweird.f32 %v2472
        %vm2480 = vmor %vm2478, %vm2479
        %v2481 = vsel %vm2480, %v2472, %v2477
        %v2482 = vmul.f32 %v2450, %v2471
        %v2483 = vmul.f32 %v2451, %v2481
        %v2485 = vperm.slane %v2442, 0
        %v2487 = vmul.f32 %v2482, %v2485
        %v2488 = vmul.f32 %v2483, %v2485
        %v2490 = vperm.slane %v2443, 0
        %v2492 = vadd.f32 %v2487, %v2490
        %v2493 = vadd.f32 %v2488, %v2490
        %v2494 = vmul.f32 %v2492, %v839
        %v2495 = vmul.f32 %v2493, %v842
        %2496 = vst [vmem:[%s712] sm:$0xff] %v2494
        %2497 = vst [vmem:[%s712 + $0x8] sm:$0xff] %v2495
        %s2498 = smul.u32 2, %s33
        %p2499 = scmp.lt.s32.totalorder %s2498, 3
        %s2500 = scalar_select %p2499, %s2498, 3
        %s2501 = smul.addr %s2500, 8
        %s2502 = scalar_lea.vmem %s19, %s2501
        // Predicated region
        $region113: #{_lambda_.4} parent=95 // pred_check
          %p2503 = pneg %p465
        $region114: #{_lambda_.4} parent=95 // pred_check_branch
          %2505 = sbr.rel (%p2503) target = $region116
        $region115: #{_lambda_.4} parent=95 // pred_region
          %s2506 = smul.u32 2, %s33
        $region116: #{_lambda_.4} parent=95 // pred_fallthru
          _
      $region96: #{_lambda_.4} parent=5 // pred_fallthru
        _
      %p2507 = scmp.le.s32.totalorder 2, %s28
      // Predicated region
      $region117: #{_lambda_.4} parent=5 // pred_check
        %p2508 = pneg %p2507
      $region118: #{_lambda_.4} parent=5 // pred_check_branch
        %2510 = sbr.rel (%p2508) target = $region120
      $region119: #{_lambda_.4} parent=5 // pred_region
        %s2511 = ssub.s32 %s28, 2
        // Predicated region
        $region121: #{_lambda_.4} parent=119 // pred_check
          %p2512 = pneg %p471
        $region122: #{_lambda_.4} parent=119 // pred_check_branch
          %2514 = sbr.rel (%p2512) target = $region124
        $region123: #{_lambda_.4} parent=119 // pred_region
          %s2515 = smul.u32 2, %s34
          %p2516 = scmp.lt.s32.totalorder %s2515, 3
          %s2517 = scalar_select %p2516, %s2515, 3
          %s2518 = smul.addr %s2517, 8
          %s2519 = scalar_lea.vmem %s19, %s2518
        $region124: #{_lambda_.4} parent=119 // pred_fallthru
          _
      $region120: #{_lambda_.4} parent=5 // pred_fallthru
        _
    $region6: #{_lambda_.4} parent=1 // loop_footer
      %s32 = sadd.s32 1, %s28
    $region7: #{_lambda_.4} parent=1 // loop_footer_branch
      %27 = sbr.rel target = $region3
    $region8: #{_lambda_.4} parent=1 // loop_exit
      _
    %2520 = vsyncpa [#allocation3], 1
    %s2521 = scalar_lea.sflag [#allocation3], 1
    %2522 = vsyncpa %s2521, 1
    %2523 = vsyncpa [#allocation5], 1
    %2524 = vsyncpa [#allocation8], 1

</llo_original>
